<compile_context>
chip_gen: v7x
topology: tpu7x:2x2x1
jax: 0.10.0
libtpu: 0.0.40
codegen_flags: <defaults>
</compile_context>

<pallas_src>
import jax
import jax.numpy as jnp
from jax.experimental import pallas as pl
from jax.experimental.pallas import tpu as pltpu

# ---------------- model config (small, consistent with the module) ----------
INPUT_SIZE = 4          # conv in_channels
NUM_FILTERS = 8         # conv out_channels == GRU input size
KERNEL_SIZE = 3
HIDDEN_SIZE = 16
OUTPUT_SIZE = 5
T_OUT = 18                              # fc = Linear(18*hidden) forces conv-out length = 18
SEQ_LEN = T_OUT + KERNEL_SIZE - 1       # conv 'valid' => L = 18 + K - 1
BATCH = 2

B_PAD = 8               # batch padded to the sublane width
GATE_PAD = 128          # per-gate lane padding so r/z/n slices are vreg-aligned


def model_kernel(x_ref, cw_ref, cb_ref, wih_ref, whh_ref, bih_ref, bhh_ref,
                 fcw_ref, fcb_ref, out_ref, xg_ref):
    """Fused Conv1d+ReLU -> GRU -> Linear for the whole (padded) batch."""
    BP = B_PAD
    H = HIDDEN_SIZE
    GP = GATE_PAD
    TB = T_OUT * BP

    # --- Conv1d ('valid') + ReLU as K shifted matmuls on time-major rows.
    # x_ref: (L*BP, C) with row l*BP + b = x[b, :, l]; the K slice offsets
    # (0, 8, 16 rows) are sublane-tile aligned.
    y = cb_ref[...]                                     # (1, F) broadcast
    for k in range(KERNEL_SIZE):
        y = y + jnp.dot(x_ref[k * BP:k * BP + TB, :], cw_ref[k],
                        preferred_element_type=jnp.float32)
    y = jnp.maximum(y, 0.0)                             # (T*BP, F)

    # --- Input-side GRU gates for every (t, b) in one matmul -> VMEM scratch.
    # Gate layout is [r | pad | z | pad | n | pad], 128 lanes per gate.
    xg_ref[...] = jnp.dot(y, wih_ref[...],
                          preferred_element_type=jnp.float32) + bih_ref[...]

    # --- GRU recurrence, h0 = 0, PyTorch gate order [r, z, n], batched over BP.
    # h is carried in the 128-lane gate frame; lanes >= H stay exactly 0, so
    # only h[:, :H] feeds the matmuls (keeps the MXU weight push at K = 16).
    # TODO(synk): on v5e/v6e a further win would be keeping w_hh resident in the
    # MXU weight registers across steps (pltpu.matmul_push_rhs / matmul_acc_lhs).
    h = jnp.zeros((BP, GP), jnp.float32)
    acc = jnp.zeros((BP, OUTPUT_SIZE), jnp.float32)
    for t in range(T_OUT):                              # static unroll, T = 18
        xt = xg_ref[t * BP:(t + 1) * BP, :]             # (BP, 3*GP) aligned view
        hg = jnp.dot(h[:, 0:H], whh_ref[...],
                     preferred_element_type=jnp.float32) + bhh_ref[...]
        r = jax.nn.sigmoid(xt[:, 0:GP] + hg[:, 0:GP])
        z = jax.nn.sigmoid(xt[:, GP:2 * GP] + hg[:, GP:2 * GP])
        n = jnp.tanh(xt[:, 2 * GP:3 * GP] + r * hg[:, 2 * GP:3 * GP])
        h = (1.0 - z) * n + z * h
        # Final Linear accumulated in-loop (off the recurrence dependency
        # chain); replaces the hs scratch + epilogue matmul.
        acc = acc + jnp.dot(h[:, 0:H], fcw_ref[t],
                            preferred_element_type=jnp.float32)

    # Only the real batch rows are written out (padded rows never leak).
    out_ref[...] = acc[0:BATCH, :] + fcb_ref[...]


def _full_spec(shape):
    nd = len(shape)

    def imap(i):
        return (0,) * nd

    return pl.BlockSpec(shape, imap)


def _model_forward(x, packed):
    """x: (B, C_in, L) float32 -> (B, OUTPUT_SIZE) float32."""
    cw, cb, wih, whh, bih, bhh, fcw, fcb = packed
    # Zero-pad batch to 8 sublanes and lay x out time-major: row l*B_PAD + b.
    # Under jit this is a single fused tiny op on 640 B of data.
    xp = jnp.zeros((B_PAD, INPUT_SIZE, SEQ_LEN), x.dtype).at[:x.shape[0]].set(x)
    x_tm = jnp.transpose(xp, (2, 0, 1)).reshape(SEQ_LEN * B_PAD, INPUT_SIZE)

    args = (x_tm, cw, cb, wih, whh, bih, bhh, fcw, fcb)
    return pl.pallas_call(
        model_kernel,
        out_shape=jax.ShapeDtypeStruct((BATCH, OUTPUT_SIZE), jnp.float32),
        grid_spec=pltpu.PrefetchScalarGridSpec(
            num_scalar_prefetch=0,
            grid=(1,),                                  # single invocation, whole batch
            in_specs=[_full_spec(a.shape) for a in args],
            out_specs=pl.BlockSpec((BATCH, OUTPUT_SIZE), lambda i: (0, 0)),
            scratch_shapes=[
                pltpu.VMEM((T_OUT * B_PAD, 3 * GATE_PAD), jnp.float32)],
        ),
        compiler_params=pltpu.CompilerParams(
            dimension_semantics=("arbitrary",)),
    )(*args)


model_forward = jax.jit(_model_forward)


def make_params(key):
    ks = jax.random.split(key, 8)
    s = 0.2
    conv_w = s * jax.random.normal(ks[0], (NUM_FILTERS, INPUT_SIZE, KERNEL_SIZE), jnp.float32)
    conv_b = s * jax.random.normal(ks[1], (NUM_FILTERS,), jnp.float32)
    w_ih = s * jax.random.normal(ks[2], (3 * HIDDEN_SIZE, NUM_FILTERS), jnp.float32)
    w_hh = s * jax.random.normal(ks[3], (3 * HIDDEN_SIZE, HIDDEN_SIZE), jnp.float32)
    b_ih = s * jax.random.normal(ks[4], (3 * HIDDEN_SIZE,), jnp.float32)
    b_hh = s * jax.random.normal(ks[5], (3 * HIDDEN_SIZE,), jnp.float32)
    fc_w = s * jax.random.normal(ks[6], (OUTPUT_SIZE, T_OUT * HIDDEN_SIZE), jnp.float32)
    fc_b = s * jax.random.normal(ks[7], (OUTPUT_SIZE,), jnp.float32)
    return conv_w, conv_b, w_ih, w_hh, b_ih, b_hh, fc_w, fc_b


def pack_for_kernel(p):
    """Pre-transpose / gate-pad the weights into the kernel's layouts (one-time)."""
    conv_w, conv_b, w_ih, w_hh, b_ih, b_hh, fc_w, fc_b = p
    H, F, O, GP = HIDDEN_SIZE, NUM_FILTERS, OUTPUT_SIZE, GATE_PAD

    cw = jnp.transpose(conv_w, (2, 1, 0))                         # (K, C, F)
    cb = conv_b.reshape(1, F)                                     # (1, F)

    # Gate-padded GRU weights: columns [g*128 : g*128+H] hold gate g (r, z, n).
    wih = jnp.zeros((F, 3 * GP), jnp.float32)
    whh = jnp.zeros((H, 3 * GP), jnp.float32)
    bih = jnp.zeros((1, 3 * GP), jnp.float32)
    bhh = jnp.zeros((1, 3 * GP), jnp.float32)
    for g in range(3):
        wih = wih.at[:, g * GP:g * GP + H].set(w_ih[g * H:(g + 1) * H, :].T)
        whh = whh.at[:, g * GP:g * GP + H].set(w_hh[g * H:(g + 1) * H, :].T)
        bih = bih.at[0, g * GP:g * GP + H].set(b_ih[g * H:(g + 1) * H])
        bhh = bhh.at[0, g * GP:g * GP + H].set(b_hh[g * H:(g + 1) * H])

    # FC weight per time-step: fcw[t] = fc_w[:, t*H:(t+1)*H].T  -> (T, H, O)
    fcw = jnp.transpose(fc_w.reshape(O, T_OUT, H), (1, 2, 0))
    fcb = fc_b.reshape(1, O)                                      # (1, O)
    return cw, cb, wih, whh, bih, bhh, fcw, fcb


def reference_forward(x, p):
    """Pure-JAX reference matching PyTorch semantics (for correctness check)."""
    conv_w, conv_b, w_ih, w_hh, b_ih, b_hh, fc_w, fc_b = p
    y = jax.lax.conv_general_dilated(
        x, conv_w, window_strides=(1,), padding='VALID',
        dimension_numbers=('NCH', 'OIH', 'NCH'))
    y = jnp.maximum(y + conv_b.reshape(1, -1, 1), 0.0)      # (B, F, T)
    xs = jnp.transpose(y, (0, 2, 1))                        # (B, T, F)
    H = HIDDEN_SIZE

    def step(h, xt):
        xgate = xt @ w_ih.T + b_ih
        hgate = h @ w_hh.T + b_hh
        r = jax.nn.sigmoid(xgate[:, :H] + hgate[:, :H])
        z = jax.nn.sigmoid(xgate[:, H:2 * H] + hgate[:, H:2 * H])
        n = jnp.tanh(xgate[:, 2 * H:] + r * hgate[:, 2 * H:])
        h = (1.0 - z) * n + z * h
        return h, h

    h0 = jnp.zeros((x.shape[0], H), jnp.float32)
    _, hs = jax.lax.scan(step, h0, jnp.transpose(xs, (1, 0, 2)))
    hs = jnp.transpose(hs, (1, 0, 2))                       # (B, T, H)
    flat = hs.reshape(x.shape[0], -1)
    return flat @ fc_w.T + fc_b


if __name__ == "__main__":
    key = jax.random.PRNGKey(0)
    k_x, k_p = jax.random.split(key)
    x = jax.random.normal(k_x, (BATCH, INPUT_SIZE, SEQ_LEN), jnp.float32)
    params = make_params(k_p)
    packed = pack_for_kernel(params)

    out = jax.block_until_ready(model_forward(x, packed))
    ref = jax.block_until_ready(reference_forward(x, params))

    assert out.shape == (BATCH, OUTPUT_SIZE)
    assert jnp.allclose(out, ref, atol=1e-4, rtol=1e-4), (out, ref)
    print("KERNEL_OK")
</pallas_src>

<mosaic_0001>
module attributes {stable_mosaic.version = 11 : i64} {
  func.func @model_kernel(%arg0: i32, %arg1: memref<160x4xf32, #tpu.memory_space<vmem>>, %arg2: memref<3x4x8xf32, #tpu.memory_space<vmem>>, %arg3: memref<1x8xf32, #tpu.memory_space<vmem>>, %arg4: memref<8x384xf32, #tpu.memory_space<vmem>>, %arg5: memref<16x384xf32, #tpu.memory_space<vmem>>, %arg6: memref<1x384xf32, #tpu.memory_space<vmem>>, %arg7: memref<1x384xf32, #tpu.memory_space<vmem>>, %arg8: memref<18x16x5xf32, #tpu.memory_space<vmem>>, %arg9: memref<1x5xf32, #tpu.memory_space<vmem>>, %arg10: memref<2x5xf32, #tpu.memory_space<vmem>>, %arg11: memref<144x384xf32, #tpu.memory_space<vmem>>) attributes {dimension_semantics = [#tpu.dimension_semantics<arbitrary>], iteration_bounds = array<i64: 1>, scalar_prefetch = 0 : i64, scratch_operands = 1 : i64, tpu.core_type = #tpu.core_type<tc>, window_params = [{pipeline_mode = #tpu.pipeline_mode<synchronous>, transform_indices = @transform_0, window_bounds = array<i64: 160, 4>}, {pipeline_mode = #tpu.pipeline_mode<synchronous>, transform_indices = @transform_1, window_bounds = array<i64: 3, 4, 8>}, {pipeline_mode = #tpu.pipeline_mode<synchronous>, transform_indices = @transform_2, window_bounds = array<i64: 1, 8>}, {pipeline_mode = #tpu.pipeline_mode<synchronous>, transform_indices = @transform_3, window_bounds = array<i64: 8, 384>}, {pipeline_mode = #tpu.pipeline_mode<synchronous>, transform_indices = @transform_4, window_bounds = array<i64: 16, 384>}, {pipeline_mode = #tpu.pipeline_mode<synchronous>, transform_indices = @transform_5, window_bounds = array<i64: 1, 384>}, {pipeline_mode = #tpu.pipeline_mode<synchronous>, transform_indices = @transform_6, window_bounds = array<i64: 1, 384>}, {pipeline_mode = #tpu.pipeline_mode<synchronous>, transform_indices = @transform_7, window_bounds = array<i64: 18, 16, 5>}, {pipeline_mode = #tpu.pipeline_mode<synchronous>, transform_indices = @transform_8, window_bounds = array<i64: 1, 5>}, {pipeline_mode = #tpu.pipeline_mode<synchronous>, transform_indices = @transform_9, window_bounds = array<i64: 2, 5>}]} {
    %c0 = arith.constant 0 : index
    %c0_0 = arith.constant 0 : index
    %0 = vector.load %arg3[%c0, %c0_0] : memref<1x8xf32, #tpu.memory_space<vmem>>, vector<1x8xf32>
    %c0_1 = arith.constant 0 : index
    %c0_2 = arith.constant 0 : index
    %1 = vector.load %arg1[%c0_1, %c0_2] : memref<160x4xf32, #tpu.memory_space<vmem>>, vector<144x4xf32>
    %c0_3 = arith.constant 0 : index
    %c0_4 = arith.constant 0 : index
    %c0_5 = arith.constant 0 : index
    %2 = vector.load %arg2[%c0_3, %c0_4, %c0_5] : memref<3x4x8xf32, #tpu.memory_space<vmem>>, vector<1x4x8xf32>
    %3 = vector.shape_cast %2 : vector<1x4x8xf32> to vector<4x8xf32>
    %cst = arith.constant dense<0.000000e+00> : vector<144x8xf32>
    %4 = tpu.matmul %1, %3, %cst {dimension_numbers = #tpu.dot_dimension_numbers<[1], [0], [0], [1], [0, 0, 1, 1], [], []>} : vector<144x4xf32>, vector<4x8xf32>, vector<144x8xf32> -> vector<144x8xf32>
    %5 = vector.broadcast %0 : vector<1x8xf32> to vector<144x8xf32>
    %6 = arith.addf %5, %4 : vector<144x8xf32>
    %c8 = arith.constant 8 : index
    %c0_6 = arith.constant 0 : index
    %7 = vector.load %arg1[%c8, %c0_6] : memref<160x4xf32, #tpu.memory_space<vmem>>, vector<144x4xf32>
    %c1 = arith.constant 1 : index
    %c0_7 = arith.constant 0 : index
    %c0_8 = arith.constant 0 : index
    %8 = vector.load %arg2[%c1, %c0_7, %c0_8] : memref<3x4x8xf32, #tpu.memory_space<vmem>>, vector<1x4x8xf32>
    %9 = vector.shape_cast %8 : vector<1x4x8xf32> to vector<4x8xf32>
    %cst_9 = arith.constant dense<0.000000e+00> : vector<144x8xf32>
    %10 = tpu.matmul %7, %9, %cst_9 {dimension_numbers = #tpu.dot_dimension_numbers<[1], [0], [0], [1], [0, 0, 1, 1], [], []>} : vector<144x4xf32>, vector<4x8xf32>, vector<144x8xf32> -> vector<144x8xf32>
    %11 = arith.addf %6, %10 : vector<144x8xf32>
    %c16 = arith.constant 16 : index
    %c0_10 = arith.constant 0 : index
    %12 = vector.load %arg1[%c16, %c0_10] : memref<160x4xf32, #tpu.memory_space<vmem>>, vector<144x4xf32>
    %c2 = arith.constant 2 : index
    %c0_11 = arith.constant 0 : index
    %c0_12 = arith.constant 0 : index
    %13 = vector.load %arg2[%c2, %c0_11, %c0_12] : memref<3x4x8xf32, #tpu.memory_space<vmem>>, vector<1x4x8xf32>
    %14 = vector.shape_cast %13 : vector<1x4x8xf32> to vector<4x8xf32>
    %cst_13 = arith.constant dense<0.000000e+00> : vector<144x8xf32>
    %15 = tpu.matmul %12, %14, %cst_13 {dimension_numbers = #tpu.dot_dimension_numbers<[1], [0], [0], [1], [0, 0, 1, 1], [], []>} : vector<144x4xf32>, vector<4x8xf32>, vector<144x8xf32> -> vector<144x8xf32>
    %16 = arith.addf %11, %15 : vector<144x8xf32>
    %cst_14 = arith.constant 0.000000e+00 : f32
    %17 = vector.broadcast %cst_14 : f32 to vector<144x8xf32>
    %18 = arith.maximumf %16, %17 : vector<144x8xf32>
    %c0_15 = arith.constant 0 : index
    %c0_16 = arith.constant 0 : index
    %19 = vector.load %arg4[%c0_15, %c0_16] : memref<8x384xf32, #tpu.memory_space<vmem>>, vector<8x384xf32>
    %cst_17 = arith.constant dense<0.000000e+00> : vector<144x384xf32>
    %20 = tpu.matmul %18, %19, %cst_17 {dimension_numbers = #tpu.dot_dimension_numbers<[1], [0], [0], [1], [0, 0, 1, 1], [], []>} : vector<144x8xf32>, vector<8x384xf32>, vector<144x384xf32> -> vector<144x384xf32>
    %c0_18 = arith.constant 0 : index
    %c0_19 = arith.constant 0 : index
    %21 = vector.load %arg6[%c0_18, %c0_19] : memref<1x384xf32, #tpu.memory_space<vmem>>, vector<1x384xf32>
    %22 = vector.broadcast %21 : vector<1x384xf32> to vector<144x384xf32>
    %23 = arith.addf %20, %22 : vector<144x384xf32>
    %c0_20 = arith.constant 0 : index
    %c0_21 = arith.constant 0 : index
    %24 = vector.load %arg11[%c0_20, %c0_21] : memref<144x384xf32, #tpu.memory_space<vmem>>, vector<144x384xf32>
    tpu.vector_store %arg11[%c0_20, %c0_21], %23 {strides = array<i32>} : memref<144x384xf32, #tpu.memory_space<vmem>>, vector<144x384xf32>,
    %cst_22 = arith.constant 0.000000e+00 : f32
    %25 = vector.broadcast %cst_22 : f32 to vector<8x128xf32>
    %cst_23 = arith.constant 0.000000e+00 : f32
    %26 = vector.broadcast %cst_23 : f32 to vector<8x5xf32>
    %c0_24 = arith.constant 0 : index
    %c0_25 = arith.constant 0 : index
    %27 = vector.load %arg11[%c0_24, %c0_25] : memref<144x384xf32, #tpu.memory_space<vmem>>, vector<8x384xf32>
    %28 = vector.extract_strided_slice %25 {offsets = [0, 0], sizes = [8, 16], strides = [1, 1]} : vector<8x128xf32> to vector<8x16xf32>
    %c0_26 = arith.constant 0 : index
    %c0_27 = arith.constant 0 : index
    %29 = vector.load %arg5[%c0_26, %c0_27] : memref<16x384xf32, #tpu.memory_space<vmem>>, vector<16x384xf32>
    %cst_28 = arith.constant dense<0.000000e+00> : vector<8x384xf32>
    %30 = tpu.matmul %28, %29, %cst_28 {dimension_numbers = #tpu.dot_dimension_numbers<[1], [0], [0], [1], [0, 0, 1, 1], [], []>} : vector<8x16xf32>, vector<16x384xf32>, vector<8x384xf32> -> vector<8x384xf32>
    %c0_29 = arith.constant 0 : index
    %c0_30 = arith.constant 0 : index
    %31 = vector.load %arg7[%c0_29, %c0_30] : memref<1x384xf32, #tpu.memory_space<vmem>>, vector<1x384xf32>
    %32 = vector.broadcast %31 : vector<1x384xf32> to vector<8x384xf32>
    %33 = arith.addf %30, %32 : vector<8x384xf32>
    %34 = vector.extract_strided_slice %27 {offsets = [0, 0], sizes = [8, 128], strides = [1, 1]} : vector<8x384xf32> to vector<8x128xf32>
    %35 = vector.extract_strided_slice %33 {offsets = [0, 0], sizes = [8, 128], strides = [1, 1]} : vector<8x384xf32> to vector<8x128xf32>
    %36 = arith.addf %34, %35 : vector<8x128xf32>
    %37 = arith.negf %36 : vector<8x128xf32>
    %38 = math.exp %37 : vector<8x128xf32>
    %cst_31 = arith.constant 1.000000e+00 : f32
    %39 = vector.broadcast %cst_31 : f32 to vector<8x128xf32>
    %40 = arith.addf %39, %38 : vector<8x128xf32>
    %41 = arith.divf %39, %40 : vector<8x128xf32>
    %42 = vector.extract_strided_slice %27 {offsets = [0, 128], sizes = [8, 128], strides = [1, 1]} : vector<8x384xf32> to vector<8x128xf32>
    %43 = vector.extract_strided_slice %33 {offsets = [0, 128], sizes = [8, 128], strides = [1, 1]} : vector<8x384xf32> to vector<8x128xf32>
    %44 = arith.addf %42, %43 : vector<8x128xf32>
    %45 = arith.negf %44 : vector<8x128xf32>
    %46 = math.exp %45 : vector<8x128xf32>
    %cst_32 = arith.constant 1.000000e+00 : f32
    %47 = vector.broadcast %cst_32 : f32 to vector<8x128xf32>
    %48 = arith.addf %47, %46 : vector<8x128xf32>
    %49 = arith.divf %47, %48 : vector<8x128xf32>
    %50 = vector.extract_strided_slice %27 {offsets = [0, 256], sizes = [8, 128], strides = [1, 1]} : vector<8x384xf32> to vector<8x128xf32>
    %51 = vector.extract_strided_slice %33 {offsets = [0, 256], sizes = [8, 128], strides = [1, 1]} : vector<8x384xf32> to vector<8x128xf32>
    %52 = arith.mulf %41, %51 : vector<8x128xf32>
    %53 = arith.addf %50, %52 : vector<8x128xf32>
    %54 = math.tanh %53 : vector<8x128xf32>
    %cst_33 = arith.constant 1.000000e+00 : f32
    %55 = vector.broadcast %cst_33 : f32 to vector<8x128xf32>
    %56 = arith.subf %55, %49 : vector<8x128xf32>
    %57 = arith.mulf %56, %54 : vector<8x128xf32>
    %58 = arith.mulf %49, %25 : vector<8x128xf32>
    %59 = arith.addf %57, %58 : vector<8x128xf32>
    %60 = vector.extract_strided_slice %59 {offsets = [0, 0], sizes = [8, 16], strides = [1, 1]} : vector<8x128xf32> to vector<8x16xf32>
    %c0_34 = arith.constant 0 : index
    %c0_35 = arith.constant 0 : index
    %c0_36 = arith.constant 0 : index
    %61 = vector.load %arg8[%c0_34, %c0_35, %c0_36] : memref<18x16x5xf32, #tpu.memory_space<vmem>>, vector<1x16x5xf32>
    %62 = vector.shape_cast %61 : vector<1x16x5xf32> to vector<16x5xf32>
    %cst_37 = arith.constant dense<0.000000e+00> : vector<8x5xf32>
    %63 = tpu.matmul %60, %62, %cst_37 {dimension_numbers = #tpu.dot_dimension_numbers<[1], [0], [0], [1], [0, 0, 1, 1], [], []>} : vector<8x16xf32>, vector<16x5xf32>, vector<8x5xf32> -> vector<8x5xf32>
    %64 = arith.addf %26, %63 : vector<8x5xf32>
    %c8_38 = arith.constant 8 : index
    %c0_39 = arith.constant 0 : index
    %65 = vector.load %arg11[%c8_38, %c0_39] : memref<144x384xf32, #tpu.memory_space<vmem>>, vector<8x384xf32>
    %66 = vector.extract_strided_slice %59 {offsets = [0, 0], sizes = [8, 16], strides = [1, 1]} : vector<8x128xf32> to vector<8x16xf32>
    %c0_40 = arith.constant 0 : index
    %c0_41 = arith.constant 0 : index
    %67 = vector.load %arg5[%c0_40, %c0_41] : memref<16x384xf32, #tpu.memory_space<vmem>>, vector<16x384xf32>
    %cst_42 = arith.constant dense<0.000000e+00> : vector<8x384xf32>
    %68 = tpu.matmul %66, %67, %cst_42 {dimension_numbers = #tpu.dot_dimension_numbers<[1], [0], [0], [1], [0, 0, 1, 1], [], []>} : vector<8x16xf32>, vector<16x384xf32>, vector<8x384xf32> -> vector<8x384xf32>
    %c0_43 = arith.constant 0 : index
    %c0_44 = arith.constant 0 : index
    %69 = vector.load %arg7[%c0_43, %c0_44] : memref<1x384xf32, #tpu.memory_space<vmem>>, vector<1x384xf32>
    %70 = vector.broadcast %69 : vector<1x384xf32> to vector<8x384xf32>
    %71 = arith.addf %68, %70 : vector<8x384xf32>
    %72 = vector.extract_strided_slice %65 {offsets = [0, 0], sizes = [8, 128], strides = [1, 1]} : vector<8x384xf32> to vector<8x128xf32>
    %73 = vector.extract_strided_slice %71 {offsets = [0, 0], sizes = [8, 128], strides = [1, 1]} : vector<8x384xf32> to vector<8x128xf32>
    %74 = arith.addf %72, %73 : vector<8x128xf32>
    %75 = arith.negf %74 : vector<8x128xf32>
    %76 = math.exp %75 : vector<8x128xf32>
    %cst_45 = arith.constant 1.000000e+00 : f32
    %77 = vector.broadcast %cst_45 : f32 to vector<8x128xf32>
    %78 = arith.addf %77, %76 : vector<8x128xf32>
    %79 = arith.divf %77, %78 : vector<8x128xf32>
    %80 = vector.extract_strided_slice %65 {offsets = [0, 128], sizes = [8, 128], strides = [1, 1]} : vector<8x384xf32> to vector<8x128xf32>
    %81 = vector.extract_strided_slice %71 {offsets = [0, 128], sizes = [8, 128], strides = [1, 1]} : vector<8x384xf32> to vector<8x128xf32>
    %82 = arith.addf %80, %81 : vector<8x128xf32>
    %83 = arith.negf %82 : vector<8x128xf32>
    %84 = math.exp %83 : vector<8x128xf32>
    %cst_46 = arith.constant 1.000000e+00 : f32
    %85 = vector.broadcast %cst_46 : f32 to vector<8x128xf32>
    %86 = arith.addf %85, %84 : vector<8x128xf32>
    %87 = arith.divf %85, %86 : vector<8x128xf32>
    %88 = vector.extract_strided_slice %65 {offsets = [0, 256], sizes = [8, 128], strides = [1, 1]} : vector<8x384xf32> to vector<8x128xf32>
    %89 = vector.extract_strided_slice %71 {offsets = [0, 256], sizes = [8, 128], strides = [1, 1]} : vector<8x384xf32> to vector<8x128xf32>
    %90 = arith.mulf %79, %89 : vector<8x128xf32>
    %91 = arith.addf %88, %90 : vector<8x128xf32>
    %92 = math.tanh %91 : vector<8x128xf32>
    %cst_47 = arith.constant 1.000000e+00 : f32
    %93 = vector.broadcast %cst_47 : f32 to vector<8x128xf32>
    %94 = arith.subf %93, %87 : vector<8x128xf32>
    %95 = arith.mulf %94, %92 : vector<8x128xf32>
    %96 = arith.mulf %87, %59 : vector<8x128xf32>
    %97 = arith.addf %95, %96 : vector<8x128xf32>
    %98 = vector.extract_strided_slice %97 {offsets = [0, 0], sizes = [8, 16], strides = [1, 1]} : vector<8x128xf32> to vector<8x16xf32>
    %c1_48 = arith.constant 1 : index
    %c0_49 = arith.constant 0 : index
    %c0_50 = arith.constant 0 : index
    %99 = vector.load %arg8[%c1_48, %c0_49, %c0_50] : memref<18x16x5xf32, #tpu.memory_space<vmem>>, vector<1x16x5xf32>
    %100 = vector.shape_cast %99 : vector<1x16x5xf32> to vector<16x5xf32>
    %cst_51 = arith.constant dense<0.000000e+00> : vector<8x5xf32>
    %101 = tpu.matmul %98, %100, %cst_51 {dimension_numbers = #tpu.dot_dimension_numbers<[1], [0], [0], [1], [0, 0, 1, 1], [], []>} : vector<8x16xf32>, vector<16x5xf32>, vector<8x5xf32> -> vector<8x5xf32>
    %102 = arith.addf %64, %101 : vector<8x5xf32>
    %c16_52 = arith.constant 16 : index
    %c0_53 = arith.constant 0 : index
    %103 = vector.load %arg11[%c16_52, %c0_53] : memref<144x384xf32, #tpu.memory_space<vmem>>, vector<8x384xf32>
    %104 = vector.extract_strided_slice %97 {offsets = [0, 0], sizes = [8, 16], strides = [1, 1]} : vector<8x128xf32> to vector<8x16xf32>
    %c0_54 = arith.constant 0 : index
    %c0_55 = arith.constant 0 : index
    %105 = vector.load %arg5[%c0_54, %c0_55] : memref<16x384xf32, #tpu.memory_space<vmem>>, vector<16x384xf32>
    %cst_56 = arith.constant dense<0.000000e+00> : vector<8x384xf32>
    %106 = tpu.matmul %104, %105, %cst_56 {dimension_numbers = #tpu.dot_dimension_numbers<[1], [0], [0], [1], [0, 0, 1, 1], [], []>} : vector<8x16xf32>, vector<16x384xf32>, vector<8x384xf32> -> vector<8x384xf32>
    %c0_57 = arith.constant 0 : index
    %c0_58 = arith.constant 0 : index
    %107 = vector.load %arg7[%c0_57, %c0_58] : memref<1x384xf32, #tpu.memory_space<vmem>>, vector<1x384xf32>
    %108 = vector.broadcast %107 : vector<1x384xf32> to vector<8x384xf32>
    %109 = arith.addf %106, %108 : vector<8x384xf32>
    %110 = vector.extract_strided_slice %103 {offsets = [0, 0], sizes = [8, 128], strides = [1, 1]} : vector<8x384xf32> to vector<8x128xf32>
    %111 = vector.extract_strided_slice %109 {offsets = [0, 0], sizes = [8, 128], strides = [1, 1]} : vector<8x384xf32> to vector<8x128xf32>
    %112 = arith.addf %110, %111 : vector<8x128xf32>
    %113 = arith.negf %112 : vector<8x128xf32>
    %114 = math.exp %113 : vector<8x128xf32>
    %cst_59 = arith.constant 1.000000e+00 : f32
    %115 = vector.broadcast %cst_59 : f32 to vector<8x128xf32>
    %116 = arith.addf %115, %114 : vector<8x128xf32>
    %117 = arith.divf %115, %116 : vector<8x128xf32>
    %118 = vector.extract_strided_slice %103 {offsets = [0, 128], sizes = [8, 128], strides = [1, 1]} : vector<8x384xf32> to vector<8x128xf32>
    %119 = vector.extract_strided_slice %109 {offsets = [0, 128], sizes = [8, 128], strides = [1, 1]} : vector<8x384xf32> to vector<8x128xf32>
    %120 = arith.addf %118, %119 : vector<8x128xf32>
    %121 = arith.negf %120 : vector<8x128xf32>
    %122 = math.exp %121 : vector<8x128xf32>
    %cst_60 = arith.constant 1.000000e+00 : f32
    %123 = vector.broadcast %cst_60 : f32 to vector<8x128xf32>
    %124 = arith.addf %123, %122 : vector<8x128xf32>
    %125 = arith.divf %123, %124 : vector<8x128xf32>
    %126 = vector.extract_strided_slice %103 {offsets = [0, 256], sizes = [8, 128], strides = [1, 1]} : vector<8x384xf32> to vector<8x128xf32>
    %127 = vector.extract_strided_slice %109 {offsets = [0, 256], sizes = [8, 128], strides = [1, 1]} : vector<8x384xf32> to vector<8x128xf32>
    %128 = arith.mulf %117, %127 : vector<8x128xf32>
    %129 = arith.addf %126, %128 : vector<8x128xf32>
    %130 = math.tanh %129 : vector<8x128xf32>
    %cst_61 = arith.constant 1.000000e+00 : f32
    %131 = vector.broadcast %cst_61 : f32 to vector<8x128xf32>
    %132 = arith.subf %131, %125 : vector<8x128xf32>
    %133 = arith.mulf %132, %130 : vector<8x128xf32>
    %134 = arith.mulf %125, %97 : vector<8x128xf32>
    %135 = arith.addf %133, %134 : vector<8x128xf32>
    %136 = vector.extract_strided_slice %135 {offsets = [0, 0], sizes = [8, 16], strides = [1, 1]} : vector<8x128xf32> to vector<8x16xf32>
    %c2_62 = arith.constant 2 : index
    %c0_63 = arith.constant 0 : index
    %c0_64 = arith.constant 0 : index
    %137 = vector.load %arg8[%c2_62, %c0_63, %c0_64] : memref<18x16x5xf32, #tpu.memory_space<vmem>>, vector<1x16x5xf32>
    %138 = vector.shape_cast %137 : vector<1x16x5xf32> to vector<16x5xf32>
    %cst_65 = arith.constant dense<0.000000e+00> : vector<8x5xf32>
    %139 = tpu.matmul %136, %138, %cst_65 {dimension_numbers = #tpu.dot_dimension_numbers<[1], [0], [0], [1], [0, 0, 1, 1], [], []>} : vector<8x16xf32>, vector<16x5xf32>, vector<8x5xf32> -> vector<8x5xf32>
    %140 = arith.addf %102, %139 : vector<8x5xf32>
    %c24 = arith.constant 24 : index
    %c0_66 = arith.constant 0 : index
    %141 = vector.load %arg11[%c24, %c0_66] : memref<144x384xf32, #tpu.memory_space<vmem>>, vector<8x384xf32>
    %142 = vector.extract_strided_slice %135 {offsets = [0, 0], sizes = [8, 16], strides = [1, 1]} : vector<8x128xf32> to vector<8x16xf32>
    %c0_67 = arith.constant 0 : index
    %c0_68 = arith.constant 0 : index
    %143 = vector.load %arg5[%c0_67, %c0_68] : memref<16x384xf32, #tpu.memory_space<vmem>>, vector<16x384xf32>
    %cst_69 = arith.constant dense<0.000000e+00> : vector<8x384xf32>
    %144 = tpu.matmul %142, %143, %cst_69 {dimension_numbers = #tpu.dot_dimension_numbers<[1], [0], [0], [1], [0, 0, 1, 1], [], []>} : vector<8x16xf32>, vector<16x384xf32>, vector<8x384xf32> -> vector<8x384xf32>
    %c0_70 = arith.constant 0 : index
    %c0_71 = arith.constant 0 : index
    %145 = vector.load %arg7[%c0_70, %c0_71] : memref<1x384xf32, #tpu.memory_space<vmem>>, vector<1x384xf32>
    %146 = vector.broadcast %145 : vector<1x384xf32> to vector<8x384xf32>
    %147 = arith.addf %144, %146 : vector<8x384xf32>
    %148 = vector.extract_strided_slice %141 {offsets = [0, 0], sizes = [8, 128], strides = [1, 1]} : vector<8x384xf32> to vector<8x128xf32>
    %149 = vector.extract_strided_slice %147 {offsets = [0, 0], sizes = [8, 128], strides = [1, 1]} : vector<8x384xf32> to vector<8x128xf32>
    %150 = arith.addf %148, %149 : vector<8x128xf32>
    %151 = arith.negf %150 : vector<8x128xf32>
    %152 = math.exp %151 : vector<8x128xf32>
    %cst_72 = arith.constant 1.000000e+00 : f32
    %153 = vector.broadcast %cst_72 : f32 to vector<8x128xf32>
    %154 = arith.addf %153, %152 : vector<8x128xf32>
    %155 = arith.divf %153, %154 : vector<8x128xf32>
    %156 = vector.extract_strided_slice %141 {offsets = [0, 128], sizes = [8, 128], strides = [1, 1]} : vector<8x384xf32> to vector<8x128xf32>
    %157 = vector.extract_strided_slice %147 {offsets = [0, 128], sizes = [8, 128], strides = [1, 1]} : vector<8x384xf32> to vector<8x128xf32>
    %158 = arith.addf %156, %157 : vector<8x128xf32>
    %159 = arith.negf %158 : vector<8x128xf32>
    %160 = math.exp %159 : vector<8x128xf32>
    %cst_73 = arith.constant 1.000000e+00 : f32
    %161 = vector.broadcast %cst_73 : f32 to vector<8x128xf32>
    %162 = arith.addf %161, %160 : vector<8x128xf32>
    %163 = arith.divf %161, %162 : vector<8x128xf32>
    %164 = vector.extract_strided_slice %141 {offsets = [0, 256], sizes = [8, 128], strides = [1, 1]} : vector<8x384xf32> to vector<8x128xf32>
    %165 = vector.extract_strided_slice %147 {offsets = [0, 256], sizes = [8, 128], strides = [1, 1]} : vector<8x384xf32> to vector<8x128xf32>
    %166 = arith.mulf %155, %165 : vector<8x128xf32>
    %167 = arith.addf %164, %166 : vector<8x128xf32>
    %168 = math.tanh %167 : vector<8x128xf32>
    %cst_74 = arith.constant 1.000000e+00 : f32
    %169 = vector.broadcast %cst_74 : f32 to vector<8x128xf32>
    %170 = arith.subf %169, %163 : vector<8x128xf32>
    %171 = arith.mulf %170, %168 : vector<8x128xf32>
    %172 = arith.mulf %163, %135 : vector<8x128xf32>
    %173 = arith.addf %171, %172 : vector<8x128xf32>
    %174 = vector.extract_strided_slice %173 {offsets = [0, 0], sizes = [8, 16], strides = [1, 1]} : vector<8x128xf32> to vector<8x16xf32>
    %c3 = arith.constant 3 : index
    %c0_75 = arith.constant 0 : index
    %c0_76 = arith.constant 0 : index
    %175 = vector.load %arg8[%c3, %c0_75, %c0_76] : memref<18x16x5xf32, #tpu.memory_space<vmem>>, vector<1x16x5xf32>
    %176 = vector.shape_cast %175 : vector<1x16x5xf32> to vector<16x5xf32>
    %cst_77 = arith.constant dense<0.000000e+00> : vector<8x5xf32>
    %177 = tpu.matmul %174, %176, %cst_77 {dimension_numbers = #tpu.dot_dimension_numbers<[1], [0], [0], [1], [0, 0, 1, 1], [], []>} : vector<8x16xf32>, vector<16x5xf32>, vector<8x5xf32> -> vector<8x5xf32>
    %178 = arith.addf %140, %177 : vector<8x5xf32>
    %c32 = arith.constant 32 : index
    %c0_78 = arith.constant 0 : index
    %179 = vector.load %arg11[%c32, %c0_78] : memref<144x384xf32, #tpu.memory_space<vmem>>, vector<8x384xf32>
    %180 = vector.extract_strided_slice %173 {offsets = [0, 0], sizes = [8, 16], strides = [1, 1]} : vector<8x128xf32> to vector<8x16xf32>
    %c0_79 = arith.constant 0 : index
    %c0_80 = arith.constant 0 : index
    %181 = vector.load %arg5[%c0_79, %c0_80] : memref<16x384xf32, #tpu.memory_space<vmem>>, vector<16x384xf32>
    %cst_81 = arith.constant dense<0.000000e+00> : vector<8x384xf32>
    %182 = tpu.matmul %180, %181, %cst_81 {dimension_numbers = #tpu.dot_dimension_numbers<[1], [0], [0], [1], [0, 0, 1, 1], [], []>} : vector<8x16xf32>, vector<16x384xf32>, vector<8x384xf32> -> vector<8x384xf32>
    %c0_82 = arith.constant 0 : index
    %c0_83 = arith.constant 0 : index
    %183 = vector.load %arg7[%c0_82, %c0_83] : memref<1x384xf32, #tpu.memory_space<vmem>>, vector<1x384xf32>
    %184 = vector.broadcast %183 : vector<1x384xf32> to vector<8x384xf32>
    %185 = arith.addf %182, %184 : vector<8x384xf32>
    %186 = vector.extract_strided_slice %179 {offsets = [0, 0], sizes = [8, 128], strides = [1, 1]} : vector<8x384xf32> to vector<8x128xf32>
    %187 = vector.extract_strided_slice %185 {offsets = [0, 0], sizes = [8, 128], strides = [1, 1]} : vector<8x384xf32> to vector<8x128xf32>
    %188 = arith.addf %186, %187 : vector<8x128xf32>
    %189 = arith.negf %188 : vector<8x128xf32>
    %190 = math.exp %189 : vector<8x128xf32>
    %cst_84 = arith.constant 1.000000e+00 : f32
    %191 = vector.broadcast %cst_84 : f32 to vector<8x128xf32>
    %192 = arith.addf %191, %190 : vector<8x128xf32>
    %193 = arith.divf %191, %192 : vector<8x128xf32>
    %194 = vector.extract_strided_slice %179 {offsets = [0, 128], sizes = [8, 128], strides = [1, 1]} : vector<8x384xf32> to vector<8x128xf32>
    %195 = vector.extract_strided_slice %185 {offsets = [0, 128], sizes = [8, 128], strides = [1, 1]} : vector<8x384xf32> to vector<8x128xf32>
    %196 = arith.addf %194, %195 : vector<8x128xf32>
    %197 = arith.negf %196 : vector<8x128xf32>
    %198 = math.exp %197 : vector<8x128xf32>
    %cst_85 = arith.constant 1.000000e+00 : f32
    %199 = vector.broadcast %cst_85 : f32 to vector<8x128xf32>
    %200 = arith.addf %199, %198 : vector<8x128xf32>
    %201 = arith.divf %199, %200 : vector<8x128xf32>
    %202 = vector.extract_strided_slice %179 {offsets = [0, 256], sizes = [8, 128], strides = [1, 1]} : vector<8x384xf32> to vector<8x128xf32>
    %203 = vector.extract_strided_slice %185 {offsets = [0, 256], sizes = [8, 128], strides = [1, 1]} : vector<8x384xf32> to vector<8x128xf32>
    %204 = arith.mulf %193, %203 : vector<8x128xf32>
    %205 = arith.addf %202, %204 : vector<8x128xf32>
    %206 = math.tanh %205 : vector<8x128xf32>
    %cst_86 = arith.constant 1.000000e+00 : f32
    %207 = vector.broadcast %cst_86 : f32 to vector<8x128xf32>
    %208 = arith.subf %207, %201 : vector<8x128xf32>
    %209 = arith.mulf %208, %206 : vector<8x128xf32>
    %210 = arith.mulf %201, %173 : vector<8x128xf32>
    %211 = arith.addf %209, %210 : vector<8x128xf32>
    %212 = vector.extract_strided_slice %211 {offsets = [0, 0], sizes = [8, 16], strides = [1, 1]} : vector<8x128xf32> to vector<8x16xf32>
    %c4 = arith.constant 4 : index
    %c0_87 = arith.constant 0 : index
    %c0_88 = arith.constant 0 : index
    %213 = vector.load %arg8[%c4, %c0_87, %c0_88] : memref<18x16x5xf32, #tpu.memory_space<vmem>>, vector<1x16x5xf32>
    %214 = vector.shape_cast %213 : vector<1x16x5xf32> to vector<16x5xf32>
    %cst_89 = arith.constant dense<0.000000e+00> : vector<8x5xf32>
    %215 = tpu.matmul %212, %214, %cst_89 {dimension_numbers = #tpu.dot_dimension_numbers<[1], [0], [0], [1], [0, 0, 1, 1], [], []>} : vector<8x16xf32>, vector<16x5xf32>, vector<8x5xf32> -> vector<8x5xf32>
    %216 = arith.addf %178, %215 : vector<8x5xf32>
    %c40 = arith.constant 40 : index
    %c0_90 = arith.constant 0 : index
    %217 = vector.load %arg11[%c40, %c0_90] : memref<144x384xf32, #tpu.memory_space<vmem>>, vector<8x384xf32>
    %218 = vector.extract_strided_slice %211 {offsets = [0, 0], sizes = [8, 16], strides = [1, 1]} : vector<8x128xf32> to vector<8x16xf32>
    %c0_91 = arith.constant 0 : index
    %c0_92 = arith.constant 0 : index
    %219 = vector.load %arg5[%c0_91, %c0_92] : memref<16x384xf32, #tpu.memory_space<vmem>>, vector<16x384xf32>
    %cst_93 = arith.constant dense<0.000000e+00> : vector<8x384xf32>
    %220 = tpu.matmul %218, %219, %cst_93 {dimension_numbers = #tpu.dot_dimension_numbers<[1], [0], [0], [1], [0, 0, 1, 1], [], []>} : vector<8x16xf32>, vector<16x384xf32>, vector<8x384xf32> -> vector<8x384xf32>
    %c0_94 = arith.constant 0 : index
    %c0_95 = arith.constant 0 : index
    %221 = vector.load %arg7[%c0_94, %c0_95] : memref<1x384xf32, #tpu.memory_space<vmem>>, vector<1x384xf32>
    %222 = vector.broadcast %221 : vector<1x384xf32> to vector<8x384xf32>
    %223 = arith.addf %220, %222 : vector<8x384xf32>
    %224 = vector.extract_strided_slice %217 {offsets = [0, 0], sizes = [8, 128], strides = [1, 1]} : vector<8x384xf32> to vector<8x128xf32>
    %225 = vector.extract_strided_slice %223 {offsets = [0, 0], sizes = [8, 128], strides = [1, 1]} : vector<8x384xf32> to vector<8x128xf32>
    %226 = arith.addf %224, %225 : vector<8x128xf32>
    %227 = arith.negf %226 : vector<8x128xf32>
    %228 = math.exp %227 : vector<8x128xf32>
    %cst_96 = arith.constant 1.000000e+00 : f32
    %229 = vector.broadcast %cst_96 : f32 to vector<8x128xf32>
    %230 = arith.addf %229, %228 : vector<8x128xf32>
    %231 = arith.divf %229, %230 : vector<8x128xf32>
    %232 = vector.extract_strided_slice %217 {offsets = [0, 128], sizes = [8, 128], strides = [1, 1]} : vector<8x384xf32> to vector<8x128xf32>
    %233 = vector.extract_strided_slice %223 {offsets = [0, 128], sizes = [8, 128], strides = [1, 1]} : vector<8x384xf32> to vector<8x128xf32>
    %234 = arith.addf %232, %233 : vector<8x128xf32>
    %235 = arith.negf %234 : vector<8x128xf32>
    %236 = math.exp %235 : vector<8x128xf32>
    %cst_97 = arith.constant 1.000000e+00 : f32
    %237 = vector.broadcast %cst_97 : f32 to vector<8x128xf32>
    %238 = arith.addf %237, %236 : vector<8x128xf32>
    %239 = arith.divf %237, %238 : vector<8x128xf32>
    %240 = vector.extract_strided_slice %217 {offsets = [0, 256], sizes = [8, 128], strides = [1, 1]} : vector<8x384xf32> to vector<8x128xf32>
    %241 = vector.extract_strided_slice %223 {offsets = [0, 256], sizes = [8, 128], strides = [1, 1]} : vector<8x384xf32> to vector<8x128xf32>
    %242 = arith.mulf %231, %241 : vector<8x128xf32>
    %243 = arith.addf %240, %242 : vector<8x128xf32>
    %244 = math.tanh %243 : vector<8x128xf32>
    %cst_98 = arith.constant 1.000000e+00 : f32
    %245 = vector.broadcast %cst_98 : f32 to vector<8x128xf32>
    %246 = arith.subf %245, %239 : vector<8x128xf32>
    %247 = arith.mulf %246, %244 : vector<8x128xf32>
    %248 = arith.mulf %239, %211 : vector<8x128xf32>
    %249 = arith.addf %247, %248 : vector<8x128xf32>
    %250 = vector.extract_strided_slice %249 {offsets = [0, 0], sizes = [8, 16], strides = [1, 1]} : vector<8x128xf32> to vector<8x16xf32>
    %c5 = arith.constant 5 : index
    %c0_99 = arith.constant 0 : index
    %c0_100 = arith.constant 0 : index
    %251 = vector.load %arg8[%c5, %c0_99, %c0_100] : memref<18x16x5xf32, #tpu.memory_space<vmem>>, vector<1x16x5xf32>
    %252 = vector.shape_cast %251 : vector<1x16x5xf32> to vector<16x5xf32>
    %cst_101 = arith.constant dense<0.000000e+00> : vector<8x5xf32>
    %253 = tpu.matmul %250, %252, %cst_101 {dimension_numbers = #tpu.dot_dimension_numbers<[1], [0], [0], [1], [0, 0, 1, 1], [], []>} : vector<8x16xf32>, vector<16x5xf32>, vector<8x5xf32> -> vector<8x5xf32>
    %254 = arith.addf %216, %253 : vector<8x5xf32>
    %c48 = arith.constant 48 : index
    %c0_102 = arith.constant 0 : index
    %255 = vector.load %arg11[%c48, %c0_102] : memref<144x384xf32, #tpu.memory_space<vmem>>, vector<8x384xf32>
    %256 = vector.extract_strided_slice %249 {offsets = [0, 0], sizes = [8, 16], strides = [1, 1]} : vector<8x128xf32> to vector<8x16xf32>
    %c0_103 = arith.constant 0 : index
    %c0_104 = arith.constant 0 : index
    %257 = vector.load %arg5[%c0_103, %c0_104] : memref<16x384xf32, #tpu.memory_space<vmem>>, vector<16x384xf32>
    %cst_105 = arith.constant dense<0.000000e+00> : vector<8x384xf32>
    %258 = tpu.matmul %256, %257, %cst_105 {dimension_numbers = #tpu.dot_dimension_numbers<[1], [0], [0], [1], [0, 0, 1, 1], [], []>} : vector<8x16xf32>, vector<16x384xf32>, vector<8x384xf32> -> vector<8x384xf32>
    %c0_106 = arith.constant 0 : index
    %c0_107 = arith.constant 0 : index
    %259 = vector.load %arg7[%c0_106, %c0_107] : memref<1x384xf32, #tpu.memory_space<vmem>>, vector<1x384xf32>
    %260 = vector.broadcast %259 : vector<1x384xf32> to vector<8x384xf32>
    %261 = arith.addf %258, %260 : vector<8x384xf32>
    %262 = vector.extract_strided_slice %255 {offsets = [0, 0], sizes = [8, 128], strides = [1, 1]} : vector<8x384xf32> to vector<8x128xf32>
    %263 = vector.extract_strided_slice %261 {offsets = [0, 0], sizes = [8, 128], strides = [1, 1]} : vector<8x384xf32> to vector<8x128xf32>
    %264 = arith.addf %262, %263 : vector<8x128xf32>
    %265 = arith.negf %264 : vector<8x128xf32>
    %266 = math.exp %265 : vector<8x128xf32>
    %cst_108 = arith.constant 1.000000e+00 : f32
    %267 = vector.broadcast %cst_108 : f32 to vector<8x128xf32>
    %268 = arith.addf %267, %266 : vector<8x128xf32>
    %269 = arith.divf %267, %268 : vector<8x128xf32>
    %270 = vector.extract_strided_slice %255 {offsets = [0, 128], sizes = [8, 128], strides = [1, 1]} : vector<8x384xf32> to vector<8x128xf32>
    %271 = vector.extract_strided_slice %261 {offsets = [0, 128], sizes = [8, 128], strides = [1, 1]} : vector<8x384xf32> to vector<8x128xf32>
    %272 = arith.addf %270, %271 : vector<8x128xf32>
    %273 = arith.negf %272 : vector<8x128xf32>
    %274 = math.exp %273 : vector<8x128xf32>
    %cst_109 = arith.constant 1.000000e+00 : f32
    %275 = vector.broadcast %cst_109 : f32 to vector<8x128xf32>
    %276 = arith.addf %275, %274 : vector<8x128xf32>
    %277 = arith.divf %275, %276 : vector<8x128xf32>
    %278 = vector.extract_strided_slice %255 {offsets = [0, 256], sizes = [8, 128], strides = [1, 1]} : vector<8x384xf32> to vector<8x128xf32>
    %279 = vector.extract_strided_slice %261 {offsets = [0, 256], sizes = [8, 128], strides = [1, 1]} : vector<8x384xf32> to vector<8x128xf32>
    %280 = arith.mulf %269, %279 : vector<8x128xf32>
    %281 = arith.addf %278, %280 : vector<8x128xf32>
    %282 = math.tanh %281 : vector<8x128xf32>
    %cst_110 = arith.constant 1.000000e+00 : f32
    %283 = vector.broadcast %cst_110 : f32 to vector<8x128xf32>
    %284 = arith.subf %283, %277 : vector<8x128xf32>
    %285 = arith.mulf %284, %282 : vector<8x128xf32>
    %286 = arith.mulf %277, %249 : vector<8x128xf32>
    %287 = arith.addf %285, %286 : vector<8x128xf32>
    %288 = vector.extract_strided_slice %287 {offsets = [0, 0], sizes = [8, 16], strides = [1, 1]} : vector<8x128xf32> to vector<8x16xf32>
    %c6 = arith.constant 6 : index
    %c0_111 = arith.constant 0 : index
    %c0_112 = arith.constant 0 : index
    %289 = vector.load %arg8[%c6, %c0_111, %c0_112] : memref<18x16x5xf32, #tpu.memory_space<vmem>>, vector<1x16x5xf32>
    %290 = vector.shape_cast %289 : vector<1x16x5xf32> to vector<16x5xf32>
    %cst_113 = arith.constant dense<0.000000e+00> : vector<8x5xf32>
    %291 = tpu.matmul %288, %290, %cst_113 {dimension_numbers = #tpu.dot_dimension_numbers<[1], [0], [0], [1], [0, 0, 1, 1], [], []>} : vector<8x16xf32>, vector<16x5xf32>, vector<8x5xf32> -> vector<8x5xf32>
    %292 = arith.addf %254, %291 : vector<8x5xf32>
    %c56 = arith.constant 56 : index
    %c0_114 = arith.constant 0 : index
    %293 = vector.load %arg11[%c56, %c0_114] : memref<144x384xf32, #tpu.memory_space<vmem>>, vector<8x384xf32>
    %294 = vector.extract_strided_slice %287 {offsets = [0, 0], sizes = [8, 16], strides = [1, 1]} : vector<8x128xf32> to vector<8x16xf32>
    %c0_115 = arith.constant 0 : index
    %c0_116 = arith.constant 0 : index
    %295 = vector.load %arg5[%c0_115, %c0_116] : memref<16x384xf32, #tpu.memory_space<vmem>>, vector<16x384xf32>
    %cst_117 = arith.constant dense<0.000000e+00> : vector<8x384xf32>
    %296 = tpu.matmul %294, %295, %cst_117 {dimension_numbers = #tpu.dot_dimension_numbers<[1], [0], [0], [1], [0, 0, 1, 1], [], []>} : vector<8x16xf32>, vector<16x384xf32>, vector<8x384xf32> -> vector<8x384xf32>
    %c0_118 = arith.constant 0 : index
    %c0_119 = arith.constant 0 : index
    %297 = vector.load %arg7[%c0_118, %c0_119] : memref<1x384xf32, #tpu.memory_space<vmem>>, vector<1x384xf32>
    %298 = vector.broadcast %297 : vector<1x384xf32> to vector<8x384xf32>
    %299 = arith.addf %296, %298 : vector<8x384xf32>
    %300 = vector.extract_strided_slice %293 {offsets = [0, 0], sizes = [8, 128], strides = [1, 1]} : vector<8x384xf32> to vector<8x128xf32>
    %301 = vector.extract_strided_slice %299 {offsets = [0, 0], sizes = [8, 128], strides = [1, 1]} : vector<8x384xf32> to vector<8x128xf32>
    %302 = arith.addf %300, %301 : vector<8x128xf32>
    %303 = arith.negf %302 : vector<8x128xf32>
    %304 = math.exp %303 : vector<8x128xf32>
    %cst_120 = arith.constant 1.000000e+00 : f32
    %305 = vector.broadcast %cst_120 : f32 to vector<8x128xf32>
    %306 = arith.addf %305, %304 : vector<8x128xf32>
    %307 = arith.divf %305, %306 : vector<8x128xf32>
    %308 = vector.extract_strided_slice %293 {offsets = [0, 128], sizes = [8, 128], strides = [1, 1]} : vector<8x384xf32> to vector<8x128xf32>
    %309 = vector.extract_strided_slice %299 {offsets = [0, 128], sizes = [8, 128], strides = [1, 1]} : vector<8x384xf32> to vector<8x128xf32>
    %310 = arith.addf %308, %309 : vector<8x128xf32>
    %311 = arith.negf %310 : vector<8x128xf32>
    %312 = math.exp %311 : vector<8x128xf32>
    %cst_121 = arith.constant 1.000000e+00 : f32
    %313 = vector.broadcast %cst_121 : f32 to vector<8x128xf32>
    %314 = arith.addf %313, %312 : vector<8x128xf32>
    %315 = arith.divf %313, %314 : vector<8x128xf32>
    %316 = vector.extract_strided_slice %293 {offsets = [0, 256], sizes = [8, 128], strides = [1, 1]} : vector<8x384xf32> to vector<8x128xf32>
    %317 = vector.extract_strided_slice %299 {offsets = [0, 256], sizes = [8, 128], strides = [1, 1]} : vector<8x384xf32> to vector<8x128xf32>
    %318 = arith.mulf %307, %317 : vector<8x128xf32>
    %319 = arith.addf %316, %318 : vector<8x128xf32>
    %320 = math.tanh %319 : vector<8x128xf32>
    %cst_122 = arith.constant 1.000000e+00 : f32
    %321 = vector.broadcast %cst_122 : f32 to vector<8x128xf32>
    %322 = arith.subf %321, %315 : vector<8x128xf32>
    %323 = arith.mulf %322, %320 : vector<8x128xf32>
    %324 = arith.mulf %315, %287 : vector<8x128xf32>
    %325 = arith.addf %323, %324 : vector<8x128xf32>
    %326 = vector.extract_strided_slice %325 {offsets = [0, 0], sizes = [8, 16], strides = [1, 1]} : vector<8x128xf32> to vector<8x16xf32>
    %c7 = arith.constant 7 : index
    %c0_123 = arith.constant 0 : index
    %c0_124 = arith.constant 0 : index
    %327 = vector.load %arg8[%c7, %c0_123, %c0_124] : memref<18x16x5xf32, #tpu.memory_space<vmem>>, vector<1x16x5xf32>
    %328 = vector.shape_cast %327 : vector<1x16x5xf32> to vector<16x5xf32>
    %cst_125 = arith.constant dense<0.000000e+00> : vector<8x5xf32>
    %329 = tpu.matmul %326, %328, %cst_125 {dimension_numbers = #tpu.dot_dimension_numbers<[1], [0], [0], [1], [0, 0, 1, 1], [], []>} : vector<8x16xf32>, vector<16x5xf32>, vector<8x5xf32> -> vector<8x5xf32>
    %330 = arith.addf %292, %329 : vector<8x5xf32>
    %c64 = arith.constant 64 : index
    %c0_126 = arith.constant 0 : index
    %331 = vector.load %arg11[%c64, %c0_126] : memref<144x384xf32, #tpu.memory_space<vmem>>, vector<8x384xf32>
    %332 = vector.extract_strided_slice %325 {offsets = [0, 0], sizes = [8, 16], strides = [1, 1]} : vector<8x128xf32> to vector<8x16xf32>
    %c0_127 = arith.constant 0 : index
    %c0_128 = arith.constant 0 : index
    %333 = vector.load %arg5[%c0_127, %c0_128] : memref<16x384xf32, #tpu.memory_space<vmem>>, vector<16x384xf32>
    %cst_129 = arith.constant dense<0.000000e+00> : vector<8x384xf32>
    %334 = tpu.matmul %332, %333, %cst_129 {dimension_numbers = #tpu.dot_dimension_numbers<[1], [0], [0], [1], [0, 0, 1, 1], [], []>} : vector<8x16xf32>, vector<16x384xf32>, vector<8x384xf32> -> vector<8x384xf32>
    %c0_130 = arith.constant 0 : index
    %c0_131 = arith.constant 0 : index
    %335 = vector.load %arg7[%c0_130, %c0_131] : memref<1x384xf32, #tpu.memory_space<vmem>>, vector<1x384xf32>
    %336 = vector.broadcast %335 : vector<1x384xf32> to vector<8x384xf32>
    %337 = arith.addf %334, %336 : vector<8x384xf32>
    %338 = vector.extract_strided_slice %331 {offsets = [0, 0], sizes = [8, 128], strides = [1, 1]} : vector<8x384xf32> to vector<8x128xf32>
    %339 = vector.extract_strided_slice %337 {offsets = [0, 0], sizes = [8, 128], strides = [1, 1]} : vector<8x384xf32> to vector<8x128xf32>
    %340 = arith.addf %338, %339 : vector<8x128xf32>
    %341 = arith.negf %340 : vector<8x128xf32>
    %342 = math.exp %341 : vector<8x128xf32>
    %cst_132 = arith.constant 1.000000e+00 : f32
    %343 = vector.broadcast %cst_132 : f32 to vector<8x128xf32>
    %344 = arith.addf %343, %342 : vector<8x128xf32>
    %345 = arith.divf %343, %344 : vector<8x128xf32>
    %346 = vector.extract_strided_slice %331 {offsets = [0, 128], sizes = [8, 128], strides = [1, 1]} : vector<8x384xf32> to vector<8x128xf32>
    %347 = vector.extract_strided_slice %337 {offsets = [0, 128], sizes = [8, 128], strides = [1, 1]} : vector<8x384xf32> to vector<8x128xf32>
    %348 = arith.addf %346, %347 : vector<8x128xf32>
    %349 = arith.negf %348 : vector<8x128xf32>
    %350 = math.exp %349 : vector<8x128xf32>
    %cst_133 = arith.constant 1.000000e+00 : f32
    %351 = vector.broadcast %cst_133 : f32 to vector<8x128xf32>
    %352 = arith.addf %351, %350 : vector<8x128xf32>
    %353 = arith.divf %351, %352 : vector<8x128xf32>
    %354 = vector.extract_strided_slice %331 {offsets = [0, 256], sizes = [8, 128], strides = [1, 1]} : vector<8x384xf32> to vector<8x128xf32>
    %355 = vector.extract_strided_slice %337 {offsets = [0, 256], sizes = [8, 128], strides = [1, 1]} : vector<8x384xf32> to vector<8x128xf32>
    %356 = arith.mulf %345, %355 : vector<8x128xf32>
    %357 = arith.addf %354, %356 : vector<8x128xf32>
    %358 = math.tanh %357 : vector<8x128xf32>
    %cst_134 = arith.constant 1.000000e+00 : f32
    %359 = vector.broadcast %cst_134 : f32 to vector<8x128xf32>
    %360 = arith.subf %359, %353 : vector<8x128xf32>
    %361 = arith.mulf %360, %358 : vector<8x128xf32>
    %362 = arith.mulf %353, %325 : vector<8x128xf32>
    %363 = arith.addf %361, %362 : vector<8x128xf32>
    %364 = vector.extract_strided_slice %363 {offsets = [0, 0], sizes = [8, 16], strides = [1, 1]} : vector<8x128xf32> to vector<8x16xf32>
    %c8_135 = arith.constant 8 : index
    %c0_136 = arith.constant 0 : index
    %c0_137 = arith.constant 0 : index
    %365 = vector.load %arg8[%c8_135, %c0_136, %c0_137] : memref<18x16x5xf32, #tpu.memory_space<vmem>>, vector<1x16x5xf32>
    %366 = vector.shape_cast %365 : vector<1x16x5xf32> to vector<16x5xf32>
    %cst_138 = arith.constant dense<0.000000e+00> : vector<8x5xf32>
    %367 = tpu.matmul %364, %366, %cst_138 {dimension_numbers = #tpu.dot_dimension_numbers<[1], [0], [0], [1], [0, 0, 1, 1], [], []>} : vector<8x16xf32>, vector<16x5xf32>, vector<8x5xf32> -> vector<8x5xf32>
    %368 = arith.addf %330, %367 : vector<8x5xf32>
    %c72 = arith.constant 72 : index
    %c0_139 = arith.constant 0 : index
    %369 = vector.load %arg11[%c72, %c0_139] : memref<144x384xf32, #tpu.memory_space<vmem>>, vector<8x384xf32>
    %370 = vector.extract_strided_slice %363 {offsets = [0, 0], sizes = [8, 16], strides = [1, 1]} : vector<8x128xf32> to vector<8x16xf32>
    %c0_140 = arith.constant 0 : index
    %c0_141 = arith.constant 0 : index
    %371 = vector.load %arg5[%c0_140, %c0_141] : memref<16x384xf32, #tpu.memory_space<vmem>>, vector<16x384xf32>
    %cst_142 = arith.constant dense<0.000000e+00> : vector<8x384xf32>
    %372 = tpu.matmul %370, %371, %cst_142 {dimension_numbers = #tpu.dot_dimension_numbers<[1], [0], [0], [1], [0, 0, 1, 1], [], []>} : vector<8x16xf32>, vector<16x384xf32>, vector<8x384xf32> -> vector<8x384xf32>
    %c0_143 = arith.constant 0 : index
    %c0_144 = arith.constant 0 : index
    %373 = vector.load %arg7[%c0_143, %c0_144] : memref<1x384xf32, #tpu.memory_space<vmem>>, vector<1x384xf32>
    %374 = vector.broadcast %373 : vector<1x384xf32> to vector<8x384xf32>
    %375 = arith.addf %372, %374 : vector<8x384xf32>
    %376 = vector.extract_strided_slice %369 {offsets = [0, 0], sizes = [8, 128], strides = [1, 1]} : vector<8x384xf32> to vector<8x128xf32>
    %377 = vector.extract_strided_slice %375 {offsets = [0, 0], sizes = [8, 128], strides = [1, 1]} : vector<8x384xf32> to vector<8x128xf32>
    %378 = arith.addf %376, %377 : vector<8x128xf32>
    %379 = arith.negf %378 : vector<8x128xf32>
    %380 = math.exp %379 : vector<8x128xf32>
    %cst_145 = arith.constant 1.000000e+00 : f32
    %381 = vector.broadcast %cst_145 : f32 to vector<8x128xf32>
    %382 = arith.addf %381, %380 : vector<8x128xf32>
    %383 = arith.divf %381, %382 : vector<8x128xf32>
    %384 = vector.extract_strided_slice %369 {offsets = [0, 128], sizes = [8, 128], strides = [1, 1]} : vector<8x384xf32> to vector<8x128xf32>
    %385 = vector.extract_strided_slice %375 {offsets = [0, 128], sizes = [8, 128], strides = [1, 1]} : vector<8x384xf32> to vector<8x128xf32>
    %386 = arith.addf %384, %385 : vector<8x128xf32>
    %387 = arith.negf %386 : vector<8x128xf32>
    %388 = math.exp %387 : vector<8x128xf32>
    %cst_146 = arith.constant 1.000000e+00 : f32
    %389 = vector.broadcast %cst_146 : f32 to vector<8x128xf32>
    %390 = arith.addf %389, %388 : vector<8x128xf32>
    %391 = arith.divf %389, %390 : vector<8x128xf32>
    %392 = vector.extract_strided_slice %369 {offsets = [0, 256], sizes = [8, 128], strides = [1, 1]} : vector<8x384xf32> to vector<8x128xf32>
    %393 = vector.extract_strided_slice %375 {offsets = [0, 256], sizes = [8, 128], strides = [1, 1]} : vector<8x384xf32> to vector<8x128xf32>
    %394 = arith.mulf %383, %393 : vector<8x128xf32>
    %395 = arith.addf %392, %394 : vector<8x128xf32>
    %396 = math.tanh %395 : vector<8x128xf32>
    %cst_147 = arith.constant 1.000000e+00 : f32
    %397 = vector.broadcast %cst_147 : f32 to vector<8x128xf32>
    %398 = arith.subf %397, %391 : vector<8x128xf32>
    %399 = arith.mulf %398, %396 : vector<8x128xf32>
    %400 = arith.mulf %391, %363 : vector<8x128xf32>
    %401 = arith.addf %399, %400 : vector<8x128xf32>
    %402 = vector.extract_strided_slice %401 {offsets = [0, 0], sizes = [8, 16], strides = [1, 1]} : vector<8x128xf32> to vector<8x16xf32>
    %c9 = arith.constant 9 : index
    %c0_148 = arith.constant 0 : index
    %c0_149 = arith.constant 0 : index
    %403 = vector.load %arg8[%c9, %c0_148, %c0_149] : memref<18x16x5xf32, #tpu.memory_space<vmem>>, vector<1x16x5xf32>
    %404 = vector.shape_cast %403 : vector<1x16x5xf32> to vector<16x5xf32>
    %cst_150 = arith.constant dense<0.000000e+00> : vector<8x5xf32>
    %405 = tpu.matmul %402, %404, %cst_150 {dimension_numbers = #tpu.dot_dimension_numbers<[1], [0], [0], [1], [0, 0, 1, 1], [], []>} : vector<8x16xf32>, vector<16x5xf32>, vector<8x5xf32> -> vector<8x5xf32>
    %406 = arith.addf %368, %405 : vector<8x5xf32>
    %c80 = arith.constant 80 : index
    %c0_151 = arith.constant 0 : index
    %407 = vector.load %arg11[%c80, %c0_151] : memref<144x384xf32, #tpu.memory_space<vmem>>, vector<8x384xf32>
    %408 = vector.extract_strided_slice %401 {offsets = [0, 0], sizes = [8, 16], strides = [1, 1]} : vector<8x128xf32> to vector<8x16xf32>
    %c0_152 = arith.constant 0 : index
    %c0_153 = arith.constant 0 : index
    %409 = vector.load %arg5[%c0_152, %c0_153] : memref<16x384xf32, #tpu.memory_space<vmem>>, vector<16x384xf32>
    %cst_154 = arith.constant dense<0.000000e+00> : vector<8x384xf32>
    %410 = tpu.matmul %408, %409, %cst_154 {dimension_numbers = #tpu.dot_dimension_numbers<[1], [0], [0], [1], [0, 0, 1, 1], [], []>} : vector<8x16xf32>, vector<16x384xf32>, vector<8x384xf32> -> vector<8x384xf32>
    %c0_155 = arith.constant 0 : index
    %c0_156 = arith.constant 0 : index
    %411 = vector.load %arg7[%c0_155, %c0_156] : memref<1x384xf32, #tpu.memory_space<vmem>>, vector<1x384xf32>
    %412 = vector.broadcast %411 : vector<1x384xf32> to vector<8x384xf32>
    %413 = arith.addf %410, %412 : vector<8x384xf32>
    %414 = vector.extract_strided_slice %407 {offsets = [0, 0], sizes = [8, 128], strides = [1, 1]} : vector<8x384xf32> to vector<8x128xf32>
    %415 = vector.extract_strided_slice %413 {offsets = [0, 0], sizes = [8, 128], strides = [1, 1]} : vector<8x384xf32> to vector<8x128xf32>
    %416 = arith.addf %414, %415 : vector<8x128xf32>
    %417 = arith.negf %416 : vector<8x128xf32>
    %418 = math.exp %417 : vector<8x128xf32>
    %cst_157 = arith.constant 1.000000e+00 : f32
    %419 = vector.broadcast %cst_157 : f32 to vector<8x128xf32>
    %420 = arith.addf %419, %418 : vector<8x128xf32>
    %421 = arith.divf %419, %420 : vector<8x128xf32>
    %422 = vector.extract_strided_slice %407 {offsets = [0, 128], sizes = [8, 128], strides = [1, 1]} : vector<8x384xf32> to vector<8x128xf32>
    %423 = vector.extract_strided_slice %413 {offsets = [0, 128], sizes = [8, 128], strides = [1, 1]} : vector<8x384xf32> to vector<8x128xf32>
    %424 = arith.addf %422, %423 : vector<8x128xf32>
    %425 = arith.negf %424 : vector<8x128xf32>
    %426 = math.exp %425 : vector<8x128xf32>
    %cst_158 = arith.constant 1.000000e+00 : f32
    %427 = vector.broadcast %cst_158 : f32 to vector<8x128xf32>
    %428 = arith.addf %427, %426 : vector<8x128xf32>
    %429 = arith.divf %427, %428 : vector<8x128xf32>
    %430 = vector.extract_strided_slice %407 {offsets = [0, 256], sizes = [8, 128], strides = [1, 1]} : vector<8x384xf32> to vector<8x128xf32>
    %431 = vector.extract_strided_slice %413 {offsets = [0, 256], sizes = [8, 128], strides = [1, 1]} : vector<8x384xf32> to vector<8x128xf32>
    %432 = arith.mulf %421, %431 : vector<8x128xf32>
    %433 = arith.addf %430, %432 : vector<8x128xf32>
    %434 = math.tanh %433 : vector<8x128xf32>
    %cst_159 = arith.constant 1.000000e+00 : f32
    %435 = vector.broadcast %cst_159 : f32 to vector<8x128xf32>
    %436 = arith.subf %435, %429 : vector<8x128xf32>
    %437 = arith.mulf %436, %434 : vector<8x128xf32>
    %438 = arith.mulf %429, %401 : vector<8x128xf32>
    %439 = arith.addf %437, %438 : vector<8x128xf32>
    %440 = vector.extract_strided_slice %439 {offsets = [0, 0], sizes = [8, 16], strides = [1, 1]} : vector<8x128xf32> to vector<8x16xf32>
    %c10 = arith.constant 10 : index
    %c0_160 = arith.constant 0 : index
    %c0_161 = arith.constant 0 : index
    %441 = vector.load %arg8[%c10, %c0_160, %c0_161] : memref<18x16x5xf32, #tpu.memory_space<vmem>>, vector<1x16x5xf32>
    %442 = vector.shape_cast %441 : vector<1x16x5xf32> to vector<16x5xf32>
    %cst_162 = arith.constant dense<0.000000e+00> : vector<8x5xf32>
    %443 = tpu.matmul %440, %442, %cst_162 {dimension_numbers = #tpu.dot_dimension_numbers<[1], [0], [0], [1], [0, 0, 1, 1], [], []>} : vector<8x16xf32>, vector<16x5xf32>, vector<8x5xf32> -> vector<8x5xf32>
    %444 = arith.addf %406, %443 : vector<8x5xf32>
    %c88 = arith.constant 88 : index
    %c0_163 = arith.constant 0 : index
    %445 = vector.load %arg11[%c88, %c0_163] : memref<144x384xf32, #tpu.memory_space<vmem>>, vector<8x384xf32>
    %446 = vector.extract_strided_slice %439 {offsets = [0, 0], sizes = [8, 16], strides = [1, 1]} : vector<8x128xf32> to vector<8x16xf32>
    %c0_164 = arith.constant 0 : index
    %c0_165 = arith.constant 0 : index
    %447 = vector.load %arg5[%c0_164, %c0_165] : memref<16x384xf32, #tpu.memory_space<vmem>>, vector<16x384xf32>
    %cst_166 = arith.constant dense<0.000000e+00> : vector<8x384xf32>
    %448 = tpu.matmul %446, %447, %cst_166 {dimension_numbers = #tpu.dot_dimension_numbers<[1], [0], [0], [1], [0, 0, 1, 1], [], []>} : vector<8x16xf32>, vector<16x384xf32>, vector<8x384xf32> -> vector<8x384xf32>
    %c0_167 = arith.constant 0 : index
    %c0_168 = arith.constant 0 : index
    %449 = vector.load %arg7[%c0_167, %c0_168] : memref<1x384xf32, #tpu.memory_space<vmem>>, vector<1x384xf32>
    %450 = vector.broadcast %449 : vector<1x384xf32> to vector<8x384xf32>
    %451 = arith.addf %448, %450 : vector<8x384xf32>
    %452 = vector.extract_strided_slice %445 {offsets = [0, 0], sizes = [8, 128], strides = [1, 1]} : vector<8x384xf32> to vector<8x128xf32>
    %453 = vector.extract_strided_slice %451 {offsets = [0, 0], sizes = [8, 128], strides = [1, 1]} : vector<8x384xf32> to vector<8x128xf32>
    %454 = arith.addf %452, %453 : vector<8x128xf32>
    %455 = arith.negf %454 : vector<8x128xf32>
    %456 = math.exp %455 : vector<8x128xf32>
    %cst_169 = arith.constant 1.000000e+00 : f32
    %457 = vector.broadcast %cst_169 : f32 to vector<8x128xf32>
    %458 = arith.addf %457, %456 : vector<8x128xf32>
    %459 = arith.divf %457, %458 : vector<8x128xf32>
    %460 = vector.extract_strided_slice %445 {offsets = [0, 128], sizes = [8, 128], strides = [1, 1]} : vector<8x384xf32> to vector<8x128xf32>
    %461 = vector.extract_strided_slice %451 {offsets = [0, 128], sizes = [8, 128], strides = [1, 1]} : vector<8x384xf32> to vector<8x128xf32>
    %462 = arith.addf %460, %461 : vector<8x128xf32>
    %463 = arith.negf %462 : vector<8x128xf32>
    %464 = math.exp %463 : vector<8x128xf32>
    %cst_170 = arith.constant 1.000000e+00 : f32
    %465 = vector.broadcast %cst_170 : f32 to vector<8x128xf32>
    %466 = arith.addf %465, %464 : vector<8x128xf32>
    %467 = arith.divf %465, %466 : vector<8x128xf32>
    %468 = vector.extract_strided_slice %445 {offsets = [0, 256], sizes = [8, 128], strides = [1, 1]} : vector<8x384xf32> to vector<8x128xf32>
    %469 = vector.extract_strided_slice %451 {offsets = [0, 256], sizes = [8, 128], strides = [1, 1]} : vector<8x384xf32> to vector<8x128xf32>
    %470 = arith.mulf %459, %469 : vector<8x128xf32>
    %471 = arith.addf %468, %470 : vector<8x128xf32>
    %472 = math.tanh %471 : vector<8x128xf32>
    %cst_171 = arith.constant 1.000000e+00 : f32
    %473 = vector.broadcast %cst_171 : f32 to vector<8x128xf32>
    %474 = arith.subf %473, %467 : vector<8x128xf32>
    %475 = arith.mulf %474, %472 : vector<8x128xf32>
    %476 = arith.mulf %467, %439 : vector<8x128xf32>
    %477 = arith.addf %475, %476 : vector<8x128xf32>
    %478 = vector.extract_strided_slice %477 {offsets = [0, 0], sizes = [8, 16], strides = [1, 1]} : vector<8x128xf32> to vector<8x16xf32>
    %c11 = arith.constant 11 : index
    %c0_172 = arith.constant 0 : index
    %c0_173 = arith.constant 0 : index
    %479 = vector.load %arg8[%c11, %c0_172, %c0_173] : memref<18x16x5xf32, #tpu.memory_space<vmem>>, vector<1x16x5xf32>
    %480 = vector.shape_cast %479 : vector<1x16x5xf32> to vector<16x5xf32>
    %cst_174 = arith.constant dense<0.000000e+00> : vector<8x5xf32>
    %481 = tpu.matmul %478, %480, %cst_174 {dimension_numbers = #tpu.dot_dimension_numbers<[1], [0], [0], [1], [0, 0, 1, 1], [], []>} : vector<8x16xf32>, vector<16x5xf32>, vector<8x5xf32> -> vector<8x5xf32>
    %482 = arith.addf %444, %481 : vector<8x5xf32>
    %c96 = arith.constant 96 : index
    %c0_175 = arith.constant 0 : index
    %483 = vector.load %arg11[%c96, %c0_175] : memref<144x384xf32, #tpu.memory_space<vmem>>, vector<8x384xf32>
    %484 = vector.extract_strided_slice %477 {offsets = [0, 0], sizes = [8, 16], strides = [1, 1]} : vector<8x128xf32> to vector<8x16xf32>
    %c0_176 = arith.constant 0 : index
    %c0_177 = arith.constant 0 : index
    %485 = vector.load %arg5[%c0_176, %c0_177] : memref<16x384xf32, #tpu.memory_space<vmem>>, vector<16x384xf32>
    %cst_178 = arith.constant dense<0.000000e+00> : vector<8x384xf32>
    %486 = tpu.matmul %484, %485, %cst_178 {dimension_numbers = #tpu.dot_dimension_numbers<[1], [0], [0], [1], [0, 0, 1, 1], [], []>} : vector<8x16xf32>, vector<16x384xf32>, vector<8x384xf32> -> vector<8x384xf32>
    %c0_179 = arith.constant 0 : index
    %c0_180 = arith.constant 0 : index
    %487 = vector.load %arg7[%c0_179, %c0_180] : memref<1x384xf32, #tpu.memory_space<vmem>>, vector<1x384xf32>
    %488 = vector.broadcast %487 : vector<1x384xf32> to vector<8x384xf32>
    %489 = arith.addf %486, %488 : vector<8x384xf32>
    %490 = vector.extract_strided_slice %483 {offsets = [0, 0], sizes = [8, 128], strides = [1, 1]} : vector<8x384xf32> to vector<8x128xf32>
    %491 = vector.extract_strided_slice %489 {offsets = [0, 0], sizes = [8, 128], strides = [1, 1]} : vector<8x384xf32> to vector<8x128xf32>
    %492 = arith.addf %490, %491 : vector<8x128xf32>
    %493 = arith.negf %492 : vector<8x128xf32>
    %494 = math.exp %493 : vector<8x128xf32>
    %cst_181 = arith.constant 1.000000e+00 : f32
    %495 = vector.broadcast %cst_181 : f32 to vector<8x128xf32>
    %496 = arith.addf %495, %494 : vector<8x128xf32>
    %497 = arith.divf %495, %496 : vector<8x128xf32>
    %498 = vector.extract_strided_slice %483 {offsets = [0, 128], sizes = [8, 128], strides = [1, 1]} : vector<8x384xf32> to vector<8x128xf32>
    %499 = vector.extract_strided_slice %489 {offsets = [0, 128], sizes = [8, 128], strides = [1, 1]} : vector<8x384xf32> to vector<8x128xf32>
    %500 = arith.addf %498, %499 : vector<8x128xf32>
    %501 = arith.negf %500 : vector<8x128xf32>
    %502 = math.exp %501 : vector<8x128xf32>
    %cst_182 = arith.constant 1.000000e+00 : f32
    %503 = vector.broadcast %cst_182 : f32 to vector<8x128xf32>
    %504 = arith.addf %503, %502 : vector<8x128xf32>
    %505 = arith.divf %503, %504 : vector<8x128xf32>
    %506 = vector.extract_strided_slice %483 {offsets = [0, 256], sizes = [8, 128], strides = [1, 1]} : vector<8x384xf32> to vector<8x128xf32>
    %507 = vector.extract_strided_slice %489 {offsets = [0, 256], sizes = [8, 128], strides = [1, 1]} : vector<8x384xf32> to vector<8x128xf32>
    %508 = arith.mulf %497, %507 : vector<8x128xf32>
    %509 = arith.addf %506, %508 : vector<8x128xf32>
    %510 = math.tanh %509 : vector<8x128xf32>
    %cst_183 = arith.constant 1.000000e+00 : f32
    %511 = vector.broadcast %cst_183 : f32 to vector<8x128xf32>
    %512 = arith.subf %511, %505 : vector<8x128xf32>
    %513 = arith.mulf %512, %510 : vector<8x128xf32>
    %514 = arith.mulf %505, %477 : vector<8x128xf32>
    %515 = arith.addf %513, %514 : vector<8x128xf32>
    %516 = vector.extract_strided_slice %515 {offsets = [0, 0], sizes = [8, 16], strides = [1, 1]} : vector<8x128xf32> to vector<8x16xf32>
    %c12 = arith.constant 12 : index
    %c0_184 = arith.constant 0 : index
    %c0_185 = arith.constant 0 : index
    %517 = vector.load %arg8[%c12, %c0_184, %c0_185] : memref<18x16x5xf32, #tpu.memory_space<vmem>>, vector<1x16x5xf32>
    %518 = vector.shape_cast %517 : vector<1x16x5xf32> to vector<16x5xf32>
    %cst_186 = arith.constant dense<0.000000e+00> : vector<8x5xf32>
    %519 = tpu.matmul %516, %518, %cst_186 {dimension_numbers = #tpu.dot_dimension_numbers<[1], [0], [0], [1], [0, 0, 1, 1], [], []>} : vector<8x16xf32>, vector<16x5xf32>, vector<8x5xf32> -> vector<8x5xf32>
    %520 = arith.addf %482, %519 : vector<8x5xf32>
    %c104 = arith.constant 104 : index
    %c0_187 = arith.constant 0 : index
    %521 = vector.load %arg11[%c104, %c0_187] : memref<144x384xf32, #tpu.memory_space<vmem>>, vector<8x384xf32>
    %522 = vector.extract_strided_slice %515 {offsets = [0, 0], sizes = [8, 16], strides = [1, 1]} : vector<8x128xf32> to vector<8x16xf32>
    %c0_188 = arith.constant 0 : index
    %c0_189 = arith.constant 0 : index
    %523 = vector.load %arg5[%c0_188, %c0_189] : memref<16x384xf32, #tpu.memory_space<vmem>>, vector<16x384xf32>
    %cst_190 = arith.constant dense<0.000000e+00> : vector<8x384xf32>
    %524 = tpu.matmul %522, %523, %cst_190 {dimension_numbers = #tpu.dot_dimension_numbers<[1], [0], [0], [1], [0, 0, 1, 1], [], []>} : vector<8x16xf32>, vector<16x384xf32>, vector<8x384xf32> -> vector<8x384xf32>
    %c0_191 = arith.constant 0 : index
    %c0_192 = arith.constant 0 : index
    %525 = vector.load %arg7[%c0_191, %c0_192] : memref<1x384xf32, #tpu.memory_space<vmem>>, vector<1x384xf32>
    %526 = vector.broadcast %525 : vector<1x384xf32> to vector<8x384xf32>
    %527 = arith.addf %524, %526 : vector<8x384xf32>
    %528 = vector.extract_strided_slice %521 {offsets = [0, 0], sizes = [8, 128], strides = [1, 1]} : vector<8x384xf32> to vector<8x128xf32>
    %529 = vector.extract_strided_slice %527 {offsets = [0, 0], sizes = [8, 128], strides = [1, 1]} : vector<8x384xf32> to vector<8x128xf32>
    %530 = arith.addf %528, %529 : vector<8x128xf32>
    %531 = arith.negf %530 : vector<8x128xf32>
    %532 = math.exp %531 : vector<8x128xf32>
    %cst_193 = arith.constant 1.000000e+00 : f32
    %533 = vector.broadcast %cst_193 : f32 to vector<8x128xf32>
    %534 = arith.addf %533, %532 : vector<8x128xf32>
    %535 = arith.divf %533, %534 : vector<8x128xf32>
    %536 = vector.extract_strided_slice %521 {offsets = [0, 128], sizes = [8, 128], strides = [1, 1]} : vector<8x384xf32> to vector<8x128xf32>
    %537 = vector.extract_strided_slice %527 {offsets = [0, 128], sizes = [8, 128], strides = [1, 1]} : vector<8x384xf32> to vector<8x128xf32>
    %538 = arith.addf %536, %537 : vector<8x128xf32>
    %539 = arith.negf %538 : vector<8x128xf32>
    %540 = math.exp %539 : vector<8x128xf32>
    %cst_194 = arith.constant 1.000000e+00 : f32
    %541 = vector.broadcast %cst_194 : f32 to vector<8x128xf32>
    %542 = arith.addf %541, %540 : vector<8x128xf32>
    %543 = arith.divf %541, %542 : vector<8x128xf32>
    %544 = vector.extract_strided_slice %521 {offsets = [0, 256], sizes = [8, 128], strides = [1, 1]} : vector<8x384xf32> to vector<8x128xf32>
    %545 = vector.extract_strided_slice %527 {offsets = [0, 256], sizes = [8, 128], strides = [1, 1]} : vector<8x384xf32> to vector<8x128xf32>
    %546 = arith.mulf %535, %545 : vector<8x128xf32>
    %547 = arith.addf %544, %546 : vector<8x128xf32>
    %548 = math.tanh %547 : vector<8x128xf32>
    %cst_195 = arith.constant 1.000000e+00 : f32
    %549 = vector.broadcast %cst_195 : f32 to vector<8x128xf32>
    %550 = arith.subf %549, %543 : vector<8x128xf32>
    %551 = arith.mulf %550, %548 : vector<8x128xf32>
    %552 = arith.mulf %543, %515 : vector<8x128xf32>
    %553 = arith.addf %551, %552 : vector<8x128xf32>
    %554 = vector.extract_strided_slice %553 {offsets = [0, 0], sizes = [8, 16], strides = [1, 1]} : vector<8x128xf32> to vector<8x16xf32>
    %c13 = arith.constant 13 : index
    %c0_196 = arith.constant 0 : index
    %c0_197 = arith.constant 0 : index
    %555 = vector.load %arg8[%c13, %c0_196, %c0_197] : memref<18x16x5xf32, #tpu.memory_space<vmem>>, vector<1x16x5xf32>
    %556 = vector.shape_cast %555 : vector<1x16x5xf32> to vector<16x5xf32>
    %cst_198 = arith.constant dense<0.000000e+00> : vector<8x5xf32>
    %557 = tpu.matmul %554, %556, %cst_198 {dimension_numbers = #tpu.dot_dimension_numbers<[1], [0], [0], [1], [0, 0, 1, 1], [], []>} : vector<8x16xf32>, vector<16x5xf32>, vector<8x5xf32> -> vector<8x5xf32>
    %558 = arith.addf %520, %557 : vector<8x5xf32>
    %c112 = arith.constant 112 : index
    %c0_199 = arith.constant 0 : index
    %559 = vector.load %arg11[%c112, %c0_199] : memref<144x384xf32, #tpu.memory_space<vmem>>, vector<8x384xf32>
    %560 = vector.extract_strided_slice %553 {offsets = [0, 0], sizes = [8, 16], strides = [1, 1]} : vector<8x128xf32> to vector<8x16xf32>
    %c0_200 = arith.constant 0 : index
    %c0_201 = arith.constant 0 : index
    %561 = vector.load %arg5[%c0_200, %c0_201] : memref<16x384xf32, #tpu.memory_space<vmem>>, vector<16x384xf32>
    %cst_202 = arith.constant dense<0.000000e+00> : vector<8x384xf32>
    %562 = tpu.matmul %560, %561, %cst_202 {dimension_numbers = #tpu.dot_dimension_numbers<[1], [0], [0], [1], [0, 0, 1, 1], [], []>} : vector<8x16xf32>, vector<16x384xf32>, vector<8x384xf32> -> vector<8x384xf32>
    %c0_203 = arith.constant 0 : index
    %c0_204 = arith.constant 0 : index
    %563 = vector.load %arg7[%c0_203, %c0_204] : memref<1x384xf32, #tpu.memory_space<vmem>>, vector<1x384xf32>
    %564 = vector.broadcast %563 : vector<1x384xf32> to vector<8x384xf32>
    %565 = arith.addf %562, %564 : vector<8x384xf32>
    %566 = vector.extract_strided_slice %559 {offsets = [0, 0], sizes = [8, 128], strides = [1, 1]} : vector<8x384xf32> to vector<8x128xf32>
    %567 = vector.extract_strided_slice %565 {offsets = [0, 0], sizes = [8, 128], strides = [1, 1]} : vector<8x384xf32> to vector<8x128xf32>
    %568 = arith.addf %566, %567 : vector<8x128xf32>
    %569 = arith.negf %568 : vector<8x128xf32>
    %570 = math.exp %569 : vector<8x128xf32>
    %cst_205 = arith.constant 1.000000e+00 : f32
    %571 = vector.broadcast %cst_205 : f32 to vector<8x128xf32>
    %572 = arith.addf %571, %570 : vector<8x128xf32>
    %573 = arith.divf %571, %572 : vector<8x128xf32>
    %574 = vector.extract_strided_slice %559 {offsets = [0, 128], sizes = [8, 128], strides = [1, 1]} : vector<8x384xf32> to vector<8x128xf32>
    %575 = vector.extract_strided_slice %565 {offsets = [0, 128], sizes = [8, 128], strides = [1, 1]} : vector<8x384xf32> to vector<8x128xf32>
    %576 = arith.addf %574, %575 : vector<8x128xf32>
    %577 = arith.negf %576 : vector<8x128xf32>
    %578 = math.exp %577 : vector<8x128xf32>
    %cst_206 = arith.constant 1.000000e+00 : f32
    %579 = vector.broadcast %cst_206 : f32 to vector<8x128xf32>
    %580 = arith.addf %579, %578 : vector<8x128xf32>
    %581 = arith.divf %579, %580 : vector<8x128xf32>
    %582 = vector.extract_strided_slice %559 {offsets = [0, 256], sizes = [8, 128], strides = [1, 1]} : vector<8x384xf32> to vector<8x128xf32>
    %583 = vector.extract_strided_slice %565 {offsets = [0, 256], sizes = [8, 128], strides = [1, 1]} : vector<8x384xf32> to vector<8x128xf32>
    %584 = arith.mulf %573, %583 : vector<8x128xf32>
    %585 = arith.addf %582, %584 : vector<8x128xf32>
    %586 = math.tanh %585 : vector<8x128xf32>
    %cst_207 = arith.constant 1.000000e+00 : f32
    %587 = vector.broadcast %cst_207 : f32 to vector<8x128xf32>
    %588 = arith.subf %587, %581 : vector<8x128xf32>
    %589 = arith.mulf %588, %586 : vector<8x128xf32>
    %590 = arith.mulf %581, %553 : vector<8x128xf32>
    %591 = arith.addf %589, %590 : vector<8x128xf32>
    %592 = vector.extract_strided_slice %591 {offsets = [0, 0], sizes = [8, 16], strides = [1, 1]} : vector<8x128xf32> to vector<8x16xf32>
    %c14 = arith.constant 14 : index
    %c0_208 = arith.constant 0 : index
    %c0_209 = arith.constant 0 : index
    %593 = vector.load %arg8[%c14, %c0_208, %c0_209] : memref<18x16x5xf32, #tpu.memory_space<vmem>>, vector<1x16x5xf32>
    %594 = vector.shape_cast %593 : vector<1x16x5xf32> to vector<16x5xf32>
    %cst_210 = arith.constant dense<0.000000e+00> : vector<8x5xf32>
    %595 = tpu.matmul %592, %594, %cst_210 {dimension_numbers = #tpu.dot_dimension_numbers<[1], [0], [0], [1], [0, 0, 1, 1], [], []>} : vector<8x16xf32>, vector<16x5xf32>, vector<8x5xf32> -> vector<8x5xf32>
    %596 = arith.addf %558, %595 : vector<8x5xf32>
    %c120 = arith.constant 120 : index
    %c0_211 = arith.constant 0 : index
    %597 = vector.load %arg11[%c120, %c0_211] : memref<144x384xf32, #tpu.memory_space<vmem>>, vector<8x384xf32>
    %598 = vector.extract_strided_slice %591 {offsets = [0, 0], sizes = [8, 16], strides = [1, 1]} : vector<8x128xf32> to vector<8x16xf32>
    %c0_212 = arith.constant 0 : index
    %c0_213 = arith.constant 0 : index
    %599 = vector.load %arg5[%c0_212, %c0_213] : memref<16x384xf32, #tpu.memory_space<vmem>>, vector<16x384xf32>
    %cst_214 = arith.constant dense<0.000000e+00> : vector<8x384xf32>
    %600 = tpu.matmul %598, %599, %cst_214 {dimension_numbers = #tpu.dot_dimension_numbers<[1], [0], [0], [1], [0, 0, 1, 1], [], []>} : vector<8x16xf32>, vector<16x384xf32>, vector<8x384xf32> -> vector<8x384xf32>
    %c0_215 = arith.constant 0 : index
    %c0_216 = arith.constant 0 : index
    %601 = vector.load %arg7[%c0_215, %c0_216] : memref<1x384xf32, #tpu.memory_space<vmem>>, vector<1x384xf32>
    %602 = vector.broadcast %601 : vector<1x384xf32> to vector<8x384xf32>
    %603 = arith.addf %600, %602 : vector<8x384xf32>
    %604 = vector.extract_strided_slice %597 {offsets = [0, 0], sizes = [8, 128], strides = [1, 1]} : vector<8x384xf32> to vector<8x128xf32>
    %605 = vector.extract_strided_slice %603 {offsets = [0, 0], sizes = [8, 128], strides = [1, 1]} : vector<8x384xf32> to vector<8x128xf32>
    %606 = arith.addf %604, %605 : vector<8x128xf32>
    %607 = arith.negf %606 : vector<8x128xf32>
    %608 = math.exp %607 : vector<8x128xf32>
    %cst_217 = arith.constant 1.000000e+00 : f32
    %609 = vector.broadcast %cst_217 : f32 to vector<8x128xf32>
    %610 = arith.addf %609, %608 : vector<8x128xf32>
    %611 = arith.divf %609, %610 : vector<8x128xf32>
    %612 = vector.extract_strided_slice %597 {offsets = [0, 128], sizes = [8, 128], strides = [1, 1]} : vector<8x384xf32> to vector<8x128xf32>
    %613 = vector.extract_strided_slice %603 {offsets = [0, 128], sizes = [8, 128], strides = [1, 1]} : vector<8x384xf32> to vector<8x128xf32>
    %614 = arith.addf %612, %613 : vector<8x128xf32>
    %615 = arith.negf %614 : vector<8x128xf32>
    %616 = math.exp %615 : vector<8x128xf32>
    %cst_218 = arith.constant 1.000000e+00 : f32
    %617 = vector.broadcast %cst_218 : f32 to vector<8x128xf32>
    %618 = arith.addf %617, %616 : vector<8x128xf32>
    %619 = arith.divf %617, %618 : vector<8x128xf32>
    %620 = vector.extract_strided_slice %597 {offsets = [0, 256], sizes = [8, 128], strides = [1, 1]} : vector<8x384xf32> to vector<8x128xf32>
    %621 = vector.extract_strided_slice %603 {offsets = [0, 256], sizes = [8, 128], strides = [1, 1]} : vector<8x384xf32> to vector<8x128xf32>
    %622 = arith.mulf %611, %621 : vector<8x128xf32>
    %623 = arith.addf %620, %622 : vector<8x128xf32>
    %624 = math.tanh %623 : vector<8x128xf32>
    %cst_219 = arith.constant 1.000000e+00 : f32
    %625 = vector.broadcast %cst_219 : f32 to vector<8x128xf32>
    %626 = arith.subf %625, %619 : vector<8x128xf32>
    %627 = arith.mulf %626, %624 : vector<8x128xf32>
    %628 = arith.mulf %619, %591 : vector<8x128xf32>
    %629 = arith.addf %627, %628 : vector<8x128xf32>
    %630 = vector.extract_strided_slice %629 {offsets = [0, 0], sizes = [8, 16], strides = [1, 1]} : vector<8x128xf32> to vector<8x16xf32>
    %c15 = arith.constant 15 : index
    %c0_220 = arith.constant 0 : index
    %c0_221 = arith.constant 0 : index
    %631 = vector.load %arg8[%c15, %c0_220, %c0_221] : memref<18x16x5xf32, #tpu.memory_space<vmem>>, vector<1x16x5xf32>
    %632 = vector.shape_cast %631 : vector<1x16x5xf32> to vector<16x5xf32>
    %cst_222 = arith.constant dense<0.000000e+00> : vector<8x5xf32>
    %633 = tpu.matmul %630, %632, %cst_222 {dimension_numbers = #tpu.dot_dimension_numbers<[1], [0], [0], [1], [0, 0, 1, 1], [], []>} : vector<8x16xf32>, vector<16x5xf32>, vector<8x5xf32> -> vector<8x5xf32>
    %634 = arith.addf %596, %633 : vector<8x5xf32>
    %c128 = arith.constant 128 : index
    %c0_223 = arith.constant 0 : index
    %635 = vector.load %arg11[%c128, %c0_223] : memref<144x384xf32, #tpu.memory_space<vmem>>, vector<8x384xf32>
    %636 = vector.extract_strided_slice %629 {offsets = [0, 0], sizes = [8, 16], strides = [1, 1]} : vector<8x128xf32> to vector<8x16xf32>
    %c0_224 = arith.constant 0 : index
    %c0_225 = arith.constant 0 : index
    %637 = vector.load %arg5[%c0_224, %c0_225] : memref<16x384xf32, #tpu.memory_space<vmem>>, vector<16x384xf32>
    %cst_226 = arith.constant dense<0.000000e+00> : vector<8x384xf32>
    %638 = tpu.matmul %636, %637, %cst_226 {dimension_numbers = #tpu.dot_dimension_numbers<[1], [0], [0], [1], [0, 0, 1, 1], [], []>} : vector<8x16xf32>, vector<16x384xf32>, vector<8x384xf32> -> vector<8x384xf32>
    %c0_227 = arith.constant 0 : index
    %c0_228 = arith.constant 0 : index
    %639 = vector.load %arg7[%c0_227, %c0_228] : memref<1x384xf32, #tpu.memory_space<vmem>>, vector<1x384xf32>
    %640 = vector.broadcast %639 : vector<1x384xf32> to vector<8x384xf32>
    %641 = arith.addf %638, %640 : vector<8x384xf32>
    %642 = vector.extract_strided_slice %635 {offsets = [0, 0], sizes = [8, 128], strides = [1, 1]} : vector<8x384xf32> to vector<8x128xf32>
    %643 = vector.extract_strided_slice %641 {offsets = [0, 0], sizes = [8, 128], strides = [1, 1]} : vector<8x384xf32> to vector<8x128xf32>
    %644 = arith.addf %642, %643 : vector<8x128xf32>
    %645 = arith.negf %644 : vector<8x128xf32>
    %646 = math.exp %645 : vector<8x128xf32>
    %cst_229 = arith.constant 1.000000e+00 : f32
    %647 = vector.broadcast %cst_229 : f32 to vector<8x128xf32>
    %648 = arith.addf %647, %646 : vector<8x128xf32>
    %649 = arith.divf %647, %648 : vector<8x128xf32>
    %650 = vector.extract_strided_slice %635 {offsets = [0, 128], sizes = [8, 128], strides = [1, 1]} : vector<8x384xf32> to vector<8x128xf32>
    %651 = vector.extract_strided_slice %641 {offsets = [0, 128], sizes = [8, 128], strides = [1, 1]} : vector<8x384xf32> to vector<8x128xf32>
    %652 = arith.addf %650, %651 : vector<8x128xf32>
    %653 = arith.negf %652 : vector<8x128xf32>
    %654 = math.exp %653 : vector<8x128xf32>
    %cst_230 = arith.constant 1.000000e+00 : f32
    %655 = vector.broadcast %cst_230 : f32 to vector<8x128xf32>
    %656 = arith.addf %655, %654 : vector<8x128xf32>
    %657 = arith.divf %655, %656 : vector<8x128xf32>
    %658 = vector.extract_strided_slice %635 {offsets = [0, 256], sizes = [8, 128], strides = [1, 1]} : vector<8x384xf32> to vector<8x128xf32>
    %659 = vector.extract_strided_slice %641 {offsets = [0, 256], sizes = [8, 128], strides = [1, 1]} : vector<8x384xf32> to vector<8x128xf32>
    %660 = arith.mulf %649, %659 : vector<8x128xf32>
    %661 = arith.addf %658, %660 : vector<8x128xf32>
    %662 = math.tanh %661 : vector<8x128xf32>
    %cst_231 = arith.constant 1.000000e+00 : f32
    %663 = vector.broadcast %cst_231 : f32 to vector<8x128xf32>
    %664 = arith.subf %663, %657 : vector<8x128xf32>
    %665 = arith.mulf %664, %662 : vector<8x128xf32>
    %666 = arith.mulf %657, %629 : vector<8x128xf32>
    %667 = arith.addf %665, %666 : vector<8x128xf32>
    %668 = vector.extract_strided_slice %667 {offsets = [0, 0], sizes = [8, 16], strides = [1, 1]} : vector<8x128xf32> to vector<8x16xf32>
    %c16_232 = arith.constant 16 : index
    %c0_233 = arith.constant 0 : index
    %c0_234 = arith.constant 0 : index
    %669 = vector.load %arg8[%c16_232, %c0_233, %c0_234] : memref<18x16x5xf32, #tpu.memory_space<vmem>>, vector<1x16x5xf32>
    %670 = vector.shape_cast %669 : vector<1x16x5xf32> to vector<16x5xf32>
    %cst_235 = arith.constant dense<0.000000e+00> : vector<8x5xf32>
    %671 = tpu.matmul %668, %670, %cst_235 {dimension_numbers = #tpu.dot_dimension_numbers<[1], [0], [0], [1], [0, 0, 1, 1], [], []>} : vector<8x16xf32>, vector<16x5xf32>, vector<8x5xf32> -> vector<8x5xf32>
    %672 = arith.addf %634, %671 : vector<8x5xf32>
    %c136 = arith.constant 136 : index
    %c0_236 = arith.constant 0 : index
    %673 = vector.load %arg11[%c136, %c0_236] : memref<144x384xf32, #tpu.memory_space<vmem>>, vector<8x384xf32>
    %674 = vector.extract_strided_slice %667 {offsets = [0, 0], sizes = [8, 16], strides = [1, 1]} : vector<8x128xf32> to vector<8x16xf32>
    %c0_237 = arith.constant 0 : index
    %c0_238 = arith.constant 0 : index
    %675 = vector.load %arg5[%c0_237, %c0_238] : memref<16x384xf32, #tpu.memory_space<vmem>>, vector<16x384xf32>
    %cst_239 = arith.constant dense<0.000000e+00> : vector<8x384xf32>
    %676 = tpu.matmul %674, %675, %cst_239 {dimension_numbers = #tpu.dot_dimension_numbers<[1], [0], [0], [1], [0, 0, 1, 1], [], []>} : vector<8x16xf32>, vector<16x384xf32>, vector<8x384xf32> -> vector<8x384xf32>
    %c0_240 = arith.constant 0 : index
    %c0_241 = arith.constant 0 : index
    %677 = vector.load %arg7[%c0_240, %c0_241] : memref<1x384xf32, #tpu.memory_space<vmem>>, vector<1x384xf32>
    %678 = vector.broadcast %677 : vector<1x384xf32> to vector<8x384xf32>
    %679 = arith.addf %676, %678 : vector<8x384xf32>
    %680 = vector.extract_strided_slice %673 {offsets = [0, 0], sizes = [8, 128], strides = [1, 1]} : vector<8x384xf32> to vector<8x128xf32>
    %681 = vector.extract_strided_slice %679 {offsets = [0, 0], sizes = [8, 128], strides = [1, 1]} : vector<8x384xf32> to vector<8x128xf32>
    %682 = arith.addf %680, %681 : vector<8x128xf32>
    %683 = arith.negf %682 : vector<8x128xf32>
    %684 = math.exp %683 : vector<8x128xf32>
    %cst_242 = arith.constant 1.000000e+00 : f32
    %685 = vector.broadcast %cst_242 : f32 to vector<8x128xf32>
    %686 = arith.addf %685, %684 : vector<8x128xf32>
    %687 = arith.divf %685, %686 : vector<8x128xf32>
    %688 = vector.extract_strided_slice %673 {offsets = [0, 128], sizes = [8, 128], strides = [1, 1]} : vector<8x384xf32> to vector<8x128xf32>
    %689 = vector.extract_strided_slice %679 {offsets = [0, 128], sizes = [8, 128], strides = [1, 1]} : vector<8x384xf32> to vector<8x128xf32>
    %690 = arith.addf %688, %689 : vector<8x128xf32>
    %691 = arith.negf %690 : vector<8x128xf32>
    %692 = math.exp %691 : vector<8x128xf32>
    %cst_243 = arith.constant 1.000000e+00 : f32
    %693 = vector.broadcast %cst_243 : f32 to vector<8x128xf32>
    %694 = arith.addf %693, %692 : vector<8x128xf32>
    %695 = arith.divf %693, %694 : vector<8x128xf32>
    %696 = vector.extract_strided_slice %673 {offsets = [0, 256], sizes = [8, 128], strides = [1, 1]} : vector<8x384xf32> to vector<8x128xf32>
    %697 = vector.extract_strided_slice %679 {offsets = [0, 256], sizes = [8, 128], strides = [1, 1]} : vector<8x384xf32> to vector<8x128xf32>
    %698 = arith.mulf %687, %697 : vector<8x128xf32>
    %699 = arith.addf %696, %698 : vector<8x128xf32>
    %700 = math.tanh %699 : vector<8x128xf32>
    %cst_244 = arith.constant 1.000000e+00 : f32
    %701 = vector.broadcast %cst_244 : f32 to vector<8x128xf32>
    %702 = arith.subf %701, %695 : vector<8x128xf32>
    %703 = arith.mulf %702, %700 : vector<8x128xf32>
    %704 = arith.mulf %695, %667 : vector<8x128xf32>
    %705 = arith.addf %703, %704 : vector<8x128xf32>
    %706 = vector.extract_strided_slice %705 {offsets = [0, 0], sizes = [8, 16], strides = [1, 1]} : vector<8x128xf32> to vector<8x16xf32>
    %c17 = arith.constant 17 : index
    %c0_245 = arith.constant 0 : index
    %c0_246 = arith.constant 0 : index
    %707 = vector.load %arg8[%c17, %c0_245, %c0_246] : memref<18x16x5xf32, #tpu.memory_space<vmem>>, vector<1x16x5xf32>
    %708 = vector.shape_cast %707 : vector<1x16x5xf32> to vector<16x5xf32>
    %cst_247 = arith.constant dense<0.000000e+00> : vector<8x5xf32>
    %709 = tpu.matmul %706, %708, %cst_247 {dimension_numbers = #tpu.dot_dimension_numbers<[1], [0], [0], [1], [0, 0, 1, 1], [], []>} : vector<8x16xf32>, vector<16x5xf32>, vector<8x5xf32> -> vector<8x5xf32>
    %710 = arith.addf %672, %709 : vector<8x5xf32>
    %711 = vector.extract_strided_slice %710 {offsets = [0, 0], sizes = [2, 5], strides = [1, 1]} : vector<8x5xf32> to vector<2x5xf32>
    %c0_248 = arith.constant 0 : index
    %c0_249 = arith.constant 0 : index
    %712 = vector.load %arg9[%c0_248, %c0_249] : memref<1x5xf32, #tpu.memory_space<vmem>>, vector<1x5xf32>
    %713 = vector.broadcast %712 : vector<1x5xf32> to vector<2x5xf32>
    %714 = arith.addf %711, %713 : vector<2x5xf32>
    %c0_250 = arith.constant 0 : index
    %c0_251 = arith.constant 0 : index
    %715 = vector.load %arg10[%c0_250, %c0_251] : memref<2x5xf32, #tpu.memory_space<vmem>>, vector<2x5xf32>
    tpu.vector_store %arg10[%c0_250, %c0_251], %714 {strides = array<i32>} : memref<2x5xf32, #tpu.memory_space<vmem>>, vector<2x5xf32>,
    return
  }
  func.func @transform_0(%arg0: i32) -> (i32, i32) {
    %c0_i32 = arith.constant 0 : i32
    %c0_i32_0 = arith.constant 0 : i32
    %c0_i32_1 = arith.constant 0 : i32
    return %c0_i32, %c0_i32_0 : i32, i32
  }
  func.func @transform_1(%arg0: i32) -> (i32, i32, i32) {
    %c0_i32 = arith.constant 0 : i32
    %c0_i32_0 = arith.constant 0 : i32
    %c0_i32_1 = arith.constant 0 : i32
    %c0_i32_2 = arith.constant 0 : i32
    return %c0_i32, %c0_i32_0, %c0_i32_1 : i32, i32, i32
  }
  func.func @transform_2(%arg0: i32) -> (i32, i32) {
    %c0_i32 = arith.constant 0 : i32
    %c0_i32_0 = arith.constant 0 : i32
    %c0_i32_1 = arith.constant 0 : i32
    return %c0_i32, %c0_i32_0 : i32, i32
  }
  func.func @transform_3(%arg0: i32) -> (i32, i32) {
    %c0_i32 = arith.constant 0 : i32
    %c0_i32_0 = arith.constant 0 : i32
    %c0_i32_1 = arith.constant 0 : i32
    return %c0_i32, %c0_i32_0 : i32, i32
  }
  func.func @transform_4(%arg0: i32) -> (i32, i32) {
    %c0_i32 = arith.constant 0 : i32
    %c0_i32_0 = arith.constant 0 : i32
    %c0_i32_1 = arith.constant 0 : i32
    return %c0_i32, %c0_i32_0 : i32, i32
  }
  func.func @transform_5(%arg0: i32) -> (i32, i32) {
    %c0_i32 = arith.constant 0 : i32
    %c0_i32_0 = arith.constant 0 : i32
    %c0_i32_1 = arith.constant 0 : i32
    return %c0_i32, %c0_i32_0 : i32, i32
  }
  func.func @transform_6(%arg0: i32) -> (i32, i32) {
    %c0_i32 = arith.constant 0 : i32
    %c0_i32_0 = arith.constant 0 : i32
    %c0_i32_1 = arith.constant 0 : i32
    return %c0_i32, %c0_i32_0 : i32, i32
  }
  func.func @transform_7(%arg0: i32) -> (i32, i32, i32) {
    %c0_i32 = arith.constant 0 : i32
    %c0_i32_0 = arith.constant 0 : i32
    %c0_i32_1 = arith.constant 0 : i32
    %c0_i32_2 = arith.constant 0 : i32
    return %c0_i32, %c0_i32_0, %c0_i32_1 : i32, i32, i32
  }
  func.func @transform_8(%arg0: i32) -> (i32, i32) {
    %c0_i32 = arith.constant 0 : i32
    %c0_i32_0 = arith.constant 0 : i32
    %c0_i32_1 = arith.constant 0 : i32
    return %c0_i32, %c0_i32_0 : i32, i32
  }
  func.func @transform_9(%arg0: i32) -> (i32, i32) {
    %c0_i32 = arith.constant 0 : i32
    %c0_i32_0 = arith.constant 0 : i32
    %c0_i32_1 = arith.constant 0 : i32
    return %c0_i32, %c0_i32_0 : i32, i32
  }
}

</mosaic_0001>

<llo_original>
// kernel: _model_forward.1
$region0: #{_model_forward.1}
  #allocation0 [shape = 'u32[]', space=smem, size = 0x4, offset = 0x4, fixed_abs, tag = 'smem constant byte address 0x4 - core index']
  #allocation1 [shape = 'u32[144,128]{1,0:T(1,128)}', space=vmem, size = 0x12000, scoped, tag = 'internal scratch']
  #allocation2 [shape = 'f32[144,384]{1,0:T(8,128)}', space=vmem, size = 0x36000, scoped, tag = 'scratch operand']
  %s0 = inlined_call_operand.vmem [shape: f32[160,4], index: 0, kind: input, shape index: {}]
  %s1 = inlined_call_operand.vmem [shape: f32[3,4,8], index: 1, kind: input, shape index: {}]
  %s2 = inlined_call_operand.vmem [shape: f32[1,8], index: 2, kind: input, shape index: {}]
  %s3 = inlined_call_operand.vmem [shape: f32[8,384], index: 3, kind: input, shape index: {}]
  %s4 = inlined_call_operand.vmem [shape: f32[16,384], index: 4, kind: input, shape index: {}]
  %s5 = inlined_call_operand.vmem [shape: f32[1,384], index: 5, kind: input, shape index: {}]
  %s6 = inlined_call_operand.vmem [shape: f32[1,384], index: 6, kind: input, shape index: {}]
  %s7 = inlined_call_operand.vmem [shape: f32[18,16,5], index: 7, kind: input, shape index: {}]
  %s8 = inlined_call_operand.vmem [shape: f32[1,5], index: 8, kind: input, shape index: {}]
  %s9 = inlined_call_operand.hbm [shape: f32[2,5], index: 9, kind: output, shape index: {}]
  %s10 = sld [smem:[#allocation0]]
  $region46: #{_model_forward.1} parent=0
    _
  %s12 = ssub.s32 1, %s10
  %s13 = scalar_select 0, %s12, %s10
  $region1: #{_model_forward.1} parent=0
    #allocation3 [shape = 'u8[1024]{0}', space=vmem, size = 0x400, scoped, tag = 'output window, operand 0, single buffered']
    #allocation4 [shape = 's32[1]{0}', space=sflag, size = 0x4, scoped, tag = 'scoped memory for _model_forward.1']
    %14 = vsyncpa [#allocation4], 0
    // Predicated region
    $region2: #{_model_forward.1} parent=1 // pred_check
      _
    $region3: #{_model_forward.1} parent=1 // pred_check_branch
      %16 = sbr.rel (0) target = $region5
    $region4: #{_model_forward.1} parent=1 // pred_region
      _
    $region5: #{_model_forward.1} parent=1 // pred_fallthru
      _
    // Predicated region
    $region6: #{_model_forward.1} parent=1 // pred_check
      _
    $region7: #{_model_forward.1} parent=1 // pred_check_branch
      %18 = sbr.rel (0) target = $region9
    $region8: #{_model_forward.1} parent=1 // pred_region
      _
    $region9: #{_model_forward.1} parent=1 // pred_fallthru
      _
    // Predicated region
    $region10: #{_model_forward.1} parent=1 // pred_check
      _
    $region11: #{_model_forward.1} parent=1 // pred_check_branch
      %20 = sbr.rel (0) target = $region13
    $region12: #{_model_forward.1} parent=1 // pred_region
      _
    $region13: #{_model_forward.1} parent=1 // pred_fallthru
      _
    // Predicated region
    $region14: #{_model_forward.1} parent=1 // pred_check
      _
    $region15: #{_model_forward.1} parent=1 // pred_check_branch
      %22 = sbr.rel (0) target = $region17
    $region16: #{_model_forward.1} parent=1 // pred_region
      _
    $region17: #{_model_forward.1} parent=1 // pred_fallthru
      _
    // Predicated region
    $region18: #{_model_forward.1} parent=1 // pred_check
      _
    $region19: #{_model_forward.1} parent=1 // pred_check_branch
      %24 = sbr.rel (0) target = $region21
    $region20: #{_model_forward.1} parent=1 // pred_region
      _
    $region21: #{_model_forward.1} parent=1 // pred_fallthru
      _
    // Predicated region
    $region22: #{_model_forward.1} parent=1 // pred_check
      _
    $region23: #{_model_forward.1} parent=1 // pred_check_branch
      %26 = sbr.rel (0) target = $region25
    $region24: #{_model_forward.1} parent=1 // pred_region
      _
    $region25: #{_model_forward.1} parent=1 // pred_fallthru
      _
    // Predicated region
    $region26: #{_model_forward.1} parent=1 // pred_check
      _
    $region27: #{_model_forward.1} parent=1 // pred_check_branch
      %28 = sbr.rel (0) target = $region29
    $region28: #{_model_forward.1} parent=1 // pred_region
      _
    $region29: #{_model_forward.1} parent=1 // pred_fallthru
      _
    // Predicated region
    $region30: #{_model_forward.1} parent=1 // pred_check
      _
    $region31: #{_model_forward.1} parent=1 // pred_check_branch
      %30 = sbr.rel (0) target = $region33
    $region32: #{_model_forward.1} parent=1 // pred_region
      _
    $region33: #{_model_forward.1} parent=1 // pred_fallthru
      _
    // Predicated region
    $region34: #{_model_forward.1} parent=1 // pred_check
      _
    $region35: #{_model_forward.1} parent=1 // pred_check_branch
      %32 = sbr.rel (0) target = $region37
    $region36: #{_model_forward.1} parent=1 // pred_region
      _
    $region37: #{_model_forward.1} parent=1 // pred_fallthru
      _
    %v33 = vld [vmem:[%s2] sm:$0x1]
    %v34 = vld [vmem:[%s0] sm:$0xff]
    %v35 = vld [vmem:[%s0 + $0x8] sm:$0xff]
    %v36 = vld [vmem:[%s0 + $0x10] sm:$0xff]
    %v37 = vld [vmem:[%s0 + $0x18] sm:$0xff]
    %v38 = vld [vmem:[%s0 + $0x20] sm:$0xff]
    %v39 = vld [vmem:[%s0 + $0x28] sm:$0xff]
    %v40 = vld [vmem:[%s0 + $0x30] sm:$0xff]
    %v41 = vld [vmem:[%s0 + $0x38] sm:$0xff]
    %v42 = vld [vmem:[%s0 + $0x40] sm:$0xff]
    %v43 = vld [vmem:[%s0 + $0x48] sm:$0xff]
    %v44 = vld [vmem:[%s0 + $0x50] sm:$0xff]
    %v45 = vld [vmem:[%s0 + $0x58] sm:$0xff]
    %v46 = vld [vmem:[%s0 + $0x60] sm:$0xff]
    %v47 = vld [vmem:[%s0 + $0x68] sm:$0xff]
    %v48 = vld [vmem:[%s0 + $0x70] sm:$0xff]
    %v49 = vld [vmem:[%s0 + $0x78] sm:$0xff]
    %v50 = vld [vmem:[%s0 + $0x80] sm:$0xff]
    %v51 = vld [vmem:[%s0 + $0x88] sm:$0xff]
    %v52 = vld [vmem:[%s1] sm:$0xf]
    %vm53 = vcmask 31744
    %v55 = vsel %vm53, %v34, 0
    %v58 = vsel %vm53, %v35, 0
    %v61 = vsel %vm53, %v36, 0
    %v64 = vsel %vm53, %v37, 0
    %v67 = vsel %vm53, %v38, 0
    %v70 = vsel %vm53, %v39, 0
    %v73 = vsel %vm53, %v40, 0
    %v76 = vsel %vm53, %v41, 0
    %v79 = vsel %vm53, %v42, 0
    %v82 = vsel %vm53, %v43, 0
    %v85 = vsel %vm53, %v44, 0
    %v88 = vsel %vm53, %v45, 0
    %v91 = vsel %vm53, %v46, 0
    %v94 = vsel %vm53, %v47, 0
    %v97 = vsel %vm53, %v48, 0
    %v100 = vsel %vm53, %v49, 0
    %v103 = vsel %vm53, %v50, 0
    %v106 = vsel %vm53, %v51, 0
    %vm108 = vcmask 1043456
    %v110 = vsel %vm108, %v52, 0
    %112 = vmatprep.subr.mxu0 0.0
    %113 = vmatpush1.msra.mxu0 %v110
    %114 = vmatprep.subr.mxu0 0.0
    %115 = vmatpush1.msra.mxu0 0.0
    %116 = vmatprep.subr.mxu0 0.0
    %117 = vmatpush1.msra.mxu0 0.0
    %118 = vmatprep.subr.mxu0 0.0
    %119 = vmatpush1.msra.mxu0 0.0
    %120 = vmatprep.subr.mxu0 0.0
    %121 = vmatpush1.msra.mxu0 0.0
    %122 = vmatprep.subr.mxu0 0.0
    %123 = vmatpush1.msra.mxu0 0.0
    %124 = vmatprep.subr.mxu0 0.0
    %125 = vmatpush1.msra.mxu0 0.0
    %126 = vmatprep.subr.mxu0 0.0
    %127 = vmatpush1.msra.mxu0 0.0
    %128 = vmatprep.subr.mxu0 0.0
    %129 = vmatpush1.msra.mxu0 0.0
    %130 = vmatprep.subr.mxu0 0.0
    %131 = vmatpush1.msra.mxu0 0.0
    %132 = vmatprep.subr.mxu0 0.0
    %133 = vmatpush1.msra.mxu0 0.0
    %134 = vmatprep.subr.mxu0 0.0
    %135 = vmatpush1.msra.mxu0 0.0
    %136 = vmatprep.subr.mxu0 0.0
    %137 = vmatpush1.msra.mxu0 0.0
    %138 = vmatprep.subr.mxu0 0.0
    %139 = vmatpush1.msra.mxu0 0.0
    %140 = vmatprep.subr.mxu0 0.0
    %141 = vmatpush1.msra.mxu0 0.0
    %142 = vmatprep.subr.mxu0 0.0
    %143 = vmatpush1.msra.mxu0 0.0
    %144 = vmatprep.subr.mxu0 0.0
    %145 = vmatpush1.msra.mxu0 0.0
    %146 = vmatprep.subr.mxu0 0.0
    %147 = vmatpush1.msra.mxu0 0.0
    %148 = vmatprep.subr.mxu0 0.0
    %149 = vmatpush1.msra.mxu0 0.0
    %150 = vmatprep.subr.mxu0 0.0
    %151 = vmatpush1.msra.mxu0 0.0
    %152 = vmatprep.subr.mxu0 0.0
    %153 = vmatpush1.msra.mxu0 0.0
    %154 = vmatprep.subr.mxu0 0.0
    %155 = vmatpush1.msra.mxu0 0.0
    %156 = vmatprep.subr.mxu0 0.0
    %157 = vmatpush1.msra.mxu0 0.0
    %158 = vmatprep.subr.mxu0 0.0
    %159 = vmatpush1.msra.mxu0 0.0
    %160 = vmatprep.subr.mxu0 0.0
    %161 = vmatpush1.msra.mxu0 0.0
    %162 = vmatprep.subr.mxu0 0.0
    %163 = vmatpush1.msra.mxu0 0.0
    %164 = vmatprep.subr.mxu0 0.0
    %165 = vmatpush1.msra.mxu0 0.0
    %166 = vmatprep.subr.mxu0 0.0
    %167 = vmatpush1.msra.mxu0 0.0
    %168 = vmatprep.subr.mxu0 0.0
    %169 = vmatpush1.msra.mxu0 0.0
    %170 = vmatprep.subr.mxu0 0.0
    %171 = vmatpush1.msra.mxu0 0.0
    %172 = vmatprep.subr.mxu0 0.0
    %173 = vmatpush1.msra.mxu0 0.0
    %174 = vmatprep.subr.mxu0 0.0
    %175 = vmatpush1.msra.mxu0 0.0
    %176 = vmatprep.mubr.f32.mxu0 0.0
    %177 = vmatmul.mubr.f32.gmra.mrb[0].mxu0 %v55
    %v178 = vpop.f32.mrb[0].mxu0
    %v179 = vadd.f32 0.0, %v178
    %v180 = vpop.f32.mrb[0].mxu0
    %181 = vmatprep.mubr.f32.mxu0 0.0
    %182 = vmatmul.mubr.f32.gmra.mrb[0].mxu0 %v58
    %v183 = vpop.f32.mrb[0].mxu0
    %v184 = vadd.f32 0.0, %v183
    %v185 = vpop.f32.mrb[0].mxu0
    %186 = vmatprep.mubr.f32.mxu0 0.0
    %187 = vmatmul.mubr.f32.gmra.mrb[0].mxu0 %v61
    %v188 = vpop.f32.mrb[0].mxu0
    %v189 = vadd.f32 0.0, %v188
    %v190 = vpop.f32.mrb[0].mxu0
    %191 = vmatprep.mubr.f32.mxu0 0.0
    %192 = vmatmul.mubr.f32.gmra.mrb[0].mxu0 %v64
    %v193 = vpop.f32.mrb[0].mxu0
    %v194 = vadd.f32 0.0, %v193
    %v195 = vpop.f32.mrb[0].mxu0
    %196 = vmatprep.mubr.f32.mxu0 0.0
    %197 = vmatmul.mubr.f32.gmra.mrb[0].mxu0 %v67
    %v198 = vpop.f32.mrb[0].mxu0
    %v199 = vadd.f32 0.0, %v198
    %v200 = vpop.f32.mrb[0].mxu0
    %201 = vmatprep.mubr.f32.mxu0 0.0
    %202 = vmatmul.mubr.f32.gmra.mrb[0].mxu0 %v70
    %v203 = vpop.f32.mrb[0].mxu0
    %v204 = vadd.f32 0.0, %v203
    %v205 = vpop.f32.mrb[0].mxu0
    %206 = vmatprep.mubr.f32.mxu0 0.0
    %207 = vmatmul.mubr.f32.gmra.mrb[0].mxu0 %v73
    %v208 = vpop.f32.mrb[0].mxu0
    %v209 = vadd.f32 0.0, %v208
    %v210 = vpop.f32.mrb[0].mxu0
    %211 = vmatprep.mubr.f32.mxu0 0.0
    %212 = vmatmul.mubr.f32.gmra.mrb[0].mxu0 %v76
    %v213 = vpop.f32.mrb[0].mxu0
    %v214 = vadd.f32 0.0, %v213
    %v215 = vpop.f32.mrb[0].mxu0
    %216 = vmatprep.mubr.f32.mxu0 0.0
    %217 = vmatmul.mubr.f32.gmra.mrb[0].mxu0 %v79
    %v218 = vpop.f32.mrb[0].mxu0
    %v219 = vadd.f32 0.0, %v218
    %v220 = vpop.f32.mrb[0].mxu0
    %221 = vmatprep.mubr.f32.mxu0 0.0
    %222 = vmatmul.mubr.f32.gmra.mrb[0].mxu0 %v82
    %v223 = vpop.f32.mrb[0].mxu0
    %v224 = vadd.f32 0.0, %v223
    %v225 = vpop.f32.mrb[0].mxu0
    %226 = vmatprep.mubr.f32.mxu0 0.0
    %227 = vmatmul.mubr.f32.gmra.mrb[0].mxu0 %v85
    %v228 = vpop.f32.mrb[0].mxu0
    %v229 = vadd.f32 0.0, %v228
    %v230 = vpop.f32.mrb[0].mxu0
    %231 = vmatprep.mubr.f32.mxu0 0.0
    %232 = vmatmul.mubr.f32.gmra.mrb[0].mxu0 %v88
    %v233 = vpop.f32.mrb[0].mxu0
    %v234 = vadd.f32 0.0, %v233
    %v235 = vpop.f32.mrb[0].mxu0
    %236 = vmatprep.mubr.f32.mxu0 0.0
    %237 = vmatmul.mubr.f32.gmra.mrb[0].mxu0 %v91
    %v238 = vpop.f32.mrb[0].mxu0
    %v239 = vadd.f32 0.0, %v238
    %v240 = vpop.f32.mrb[0].mxu0
    %241 = vmatprep.mubr.f32.mxu0 0.0
    %242 = vmatmul.mubr.f32.gmra.mrb[0].mxu0 %v94
    %v243 = vpop.f32.mrb[0].mxu0
    %v244 = vadd.f32 0.0, %v243
    %v245 = vpop.f32.mrb[0].mxu0
    %246 = vmatprep.mubr.f32.mxu0 0.0
    %247 = vmatmul.mubr.f32.gmra.mrb[0].mxu0 %v97
    %v248 = vpop.f32.mrb[0].mxu0
    %v249 = vadd.f32 0.0, %v248
    %v250 = vpop.f32.mrb[0].mxu0
    %251 = vmatprep.mubr.f32.mxu0 0.0
    %252 = vmatmul.mubr.f32.gmra.mrb[0].mxu0 %v100
    %v253 = vpop.f32.mrb[0].mxu0
    %v254 = vadd.f32 0.0, %v253
    %v255 = vpop.f32.mrb[0].mxu0
    %256 = vmatprep.mubr.f32.mxu0 0.0
    %257 = vmatmul.mubr.f32.gmra.mrb[0].mxu0 %v103
    %v258 = vpop.f32.mrb[0].mxu0
    %v259 = vadd.f32 0.0, %v258
    %v260 = vpop.f32.mrb[0].mxu0
    %261 = vmatprep.mubr.f32.mxu0 0.0
    %262 = vmatmul.mubr.f32.gmra.mrb[0].mxu0 %v106
    %v263 = vpop.f32.mrb[0].mxu0
    %v264 = vadd.f32 0.0, %v263
    %v265 = vpop.f32.mrb[0].mxu0
    %266 = vdwg.mxu0
    %v268 = vlaneseq
    %v269 = vshrl.u32 %v268, 7
    %v270 = vsub.s32 0, %v269
    %v271 = vrot.slane %v33, %v270
    %v273 = vadd.f32 %v271, %v179
    %v274 = vadd.f32 %v271, %v184
    %v275 = vadd.f32 %v271, %v189
    %v276 = vadd.f32 %v271, %v194
    %v277 = vadd.f32 %v271, %v199
    %v278 = vadd.f32 %v271, %v204
    %v279 = vadd.f32 %v271, %v209
    %v280 = vadd.f32 %v271, %v214
    %v281 = vadd.f32 %v271, %v219
    %v282 = vadd.f32 %v271, %v224
    %v283 = vadd.f32 %v271, %v229
    %v284 = vadd.f32 %v271, %v234
    %v285 = vadd.f32 %v271, %v239
    %v286 = vadd.f32 %v271, %v244
    %v287 = vadd.f32 %v271, %v249
    %v288 = vadd.f32 %v271, %v254
    %v289 = vadd.f32 %v271, %v259
    %v290 = vadd.f32 %v271, %v264
    %v291 = vld [vmem:[%s0 + $0x8] sm:$0xff]
    %v292 = vld [vmem:[%s0 + $0x10] sm:$0xff]
    %v293 = vld [vmem:[%s0 + $0x18] sm:$0xff]
    %v294 = vld [vmem:[%s0 + $0x20] sm:$0xff]
    %v295 = vld [vmem:[%s0 + $0x28] sm:$0xff]
    %v296 = vld [vmem:[%s0 + $0x30] sm:$0xff]
    %v297 = vld [vmem:[%s0 + $0x38] sm:$0xff]
    %v298 = vld [vmem:[%s0 + $0x40] sm:$0xff]
    %v299 = vld [vmem:[%s0 + $0x48] sm:$0xff]
    %v300 = vld [vmem:[%s0 + $0x50] sm:$0xff]
    %v301 = vld [vmem:[%s0 + $0x58] sm:$0xff]
    %v302 = vld [vmem:[%s0 + $0x60] sm:$0xff]
    %v303 = vld [vmem:[%s0 + $0x68] sm:$0xff]
    %v304 = vld [vmem:[%s0 + $0x70] sm:$0xff]
    %v305 = vld [vmem:[%s0 + $0x78] sm:$0xff]
    %v306 = vld [vmem:[%s0 + $0x80] sm:$0xff]
    %v307 = vld [vmem:[%s0 + $0x88] sm:$0xff]
    %v308 = vld [vmem:[%s0 + $0x90] sm:$0xff]
    %s309 = scalar_lea.vmem %s1, 4
    %v310 = vld [vmem:[%s309] sm:$0xf]
    %v312 = vsel %vm53, %v291, 0
    %v315 = vsel %vm53, %v292, 0
    %v318 = vsel %vm53, %v293, 0
    %v321 = vsel %vm53, %v294, 0
    %v324 = vsel %vm53, %v295, 0
    %v327 = vsel %vm53, %v296, 0
    %v330 = vsel %vm53, %v297, 0
    %v333 = vsel %vm53, %v298, 0
    %v336 = vsel %vm53, %v299, 0
    %v339 = vsel %vm53, %v300, 0
    %v342 = vsel %vm53, %v301, 0
    %v345 = vsel %vm53, %v302, 0
    %v348 = vsel %vm53, %v303, 0
    %v351 = vsel %vm53, %v304, 0
    %v354 = vsel %vm53, %v305, 0
    %v357 = vsel %vm53, %v306, 0
    %v360 = vsel %vm53, %v307, 0
    %v363 = vsel %vm53, %v308, 0
    %v366 = vsel %vm108, %v310, 0
    %368 = vmatprep.subr.mxu0 0.0
    %369 = vmatpush1.msra.mxu0 %v366
    %370 = vmatprep.subr.mxu0 0.0
    %371 = vmatpush1.msra.mxu0 0.0
    %372 = vmatprep.subr.mxu0 0.0
    %373 = vmatpush1.msra.mxu0 0.0
    %374 = vmatprep.subr.mxu0 0.0
    %375 = vmatpush1.msra.mxu0 0.0
    %376 = vmatprep.subr.mxu0 0.0
    %377 = vmatpush1.msra.mxu0 0.0
    %378 = vmatprep.subr.mxu0 0.0
    %379 = vmatpush1.msra.mxu0 0.0
    %380 = vmatprep.subr.mxu0 0.0
    %381 = vmatpush1.msra.mxu0 0.0
    %382 = vmatprep.subr.mxu0 0.0
    %383 = vmatpush1.msra.mxu0 0.0
    %384 = vmatprep.subr.mxu0 0.0
    %385 = vmatpush1.msra.mxu0 0.0
    %386 = vmatprep.subr.mxu0 0.0
    %387 = vmatpush1.msra.mxu0 0.0
    %388 = vmatprep.subr.mxu0 0.0
    %389 = vmatpush1.msra.mxu0 0.0
    %390 = vmatprep.subr.mxu0 0.0
    %391 = vmatpush1.msra.mxu0 0.0
    %392 = vmatprep.subr.mxu0 0.0
    %393 = vmatpush1.msra.mxu0 0.0
    %394 = vmatprep.subr.mxu0 0.0
    %395 = vmatpush1.msra.mxu0 0.0
    %396 = vmatprep.subr.mxu0 0.0
    %397 = vmatpush1.msra.mxu0 0.0
    %398 = vmatprep.subr.mxu0 0.0
    %399 = vmatpush1.msra.mxu0 0.0
    %400 = vmatprep.subr.mxu0 0.0
    %401 = vmatpush1.msra.mxu0 0.0
    %402 = vmatprep.subr.mxu0 0.0
    %403 = vmatpush1.msra.mxu0 0.0
    %404 = vmatprep.subr.mxu0 0.0
    %405 = vmatpush1.msra.mxu0 0.0
    %406 = vmatprep.subr.mxu0 0.0
    %407 = vmatpush1.msra.mxu0 0.0
    %408 = vmatprep.subr.mxu0 0.0
    %409 = vmatpush1.msra.mxu0 0.0
    %410 = vmatprep.subr.mxu0 0.0
    %411 = vmatpush1.msra.mxu0 0.0
    %412 = vmatprep.subr.mxu0 0.0
    %413 = vmatpush1.msra.mxu0 0.0
    %414 = vmatprep.subr.mxu0 0.0
    %415 = vmatpush1.msra.mxu0 0.0
    %416 = vmatprep.subr.mxu0 0.0
    %417 = vmatpush1.msra.mxu0 0.0
    %418 = vmatprep.subr.mxu0 0.0
    %419 = vmatpush1.msra.mxu0 0.0
    %420 = vmatprep.subr.mxu0 0.0
    %421 = vmatpush1.msra.mxu0 0.0
    %422 = vmatprep.subr.mxu0 0.0
    %423 = vmatpush1.msra.mxu0 0.0
    %424 = vmatprep.subr.mxu0 0.0
    %425 = vmatpush1.msra.mxu0 0.0
    %426 = vmatprep.subr.mxu0 0.0
    %427 = vmatpush1.msra.mxu0 0.0
    %428 = vmatprep.subr.mxu0 0.0
    %429 = vmatpush1.msra.mxu0 0.0
    %430 = vmatprep.subr.mxu0 0.0
    %431 = vmatpush1.msra.mxu0 0.0
    %432 = vmatprep.mubr.f32.mxu0 0.0
    %433 = vmatmul.mubr.f32.gmra.mrb[0].mxu0 %v312
    %v434 = vpop.f32.mrb[0].mxu0
    %v435 = vadd.f32 0.0, %v434
    %v436 = vpop.f32.mrb[0].mxu0
    %437 = vmatprep.mubr.f32.mxu0 0.0
    %438 = vmatmul.mubr.f32.gmra.mrb[0].mxu0 %v315
    %v439 = vpop.f32.mrb[0].mxu0
    %v440 = vadd.f32 0.0, %v439
    %v441 = vpop.f32.mrb[0].mxu0
    %442 = vmatprep.mubr.f32.mxu0 0.0
    %443 = vmatmul.mubr.f32.gmra.mrb[0].mxu0 %v318
    %v444 = vpop.f32.mrb[0].mxu0
    %v445 = vadd.f32 0.0, %v444
    %v446 = vpop.f32.mrb[0].mxu0
    %447 = vmatprep.mubr.f32.mxu0 0.0
    %448 = vmatmul.mubr.f32.gmra.mrb[0].mxu0 %v321
    %v449 = vpop.f32.mrb[0].mxu0
    %v450 = vadd.f32 0.0, %v449
    %v451 = vpop.f32.mrb[0].mxu0
    %452 = vmatprep.mubr.f32.mxu0 0.0
    %453 = vmatmul.mubr.f32.gmra.mrb[0].mxu0 %v324
    %v454 = vpop.f32.mrb[0].mxu0
    %v455 = vadd.f32 0.0, %v454
    %v456 = vpop.f32.mrb[0].mxu0
    %457 = vmatprep.mubr.f32.mxu0 0.0
    %458 = vmatmul.mubr.f32.gmra.mrb[0].mxu0 %v327
    %v459 = vpop.f32.mrb[0].mxu0
    %v460 = vadd.f32 0.0, %v459
    %v461 = vpop.f32.mrb[0].mxu0
    %462 = vmatprep.mubr.f32.mxu0 0.0
    %463 = vmatmul.mubr.f32.gmra.mrb[0].mxu0 %v330
    %v464 = vpop.f32.mrb[0].mxu0
    %v465 = vadd.f32 0.0, %v464
    %v466 = vpop.f32.mrb[0].mxu0
    %467 = vmatprep.mubr.f32.mxu0 0.0
    %468 = vmatmul.mubr.f32.gmra.mrb[0].mxu0 %v333
    %v469 = vpop.f32.mrb[0].mxu0
    %v470 = vadd.f32 0.0, %v469
    %v471 = vpop.f32.mrb[0].mxu0
    %472 = vmatprep.mubr.f32.mxu0 0.0
    %473 = vmatmul.mubr.f32.gmra.mrb[0].mxu0 %v336
    %v474 = vpop.f32.mrb[0].mxu0
    %v475 = vadd.f32 0.0, %v474
    %v476 = vpop.f32.mrb[0].mxu0
    %477 = vmatprep.mubr.f32.mxu0 0.0
    %478 = vmatmul.mubr.f32.gmra.mrb[0].mxu0 %v339
    %v479 = vpop.f32.mrb[0].mxu0
    %v480 = vadd.f32 0.0, %v479
    %v481 = vpop.f32.mrb[0].mxu0
    %482 = vmatprep.mubr.f32.mxu0 0.0
    %483 = vmatmul.mubr.f32.gmra.mrb[0].mxu0 %v342
    %v484 = vpop.f32.mrb[0].mxu0
    %v485 = vadd.f32 0.0, %v484
    %v486 = vpop.f32.mrb[0].mxu0
    %487 = vmatprep.mubr.f32.mxu0 0.0
    %488 = vmatmul.mubr.f32.gmra.mrb[0].mxu0 %v345
    %v489 = vpop.f32.mrb[0].mxu0
    %v490 = vadd.f32 0.0, %v489
    %v491 = vpop.f32.mrb[0].mxu0
    %492 = vmatprep.mubr.f32.mxu0 0.0
    %493 = vmatmul.mubr.f32.gmra.mrb[0].mxu0 %v348
    %v494 = vpop.f32.mrb[0].mxu0
    %v495 = vadd.f32 0.0, %v494
    %v496 = vpop.f32.mrb[0].mxu0
    %497 = vmatprep.mubr.f32.mxu0 0.0
    %498 = vmatmul.mubr.f32.gmra.mrb[0].mxu0 %v351
    %v499 = vpop.f32.mrb[0].mxu0
    %v500 = vadd.f32 0.0, %v499
    %v501 = vpop.f32.mrb[0].mxu0
    %502 = vmatprep.mubr.f32.mxu0 0.0
    %503 = vmatmul.mubr.f32.gmra.mrb[0].mxu0 %v354
    %v504 = vpop.f32.mrb[0].mxu0
    %v505 = vadd.f32 0.0, %v504
    %v506 = vpop.f32.mrb[0].mxu0
    %507 = vmatprep.mubr.f32.mxu0 0.0
    %508 = vmatmul.mubr.f32.gmra.mrb[0].mxu0 %v357
    %v509 = vpop.f32.mrb[0].mxu0
    %v510 = vadd.f32 0.0, %v509
    %v511 = vpop.f32.mrb[0].mxu0
    %512 = vmatprep.mubr.f32.mxu0 0.0
    %513 = vmatmul.mubr.f32.gmra.mrb[0].mxu0 %v360
    %v514 = vpop.f32.mrb[0].mxu0
    %v515 = vadd.f32 0.0, %v514
    %v516 = vpop.f32.mrb[0].mxu0
    %517 = vmatprep.mubr.f32.mxu0 0.0
    %518 = vmatmul.mubr.f32.gmra.mrb[0].mxu0 %v363
    %v519 = vpop.f32.mrb[0].mxu0
    %v520 = vadd.f32 0.0, %v519
    %v521 = vpop.f32.mrb[0].mxu0
    %522 = vdwg.mxu0
    %v523 = vadd.f32 %v273, %v435
    %v524 = vadd.f32 %v274, %v440
    %v525 = vadd.f32 %v275, %v445
    %v526 = vadd.f32 %v276, %v450
    %v527 = vadd.f32 %v277, %v455
    %v528 = vadd.f32 %v278, %v460
    %v529 = vadd.f32 %v279, %v465
    %v530 = vadd.f32 %v280, %v470
    %v531 = vadd.f32 %v281, %v475
    %v532 = vadd.f32 %v282, %v480
    %v533 = vadd.f32 %v283, %v485
    %v534 = vadd.f32 %v284, %v490
    %v535 = vadd.f32 %v285, %v495
    %v536 = vadd.f32 %v286, %v500
    %v537 = vadd.f32 %v287, %v505
    %v538 = vadd.f32 %v288, %v510
    %v539 = vadd.f32 %v289, %v515
    %v540 = vadd.f32 %v290, %v520
    %v541 = vld [vmem:[%s0 + $0x10] sm:$0xff]
    %v542 = vld [vmem:[%s0 + $0x18] sm:$0xff]
    %v543 = vld [vmem:[%s0 + $0x20] sm:$0xff]
    %v544 = vld [vmem:[%s0 + $0x28] sm:$0xff]
    %v545 = vld [vmem:[%s0 + $0x30] sm:$0xff]
    %v546 = vld [vmem:[%s0 + $0x38] sm:$0xff]
    %v547 = vld [vmem:[%s0 + $0x40] sm:$0xff]
    %v548 = vld [vmem:[%s0 + $0x48] sm:$0xff]
    %v549 = vld [vmem:[%s0 + $0x50] sm:$0xff]
    %v550 = vld [vmem:[%s0 + $0x58] sm:$0xff]
    %v551 = vld [vmem:[%s0 + $0x60] sm:$0xff]
    %v552 = vld [vmem:[%s0 + $0x68] sm:$0xff]
    %v553 = vld [vmem:[%s0 + $0x70] sm:$0xff]
    %v554 = vld [vmem:[%s0 + $0x78] sm:$0xff]
    %v555 = vld [vmem:[%s0 + $0x80] sm:$0xff]
    %v556 = vld [vmem:[%s0 + $0x88] sm:$0xff]
    %v557 = vld [vmem:[%s0 + $0x90] sm:$0xff]
    %v558 = vld [vmem:[%s0 + $0x98] sm:$0xff]
    %s559 = scalar_lea.vmem %s1, 8
    %v560 = vld [vmem:[%s559] sm:$0xf]
    %v562 = vsel %vm53, %v541, 0
    %v565 = vsel %vm53, %v542, 0
    %v568 = vsel %vm53, %v543, 0
    %v571 = vsel %vm53, %v544, 0
    %v574 = vsel %vm53, %v545, 0
    %v577 = vsel %vm53, %v546, 0
    %v580 = vsel %vm53, %v547, 0
    %v583 = vsel %vm53, %v548, 0
    %v586 = vsel %vm53, %v549, 0
    %v589 = vsel %vm53, %v550, 0
    %v592 = vsel %vm53, %v551, 0
    %v595 = vsel %vm53, %v552, 0
    %v598 = vsel %vm53, %v553, 0
    %v601 = vsel %vm53, %v554, 0
    %v604 = vsel %vm53, %v555, 0
    %v607 = vsel %vm53, %v556, 0
    %v610 = vsel %vm53, %v557, 0
    %v613 = vsel %vm53, %v558, 0
    %v616 = vsel %vm108, %v560, 0
    %618 = vmatprep.subr.mxu0 0.0
    %619 = vmatpush1.msra.mxu0 %v616
    %620 = vmatprep.subr.mxu0 0.0
    %621 = vmatpush1.msra.mxu0 0.0
    %622 = vmatprep.subr.mxu0 0.0
    %623 = vmatpush1.msra.mxu0 0.0
    %624 = vmatprep.subr.mxu0 0.0
    %625 = vmatpush1.msra.mxu0 0.0
    %626 = vmatprep.subr.mxu0 0.0
    %627 = vmatpush1.msra.mxu0 0.0
    %628 = vmatprep.subr.mxu0 0.0
    %629 = vmatpush1.msra.mxu0 0.0
    %630 = vmatprep.subr.mxu0 0.0
    %631 = vmatpush1.msra.mxu0 0.0
    %632 = vmatprep.subr.mxu0 0.0
    %633 = vmatpush1.msra.mxu0 0.0
    %634 = vmatprep.subr.mxu0 0.0
    %635 = vmatpush1.msra.mxu0 0.0
    %636 = vmatprep.subr.mxu0 0.0
    %637 = vmatpush1.msra.mxu0 0.0
    %638 = vmatprep.subr.mxu0 0.0
    %639 = vmatpush1.msra.mxu0 0.0
    %640 = vmatprep.subr.mxu0 0.0
    %641 = vmatpush1.msra.mxu0 0.0
    %642 = vmatprep.subr.mxu0 0.0
    %643 = vmatpush1.msra.mxu0 0.0
    %644 = vmatprep.subr.mxu0 0.0
    %645 = vmatpush1.msra.mxu0 0.0
    %646 = vmatprep.subr.mxu0 0.0
    %647 = vmatpush1.msra.mxu0 0.0
    %648 = vmatprep.subr.mxu0 0.0
    %649 = vmatpush1.msra.mxu0 0.0
    %650 = vmatprep.subr.mxu0 0.0
    %651 = vmatpush1.msra.mxu0 0.0
    %652 = vmatprep.subr.mxu0 0.0
    %653 = vmatpush1.msra.mxu0 0.0
    %654 = vmatprep.subr.mxu0 0.0
    %655 = vmatpush1.msra.mxu0 0.0
    %656 = vmatprep.subr.mxu0 0.0
    %657 = vmatpush1.msra.mxu0 0.0
    %658 = vmatprep.subr.mxu0 0.0
    %659 = vmatpush1.msra.mxu0 0.0
    %660 = vmatprep.subr.mxu0 0.0
    %661 = vmatpush1.msra.mxu0 0.0
    %662 = vmatprep.subr.mxu0 0.0
    %663 = vmatpush1.msra.mxu0 0.0
    %664 = vmatprep.subr.mxu0 0.0
    %665 = vmatpush1.msra.mxu0 0.0
    %666 = vmatprep.subr.mxu0 0.0
    %667 = vmatpush1.msra.mxu0 0.0
    %668 = vmatprep.subr.mxu0 0.0
    %669 = vmatpush1.msra.mxu0 0.0
    %670 = vmatprep.subr.mxu0 0.0
    %671 = vmatpush1.msra.mxu0 0.0
    %672 = vmatprep.subr.mxu0 0.0
    %673 = vmatpush1.msra.mxu0 0.0
    %674 = vmatprep.subr.mxu0 0.0
    %675 = vmatpush1.msra.mxu0 0.0
    %676 = vmatprep.subr.mxu0 0.0
    %677 = vmatpush1.msra.mxu0 0.0
    %678 = vmatprep.subr.mxu0 0.0
    %679 = vmatpush1.msra.mxu0 0.0
    %680 = vmatprep.subr.mxu0 0.0
    %681 = vmatpush1.msra.mxu0 0.0
    %682 = vmatprep.mubr.f32.mxu0 0.0
    %683 = vmatmul.mubr.f32.gmra.mrb[0].mxu0 %v562
    %v684 = vpop.f32.mrb[0].mxu0
    %v685 = vadd.f32 0.0, %v684
    %v686 = vpop.f32.mrb[0].mxu0
    %687 = vmatprep.mubr.f32.mxu0 0.0
    %688 = vmatmul.mubr.f32.gmra.mrb[0].mxu0 %v565
    %v689 = vpop.f32.mrb[0].mxu0
    %v690 = vadd.f32 0.0, %v689
    %v691 = vpop.f32.mrb[0].mxu0
    %692 = vmatprep.mubr.f32.mxu0 0.0
    %693 = vmatmul.mubr.f32.gmra.mrb[0].mxu0 %v568
    %v694 = vpop.f32.mrb[0].mxu0
    %v695 = vadd.f32 0.0, %v694
    %v696 = vpop.f32.mrb[0].mxu0
    %697 = vmatprep.mubr.f32.mxu0 0.0
    %698 = vmatmul.mubr.f32.gmra.mrb[0].mxu0 %v571
    %v699 = vpop.f32.mrb[0].mxu0
    %v700 = vadd.f32 0.0, %v699
    %v701 = vpop.f32.mrb[0].mxu0
    %702 = vmatprep.mubr.f32.mxu0 0.0
    %703 = vmatmul.mubr.f32.gmra.mrb[0].mxu0 %v574
    %v704 = vpop.f32.mrb[0].mxu0
    %v705 = vadd.f32 0.0, %v704
    %v706 = vpop.f32.mrb[0].mxu0
    %707 = vmatprep.mubr.f32.mxu0 0.0
    %708 = vmatmul.mubr.f32.gmra.mrb[0].mxu0 %v577
    %v709 = vpop.f32.mrb[0].mxu0
    %v710 = vadd.f32 0.0, %v709
    %v711 = vpop.f32.mrb[0].mxu0
    %712 = vmatprep.mubr.f32.mxu0 0.0
    %713 = vmatmul.mubr.f32.gmra.mrb[0].mxu0 %v580
    %v714 = vpop.f32.mrb[0].mxu0
    %v715 = vadd.f32 0.0, %v714
    %v716 = vpop.f32.mrb[0].mxu0
    %717 = vmatprep.mubr.f32.mxu0 0.0
    %718 = vmatmul.mubr.f32.gmra.mrb[0].mxu0 %v583
    %v719 = vpop.f32.mrb[0].mxu0
    %v720 = vadd.f32 0.0, %v719
    %v721 = vpop.f32.mrb[0].mxu0
    %722 = vmatprep.mubr.f32.mxu0 0.0
    %723 = vmatmul.mubr.f32.gmra.mrb[0].mxu0 %v586
    %v724 = vpop.f32.mrb[0].mxu0
    %v725 = vadd.f32 0.0, %v724
    %v726 = vpop.f32.mrb[0].mxu0
    %727 = vmatprep.mubr.f32.mxu0 0.0
    %728 = vmatmul.mubr.f32.gmra.mrb[0].mxu0 %v589
    %v729 = vpop.f32.mrb[0].mxu0
    %v730 = vadd.f32 0.0, %v729
    %v731 = vpop.f32.mrb[0].mxu0
    %732 = vmatprep.mubr.f32.mxu0 0.0
    %733 = vmatmul.mubr.f32.gmra.mrb[0].mxu0 %v592
    %v734 = vpop.f32.mrb[0].mxu0
    %v735 = vadd.f32 0.0, %v734
    %v736 = vpop.f32.mrb[0].mxu0
    %737 = vmatprep.mubr.f32.mxu0 0.0
    %738 = vmatmul.mubr.f32.gmra.mrb[0].mxu0 %v595
    %v739 = vpop.f32.mrb[0].mxu0
    %v740 = vadd.f32 0.0, %v739
    %v741 = vpop.f32.mrb[0].mxu0
    %742 = vmatprep.mubr.f32.mxu0 0.0
    %743 = vmatmul.mubr.f32.gmra.mrb[0].mxu0 %v598
    %v744 = vpop.f32.mrb[0].mxu0
    %v745 = vadd.f32 0.0, %v744
    %v746 = vpop.f32.mrb[0].mxu0
    %747 = vmatprep.mubr.f32.mxu0 0.0
    %748 = vmatmul.mubr.f32.gmra.mrb[0].mxu0 %v601
    %v749 = vpop.f32.mrb[0].mxu0
    %v750 = vadd.f32 0.0, %v749
    %v751 = vpop.f32.mrb[0].mxu0
    %752 = vmatprep.mubr.f32.mxu0 0.0
    %753 = vmatmul.mubr.f32.gmra.mrb[0].mxu0 %v604
    %v754 = vpop.f32.mrb[0].mxu0
    %v755 = vadd.f32 0.0, %v754
    %v756 = vpop.f32.mrb[0].mxu0
    %757 = vmatprep.mubr.f32.mxu0 0.0
    %758 = vmatmul.mubr.f32.gmra.mrb[0].mxu0 %v607
    %v759 = vpop.f32.mrb[0].mxu0
    %v760 = vadd.f32 0.0, %v759
    %v761 = vpop.f32.mrb[0].mxu0
    %762 = vmatprep.mubr.f32.mxu0 0.0
    %763 = vmatmul.mubr.f32.gmra.mrb[0].mxu0 %v610
    %v764 = vpop.f32.mrb[0].mxu0
    %v765 = vadd.f32 0.0, %v764
    %v766 = vpop.f32.mrb[0].mxu0
    %767 = vmatprep.mubr.f32.mxu0 0.0
    %768 = vmatmul.mubr.f32.gmra.mrb[0].mxu0 %v613
    %v769 = vpop.f32.mrb[0].mxu0
    %v770 = vadd.f32 0.0, %v769
    %v771 = vpop.f32.mrb[0].mxu0
    %772 = vdwg.mxu0
    %v773 = vadd.f32 %v523, %v685
    %v774 = vadd.f32 %v524, %v690
    %v775 = vadd.f32 %v525, %v695
    %v776 = vadd.f32 %v526, %v700
    %v777 = vadd.f32 %v527, %v705
    %v778 = vadd.f32 %v528, %v710
    %v779 = vadd.f32 %v529, %v715
    %v780 = vadd.f32 %v530, %v720
    %v781 = vadd.f32 %v531, %v725
    %v782 = vadd.f32 %v532, %v730
    %v783 = vadd.f32 %v533, %v735
    %v784 = vadd.f32 %v534, %v740
    %v785 = vadd.f32 %v535, %v745
    %v786 = vadd.f32 %v536, %v750
    %v787 = vadd.f32 %v537, %v755
    %v788 = vadd.f32 %v538, %v760
    %v789 = vadd.f32 %v539, %v765
    %v790 = vadd.f32 %v540, %v770
    %v791 = vmax.f32 %v773, 0.0
    %v792 = vmax.f32 %v774, 0.0
    %v793 = vmax.f32 %v775, 0.0
    %v794 = vmax.f32 %v776, 0.0
    %v795 = vmax.f32 %v777, 0.0
    %v796 = vmax.f32 %v778, 0.0
    %v797 = vmax.f32 %v779, 0.0
    %v798 = vmax.f32 %v780, 0.0
    %v799 = vmax.f32 %v781, 0.0
    %v800 = vmax.f32 %v782, 0.0
    %v801 = vmax.f32 %v783, 0.0
    %v802 = vmax.f32 %v784, 0.0
    %v803 = vmax.f32 %v785, 0.0
    %v804 = vmax.f32 %v786, 0.0
    %v805 = vmax.f32 %v787, 0.0
    %v806 = vmax.f32 %v788, 0.0
    %v807 = vmax.f32 %v789, 0.0
    %v808 = vmax.f32 %v790, 0.0
    %v809 = vld [vmem:[%s3] sm:$0xff]
    %v810 = vld [vmem:[%s3 + $0x8] sm:$0xff]
    %v811 = vld [vmem:[%s3 + $0x10] sm:$0xff]
    %v812 = vld [vmem:[%s5] sm:$0x7]
    %v814 = vlaneseq
    %v815 = vshrl.u32 %v814, 7
    %v816 = vsub.s32 0, %v815
    %v817 = vrot.slane %v812, %v816
    %v818 = vlaneseq
    %v819 = vshrl.u32 %v818, 7
    %v820 = vsub.s32 1, %v819
    %v821 = vrot.slane %v812, %v820
    %v822 = vlaneseq
    %v823 = vshrl.u32 %v822, 7
    %v824 = vsub.s32 2, %v823
    %v825 = vrot.slane %v812, %v824
    %vm829 = vcmask 64512
    %v831 = vsel %vm829, %v791, 0
    %v834 = vsel %vm829, %v792, 0
    %v837 = vsel %vm829, %v793, 0
    %v840 = vsel %vm829, %v794, 0
    %v843 = vsel %vm829, %v795, 0
    %v846 = vsel %vm829, %v796, 0
    %v849 = vsel %vm829, %v797, 0
    %v852 = vsel %vm829, %v798, 0
    %v855 = vsel %vm829, %v799, 0
    %v858 = vsel %vm829, %v800, 0
    %v861 = vsel %vm829, %v801, 0
    %v864 = vsel %vm829, %v802, 0
    %v867 = vsel %vm829, %v803, 0
    %v870 = vsel %vm829, %v804, 0
    %v873 = vsel %vm829, %v805, 0
    %v876 = vsel %vm829, %v806, 0
    %v879 = vsel %vm829, %v807, 0
    %v882 = vsel %vm829, %v808, 0
    %884 = vmatprep.subr.mxu0 %v810
    %885 = vmatpush1.msra.mxu0 %v809
    %886 = vmatprep.subr.mxu0 0.0
    %887 = vmatpush1.msra.mxu0 0.0
    %888 = vmatprep.subr.mxu0 0.0
    %889 = vmatpush1.msra.mxu0 0.0
    %890 = vmatprep.subr.mxu0 0.0
    %891 = vmatpush1.msra.mxu0 0.0
    %892 = vmatprep.subr.mxu0 0.0
    %893 = vmatpush1.msra.mxu0 0.0
    %894 = vmatprep.subr.mxu0 0.0
    %895 = vmatpush1.msra.mxu0 0.0
    %896 = vmatprep.subr.mxu0 0.0
    %897 = vmatpush1.msra.mxu0 0.0
    %898 = vmatprep.subr.mxu0 0.0
    %899 = vmatpush1.msra.mxu0 0.0
    %900 = vmatprep.subr.mxu0 0.0
    %901 = vmatpush1.msra.mxu0 0.0
    %902 = vmatprep.subr.mxu0 0.0
    %903 = vmatpush1.msra.mxu0 0.0
    %904 = vmatprep.subr.mxu0 0.0
    %905 = vmatpush1.msra.mxu0 0.0
    %906 = vmatprep.subr.mxu0 0.0
    %907 = vmatpush1.msra.mxu0 0.0
    %908 = vmatprep.subr.mxu0 0.0
    %909 = vmatpush1.msra.mxu0 0.0
    %910 = vmatprep.subr.mxu0 0.0
    %911 = vmatpush1.msra.mxu0 0.0
    %912 = vmatprep.subr.mxu0 0.0
    %913 = vmatpush1.msra.mxu0 0.0
    %914 = vmatprep.subr.mxu0 0.0
    %915 = vmatpush1.msra.mxu0 0.0
    %916 = vmatprep.subr.mxu0 0.0
    %917 = vmatpush1.msra.mxu0 0.0
    %918 = vmatprep.subr.mxu0 0.0
    %919 = vmatpush1.msra.mxu0 0.0
    %920 = vmatprep.subr.mxu0 0.0
    %921 = vmatpush1.msra.mxu0 0.0
    %922 = vmatprep.subr.mxu0 0.0
    %923 = vmatpush1.msra.mxu0 0.0
    %924 = vmatprep.subr.mxu0 0.0
    %925 = vmatpush1.msra.mxu0 0.0
    %926 = vmatprep.subr.mxu0 0.0
    %927 = vmatpush1.msra.mxu0 0.0
    %928 = vmatprep.subr.mxu0 0.0
    %929 = vmatpush1.msra.mxu0 0.0
    %930 = vmatprep.subr.mxu0 0.0
    %931 = vmatpush1.msra.mxu0 0.0
    %932 = vmatprep.subr.mxu0 0.0
    %933 = vmatpush1.msra.mxu0 0.0
    %934 = vmatprep.subr.mxu0 0.0
    %935 = vmatpush1.msra.mxu0 0.0
    %936 = vmatprep.subr.mxu0 0.0
    %937 = vmatpush1.msra.mxu0 0.0
    %938 = vmatprep.subr.mxu0 0.0
    %939 = vmatpush1.msra.mxu0 0.0
    %940 = vmatprep.subr.mxu0 0.0
    %941 = vmatpush1.msra.mxu0 0.0
    %942 = vmatprep.subr.mxu0 0.0
    %943 = vmatpush1.msra.mxu0 0.0
    %944 = vmatprep.subr.mxu0 0.0
    %945 = vmatpush1.msra.mxu0 0.0
    %946 = vmatprep.subr.mxu0 0.0
    %947 = vmatpush1.msra.mxu0 0.0
    %948 = vmatprep.mubr.f32.mxu0 0.0
    %949 = vmatmul.mubr.f32.gmra.mrb[0].mxu0 %v831
    %v950 = vpop.f32.mrb[0].mxu0
    %v951 = vadd.f32 %v817, %v950
    %v952 = vpop.f32.mrb[0].mxu0
    %v953 = vadd.f32 %v821, %v952
    %954 = vmatprep.mubr.f32.mxu0 0.0
    %955 = vmatmul.mubr.f32.gmra.mrb[0].mxu0 %v834
    %v956 = vpop.f32.mrb[0].mxu0
    %v957 = vadd.f32 %v817, %v956
    %v958 = vpop.f32.mrb[0].mxu0
    %v959 = vadd.f32 %v821, %v958
    %960 = vmatprep.mubr.f32.mxu0 0.0
    %961 = vmatmul.mubr.f32.gmra.mrb[0].mxu0 %v837
    %v962 = vpop.f32.mrb[0].mxu0
    %v963 = vadd.f32 %v817, %v962
    %v964 = vpop.f32.mrb[0].mxu0
    %v965 = vadd.f32 %v821, %v964
    %966 = vmatprep.mubr.f32.mxu0 0.0
    %967 = vmatmul.mubr.f32.gmra.mrb[0].mxu0 %v840
    %v968 = vpop.f32.mrb[0].mxu0
    %v969 = vadd.f32 %v817, %v968
    %v970 = vpop.f32.mrb[0].mxu0
    %v971 = vadd.f32 %v821, %v970
    %972 = vmatprep.mubr.f32.mxu0 0.0
    %973 = vmatmul.mubr.f32.gmra.mrb[0].mxu0 %v843
    %v974 = vpop.f32.mrb[0].mxu0
    %v975 = vadd.f32 %v817, %v974
    %v976 = vpop.f32.mrb[0].mxu0
    %v977 = vadd.f32 %v821, %v976
    %978 = vmatprep.mubr.f32.mxu0 0.0
    %979 = vmatmul.mubr.f32.gmra.mrb[0].mxu0 %v846
    %v980 = vpop.f32.mrb[0].mxu0
    %v981 = vadd.f32 %v817, %v980
    %v982 = vpop.f32.mrb[0].mxu0
    %v983 = vadd.f32 %v821, %v982
    %984 = vmatprep.mubr.f32.mxu0 0.0
    %985 = vmatmul.mubr.f32.gmra.mrb[0].mxu0 %v849
    %v986 = vpop.f32.mrb[0].mxu0
    %v987 = vadd.f32 %v817, %v986
    %v988 = vpop.f32.mrb[0].mxu0
    %v989 = vadd.f32 %v821, %v988
    %990 = vmatprep.mubr.f32.mxu0 0.0
    %991 = vmatmul.mubr.f32.gmra.mrb[0].mxu0 %v852
    %v992 = vpop.f32.mrb[0].mxu0
    %v993 = vadd.f32 %v817, %v992
    %v994 = vpop.f32.mrb[0].mxu0
    %v995 = vadd.f32 %v821, %v994
    %996 = vmatprep.mubr.f32.mxu0 0.0
    %997 = vmatmul.mubr.f32.gmra.mrb[0].mxu0 %v855
    %v998 = vpop.f32.mrb[0].mxu0
    %v999 = vadd.f32 %v817, %v998
    %v1000 = vpop.f32.mrb[0].mxu0
    %v1001 = vadd.f32 %v821, %v1000
    %1002 = vmatprep.mubr.f32.mxu0 0.0
    %1003 = vmatmul.mubr.f32.gmra.mrb[0].mxu0 %v858
    %v1004 = vpop.f32.mrb[0].mxu0
    %v1005 = vadd.f32 %v817, %v1004
    %v1006 = vpop.f32.mrb[0].mxu0
    %v1007 = vadd.f32 %v821, %v1006
    %1008 = vmatprep.mubr.f32.mxu0 0.0
    %1009 = vmatmul.mubr.f32.gmra.mrb[0].mxu0 %v861
    %v1010 = vpop.f32.mrb[0].mxu0
    %v1011 = vadd.f32 %v817, %v1010
    %v1012 = vpop.f32.mrb[0].mxu0
    %v1013 = vadd.f32 %v821, %v1012
    %1014 = vmatprep.mubr.f32.mxu0 0.0
    %1015 = vmatmul.mubr.f32.gmra.mrb[0].mxu0 %v864
    %v1016 = vpop.f32.mrb[0].mxu0
    %v1017 = vadd.f32 %v817, %v1016
    %v1018 = vpop.f32.mrb[0].mxu0
    %v1019 = vadd.f32 %v821, %v1018
    %1020 = vmatprep.mubr.f32.mxu0 0.0
    %1021 = vmatmul.mubr.f32.gmra.mrb[0].mxu0 %v867
    %v1022 = vpop.f32.mrb[0].mxu0
    %v1023 = vadd.f32 %v817, %v1022
    %v1024 = vpop.f32.mrb[0].mxu0
    %v1025 = vadd.f32 %v821, %v1024
    %1026 = vmatprep.mubr.f32.mxu0 0.0
    %1027 = vmatmul.mubr.f32.gmra.mrb[0].mxu0 %v870
    %v1028 = vpop.f32.mrb[0].mxu0
    %v1029 = vadd.f32 %v817, %v1028
    %v1030 = vpop.f32.mrb[0].mxu0
    %v1031 = vadd.f32 %v821, %v1030
    %1032 = vmatprep.mubr.f32.mxu0 0.0
    %1033 = vmatmul.mubr.f32.gmra.mrb[0].mxu0 %v873
    %v1034 = vpop.f32.mrb[0].mxu0
    %v1035 = vadd.f32 %v817, %v1034
    %v1036 = vpop.f32.mrb[0].mxu0
    %v1037 = vadd.f32 %v821, %v1036
    %1038 = vmatprep.mubr.f32.mxu0 0.0
    %1039 = vmatmul.mubr.f32.gmra.mrb[0].mxu0 %v876
    %v1040 = vpop.f32.mrb[0].mxu0
    %v1041 = vadd.f32 %v817, %v1040
    %v1042 = vpop.f32.mrb[0].mxu0
    %v1043 = vadd.f32 %v821, %v1042
    %1044 = vmatprep.mubr.f32.mxu0 0.0
    %1045 = vmatmul.mubr.f32.gmra.mrb[0].mxu0 %v879
    %v1046 = vpop.f32.mrb[0].mxu0
    %v1047 = vadd.f32 %v817, %v1046
    %v1048 = vpop.f32.mrb[0].mxu0
    %v1049 = vadd.f32 %v821, %v1048
    %1050 = vmatprep.mubr.f32.mxu0 0.0
    %1051 = vmatmul.mubr.f32.gmra.mrb[0].mxu0 %v882
    %v1052 = vpop.f32.mrb[0].mxu0
    %v1053 = vadd.f32 %v817, %v1052
    %v1054 = vpop.f32.mrb[0].mxu0
    %v1055 = vadd.f32 %v821, %v1054
    %1056 = vdwg.mxu0
    %1057 = vmatprep.subr.mxu0 0.0
    %1058 = vmatpush1.msra.mxu0 %v811
    %1059 = vmatprep.subr.mxu0 0.0
    %1060 = vmatpush1.msra.mxu0 0.0
    %1061 = vmatprep.subr.mxu0 0.0
    %1062 = vmatpush1.msra.mxu0 0.0
    %1063 = vmatprep.subr.mxu0 0.0
    %1064 = vmatpush1.msra.mxu0 0.0
    %1065 = vmatprep.subr.mxu0 0.0
    %1066 = vmatpush1.msra.mxu0 0.0
    %1067 = vmatprep.subr.mxu0 0.0
    %1068 = vmatpush1.msra.mxu0 0.0
    %1069 = vmatprep.subr.mxu0 0.0
    %1070 = vmatpush1.msra.mxu0 0.0
    %1071 = vmatprep.subr.mxu0 0.0
    %1072 = vmatpush1.msra.mxu0 0.0
    %1073 = vmatprep.subr.mxu0 0.0
    %1074 = vmatpush1.msra.mxu0 0.0
    %1075 = vmatprep.subr.mxu0 0.0
    %1076 = vmatpush1.msra.mxu0 0.0
    %1077 = vmatprep.subr.mxu0 0.0
    %1078 = vmatpush1.msra.mxu0 0.0
    %1079 = vmatprep.subr.mxu0 0.0
    %1080 = vmatpush1.msra.mxu0 0.0
    %1081 = vmatprep.subr.mxu0 0.0
    %1082 = vmatpush1.msra.mxu0 0.0
    %1083 = vmatprep.subr.mxu0 0.0
    %1084 = vmatpush1.msra.mxu0 0.0
    %1085 = vmatprep.subr.mxu0 0.0
    %1086 = vmatpush1.msra.mxu0 0.0
    %1087 = vmatprep.subr.mxu0 0.0
    %1088 = vmatpush1.msra.mxu0 0.0
    %1089 = vmatprep.subr.mxu0 0.0
    %1090 = vmatpush1.msra.mxu0 0.0
    %1091 = vmatprep.subr.mxu0 0.0
    %1092 = vmatpush1.msra.mxu0 0.0
    %1093 = vmatprep.subr.mxu0 0.0
    %1094 = vmatpush1.msra.mxu0 0.0
    %1095 = vmatprep.subr.mxu0 0.0
    %1096 = vmatpush1.msra.mxu0 0.0
    %1097 = vmatprep.subr.mxu0 0.0
    %1098 = vmatpush1.msra.mxu0 0.0
    %1099 = vmatprep.subr.mxu0 0.0
    %1100 = vmatpush1.msra.mxu0 0.0
    %1101 = vmatprep.subr.mxu0 0.0
    %1102 = vmatpush1.msra.mxu0 0.0
    %1103 = vmatprep.subr.mxu0 0.0
    %1104 = vmatpush1.msra.mxu0 0.0
    %1105 = vmatprep.subr.mxu0 0.0
    %1106 = vmatpush1.msra.mxu0 0.0
    %1107 = vmatprep.subr.mxu0 0.0
    %1108 = vmatpush1.msra.mxu0 0.0
    %1109 = vmatprep.subr.mxu0 0.0
    %1110 = vmatpush1.msra.mxu0 0.0
    %1111 = vmatprep.subr.mxu0 0.0
    %1112 = vmatpush1.msra.mxu0 0.0
    %1113 = vmatprep.subr.mxu0 0.0
    %1114 = vmatpush1.msra.mxu0 0.0
    %1115 = vmatprep.subr.mxu0 0.0
    %1116 = vmatpush1.msra.mxu0 0.0
    %1117 = vmatprep.subr.mxu0 0.0
    %1118 = vmatpush1.msra.mxu0 0.0
    %1119 = vmatprep.subr.mxu0 0.0
    %1120 = vmatpush1.msra.mxu0 0.0
    %1121 = vmatprep.mubr.f32.mxu0 0.0
    %1122 = vmatmul.mubr.f32.gmra.mrb[0].mxu0 %v831
    %v1123 = vpop.f32.mrb[0].mxu0
    %v1124 = vadd.f32 %v825, %v1123
    %v1125 = vpop.f32.mrb[0].mxu0
    %1126 = vmatprep.mubr.f32.mxu0 0.0
    %1127 = vmatmul.mubr.f32.gmra.mrb[0].mxu0 %v834
    %v1128 = vpop.f32.mrb[0].mxu0
    %v1129 = vadd.f32 %v825, %v1128
    %v1130 = vpop.f32.mrb[0].mxu0
    %1131 = vmatprep.mubr.f32.mxu0 0.0
    %1132 = vmatmul.mubr.f32.gmra.mrb[0].mxu0 %v837
    %v1133 = vpop.f32.mrb[0].mxu0
    %v1134 = vadd.f32 %v825, %v1133
    %v1135 = vpop.f32.mrb[0].mxu0
    %1136 = vmatprep.mubr.f32.mxu0 0.0
    %1137 = vmatmul.mubr.f32.gmra.mrb[0].mxu0 %v840
    %v1138 = vpop.f32.mrb[0].mxu0
    %v1139 = vadd.f32 %v825, %v1138
    %v1140 = vpop.f32.mrb[0].mxu0
    %1141 = vmatprep.mubr.f32.mxu0 0.0
    %1142 = vmatmul.mubr.f32.gmra.mrb[0].mxu0 %v843
    %v1143 = vpop.f32.mrb[0].mxu0
    %v1144 = vadd.f32 %v825, %v1143
    %v1145 = vpop.f32.mrb[0].mxu0
    %1146 = vmatprep.mubr.f32.mxu0 0.0
    %1147 = vmatmul.mubr.f32.gmra.mrb[0].mxu0 %v846
    %v1148 = vpop.f32.mrb[0].mxu0
    %v1149 = vadd.f32 %v825, %v1148
    %v1150 = vpop.f32.mrb[0].mxu0
    %1151 = vmatprep.mubr.f32.mxu0 0.0
    %1152 = vmatmul.mubr.f32.gmra.mrb[0].mxu0 %v849
    %v1153 = vpop.f32.mrb[0].mxu0
    %v1154 = vadd.f32 %v825, %v1153
    %v1155 = vpop.f32.mrb[0].mxu0
    %1156 = vmatprep.mubr.f32.mxu0 0.0
    %1157 = vmatmul.mubr.f32.gmra.mrb[0].mxu0 %v852
    %v1158 = vpop.f32.mrb[0].mxu0
    %v1159 = vadd.f32 %v825, %v1158
    %v1160 = vpop.f32.mrb[0].mxu0
    %1161 = vmatprep.mubr.f32.mxu0 0.0
    %1162 = vmatmul.mubr.f32.gmra.mrb[0].mxu0 %v855
    %v1163 = vpop.f32.mrb[0].mxu0
    %v1164 = vadd.f32 %v825, %v1163
    %v1165 = vpop.f32.mrb[0].mxu0
    %1166 = vmatprep.mubr.f32.mxu0 0.0
    %1167 = vmatmul.mubr.f32.gmra.mrb[0].mxu0 %v858
    %v1168 = vpop.f32.mrb[0].mxu0
    %v1169 = vadd.f32 %v825, %v1168
    %v1170 = vpop.f32.mrb[0].mxu0
    %1171 = vmatprep.mubr.f32.mxu0 0.0
    %1172 = vmatmul.mubr.f32.gmra.mrb[0].mxu0 %v861
    %v1173 = vpop.f32.mrb[0].mxu0
    %v1174 = vadd.f32 %v825, %v1173
    %v1175 = vpop.f32.mrb[0].mxu0
    %1176 = vmatprep.mubr.f32.mxu0 0.0
    %1177 = vmatmul.mubr.f32.gmra.mrb[0].mxu0 %v864
    %v1178 = vpop.f32.mrb[0].mxu0
    %v1179 = vadd.f32 %v825, %v1178
    %v1180 = vpop.f32.mrb[0].mxu0
    %1181 = vmatprep.mubr.f32.mxu0 0.0
    %1182 = vmatmul.mubr.f32.gmra.mrb[0].mxu0 %v867
    %v1183 = vpop.f32.mrb[0].mxu0
    %v1184 = vadd.f32 %v825, %v1183
    %v1185 = vpop.f32.mrb[0].mxu0
    %1186 = vmatprep.mubr.f32.mxu0 0.0
    %1187 = vmatmul.mubr.f32.gmra.mrb[0].mxu0 %v870
    %v1188 = vpop.f32.mrb[0].mxu0
    %v1189 = vadd.f32 %v825, %v1188
    %v1190 = vpop.f32.mrb[0].mxu0
    %1191 = vmatprep.mubr.f32.mxu0 0.0
    %1192 = vmatmul.mubr.f32.gmra.mrb[0].mxu0 %v873
    %v1193 = vpop.f32.mrb[0].mxu0
    %v1194 = vadd.f32 %v825, %v1193
    %v1195 = vpop.f32.mrb[0].mxu0
    %1196 = vmatprep.mubr.f32.mxu0 0.0
    %1197 = vmatmul.mubr.f32.gmra.mrb[0].mxu0 %v876
    %v1198 = vpop.f32.mrb[0].mxu0
    %v1199 = vadd.f32 %v825, %v1198
    %v1200 = vpop.f32.mrb[0].mxu0
    %1201 = vmatprep.mubr.f32.mxu0 0.0
    %1202 = vmatmul.mubr.f32.gmra.mrb[0].mxu0 %v879
    %v1203 = vpop.f32.mrb[0].mxu0
    %v1204 = vadd.f32 %v825, %v1203
    %v1205 = vpop.f32.mrb[0].mxu0
    %1206 = vmatprep.mubr.f32.mxu0 0.0
    %1207 = vmatmul.mubr.f32.gmra.mrb[0].mxu0 %v882
    %v1208 = vpop.f32.mrb[0].mxu0
    %v1209 = vadd.f32 %v825, %v1208
    %v1210 = vpop.f32.mrb[0].mxu0
    %1211 = vdwg.mxu0
    %1212 = vst [vmem:[#allocation2] sm:$0xff] %v951
    %1213 = vst [vmem:[#allocation2 + $0x8] sm:$0xff] %v953
    %1214 = vst [vmem:[#allocation2 + $0x10] sm:$0xff] %v1124
    %1215 = vst [vmem:[#allocation2 + $0x18] sm:$0xff] %v957
    %1216 = vst [vmem:[#allocation2 + $0x20] sm:$0xff] %v959
    %1217 = vst [vmem:[#allocation2 + $0x28] sm:$0xff] %v1129
    %1218 = vst [vmem:[#allocation2 + $0x30] sm:$0xff] %v963
    %1219 = vst [vmem:[#allocation2 + $0x38] sm:$0xff] %v965
    %1220 = vst [vmem:[#allocation2 + $0x40] sm:$0xff] %v1134
    %1221 = vst [vmem:[#allocation2 + $0x48] sm:$0xff] %v969
    %1222 = vst [vmem:[#allocation2 + $0x50] sm:$0xff] %v971
    %1223 = vst [vmem:[#allocation2 + $0x58] sm:$0xff] %v1139
    %1224 = vst [vmem:[#allocation2 + $0x60] sm:$0xff] %v975
    %1225 = vst [vmem:[#allocation2 + $0x68] sm:$0xff] %v977
    %1226 = vst [vmem:[#allocation2 + $0x70] sm:$0xff] %v1144
    %1227 = vst [vmem:[#allocation2 + $0x78] sm:$0xff] %v981
    %1228 = vst [vmem:[#allocation2 + $0x80] sm:$0xff] %v983
    %1229 = vst [vmem:[#allocation2 + $0x88] sm:$0xff] %v1149
    %1230 = vst [vmem:[#allocation2 + $0x90] sm:$0xff] %v987
    %1231 = vst [vmem:[#allocation2 + $0x98] sm:$0xff] %v989
    %1232 = vst [vmem:[#allocation2 + $0xa0] sm:$0xff] %v1154
    %1233 = vst [vmem:[#allocation2 + $0xa8] sm:$0xff] %v993
    %1234 = vst [vmem:[#allocation2 + $0xb0] sm:$0xff] %v995
    %1235 = vst [vmem:[#allocation2 + $0xb8] sm:$0xff] %v1159
    %1236 = vst [vmem:[#allocation2 + $0xc0] sm:$0xff] %v999
    %1237 = vst [vmem:[#allocation2 + $0xc8] sm:$0xff] %v1001
    %1238 = vst [vmem:[#allocation2 + $0xd0] sm:$0xff] %v1164
    %1239 = vst [vmem:[#allocation2 + $0xd8] sm:$0xff] %v1005
    %1240 = vst [vmem:[#allocation2 + $0xe0] sm:$0xff] %v1007
    %1241 = vst [vmem:[#allocation2 + $0xe8] sm:$0xff] %v1169
    %1242 = vst [vmem:[#allocation2 + $0xf0] sm:$0xff] %v1011
    %1243 = vst [vmem:[#allocation2 + $0xf8] sm:$0xff] %v1013
    %1244 = vst [vmem:[#allocation2 + $0x100] sm:$0xff] %v1174
    %1245 = vst [vmem:[#allocation2 + $0x108] sm:$0xff] %v1017
    %1246 = vst [vmem:[#allocation2 + $0x110] sm:$0xff] %v1019
    %1247 = vst [vmem:[#allocation2 + $0x118] sm:$0xff] %v1179
    %1248 = vst [vmem:[#allocation2 + $0x120] sm:$0xff] %v1023
    %1249 = vst [vmem:[#allocation2 + $0x128] sm:$0xff] %v1025
    %1250 = vst [vmem:[#allocation2 + $0x130] sm:$0xff] %v1184
    %1251 = vst [vmem:[#allocation2 + $0x138] sm:$0xff] %v1029
    %1252 = vst [vmem:[#allocation2 + $0x140] sm:$0xff] %v1031
    %1253 = vst [vmem:[#allocation2 + $0x148] sm:$0xff] %v1189
    %1254 = vst [vmem:[#allocation2 + $0x150] sm:$0xff] %v1035
    %1255 = vst [vmem:[#allocation2 + $0x158] sm:$0xff] %v1037
    %1256 = vst [vmem:[#allocation2 + $0x160] sm:$0xff] %v1194
    %1257 = vst [vmem:[#allocation2 + $0x168] sm:$0xff] %v1041
    %1258 = vst [vmem:[#allocation2 + $0x170] sm:$0xff] %v1043
    %1259 = vst [vmem:[#allocation2 + $0x178] sm:$0xff] %v1199
    %1260 = vst [vmem:[#allocation2 + $0x180] sm:$0xff] %v1047
    %1261 = vst [vmem:[#allocation2 + $0x188] sm:$0xff] %v1049
    %1262 = vst [vmem:[#allocation2 + $0x190] sm:$0xff] %v1204
    %1263 = vst [vmem:[#allocation2 + $0x198] sm:$0xff] %v1053
    %1264 = vst [vmem:[#allocation2 + $0x1a0] sm:$0xff] %v1055
    %1265 = vst [vmem:[#allocation2 + $0x1a8] sm:$0xff] %v1209
    %v1266 = vld [vmem:[#allocation2] sm:$0xff]
    %v1267 = vld [vmem:[#allocation2 + $0x8] sm:$0xff]
    %v1268 = vld [vmem:[#allocation2 + $0x10] sm:$0xff]
    %v1269 = vld [vmem:[%s4] sm:$0xff]
    %v1270 = vld [vmem:[%s4 + $0x8] sm:$0xff]
    %v1271 = vld [vmem:[%s4 + $0x10] sm:$0xff]
    %v1272 = vld [vmem:[%s4 + $0x18] sm:$0xff]
    %v1273 = vld [vmem:[%s4 + $0x20] sm:$0xff]
    %v1274 = vld [vmem:[%s4 + $0x28] sm:$0xff]
    %v1275 = vld [vmem:[%s6] sm:$0x7]
    %v1277 = vlaneseq
    %v1278 = vshrl.u32 %v1277, 7
    %v1279 = vsub.s32 0, %v1278
    %v1280 = vrot.slane %v1275, %v1279
    %v1281 = vlaneseq
    %v1282 = vshrl.u32 %v1281, 7
    %v1283 = vsub.s32 1, %v1282
    %v1284 = vrot.slane %v1275, %v1283
    %v1285 = vlaneseq
    %v1286 = vshrl.u32 %v1285, 7
    %v1287 = vsub.s32 2, %v1286
    %v1288 = vrot.slane %v1275, %v1287
    %vm1292 = vcmask 130048
    %v1294 = vsel %vm1292, 0.0, 0
    %1296 = vmatprep.subr.mxu0 %v1270
    %1297 = vmatpush1.msra.mxu0 %v1269
    %1298 = vmatprep.subr.mxu0 %v1273
    %1299 = vmatpush1.msra.mxu0 %v1272
    %1300 = vmatprep.subr.mxu0 0.0
    %1301 = vmatpush1.msra.mxu0 0.0
    %1302 = vmatprep.subr.mxu0 0.0
    %1303 = vmatpush1.msra.mxu0 0.0
    %1304 = vmatprep.subr.mxu0 0.0
    %1305 = vmatpush1.msra.mxu0 0.0
    %1306 = vmatprep.subr.mxu0 0.0
    %1307 = vmatpush1.msra.mxu0 0.0
    %1308 = vmatprep.subr.mxu0 0.0
    %1309 = vmatpush1.msra.mxu0 0.0
    %1310 = vmatprep.subr.mxu0 0.0
    %1311 = vmatpush1.msra.mxu0 0.0
    %1312 = vmatprep.subr.mxu0 0.0
    %1313 = vmatpush1.msra.mxu0 0.0
    %1314 = vmatprep.subr.mxu0 0.0
    %1315 = vmatpush1.msra.mxu0 0.0
    %1316 = vmatprep.subr.mxu0 0.0
    %1317 = vmatpush1.msra.mxu0 0.0
    %1318 = vmatprep.subr.mxu0 0.0
    %1319 = vmatpush1.msra.mxu0 0.0
    %1320 = vmatprep.subr.mxu0 0.0
    %1321 = vmatpush1.msra.mxu0 0.0
    %1322 = vmatprep.subr.mxu0 0.0
    %1323 = vmatpush1.msra.mxu0 0.0
    %1324 = vmatprep.subr.mxu0 0.0
    %1325 = vmatpush1.msra.mxu0 0.0
    %1326 = vmatprep.subr.mxu0 0.0
    %1327 = vmatpush1.msra.mxu0 0.0
    %1328 = vmatprep.subr.mxu0 0.0
    %1329 = vmatpush1.msra.mxu0 0.0
    %1330 = vmatprep.subr.mxu0 0.0
    %1331 = vmatpush1.msra.mxu0 0.0
    %1332 = vmatprep.subr.mxu0 0.0
    %1333 = vmatpush1.msra.mxu0 0.0
    %1334 = vmatprep.subr.mxu0 0.0
    %1335 = vmatpush1.msra.mxu0 0.0
    %1336 = vmatprep.subr.mxu0 0.0
    %1337 = vmatpush1.msra.mxu0 0.0
    %1338 = vmatprep.subr.mxu0 0.0
    %1339 = vmatpush1.msra.mxu0 0.0
    %1340 = vmatprep.subr.mxu0 0.0
    %1341 = vmatpush1.msra.mxu0 0.0
    %1342 = vmatprep.subr.mxu0 0.0
    %1343 = vmatpush1.msra.mxu0 0.0
    %1344 = vmatprep.subr.mxu0 0.0
    %1345 = vmatpush1.msra.mxu0 0.0
    %1346 = vmatprep.subr.mxu0 0.0
    %1347 = vmatpush1.msra.mxu0 0.0
    %1348 = vmatprep.subr.mxu0 0.0
    %1349 = vmatpush1.msra.mxu0 0.0
    %1350 = vmatprep.subr.mxu0 0.0
    %1351 = vmatpush1.msra.mxu0 0.0
    %1352 = vmatprep.subr.mxu0 0.0
    %1353 = vmatpush1.msra.mxu0 0.0
    %1354 = vmatprep.subr.mxu0 0.0
    %1355 = vmatpush1.msra.mxu0 0.0
    %1356 = vmatprep.subr.mxu0 0.0
    %1357 = vmatpush1.msra.mxu0 0.0
    %1358 = vmatprep.subr.mxu0 0.0
    %1359 = vmatpush1.msra.mxu0 0.0
    %1360 = vmatprep.mubr.f32.mxu0 0.0
    %1361 = vmatmul.mubr.f32.gmra.mrb[0].mxu0 %v1294
    %v1362 = vpop.f32.mrb[0].mxu0
    %v1363 = vadd.f32 %v1280, %v1362
    %v1364 = vpop.f32.mrb[0].mxu0
    %v1365 = vadd.f32 %v1284, %v1364
    %1366 = vdwg.mxu0
    %1367 = vmatprep.subr.mxu0 0.0
    %1368 = vmatpush1.msra.mxu0 %v1271
    %1369 = vmatprep.subr.mxu0 0.0
    %1370 = vmatpush1.msra.mxu0 %v1274
    %1371 = vmatprep.subr.mxu0 0.0
    %1372 = vmatpush1.msra.mxu0 0.0
    %1373 = vmatprep.subr.mxu0 0.0
    %1374 = vmatpush1.msra.mxu0 0.0
    %1375 = vmatprep.subr.mxu0 0.0
    %1376 = vmatpush1.msra.mxu0 0.0
    %1377 = vmatprep.subr.mxu0 0.0
    %1378 = vmatpush1.msra.mxu0 0.0
    %1379 = vmatprep.subr.mxu0 0.0
    %1380 = vmatpush1.msra.mxu0 0.0
    %1381 = vmatprep.subr.mxu0 0.0
    %1382 = vmatpush1.msra.mxu0 0.0
    %1383 = vmatprep.subr.mxu0 0.0
    %1384 = vmatpush1.msra.mxu0 0.0
    %1385 = vmatprep.subr.mxu0 0.0
    %1386 = vmatpush1.msra.mxu0 0.0
    %1387 = vmatprep.subr.mxu0 0.0
    %1388 = vmatpush1.msra.mxu0 0.0
    %1389 = vmatprep.subr.mxu0 0.0
    %1390 = vmatpush1.msra.mxu0 0.0
    %1391 = vmatprep.subr.mxu0 0.0
    %1392 = vmatpush1.msra.mxu0 0.0
    %1393 = vmatprep.subr.mxu0 0.0
    %1394 = vmatpush1.msra.mxu0 0.0
    %1395 = vmatprep.subr.mxu0 0.0
    %1396 = vmatpush1.msra.mxu0 0.0
    %1397 = vmatprep.subr.mxu0 0.0
    %1398 = vmatpush1.msra.mxu0 0.0
    %1399 = vmatprep.subr.mxu0 0.0
    %1400 = vmatpush1.msra.mxu0 0.0
    %1401 = vmatprep.subr.mxu0 0.0
    %1402 = vmatpush1.msra.mxu0 0.0
    %1403 = vmatprep.subr.mxu0 0.0
    %1404 = vmatpush1.msra.mxu0 0.0
    %1405 = vmatprep.subr.mxu0 0.0
    %1406 = vmatpush1.msra.mxu0 0.0
    %1407 = vmatprep.subr.mxu0 0.0
    %1408 = vmatpush1.msra.mxu0 0.0
    %1409 = vmatprep.subr.mxu0 0.0
    %1410 = vmatpush1.msra.mxu0 0.0
    %1411 = vmatprep.subr.mxu0 0.0
    %1412 = vmatpush1.msra.mxu0 0.0
    %1413 = vmatprep.subr.mxu0 0.0
    %1414 = vmatpush1.msra.mxu0 0.0
    %1415 = vmatprep.subr.mxu0 0.0
    %1416 = vmatpush1.msra.mxu0 0.0
    %1417 = vmatprep.subr.mxu0 0.0
    %1418 = vmatpush1.msra.mxu0 0.0
    %1419 = vmatprep.subr.mxu0 0.0
    %1420 = vmatpush1.msra.mxu0 0.0
    %1421 = vmatprep.subr.mxu0 0.0
    %1422 = vmatpush1.msra.mxu0 0.0
    %1423 = vmatprep.subr.mxu0 0.0
    %1424 = vmatpush1.msra.mxu0 0.0
    %1425 = vmatprep.subr.mxu0 0.0
    %1426 = vmatpush1.msra.mxu0 0.0
    %1427 = vmatprep.subr.mxu0 0.0
    %1428 = vmatpush1.msra.mxu0 0.0
    %1429 = vmatprep.subr.mxu0 0.0
    %1430 = vmatpush1.msra.mxu0 0.0
    %1431 = vmatprep.mubr.f32.mxu0 0.0
    %1432 = vmatmul.mubr.f32.gmra.mrb[0].mxu0 %v1294
    %v1433 = vpop.f32.mrb[0].mxu0
    %v1434 = vadd.f32 %v1288, %v1433
    %v1435 = vpop.f32.mrb[0].mxu0
    %1436 = vdwg.mxu0
    %v1437 = vadd.f32 %v1266, %v1363
    %v1438 = vxor.u32 %v1437, 2147483648
    %v1439 = vmul.f32 %v1438, 1.442695
    %v1440 = vpow.pop %v1439
    %v1441 = vadd.f32 %v1440, 1.0
    %v1442 = vrcp.pop %v1441
    %v1443 = vmul.f32 1.0, %v1442
    %v1444 = vadd.f32 %v1267, %v1365
    %v1445 = vxor.u32 %v1444, 2147483648
    %v1446 = vmul.f32 %v1445, 1.442695
    %v1447 = vpow.pop %v1446
    %v1448 = vadd.f32 %v1447, 1.0
    %v1449 = vrcp.pop %v1448
    %v1450 = vmul.f32 1.0, %v1449
    %v1451 = vmul.f32 %v1443, %v1434
    %v1452 = vadd.f32 %v1268, %v1451
    %v1453 = vtanh.pop %v1452
    %v1454 = vsub.f32 1.0, %v1450
    %v1455 = vmul.f32 %v1454, %v1453
    %v1456 = vmul.f32 %v1450, 0.0
    %v1457 = vadd.f32 %v1455, %v1456
    %v1458 = vld [vmem:[%s7] sm:$0xff]
    %v1459 = vld [vmem:[%s7 + $0x8] sm:$0xff]
    %v1460 = vld [vmem:[#allocation2 + $0x18] sm:$0xff]
    %v1461 = vld [vmem:[#allocation2 + $0x20] sm:$0xff]
    %v1462 = vld [vmem:[#allocation2 + $0x28] sm:$0xff]
    %v1464 = vsel %vm1292, %v1457, 0
    %1466 = vmatprep.subr.mxu0 %v1270
    %1467 = vmatpush1.msra.mxu0 %v1269
    %1468 = vmatprep.subr.mxu0 %v1273
    %1469 = vmatpush1.msra.mxu0 %v1272
    %1470 = vmatprep.subr.mxu0 0.0
    %1471 = vmatpush1.msra.mxu0 0.0
    %1472 = vmatprep.subr.mxu0 0.0
    %1473 = vmatpush1.msra.mxu0 0.0
    %1474 = vmatprep.subr.mxu0 0.0
    %1475 = vmatpush1.msra.mxu0 0.0
    %1476 = vmatprep.subr.mxu0 0.0
    %1477 = vmatpush1.msra.mxu0 0.0
    %1478 = vmatprep.subr.mxu0 0.0
    %1479 = vmatpush1.msra.mxu0 0.0
    %1480 = vmatprep.subr.mxu0 0.0
    %1481 = vmatpush1.msra.mxu0 0.0
    %1482 = vmatprep.subr.mxu0 0.0
    %1483 = vmatpush1.msra.mxu0 0.0
    %1484 = vmatprep.subr.mxu0 0.0
    %1485 = vmatpush1.msra.mxu0 0.0
    %1486 = vmatprep.subr.mxu0 0.0
    %1487 = vmatpush1.msra.mxu0 0.0
    %1488 = vmatprep.subr.mxu0 0.0
    %1489 = vmatpush1.msra.mxu0 0.0
    %1490 = vmatprep.subr.mxu0 0.0
    %1491 = vmatpush1.msra.mxu0 0.0
    %1492 = vmatprep.subr.mxu0 0.0
    %1493 = vmatpush1.msra.mxu0 0.0
    %1494 = vmatprep.subr.mxu0 0.0
    %1495 = vmatpush1.msra.mxu0 0.0
    %1496 = vmatprep.subr.mxu0 0.0
    %1497 = vmatpush1.msra.mxu0 0.0
    %1498 = vmatprep.subr.mxu0 0.0
    %1499 = vmatpush1.msra.mxu0 0.0
    %1500 = vmatprep.subr.mxu0 0.0
    %1501 = vmatpush1.msra.mxu0 0.0
    %1502 = vmatprep.subr.mxu0 0.0
    %1503 = vmatpush1.msra.mxu0 0.0
    %1504 = vmatprep.subr.mxu0 0.0
    %1505 = vmatpush1.msra.mxu0 0.0
    %1506 = vmatprep.subr.mxu0 0.0
    %1507 = vmatpush1.msra.mxu0 0.0
    %1508 = vmatprep.subr.mxu0 0.0
    %1509 = vmatpush1.msra.mxu0 0.0
    %1510 = vmatprep.subr.mxu0 0.0
    %1511 = vmatpush1.msra.mxu0 0.0
    %1512 = vmatprep.subr.mxu0 0.0
    %1513 = vmatpush1.msra.mxu0 0.0
    %1514 = vmatprep.subr.mxu0 0.0
    %1515 = vmatpush1.msra.mxu0 0.0
    %1516 = vmatprep.subr.mxu0 0.0
    %1517 = vmatpush1.msra.mxu0 0.0
    %1518 = vmatprep.subr.mxu0 0.0
    %1519 = vmatpush1.msra.mxu0 0.0
    %1520 = vmatprep.subr.mxu0 0.0
    %1521 = vmatpush1.msra.mxu0 0.0
    %1522 = vmatprep.subr.mxu0 0.0
    %1523 = vmatpush1.msra.mxu0 0.0
    %1524 = vmatprep.subr.mxu0 0.0
    %1525 = vmatpush1.msra.mxu0 0.0
    %1526 = vmatprep.subr.mxu0 0.0
    %1527 = vmatpush1.msra.mxu0 0.0
    %1528 = vmatprep.subr.mxu0 0.0
    %1529 = vmatpush1.msra.mxu0 0.0
    %1530 = vmatprep.mubr.f32.mxu0 0.0
    %1531 = vmatmul.mubr.f32.gmra.mrb[0].mxu0 %v1464
    %v1532 = vpop.f32.mrb[0].mxu0
    %v1533 = vadd.f32 %v1280, %v1532
    %v1534 = vpop.f32.mrb[0].mxu0
    %v1535 = vadd.f32 %v1284, %v1534
    %1536 = vdwg.mxu0
    %1537 = vmatprep.subr.mxu0 0.0
    %1538 = vmatpush1.msra.mxu0 %v1271
    %1539 = vmatprep.subr.mxu0 0.0
    %1540 = vmatpush1.msra.mxu0 %v1274
    %1541 = vmatprep.subr.mxu0 0.0
    %1542 = vmatpush1.msra.mxu0 0.0
    %1543 = vmatprep.subr.mxu0 0.0
    %1544 = vmatpush1.msra.mxu0 0.0
    %1545 = vmatprep.subr.mxu0 0.0
    %1546 = vmatpush1.msra.mxu0 0.0
    %1547 = vmatprep.subr.mxu0 0.0
    %1548 = vmatpush1.msra.mxu0 0.0
    %1549 = vmatprep.subr.mxu0 0.0
    %1550 = vmatpush1.msra.mxu0 0.0
    %1551 = vmatprep.subr.mxu0 0.0
    %1552 = vmatpush1.msra.mxu0 0.0
    %1553 = vmatprep.subr.mxu0 0.0
    %1554 = vmatpush1.msra.mxu0 0.0
    %1555 = vmatprep.subr.mxu0 0.0
    %1556 = vmatpush1.msra.mxu0 0.0
    %1557 = vmatprep.subr.mxu0 0.0
    %1558 = vmatpush1.msra.mxu0 0.0
    %1559 = vmatprep.subr.mxu0 0.0
    %1560 = vmatpush1.msra.mxu0 0.0
    %1561 = vmatprep.subr.mxu0 0.0
    %1562 = vmatpush1.msra.mxu0 0.0
    %1563 = vmatprep.subr.mxu0 0.0
    %1564 = vmatpush1.msra.mxu0 0.0
    %1565 = vmatprep.subr.mxu0 0.0
    %1566 = vmatpush1.msra.mxu0 0.0
    %1567 = vmatprep.subr.mxu0 0.0
    %1568 = vmatpush1.msra.mxu0 0.0
    %1569 = vmatprep.subr.mxu0 0.0
    %1570 = vmatpush1.msra.mxu0 0.0
    %1571 = vmatprep.subr.mxu0 0.0
    %1572 = vmatpush1.msra.mxu0 0.0
    %1573 = vmatprep.subr.mxu0 0.0
    %1574 = vmatpush1.msra.mxu0 0.0
    %1575 = vmatprep.subr.mxu0 0.0
    %1576 = vmatpush1.msra.mxu0 0.0
    %1577 = vmatprep.subr.mxu0 0.0
    %1578 = vmatpush1.msra.mxu0 0.0
    %1579 = vmatprep.subr.mxu0 0.0
    %1580 = vmatpush1.msra.mxu0 0.0
    %1581 = vmatprep.subr.mxu0 0.0
    %1582 = vmatpush1.msra.mxu0 0.0
    %1583 = vmatprep.subr.mxu0 0.0
    %1584 = vmatpush1.msra.mxu0 0.0
    %1585 = vmatprep.subr.mxu0 0.0
    %1586 = vmatpush1.msra.mxu0 0.0
    %1587 = vmatprep.subr.mxu0 0.0
    %1588 = vmatpush1.msra.mxu0 0.0
    %1589 = vmatprep.subr.mxu0 0.0
    %1590 = vmatpush1.msra.mxu0 0.0
    %1591 = vmatprep.subr.mxu0 0.0
    %1592 = vmatpush1.msra.mxu0 0.0
    %1593 = vmatprep.subr.mxu0 0.0
    %1594 = vmatpush1.msra.mxu0 0.0
    %1595 = vmatprep.subr.mxu0 0.0
    %1596 = vmatpush1.msra.mxu0 0.0
    %1597 = vmatprep.subr.mxu0 0.0
    %1598 = vmatpush1.msra.mxu0 0.0
    %1599 = vmatprep.subr.mxu0 0.0
    %1600 = vmatpush1.msra.mxu0 0.0
    %1601 = vmatprep.mubr.f32.mxu0 0.0
    %1602 = vmatmul.mubr.f32.gmra.mrb[0].mxu0 %v1464
    %v1603 = vpop.f32.mrb[0].mxu0
    %v1604 = vadd.f32 %v1288, %v1603
    %v1605 = vpop.f32.mrb[0].mxu0
    %1606 = vdwg.mxu0
    %v1607 = vadd.f32 %v1460, %v1533
    %v1608 = vxor.u32 %v1607, 2147483648
    %v1609 = vmul.f32 %v1608, 1.442695
    %v1610 = vpow.pop %v1609
    %v1611 = vadd.f32 %v1610, 1.0
    %v1612 = vrcp.pop %v1611
    %v1613 = vmul.f32 1.0, %v1612
    %v1614 = vadd.f32 %v1461, %v1535
    %v1615 = vxor.u32 %v1614, 2147483648
    %v1616 = vmul.f32 %v1615, 1.442695
    %v1617 = vpow.pop %v1616
    %v1618 = vadd.f32 %v1617, 1.0
    %v1619 = vrcp.pop %v1618
    %v1620 = vmul.f32 1.0, %v1619
    %v1621 = vmul.f32 %v1613, %v1604
    %v1622 = vadd.f32 %v1462, %v1621
    %v1623 = vtanh.pop %v1622
    %v1624 = vsub.f32 1.0, %v1620
    %v1625 = vmul.f32 %v1624, %v1623
    %v1626 = vmul.f32 %v1620, %v1457
    %v1627 = vadd.f32 %v1625, %v1626
    %s1628 = scalar_lea.vmem %s7, 16
    %v1629 = vld [vmem:[%s1628] sm:$0xff]
    %v1630 = vld [vmem:[%s1628 + $0x8] sm:$0xff]
    %v1632 = vsel %vm1292, %v1627, 0
    %1634 = vmatprep.subr.mxu0 0.0
    %1635 = vmatpush1.msra.mxu0 %v1629
    %1636 = vmatprep.subr.mxu0 0.0
    %1637 = vmatpush1.msra.mxu0 %v1630
    %1638 = vmatprep.subr.mxu0 0.0
    %1639 = vmatpush1.msra.mxu0 0.0
    %1640 = vmatprep.subr.mxu0 0.0
    %1641 = vmatpush1.msra.mxu0 0.0
    %1642 = vmatprep.subr.mxu0 0.0
    %1643 = vmatpush1.msra.mxu0 0.0
    %1644 = vmatprep.subr.mxu0 0.0
    %1645 = vmatpush1.msra.mxu0 0.0
    %1646 = vmatprep.subr.mxu0 0.0
    %1647 = vmatpush1.msra.mxu0 0.0
    %1648 = vmatprep.subr.mxu0 0.0
    %1649 = vmatpush1.msra.mxu0 0.0
    %1650 = vmatprep.subr.mxu0 0.0
    %1651 = vmatpush1.msra.mxu0 0.0
    %1652 = vmatprep.subr.mxu0 0.0
    %1653 = vmatpush1.msra.mxu0 0.0
    %1654 = vmatprep.subr.mxu0 0.0
    %1655 = vmatpush1.msra.mxu0 0.0
    %1656 = vmatprep.subr.mxu0 0.0
    %1657 = vmatpush1.msra.mxu0 0.0
    %1658 = vmatprep.subr.mxu0 0.0
    %1659 = vmatpush1.msra.mxu0 0.0
    %1660 = vmatprep.subr.mxu0 0.0
    %1661 = vmatpush1.msra.mxu0 0.0
    %1662 = vmatprep.subr.mxu0 0.0
    %1663 = vmatpush1.msra.mxu0 0.0
    %1664 = vmatprep.subr.mxu0 0.0
    %1665 = vmatpush1.msra.mxu0 0.0
    %1666 = vmatprep.subr.mxu0 0.0
    %1667 = vmatpush1.msra.mxu0 0.0
    %1668 = vmatprep.subr.mxu0 0.0
    %1669 = vmatpush1.msra.mxu0 0.0
    %1670 = vmatprep.subr.mxu0 0.0
    %1671 = vmatpush1.msra.mxu0 0.0
    %1672 = vmatprep.subr.mxu0 0.0
    %1673 = vmatpush1.msra.mxu0 0.0
    %1674 = vmatprep.subr.mxu0 0.0
    %1675 = vmatpush1.msra.mxu0 0.0
    %1676 = vmatprep.subr.mxu0 0.0
    %1677 = vmatpush1.msra.mxu0 0.0
    %1678 = vmatprep.subr.mxu0 0.0
    %1679 = vmatpush1.msra.mxu0 0.0
    %1680 = vmatprep.subr.mxu0 0.0
    %1681 = vmatpush1.msra.mxu0 0.0
    %1682 = vmatprep.subr.mxu0 0.0
    %1683 = vmatpush1.msra.mxu0 0.0
    %1684 = vmatprep.subr.mxu0 0.0
    %1685 = vmatpush1.msra.mxu0 0.0
    %1686 = vmatprep.subr.mxu0 0.0
    %1687 = vmatpush1.msra.mxu0 0.0
    %1688 = vmatprep.subr.mxu0 0.0
    %1689 = vmatpush1.msra.mxu0 0.0
    %1690 = vmatprep.subr.mxu0 0.0
    %1691 = vmatpush1.msra.mxu0 0.0
    %1692 = vmatprep.subr.mxu0 0.0
    %1693 = vmatpush1.msra.mxu0 0.0
    %1694 = vmatprep.subr.mxu0 0.0
    %1695 = vmatpush1.msra.mxu0 0.0
    %1696 = vmatprep.subr.mxu0 0.0
    %1697 = vmatpush1.msra.mxu0 0.0
    %1698 = vmatprep.mubr.f32.mxu0 0.0
    %1699 = vmatmul.mubr.f32.gmra.mrb[0].mxu0 %v1632
    %v1700 = vpop.f32.mrb[0].mxu0
    %v1701 = vadd.f32 0.0, %v1700
    %v1702 = vpop.f32.mrb[0].mxu0
    %1703 = vdwg.mxu0
    %1704 = vmatprep.subr.mxu0 0.0
    %1705 = vmatpush1.msra.mxu0 %v1458
    %1706 = vmatprep.subr.mxu0 0.0
    %1707 = vmatpush1.msra.mxu0 %v1459
    %1708 = vmatprep.subr.mxu0 0.0
    %1709 = vmatpush1.msra.mxu0 0.0
    %1710 = vmatprep.subr.mxu0 0.0
    %1711 = vmatpush1.msra.mxu0 0.0
    %1712 = vmatprep.subr.mxu0 0.0
    %1713 = vmatpush1.msra.mxu0 0.0
    %1714 = vmatprep.subr.mxu0 0.0
    %1715 = vmatpush1.msra.mxu0 0.0
    %1716 = vmatprep.subr.mxu0 0.0
    %1717 = vmatpush1.msra.mxu0 0.0
    %1718 = vmatprep.subr.mxu0 0.0
    %1719 = vmatpush1.msra.mxu0 0.0
    %1720 = vmatprep.subr.mxu0 0.0
    %1721 = vmatpush1.msra.mxu0 0.0
    %1722 = vmatprep.subr.mxu0 0.0
    %1723 = vmatpush1.msra.mxu0 0.0
    %1724 = vmatprep.subr.mxu0 0.0
    %1725 = vmatpush1.msra.mxu0 0.0
    %1726 = vmatprep.subr.mxu0 0.0
    %1727 = vmatpush1.msra.mxu0 0.0
    %1728 = vmatprep.subr.mxu0 0.0
    %1729 = vmatpush1.msra.mxu0 0.0
    %1730 = vmatprep.subr.mxu0 0.0
    %1731 = vmatpush1.msra.mxu0 0.0
    %1732 = vmatprep.subr.mxu0 0.0
    %1733 = vmatpush1.msra.mxu0 0.0
    %1734 = vmatprep.subr.mxu0 0.0
    %1735 = vmatpush1.msra.mxu0 0.0
    %1736 = vmatprep.subr.mxu0 0.0
    %1737 = vmatpush1.msra.mxu0 0.0
    %1738 = vmatprep.subr.mxu0 0.0
    %1739 = vmatpush1.msra.mxu0 0.0
    %1740 = vmatprep.subr.mxu0 0.0
    %1741 = vmatpush1.msra.mxu0 0.0
    %1742 = vmatprep.subr.mxu0 0.0
    %1743 = vmatpush1.msra.mxu0 0.0
    %1744 = vmatprep.subr.mxu0 0.0
    %1745 = vmatpush1.msra.mxu0 0.0
    %1746 = vmatprep.subr.mxu0 0.0
    %1747 = vmatpush1.msra.mxu0 0.0
    %1748 = vmatprep.subr.mxu0 0.0
    %1749 = vmatpush1.msra.mxu0 0.0
    %1750 = vmatprep.subr.mxu0 0.0
    %1751 = vmatpush1.msra.mxu0 0.0
    %1752 = vmatprep.subr.mxu0 0.0
    %1753 = vmatpush1.msra.mxu0 0.0
    %1754 = vmatprep.subr.mxu0 0.0
    %1755 = vmatpush1.msra.mxu0 0.0
    %1756 = vmatprep.subr.mxu0 0.0
    %1757 = vmatpush1.msra.mxu0 0.0
    %1758 = vmatprep.subr.mxu0 0.0
    %1759 = vmatpush1.msra.mxu0 0.0
    %1760 = vmatprep.subr.mxu0 0.0
    %1761 = vmatpush1.msra.mxu0 0.0
    %1762 = vmatprep.subr.mxu0 0.0
    %1763 = vmatpush1.msra.mxu0 0.0
    %1764 = vmatprep.subr.mxu0 0.0
    %1765 = vmatpush1.msra.mxu0 0.0
    %1766 = vmatprep.subr.mxu0 0.0
    %1767 = vmatpush1.msra.mxu0 0.0
    %1768 = vmatprep.mubr.f32.mxu0 0.0
    %1769 = vmatmul.mubr.f32.gmra.mrb[0].mxu0 %v1464
    %v1770 = vpop.f32.mrb[0].mxu0
    %v1771 = vadd.f32 %v1701, %v1770
    %v1772 = vpop.f32.mrb[0].mxu0
    %1773 = vdwg.mxu0
    %v1774 = vld [vmem:[#allocation2 + $0x30] sm:$0xff]
    %v1775 = vld [vmem:[#allocation2 + $0x38] sm:$0xff]
    %v1776 = vld [vmem:[#allocation2 + $0x40] sm:$0xff]
    %1777 = vmatprep.subr.mxu0 %v1270
    %1778 = vmatpush1.msra.mxu0 %v1269
    %1779 = vmatprep.subr.mxu0 %v1273
    %1780 = vmatpush1.msra.mxu0 %v1272
    %1781 = vmatprep.subr.mxu0 0.0
    %1782 = vmatpush1.msra.mxu0 0.0
    %1783 = vmatprep.subr.mxu0 0.0
    %1784 = vmatpush1.msra.mxu0 0.0
    %1785 = vmatprep.subr.mxu0 0.0
    %1786 = vmatpush1.msra.mxu0 0.0
    %1787 = vmatprep.subr.mxu0 0.0
    %1788 = vmatpush1.msra.mxu0 0.0
    %1789 = vmatprep.subr.mxu0 0.0
    %1790 = vmatpush1.msra.mxu0 0.0
    %1791 = vmatprep.subr.mxu0 0.0
    %1792 = vmatpush1.msra.mxu0 0.0
    %1793 = vmatprep.subr.mxu0 0.0
    %1794 = vmatpush1.msra.mxu0 0.0
    %1795 = vmatprep.subr.mxu0 0.0
    %1796 = vmatpush1.msra.mxu0 0.0
    %1797 = vmatprep.subr.mxu0 0.0
    %1798 = vmatpush1.msra.mxu0 0.0
    %1799 = vmatprep.subr.mxu0 0.0
    %1800 = vmatpush1.msra.mxu0 0.0
    %1801 = vmatprep.subr.mxu0 0.0
    %1802 = vmatpush1.msra.mxu0 0.0
    %1803 = vmatprep.subr.mxu0 0.0
    %1804 = vmatpush1.msra.mxu0 0.0
    %1805 = vmatprep.subr.mxu0 0.0
    %1806 = vmatpush1.msra.mxu0 0.0
    %1807 = vmatprep.subr.mxu0 0.0
    %1808 = vmatpush1.msra.mxu0 0.0
    %1809 = vmatprep.subr.mxu0 0.0
    %1810 = vmatpush1.msra.mxu0 0.0
    %1811 = vmatprep.subr.mxu0 0.0
    %1812 = vmatpush1.msra.mxu0 0.0
    %1813 = vmatprep.subr.mxu0 0.0
    %1814 = vmatpush1.msra.mxu0 0.0
    %1815 = vmatprep.subr.mxu0 0.0
    %1816 = vmatpush1.msra.mxu0 0.0
    %1817 = vmatprep.subr.mxu0 0.0
    %1818 = vmatpush1.msra.mxu0 0.0
    %1819 = vmatprep.subr.mxu0 0.0
    %1820 = vmatpush1.msra.mxu0 0.0
    %1821 = vmatprep.subr.mxu0 0.0
    %1822 = vmatpush1.msra.mxu0 0.0
    %1823 = vmatprep.subr.mxu0 0.0
    %1824 = vmatpush1.msra.mxu0 0.0
    %1825 = vmatprep.subr.mxu0 0.0
    %1826 = vmatpush1.msra.mxu0 0.0
    %1827 = vmatprep.subr.mxu0 0.0
    %1828 = vmatpush1.msra.mxu0 0.0
    %1829 = vmatprep.subr.mxu0 0.0
    %1830 = vmatpush1.msra.mxu0 0.0
    %1831 = vmatprep.subr.mxu0 0.0
    %1832 = vmatpush1.msra.mxu0 0.0
    %1833 = vmatprep.subr.mxu0 0.0
    %1834 = vmatpush1.msra.mxu0 0.0
    %1835 = vmatprep.subr.mxu0 0.0
    %1836 = vmatpush1.msra.mxu0 0.0
    %1837 = vmatprep.subr.mxu0 0.0
    %1838 = vmatpush1.msra.mxu0 0.0
    %1839 = vmatprep.subr.mxu0 0.0
    %1840 = vmatpush1.msra.mxu0 0.0
    %1841 = vmatprep.mubr.f32.mxu0 0.0
    %1842 = vmatmul.mubr.f32.gmra.mrb[0].mxu0 %v1632
    %v1843 = vpop.f32.mrb[0].mxu0
    %v1844 = vadd.f32 %v1280, %v1843
    %v1845 = vpop.f32.mrb[0].mxu0
    %v1846 = vadd.f32 %v1284, %v1845
    %1847 = vdwg.mxu0
    %1848 = vmatprep.subr.mxu0 0.0
    %1849 = vmatpush1.msra.mxu0 %v1271
    %1850 = vmatprep.subr.mxu0 0.0
    %1851 = vmatpush1.msra.mxu0 %v1274
    %1852 = vmatprep.subr.mxu0 0.0
    %1853 = vmatpush1.msra.mxu0 0.0
    %1854 = vmatprep.subr.mxu0 0.0
    %1855 = vmatpush1.msra.mxu0 0.0
    %1856 = vmatprep.subr.mxu0 0.0
    %1857 = vmatpush1.msra.mxu0 0.0
    %1858 = vmatprep.subr.mxu0 0.0
    %1859 = vmatpush1.msra.mxu0 0.0
    %1860 = vmatprep.subr.mxu0 0.0
    %1861 = vmatpush1.msra.mxu0 0.0
    %1862 = vmatprep.subr.mxu0 0.0
    %1863 = vmatpush1.msra.mxu0 0.0
    %1864 = vmatprep.subr.mxu0 0.0
    %1865 = vmatpush1.msra.mxu0 0.0
    %1866 = vmatprep.subr.mxu0 0.0
    %1867 = vmatpush1.msra.mxu0 0.0
    %1868 = vmatprep.subr.mxu0 0.0
    %1869 = vmatpush1.msra.mxu0 0.0
    %1870 = vmatprep.subr.mxu0 0.0
    %1871 = vmatpush1.msra.mxu0 0.0
    %1872 = vmatprep.subr.mxu0 0.0
    %1873 = vmatpush1.msra.mxu0 0.0
    %1874 = vmatprep.subr.mxu0 0.0
    %1875 = vmatpush1.msra.mxu0 0.0
    %1876 = vmatprep.subr.mxu0 0.0
    %1877 = vmatpush1.msra.mxu0 0.0
    %1878 = vmatprep.subr.mxu0 0.0
    %1879 = vmatpush1.msra.mxu0 0.0
    %1880 = vmatprep.subr.mxu0 0.0
    %1881 = vmatpush1.msra.mxu0 0.0
    %1882 = vmatprep.subr.mxu0 0.0
    %1883 = vmatpush1.msra.mxu0 0.0
    %1884 = vmatprep.subr.mxu0 0.0
    %1885 = vmatpush1.msra.mxu0 0.0
    %1886 = vmatprep.subr.mxu0 0.0
    %1887 = vmatpush1.msra.mxu0 0.0
    %1888 = vmatprep.subr.mxu0 0.0
    %1889 = vmatpush1.msra.mxu0 0.0
    %1890 = vmatprep.subr.mxu0 0.0
    %1891 = vmatpush1.msra.mxu0 0.0
    %1892 = vmatprep.subr.mxu0 0.0
    %1893 = vmatpush1.msra.mxu0 0.0
    %1894 = vmatprep.subr.mxu0 0.0
    %1895 = vmatpush1.msra.mxu0 0.0
    %1896 = vmatprep.subr.mxu0 0.0
    %1897 = vmatpush1.msra.mxu0 0.0
    %1898 = vmatprep.subr.mxu0 0.0
    %1899 = vmatpush1.msra.mxu0 0.0
    %1900 = vmatprep.subr.mxu0 0.0
    %1901 = vmatpush1.msra.mxu0 0.0
    %1902 = vmatprep.subr.mxu0 0.0
    %1903 = vmatpush1.msra.mxu0 0.0
    %1904 = vmatprep.subr.mxu0 0.0
    %1905 = vmatpush1.msra.mxu0 0.0
    %1906 = vmatprep.subr.mxu0 0.0
    %1907 = vmatpush1.msra.mxu0 0.0
    %1908 = vmatprep.subr.mxu0 0.0
    %1909 = vmatpush1.msra.mxu0 0.0
    %1910 = vmatprep.subr.mxu0 0.0
    %1911 = vmatpush1.msra.mxu0 0.0
    %1912 = vmatprep.mubr.f32.mxu0 0.0
    %1913 = vmatmul.mubr.f32.gmra.mrb[0].mxu0 %v1632
    %v1914 = vpop.f32.mrb[0].mxu0
    %v1915 = vadd.f32 %v1288, %v1914
    %v1916 = vpop.f32.mrb[0].mxu0
    %1917 = vdwg.mxu0
    %v1918 = vadd.f32 %v1774, %v1844
    %v1919 = vxor.u32 %v1918, 2147483648
    %v1920 = vmul.f32 %v1919, 1.442695
    %v1921 = vpow.pop %v1920
    %v1922 = vadd.f32 %v1921, 1.0
    %v1923 = vrcp.pop %v1922
    %v1924 = vmul.f32 1.0, %v1923
    %v1925 = vadd.f32 %v1775, %v1846
    %v1926 = vxor.u32 %v1925, 2147483648
    %v1927 = vmul.f32 %v1926, 1.442695
    %v1928 = vpow.pop %v1927
    %v1929 = vadd.f32 %v1928, 1.0
    %v1930 = vrcp.pop %v1929
    %v1931 = vmul.f32 1.0, %v1930
    %v1932 = vmul.f32 %v1924, %v1915
    %v1933 = vadd.f32 %v1776, %v1932
    %v1934 = vtanh.pop %v1933
    %v1935 = vsub.f32 1.0, %v1931
    %v1936 = vmul.f32 %v1935, %v1934
    %v1937 = vmul.f32 %v1931, %v1627
    %v1938 = vadd.f32 %v1936, %v1937
    %s1939 = scalar_lea.vmem %s7, 32
    %v1940 = vld [vmem:[%s1939] sm:$0xff]
    %v1941 = vld [vmem:[%s1939 + $0x8] sm:$0xff]
    %v1943 = vsel %vm1292, %v1938, 0
    %1945 = vmatprep.subr.mxu0 0.0
    %1946 = vmatpush1.msra.mxu0 %v1940
    %1947 = vmatprep.subr.mxu0 0.0
    %1948 = vmatpush1.msra.mxu0 %v1941
    %1949 = vmatprep.subr.mxu0 0.0
    %1950 = vmatpush1.msra.mxu0 0.0
    %1951 = vmatprep.subr.mxu0 0.0
    %1952 = vmatpush1.msra.mxu0 0.0
    %1953 = vmatprep.subr.mxu0 0.0
    %1954 = vmatpush1.msra.mxu0 0.0
    %1955 = vmatprep.subr.mxu0 0.0
    %1956 = vmatpush1.msra.mxu0 0.0
    %1957 = vmatprep.subr.mxu0 0.0
    %1958 = vmatpush1.msra.mxu0 0.0
    %1959 = vmatprep.subr.mxu0 0.0
    %1960 = vmatpush1.msra.mxu0 0.0
    %1961 = vmatprep.subr.mxu0 0.0
    %1962 = vmatpush1.msra.mxu0 0.0
    %1963 = vmatprep.subr.mxu0 0.0
    %1964 = vmatpush1.msra.mxu0 0.0
    %1965 = vmatprep.subr.mxu0 0.0
    %1966 = vmatpush1.msra.mxu0 0.0
    %1967 = vmatprep.subr.mxu0 0.0
    %1968 = vmatpush1.msra.mxu0 0.0
    %1969 = vmatprep.subr.mxu0 0.0
    %1970 = vmatpush1.msra.mxu0 0.0
    %1971 = vmatprep.subr.mxu0 0.0
    %1972 = vmatpush1.msra.mxu0 0.0
    %1973 = vmatprep.subr.mxu0 0.0
    %1974 = vmatpush1.msra.mxu0 0.0
    %1975 = vmatprep.subr.mxu0 0.0
    %1976 = vmatpush1.msra.mxu0 0.0
    %1977 = vmatprep.subr.mxu0 0.0
    %1978 = vmatpush1.msra.mxu0 0.0
    %1979 = vmatprep.subr.mxu0 0.0
    %1980 = vmatpush1.msra.mxu0 0.0
    %1981 = vmatprep.subr.mxu0 0.0
    %1982 = vmatpush1.msra.mxu0 0.0
    %1983 = vmatprep.subr.mxu0 0.0
    %1984 = vmatpush1.msra.mxu0 0.0
    %1985 = vmatprep.subr.mxu0 0.0
    %1986 = vmatpush1.msra.mxu0 0.0
    %1987 = vmatprep.subr.mxu0 0.0
    %1988 = vmatpush1.msra.mxu0 0.0
    %1989 = vmatprep.subr.mxu0 0.0
    %1990 = vmatpush1.msra.mxu0 0.0
    %1991 = vmatprep.subr.mxu0 0.0
    %1992 = vmatpush1.msra.mxu0 0.0
    %1993 = vmatprep.subr.mxu0 0.0
    %1994 = vmatpush1.msra.mxu0 0.0
    %1995 = vmatprep.subr.mxu0 0.0
    %1996 = vmatpush1.msra.mxu0 0.0
    %1997 = vmatprep.subr.mxu0 0.0
    %1998 = vmatpush1.msra.mxu0 0.0
    %1999 = vmatprep.subr.mxu0 0.0
    %2000 = vmatpush1.msra.mxu0 0.0
    %2001 = vmatprep.subr.mxu0 0.0
    %2002 = vmatpush1.msra.mxu0 0.0
    %2003 = vmatprep.subr.mxu0 0.0
    %2004 = vmatpush1.msra.mxu0 0.0
    %2005 = vmatprep.subr.mxu0 0.0
    %2006 = vmatpush1.msra.mxu0 0.0
    %2007 = vmatprep.subr.mxu0 0.0
    %2008 = vmatpush1.msra.mxu0 0.0
    %2009 = vmatprep.mubr.f32.mxu0 0.0
    %2010 = vmatmul.mubr.f32.gmra.mrb[0].mxu0 %v1943
    %v2011 = vpop.f32.mrb[0].mxu0
    %v2012 = vadd.f32 0.0, %v2011
    %v2013 = vpop.f32.mrb[0].mxu0
    %2014 = vdwg.mxu0
    %v2015 = vadd.f32 %v1771, %v2012
    %v2016 = vld [vmem:[#allocation2 + $0x48] sm:$0xff]
    %v2017 = vld [vmem:[#allocation2 + $0x50] sm:$0xff]
    %v2018 = vld [vmem:[#allocation2 + $0x58] sm:$0xff]
    %2019 = vmatprep.subr.mxu0 %v1270
    %2020 = vmatpush1.msra.mxu0 %v1269
    %2021 = vmatprep.subr.mxu0 %v1273
    %2022 = vmatpush1.msra.mxu0 %v1272
    %2023 = vmatprep.subr.mxu0 0.0
    %2024 = vmatpush1.msra.mxu0 0.0
    %2025 = vmatprep.subr.mxu0 0.0
    %2026 = vmatpush1.msra.mxu0 0.0
    %2027 = vmatprep.subr.mxu0 0.0
    %2028 = vmatpush1.msra.mxu0 0.0
    %2029 = vmatprep.subr.mxu0 0.0
    %2030 = vmatpush1.msra.mxu0 0.0
    %2031 = vmatprep.subr.mxu0 0.0
    %2032 = vmatpush1.msra.mxu0 0.0
    %2033 = vmatprep.subr.mxu0 0.0
    %2034 = vmatpush1.msra.mxu0 0.0
    %2035 = vmatprep.subr.mxu0 0.0
    %2036 = vmatpush1.msra.mxu0 0.0
    %2037 = vmatprep.subr.mxu0 0.0
    %2038 = vmatpush1.msra.mxu0 0.0
    %2039 = vmatprep.subr.mxu0 0.0
    %2040 = vmatpush1.msra.mxu0 0.0
    %2041 = vmatprep.subr.mxu0 0.0
    %2042 = vmatpush1.msra.mxu0 0.0
    %2043 = vmatprep.subr.mxu0 0.0
    %2044 = vmatpush1.msra.mxu0 0.0
    %2045 = vmatprep.subr.mxu0 0.0
    %2046 = vmatpush1.msra.mxu0 0.0
    %2047 = vmatprep.subr.mxu0 0.0
    %2048 = vmatpush1.msra.mxu0 0.0
    %2049 = vmatprep.subr.mxu0 0.0
    %2050 = vmatpush1.msra.mxu0 0.0
    %2051 = vmatprep.subr.mxu0 0.0
    %2052 = vmatpush1.msra.mxu0 0.0
    %2053 = vmatprep.subr.mxu0 0.0
    %2054 = vmatpush1.msra.mxu0 0.0
    %2055 = vmatprep.subr.mxu0 0.0
    %2056 = vmatpush1.msra.mxu0 0.0
    %2057 = vmatprep.subr.mxu0 0.0
    %2058 = vmatpush1.msra.mxu0 0.0
    %2059 = vmatprep.subr.mxu0 0.0
    %2060 = vmatpush1.msra.mxu0 0.0
    %2061 = vmatprep.subr.mxu0 0.0
    %2062 = vmatpush1.msra.mxu0 0.0
    %2063 = vmatprep.subr.mxu0 0.0
    %2064 = vmatpush1.msra.mxu0 0.0
    %2065 = vmatprep.subr.mxu0 0.0
    %2066 = vmatpush1.msra.mxu0 0.0
    %2067 = vmatprep.subr.mxu0 0.0
    %2068 = vmatpush1.msra.mxu0 0.0
    %2069 = vmatprep.subr.mxu0 0.0
    %2070 = vmatpush1.msra.mxu0 0.0
    %2071 = vmatprep.subr.mxu0 0.0
    %2072 = vmatpush1.msra.mxu0 0.0
    %2073 = vmatprep.subr.mxu0 0.0
    %2074 = vmatpush1.msra.mxu0 0.0
    %2075 = vmatprep.subr.mxu0 0.0
    %2076 = vmatpush1.msra.mxu0 0.0
    %2077 = vmatprep.subr.mxu0 0.0
    %2078 = vmatpush1.msra.mxu0 0.0
    %2079 = vmatprep.subr.mxu0 0.0
    %2080 = vmatpush1.msra.mxu0 0.0
    %2081 = vmatprep.subr.mxu0 0.0
    %2082 = vmatpush1.msra.mxu0 0.0
    %2083 = vmatprep.mubr.f32.mxu0 0.0
    %2084 = vmatmul.mubr.f32.gmra.mrb[0].mxu0 %v1943
    %v2085 = vpop.f32.mrb[0].mxu0
    %v2086 = vadd.f32 %v1280, %v2085
    %v2087 = vpop.f32.mrb[0].mxu0
    %v2088 = vadd.f32 %v1284, %v2087
    %2089 = vdwg.mxu0
    %2090 = vmatprep.subr.mxu0 0.0
    %2091 = vmatpush1.msra.mxu0 %v1271
    %2092 = vmatprep.subr.mxu0 0.0
    %2093 = vmatpush1.msra.mxu0 %v1274
    %2094 = vmatprep.subr.mxu0 0.0
    %2095 = vmatpush1.msra.mxu0 0.0
    %2096 = vmatprep.subr.mxu0 0.0
    %2097 = vmatpush1.msra.mxu0 0.0
    %2098 = vmatprep.subr.mxu0 0.0
    %2099 = vmatpush1.msra.mxu0 0.0
    %2100 = vmatprep.subr.mxu0 0.0
    %2101 = vmatpush1.msra.mxu0 0.0
    %2102 = vmatprep.subr.mxu0 0.0
    %2103 = vmatpush1.msra.mxu0 0.0
    %2104 = vmatprep.subr.mxu0 0.0
    %2105 = vmatpush1.msra.mxu0 0.0
    %2106 = vmatprep.subr.mxu0 0.0
    %2107 = vmatpush1.msra.mxu0 0.0
    %2108 = vmatprep.subr.mxu0 0.0
    %2109 = vmatpush1.msra.mxu0 0.0
    %2110 = vmatprep.subr.mxu0 0.0
    %2111 = vmatpush1.msra.mxu0 0.0
    %2112 = vmatprep.subr.mxu0 0.0
    %2113 = vmatpush1.msra.mxu0 0.0
    %2114 = vmatprep.subr.mxu0 0.0
    %2115 = vmatpush1.msra.mxu0 0.0
    %2116 = vmatprep.subr.mxu0 0.0
    %2117 = vmatpush1.msra.mxu0 0.0
    %2118 = vmatprep.subr.mxu0 0.0
    %2119 = vmatpush1.msra.mxu0 0.0
    %2120 = vmatprep.subr.mxu0 0.0
    %2121 = vmatpush1.msra.mxu0 0.0
    %2122 = vmatprep.subr.mxu0 0.0
    %2123 = vmatpush1.msra.mxu0 0.0
    %2124 = vmatprep.subr.mxu0 0.0
    %2125 = vmatpush1.msra.mxu0 0.0
    %2126 = vmatprep.subr.mxu0 0.0
    %2127 = vmatpush1.msra.mxu0 0.0
    %2128 = vmatprep.subr.mxu0 0.0
    %2129 = vmatpush1.msra.mxu0 0.0
    %2130 = vmatprep.subr.mxu0 0.0
    %2131 = vmatpush1.msra.mxu0 0.0
    %2132 = vmatprep.subr.mxu0 0.0
    %2133 = vmatpush1.msra.mxu0 0.0
    %2134 = vmatprep.subr.mxu0 0.0
    %2135 = vmatpush1.msra.mxu0 0.0
    %2136 = vmatprep.subr.mxu0 0.0
    %2137 = vmatpush1.msra.mxu0 0.0
    %2138 = vmatprep.subr.mxu0 0.0
    %2139 = vmatpush1.msra.mxu0 0.0
    %2140 = vmatprep.subr.mxu0 0.0
    %2141 = vmatpush1.msra.mxu0 0.0
    %2142 = vmatprep.subr.mxu0 0.0
    %2143 = vmatpush1.msra.mxu0 0.0
    %2144 = vmatprep.subr.mxu0 0.0
    %2145 = vmatpush1.msra.mxu0 0.0
    %2146 = vmatprep.subr.mxu0 0.0
    %2147 = vmatpush1.msra.mxu0 0.0
    %2148 = vmatprep.subr.mxu0 0.0
    %2149 = vmatpush1.msra.mxu0 0.0
    %2150 = vmatprep.subr.mxu0 0.0
    %2151 = vmatpush1.msra.mxu0 0.0
    %2152 = vmatprep.subr.mxu0 0.0
    %2153 = vmatpush1.msra.mxu0 0.0
    %2154 = vmatprep.mubr.f32.mxu0 0.0
    %2155 = vmatmul.mubr.f32.gmra.mrb[0].mxu0 %v1943
    %v2156 = vpop.f32.mrb[0].mxu0
    %v2157 = vadd.f32 %v1288, %v2156
    %v2158 = vpop.f32.mrb[0].mxu0
    %2159 = vdwg.mxu0
    %v2160 = vadd.f32 %v2016, %v2086
    %v2161 = vxor.u32 %v2160, 2147483648
    %v2162 = vmul.f32 %v2161, 1.442695
    %v2163 = vpow.pop %v2162
    %v2164 = vadd.f32 %v2163, 1.0
    %v2165 = vrcp.pop %v2164
    %v2166 = vmul.f32 1.0, %v2165
    %v2167 = vadd.f32 %v2017, %v2088
    %v2168 = vxor.u32 %v2167, 2147483648
    %v2169 = vmul.f32 %v2168, 1.442695
    %v2170 = vpow.pop %v2169
    %v2171 = vadd.f32 %v2170, 1.0
    %v2172 = vrcp.pop %v2171
    %v2173 = vmul.f32 1.0, %v2172
    %v2174 = vmul.f32 %v2166, %v2157
    %v2175 = vadd.f32 %v2018, %v2174
    %v2176 = vtanh.pop %v2175
    %v2177 = vsub.f32 1.0, %v2173
    %v2178 = vmul.f32 %v2177, %v2176
    %v2179 = vmul.f32 %v2173, %v1938
    %v2180 = vadd.f32 %v2178, %v2179
    %s2181 = scalar_lea.vmem %s7, 48
    %v2182 = vld [vmem:[%s2181] sm:$0xff]
    %v2183 = vld [vmem:[%s2181 + $0x8] sm:$0xff]
    %v2185 = vsel %vm1292, %v2180, 0
    %2187 = vmatprep.subr.mxu0 0.0
    %2188 = vmatpush1.msra.mxu0 %v2182
    %2189 = vmatprep.subr.mxu0 0.0
    %2190 = vmatpush1.msra.mxu0 %v2183
    %2191 = vmatprep.subr.mxu0 0.0
    %2192 = vmatpush1.msra.mxu0 0.0
    %2193 = vmatprep.subr.mxu0 0.0
    %2194 = vmatpush1.msra.mxu0 0.0
    %2195 = vmatprep.subr.mxu0 0.0
    %2196 = vmatpush1.msra.mxu0 0.0
    %2197 = vmatprep.subr.mxu0 0.0
    %2198 = vmatpush1.msra.mxu0 0.0
    %2199 = vmatprep.subr.mxu0 0.0
    %2200 = vmatpush1.msra.mxu0 0.0
    %2201 = vmatprep.subr.mxu0 0.0
    %2202 = vmatpush1.msra.mxu0 0.0
    %2203 = vmatprep.subr.mxu0 0.0
    %2204 = vmatpush1.msra.mxu0 0.0
    %2205 = vmatprep.subr.mxu0 0.0
    %2206 = vmatpush1.msra.mxu0 0.0
    %2207 = vmatprep.subr.mxu0 0.0
    %2208 = vmatpush1.msra.mxu0 0.0
    %2209 = vmatprep.subr.mxu0 0.0
    %2210 = vmatpush1.msra.mxu0 0.0
    %2211 = vmatprep.subr.mxu0 0.0
    %2212 = vmatpush1.msra.mxu0 0.0
    %2213 = vmatprep.subr.mxu0 0.0
    %2214 = vmatpush1.msra.mxu0 0.0
    %2215 = vmatprep.subr.mxu0 0.0
    %2216 = vmatpush1.msra.mxu0 0.0
    %2217 = vmatprep.subr.mxu0 0.0
    %2218 = vmatpush1.msra.mxu0 0.0
    %2219 = vmatprep.subr.mxu0 0.0
    %2220 = vmatpush1.msra.mxu0 0.0
    %2221 = vmatprep.subr.mxu0 0.0
    %2222 = vmatpush1.msra.mxu0 0.0
    %2223 = vmatprep.subr.mxu0 0.0
    %2224 = vmatpush1.msra.mxu0 0.0
    %2225 = vmatprep.subr.mxu0 0.0
    %2226 = vmatpush1.msra.mxu0 0.0
    %2227 = vmatprep.subr.mxu0 0.0
    %2228 = vmatpush1.msra.mxu0 0.0
    %2229 = vmatprep.subr.mxu0 0.0
    %2230 = vmatpush1.msra.mxu0 0.0
    %2231 = vmatprep.subr.mxu0 0.0
    %2232 = vmatpush1.msra.mxu0 0.0
    %2233 = vmatprep.subr.mxu0 0.0
    %2234 = vmatpush1.msra.mxu0 0.0
    %2235 = vmatprep.subr.mxu0 0.0
    %2236 = vmatpush1.msra.mxu0 0.0
    %2237 = vmatprep.subr.mxu0 0.0
    %2238 = vmatpush1.msra.mxu0 0.0
    %2239 = vmatprep.subr.mxu0 0.0
    %2240 = vmatpush1.msra.mxu0 0.0
    %2241 = vmatprep.subr.mxu0 0.0
    %2242 = vmatpush1.msra.mxu0 0.0
    %2243 = vmatprep.subr.mxu0 0.0
    %2244 = vmatpush1.msra.mxu0 0.0
    %2245 = vmatprep.subr.mxu0 0.0
    %2246 = vmatpush1.msra.mxu0 0.0
    %2247 = vmatprep.subr.mxu0 0.0
    %2248 = vmatpush1.msra.mxu0 0.0
    %2249 = vmatprep.subr.mxu0 0.0
    %2250 = vmatpush1.msra.mxu0 0.0
    %2251 = vmatprep.mubr.f32.mxu0 0.0
    %2252 = vmatmul.mubr.f32.gmra.mrb[0].mxu0 %v2185
    %v2253 = vpop.f32.mrb[0].mxu0
    %v2254 = vadd.f32 0.0, %v2253
    %v2255 = vpop.f32.mrb[0].mxu0
    %2256 = vdwg.mxu0
    %v2257 = vadd.f32 %v2015, %v2254
    %v2258 = vld [vmem:[#allocation2 + $0x60] sm:$0xff]
    %v2259 = vld [vmem:[#allocation2 + $0x68] sm:$0xff]
    %v2260 = vld [vmem:[#allocation2 + $0x70] sm:$0xff]
    %2261 = vmatprep.subr.mxu0 %v1270
    %2262 = vmatpush1.msra.mxu0 %v1269
    %2263 = vmatprep.subr.mxu0 %v1273
    %2264 = vmatpush1.msra.mxu0 %v1272
    %2265 = vmatprep.subr.mxu0 0.0
    %2266 = vmatpush1.msra.mxu0 0.0
    %2267 = vmatprep.subr.mxu0 0.0
    %2268 = vmatpush1.msra.mxu0 0.0
    %2269 = vmatprep.subr.mxu0 0.0
    %2270 = vmatpush1.msra.mxu0 0.0
    %2271 = vmatprep.subr.mxu0 0.0
    %2272 = vmatpush1.msra.mxu0 0.0
    %2273 = vmatprep.subr.mxu0 0.0
    %2274 = vmatpush1.msra.mxu0 0.0
    %2275 = vmatprep.subr.mxu0 0.0
    %2276 = vmatpush1.msra.mxu0 0.0
    %2277 = vmatprep.subr.mxu0 0.0
    %2278 = vmatpush1.msra.mxu0 0.0
    %2279 = vmatprep.subr.mxu0 0.0
    %2280 = vmatpush1.msra.mxu0 0.0
    %2281 = vmatprep.subr.mxu0 0.0
    %2282 = vmatpush1.msra.mxu0 0.0
    %2283 = vmatprep.subr.mxu0 0.0
    %2284 = vmatpush1.msra.mxu0 0.0
    %2285 = vmatprep.subr.mxu0 0.0
    %2286 = vmatpush1.msra.mxu0 0.0
    %2287 = vmatprep.subr.mxu0 0.0
    %2288 = vmatpush1.msra.mxu0 0.0
    %2289 = vmatprep.subr.mxu0 0.0
    %2290 = vmatpush1.msra.mxu0 0.0
    %2291 = vmatprep.subr.mxu0 0.0
    %2292 = vmatpush1.msra.mxu0 0.0
    %2293 = vmatprep.subr.mxu0 0.0
    %2294 = vmatpush1.msra.mxu0 0.0
    %2295 = vmatprep.subr.mxu0 0.0
    %2296 = vmatpush1.msra.mxu0 0.0
    %2297 = vmatprep.subr.mxu0 0.0
    %2298 = vmatpush1.msra.mxu0 0.0
    %2299 = vmatprep.subr.mxu0 0.0
    %2300 = vmatpush1.msra.mxu0 0.0
    %2301 = vmatprep.subr.mxu0 0.0
    %2302 = vmatpush1.msra.mxu0 0.0
    %2303 = vmatprep.subr.mxu0 0.0
    %2304 = vmatpush1.msra.mxu0 0.0
    %2305 = vmatprep.subr.mxu0 0.0
    %2306 = vmatpush1.msra.mxu0 0.0
    %2307 = vmatprep.subr.mxu0 0.0
    %2308 = vmatpush1.msra.mxu0 0.0
    %2309 = vmatprep.subr.mxu0 0.0
    %2310 = vmatpush1.msra.mxu0 0.0
    %2311 = vmatprep.subr.mxu0 0.0
    %2312 = vmatpush1.msra.mxu0 0.0
    %2313 = vmatprep.subr.mxu0 0.0
    %2314 = vmatpush1.msra.mxu0 0.0
    %2315 = vmatprep.subr.mxu0 0.0
    %2316 = vmatpush1.msra.mxu0 0.0
    %2317 = vmatprep.subr.mxu0 0.0
    %2318 = vmatpush1.msra.mxu0 0.0
    %2319 = vmatprep.subr.mxu0 0.0
    %2320 = vmatpush1.msra.mxu0 0.0
    %2321 = vmatprep.subr.mxu0 0.0
    %2322 = vmatpush1.msra.mxu0 0.0
    %2323 = vmatprep.subr.mxu0 0.0
    %2324 = vmatpush1.msra.mxu0 0.0
    %2325 = vmatprep.mubr.f32.mxu0 0.0
    %2326 = vmatmul.mubr.f32.gmra.mrb[0].mxu0 %v2185
    %v2327 = vpop.f32.mrb[0].mxu0
    %v2328 = vadd.f32 %v1280, %v2327
    %v2329 = vpop.f32.mrb[0].mxu0
    %v2330 = vadd.f32 %v1284, %v2329
    %2331 = vdwg.mxu0
    %2332 = vmatprep.subr.mxu0 0.0
    %2333 = vmatpush1.msra.mxu0 %v1271
    %2334 = vmatprep.subr.mxu0 0.0
    %2335 = vmatpush1.msra.mxu0 %v1274
    %2336 = vmatprep.subr.mxu0 0.0
    %2337 = vmatpush1.msra.mxu0 0.0
    %2338 = vmatprep.subr.mxu0 0.0
    %2339 = vmatpush1.msra.mxu0 0.0
    %2340 = vmatprep.subr.mxu0 0.0
    %2341 = vmatpush1.msra.mxu0 0.0
    %2342 = vmatprep.subr.mxu0 0.0
    %2343 = vmatpush1.msra.mxu0 0.0
    %2344 = vmatprep.subr.mxu0 0.0
    %2345 = vmatpush1.msra.mxu0 0.0
    %2346 = vmatprep.subr.mxu0 0.0
    %2347 = vmatpush1.msra.mxu0 0.0
    %2348 = vmatprep.subr.mxu0 0.0
    %2349 = vmatpush1.msra.mxu0 0.0
    %2350 = vmatprep.subr.mxu0 0.0
    %2351 = vmatpush1.msra.mxu0 0.0
    %2352 = vmatprep.subr.mxu0 0.0
    %2353 = vmatpush1.msra.mxu0 0.0
    %2354 = vmatprep.subr.mxu0 0.0
    %2355 = vmatpush1.msra.mxu0 0.0
    %2356 = vmatprep.subr.mxu0 0.0
    %2357 = vmatpush1.msra.mxu0 0.0
    %2358 = vmatprep.subr.mxu0 0.0
    %2359 = vmatpush1.msra.mxu0 0.0
    %2360 = vmatprep.subr.mxu0 0.0
    %2361 = vmatpush1.msra.mxu0 0.0
    %2362 = vmatprep.subr.mxu0 0.0
    %2363 = vmatpush1.msra.mxu0 0.0
    %2364 = vmatprep.subr.mxu0 0.0
    %2365 = vmatpush1.msra.mxu0 0.0
    %2366 = vmatprep.subr.mxu0 0.0
    %2367 = vmatpush1.msra.mxu0 0.0
    %2368 = vmatprep.subr.mxu0 0.0
    %2369 = vmatpush1.msra.mxu0 0.0
    %2370 = vmatprep.subr.mxu0 0.0
    %2371 = vmatpush1.msra.mxu0 0.0
    %2372 = vmatprep.subr.mxu0 0.0
    %2373 = vmatpush1.msra.mxu0 0.0
    %2374 = vmatprep.subr.mxu0 0.0
    %2375 = vmatpush1.msra.mxu0 0.0
    %2376 = vmatprep.subr.mxu0 0.0
    %2377 = vmatpush1.msra.mxu0 0.0
    %2378 = vmatprep.subr.mxu0 0.0
    %2379 = vmatpush1.msra.mxu0 0.0
    %2380 = vmatprep.subr.mxu0 0.0
    %2381 = vmatpush1.msra.mxu0 0.0
    %2382 = vmatprep.subr.mxu0 0.0
    %2383 = vmatpush1.msra.mxu0 0.0
    %2384 = vmatprep.subr.mxu0 0.0
    %2385 = vmatpush1.msra.mxu0 0.0
    %2386 = vmatprep.subr.mxu0 0.0
    %2387 = vmatpush1.msra.mxu0 0.0
    %2388 = vmatprep.subr.mxu0 0.0
    %2389 = vmatpush1.msra.mxu0 0.0
    %2390 = vmatprep.subr.mxu0 0.0
    %2391 = vmatpush1.msra.mxu0 0.0
    %2392 = vmatprep.subr.mxu0 0.0
    %2393 = vmatpush1.msra.mxu0 0.0
    %2394 = vmatprep.subr.mxu0 0.0
    %2395 = vmatpush1.msra.mxu0 0.0
    %2396 = vmatprep.mubr.f32.mxu0 0.0
    %2397 = vmatmul.mubr.f32.gmra.mrb[0].mxu0 %v2185
    %v2398 = vpop.f32.mrb[0].mxu0
    %v2399 = vadd.f32 %v1288, %v2398
    %v2400 = vpop.f32.mrb[0].mxu0
    %2401 = vdwg.mxu0
    %v2402 = vadd.f32 %v2258, %v2328
    %v2403 = vxor.u32 %v2402, 2147483648
    %v2404 = vmul.f32 %v2403, 1.442695
    %v2405 = vpow.pop %v2404
    %v2406 = vadd.f32 %v2405, 1.0
    %v2407 = vrcp.pop %v2406
    %v2408 = vmul.f32 1.0, %v2407
    %v2409 = vadd.f32 %v2259, %v2330
    %v2410 = vxor.u32 %v2409, 2147483648
    %v2411 = vmul.f32 %v2410, 1.442695
    %v2412 = vpow.pop %v2411
    %v2413 = vadd.f32 %v2412, 1.0
    %v2414 = vrcp.pop %v2413
    %v2415 = vmul.f32 1.0, %v2414
    %v2416 = vmul.f32 %v2408, %v2399
    %v2417 = vadd.f32 %v2260, %v2416
    %v2418 = vtanh.pop %v2417
    %v2419 = vsub.f32 1.0, %v2415
    %v2420 = vmul.f32 %v2419, %v2418
    %v2421 = vmul.f32 %v2415, %v2180
    %v2422 = vadd.f32 %v2420, %v2421
    %s2423 = scalar_lea.vmem %s7, 64
    %v2424 = vld [vmem:[%s2423] sm:$0xff]
    %v2425 = vld [vmem:[%s2423 + $0x8] sm:$0xff]
    %v2427 = vsel %vm1292, %v2422, 0
    %2429 = vmatprep.subr.mxu0 0.0
    %2430 = vmatpush1.msra.mxu0 %v2424
    %2431 = vmatprep.subr.mxu0 0.0
    %2432 = vmatpush1.msra.mxu0 %v2425
    %2433 = vmatprep.subr.mxu0 0.0
    %2434 = vmatpush1.msra.mxu0 0.0
    %2435 = vmatprep.subr.mxu0 0.0
    %2436 = vmatpush1.msra.mxu0 0.0
    %2437 = vmatprep.subr.mxu0 0.0
    %2438 = vmatpush1.msra.mxu0 0.0
    %2439 = vmatprep.subr.mxu0 0.0
    %2440 = vmatpush1.msra.mxu0 0.0
    %2441 = vmatprep.subr.mxu0 0.0
    %2442 = vmatpush1.msra.mxu0 0.0
    %2443 = vmatprep.subr.mxu0 0.0
    %2444 = vmatpush1.msra.mxu0 0.0
    %2445 = vmatprep.subr.mxu0 0.0
    %2446 = vmatpush1.msra.mxu0 0.0
    %2447 = vmatprep.subr.mxu0 0.0
    %2448 = vmatpush1.msra.mxu0 0.0
    %2449 = vmatprep.subr.mxu0 0.0
    %2450 = vmatpush1.msra.mxu0 0.0
    %2451 = vmatprep.subr.mxu0 0.0
    %2452 = vmatpush1.msra.mxu0 0.0
    %2453 = vmatprep.subr.mxu0 0.0
    %2454 = vmatpush1.msra.mxu0 0.0
    %2455 = vmatprep.subr.mxu0 0.0
    %2456 = vmatpush1.msra.mxu0 0.0
    %2457 = vmatprep.subr.mxu0 0.0
    %2458 = vmatpush1.msra.mxu0 0.0
    %2459 = vmatprep.subr.mxu0 0.0
    %2460 = vmatpush1.msra.mxu0 0.0
    %2461 = vmatprep.subr.mxu0 0.0
    %2462 = vmatpush1.msra.mxu0 0.0
    %2463 = vmatprep.subr.mxu0 0.0
    %2464 = vmatpush1.msra.mxu0 0.0
    %2465 = vmatprep.subr.mxu0 0.0
    %2466 = vmatpush1.msra.mxu0 0.0
    %2467 = vmatprep.subr.mxu0 0.0
    %2468 = vmatpush1.msra.mxu0 0.0
    %2469 = vmatprep.subr.mxu0 0.0
    %2470 = vmatpush1.msra.mxu0 0.0
    %2471 = vmatprep.subr.mxu0 0.0
    %2472 = vmatpush1.msra.mxu0 0.0
    %2473 = vmatprep.subr.mxu0 0.0
    %2474 = vmatpush1.msra.mxu0 0.0
    %2475 = vmatprep.subr.mxu0 0.0
    %2476 = vmatpush1.msra.mxu0 0.0
    %2477 = vmatprep.subr.mxu0 0.0
    %2478 = vmatpush1.msra.mxu0 0.0
    %2479 = vmatprep.subr.mxu0 0.0
    %2480 = vmatpush1.msra.mxu0 0.0
    %2481 = vmatprep.subr.mxu0 0.0
    %2482 = vmatpush1.msra.mxu0 0.0
    %2483 = vmatprep.subr.mxu0 0.0
    %2484 = vmatpush1.msra.mxu0 0.0
    %2485 = vmatprep.subr.mxu0 0.0
    %2486 = vmatpush1.msra.mxu0 0.0
    %2487 = vmatprep.subr.mxu0 0.0
    %2488 = vmatpush1.msra.mxu0 0.0
    %2489 = vmatprep.subr.mxu0 0.0
    %2490 = vmatpush1.msra.mxu0 0.0
    %2491 = vmatprep.subr.mxu0 0.0
    %2492 = vmatpush1.msra.mxu0 0.0
    %2493 = vmatprep.mubr.f32.mxu0 0.0
    %2494 = vmatmul.mubr.f32.gmra.mrb[0].mxu0 %v2427
    %v2495 = vpop.f32.mrb[0].mxu0
    %v2496 = vadd.f32 0.0, %v2495
    %v2497 = vpop.f32.mrb[0].mxu0
    %2498 = vdwg.mxu0
    %v2499 = vadd.f32 %v2257, %v2496
    %v2500 = vld [vmem:[#allocation2 + $0x78] sm:$0xff]
    %v2501 = vld [vmem:[#allocation2 + $0x80] sm:$0xff]
    %v2502 = vld [vmem:[#allocation2 + $0x88] sm:$0xff]
    %2503 = vmatprep.subr.mxu0 %v1270
    %2504 = vmatpush1.msra.mxu0 %v1269
    %2505 = vmatprep.subr.mxu0 %v1273
    %2506 = vmatpush1.msra.mxu0 %v1272
    %2507 = vmatprep.subr.mxu0 0.0
    %2508 = vmatpush1.msra.mxu0 0.0
    %2509 = vmatprep.subr.mxu0 0.0
    %2510 = vmatpush1.msra.mxu0 0.0
    %2511 = vmatprep.subr.mxu0 0.0
    %2512 = vmatpush1.msra.mxu0 0.0
    %2513 = vmatprep.subr.mxu0 0.0
    %2514 = vmatpush1.msra.mxu0 0.0
    %2515 = vmatprep.subr.mxu0 0.0
    %2516 = vmatpush1.msra.mxu0 0.0
    %2517 = vmatprep.subr.mxu0 0.0
    %2518 = vmatpush1.msra.mxu0 0.0
    %2519 = vmatprep.subr.mxu0 0.0
    %2520 = vmatpush1.msra.mxu0 0.0
    %2521 = vmatprep.subr.mxu0 0.0
    %2522 = vmatpush1.msra.mxu0 0.0
    %2523 = vmatprep.subr.mxu0 0.0
    %2524 = vmatpush1.msra.mxu0 0.0
    %2525 = vmatprep.subr.mxu0 0.0
    %2526 = vmatpush1.msra.mxu0 0.0
    %2527 = vmatprep.subr.mxu0 0.0
    %2528 = vmatpush1.msra.mxu0 0.0
    %2529 = vmatprep.subr.mxu0 0.0
    %2530 = vmatpush1.msra.mxu0 0.0
    %2531 = vmatprep.subr.mxu0 0.0
    %2532 = vmatpush1.msra.mxu0 0.0
    %2533 = vmatprep.subr.mxu0 0.0
    %2534 = vmatpush1.msra.mxu0 0.0
    %2535 = vmatprep.subr.mxu0 0.0
    %2536 = vmatpush1.msra.mxu0 0.0
    %2537 = vmatprep.subr.mxu0 0.0
    %2538 = vmatpush1.msra.mxu0 0.0
    %2539 = vmatprep.subr.mxu0 0.0
    %2540 = vmatpush1.msra.mxu0 0.0
    %2541 = vmatprep.subr.mxu0 0.0
    %2542 = vmatpush1.msra.mxu0 0.0
    %2543 = vmatprep.subr.mxu0 0.0
    %2544 = vmatpush1.msra.mxu0 0.0
    %2545 = vmatprep.subr.mxu0 0.0
    %2546 = vmatpush1.msra.mxu0 0.0
    %2547 = vmatprep.subr.mxu0 0.0
    %2548 = vmatpush1.msra.mxu0 0.0
    %2549 = vmatprep.subr.mxu0 0.0
    %2550 = vmatpush1.msra.mxu0 0.0
    %2551 = vmatprep.subr.mxu0 0.0
    %2552 = vmatpush1.msra.mxu0 0.0
    %2553 = vmatprep.subr.mxu0 0.0
    %2554 = vmatpush1.msra.mxu0 0.0
    %2555 = vmatprep.subr.mxu0 0.0
    %2556 = vmatpush1.msra.mxu0 0.0
    %2557 = vmatprep.subr.mxu0 0.0
    %2558 = vmatpush1.msra.mxu0 0.0
    %2559 = vmatprep.subr.mxu0 0.0
    %2560 = vmatpush1.msra.mxu0 0.0
    %2561 = vmatprep.subr.mxu0 0.0
    %2562 = vmatpush1.msra.mxu0 0.0
    %2563 = vmatprep.subr.mxu0 0.0
    %2564 = vmatpush1.msra.mxu0 0.0
    %2565 = vmatprep.subr.mxu0 0.0
    %2566 = vmatpush1.msra.mxu0 0.0
    %2567 = vmatprep.mubr.f32.mxu0 0.0
    %2568 = vmatmul.mubr.f32.gmra.mrb[0].mxu0 %v2427
    %v2569 = vpop.f32.mrb[0].mxu0
    %v2570 = vadd.f32 %v1280, %v2569
    %v2571 = vpop.f32.mrb[0].mxu0
    %v2572 = vadd.f32 %v1284, %v2571
    %2573 = vdwg.mxu0
    %2574 = vmatprep.subr.mxu0 0.0
    %2575 = vmatpush1.msra.mxu0 %v1271
    %2576 = vmatprep.subr.mxu0 0.0
    %2577 = vmatpush1.msra.mxu0 %v1274
    %2578 = vmatprep.subr.mxu0 0.0
    %2579 = vmatpush1.msra.mxu0 0.0
    %2580 = vmatprep.subr.mxu0 0.0
    %2581 = vmatpush1.msra.mxu0 0.0
    %2582 = vmatprep.subr.mxu0 0.0
    %2583 = vmatpush1.msra.mxu0 0.0
    %2584 = vmatprep.subr.mxu0 0.0
    %2585 = vmatpush1.msra.mxu0 0.0
    %2586 = vmatprep.subr.mxu0 0.0
    %2587 = vmatpush1.msra.mxu0 0.0
    %2588 = vmatprep.subr.mxu0 0.0
    %2589 = vmatpush1.msra.mxu0 0.0
    %2590 = vmatprep.subr.mxu0 0.0
    %2591 = vmatpush1.msra.mxu0 0.0
    %2592 = vmatprep.subr.mxu0 0.0
    %2593 = vmatpush1.msra.mxu0 0.0
    %2594 = vmatprep.subr.mxu0 0.0
    %2595 = vmatpush1.msra.mxu0 0.0
    %2596 = vmatprep.subr.mxu0 0.0
    %2597 = vmatpush1.msra.mxu0 0.0
    %2598 = vmatprep.subr.mxu0 0.0
    %2599 = vmatpush1.msra.mxu0 0.0
    %2600 = vmatprep.subr.mxu0 0.0
    %2601 = vmatpush1.msra.mxu0 0.0
    %2602 = vmatprep.subr.mxu0 0.0
    %2603 = vmatpush1.msra.mxu0 0.0
    %2604 = vmatprep.subr.mxu0 0.0
    %2605 = vmatpush1.msra.mxu0 0.0
    %2606 = vmatprep.subr.mxu0 0.0
    %2607 = vmatpush1.msra.mxu0 0.0
    %2608 = vmatprep.subr.mxu0 0.0
    %2609 = vmatpush1.msra.mxu0 0.0
    %2610 = vmatprep.subr.mxu0 0.0
    %2611 = vmatpush1.msra.mxu0 0.0
    %2612 = vmatprep.subr.mxu0 0.0
    %2613 = vmatpush1.msra.mxu0 0.0
    %2614 = vmatprep.subr.mxu0 0.0
    %2615 = vmatpush1.msra.mxu0 0.0
    %2616 = vmatprep.subr.mxu0 0.0
    %2617 = vmatpush1.msra.mxu0 0.0
    %2618 = vmatprep.subr.mxu0 0.0
    %2619 = vmatpush1.msra.mxu0 0.0
    %2620 = vmatprep.subr.mxu0 0.0
    %2621 = vmatpush1.msra.mxu0 0.0
    %2622 = vmatprep.subr.mxu0 0.0
    %2623 = vmatpush1.msra.mxu0 0.0
    %2624 = vmatprep.subr.mxu0 0.0
    %2625 = vmatpush1.msra.mxu0 0.0
    %2626 = vmatprep.subr.mxu0 0.0
    %2627 = vmatpush1.msra.mxu0 0.0
    %2628 = vmatprep.subr.mxu0 0.0
    %2629 = vmatpush1.msra.mxu0 0.0
    %2630 = vmatprep.subr.mxu0 0.0
    %2631 = vmatpush1.msra.mxu0 0.0
    %2632 = vmatprep.subr.mxu0 0.0
    %2633 = vmatpush1.msra.mxu0 0.0
    %2634 = vmatprep.subr.mxu0 0.0
    %2635 = vmatpush1.msra.mxu0 0.0
    %2636 = vmatprep.subr.mxu0 0.0
    %2637 = vmatpush1.msra.mxu0 0.0
    %2638 = vmatprep.mubr.f32.mxu0 0.0
    %2639 = vmatmul.mubr.f32.gmra.mrb[0].mxu0 %v2427
    %v2640 = vpop.f32.mrb[0].mxu0
    %v2641 = vadd.f32 %v1288, %v2640
    %v2642 = vpop.f32.mrb[0].mxu0
    %2643 = vdwg.mxu0
    %v2644 = vadd.f32 %v2500, %v2570
    %v2645 = vxor.u32 %v2644, 2147483648
    %v2646 = vmul.f32 %v2645, 1.442695
    %v2647 = vpow.pop %v2646
    %v2648 = vadd.f32 %v2647, 1.0
    %v2649 = vrcp.pop %v2648
    %v2650 = vmul.f32 1.0, %v2649
    %v2651 = vadd.f32 %v2501, %v2572
    %v2652 = vxor.u32 %v2651, 2147483648
    %v2653 = vmul.f32 %v2652, 1.442695
    %v2654 = vpow.pop %v2653
    %v2655 = vadd.f32 %v2654, 1.0
    %v2656 = vrcp.pop %v2655
    %v2657 = vmul.f32 1.0, %v2656
    %v2658 = vmul.f32 %v2650, %v2641
    %v2659 = vadd.f32 %v2502, %v2658
    %v2660 = vtanh.pop %v2659
    %v2661 = vsub.f32 1.0, %v2657
    %v2662 = vmul.f32 %v2661, %v2660
    %v2663 = vmul.f32 %v2657, %v2422
    %v2664 = vadd.f32 %v2662, %v2663
    %s2665 = scalar_lea.vmem %s7, 80
    %v2666 = vld [vmem:[%s2665] sm:$0xff]
    %v2667 = vld [vmem:[%s2665 + $0x8] sm:$0xff]
    %v2669 = vsel %vm1292, %v2664, 0
    %2671 = vmatprep.subr.mxu0 0.0
    %2672 = vmatpush1.msra.mxu0 %v2666
    %2673 = vmatprep.subr.mxu0 0.0
    %2674 = vmatpush1.msra.mxu0 %v2667
    %2675 = vmatprep.subr.mxu0 0.0
    %2676 = vmatpush1.msra.mxu0 0.0
    %2677 = vmatprep.subr.mxu0 0.0
    %2678 = vmatpush1.msra.mxu0 0.0
    %2679 = vmatprep.subr.mxu0 0.0
    %2680 = vmatpush1.msra.mxu0 0.0
    %2681 = vmatprep.subr.mxu0 0.0
    %2682 = vmatpush1.msra.mxu0 0.0
    %2683 = vmatprep.subr.mxu0 0.0
    %2684 = vmatpush1.msra.mxu0 0.0
    %2685 = vmatprep.subr.mxu0 0.0
    %2686 = vmatpush1.msra.mxu0 0.0
    %2687 = vmatprep.subr.mxu0 0.0
    %2688 = vmatpush1.msra.mxu0 0.0
    %2689 = vmatprep.subr.mxu0 0.0
    %2690 = vmatpush1.msra.mxu0 0.0
    %2691 = vmatprep.subr.mxu0 0.0
    %2692 = vmatpush1.msra.mxu0 0.0
    %2693 = vmatprep.subr.mxu0 0.0
    %2694 = vmatpush1.msra.mxu0 0.0
    %2695 = vmatprep.subr.mxu0 0.0
    %2696 = vmatpush1.msra.mxu0 0.0
    %2697 = vmatprep.subr.mxu0 0.0
    %2698 = vmatpush1.msra.mxu0 0.0
    %2699 = vmatprep.subr.mxu0 0.0
    %2700 = vmatpush1.msra.mxu0 0.0
    %2701 = vmatprep.subr.mxu0 0.0
    %2702 = vmatpush1.msra.mxu0 0.0
    %2703 = vmatprep.subr.mxu0 0.0
    %2704 = vmatpush1.msra.mxu0 0.0
    %2705 = vmatprep.subr.mxu0 0.0
    %2706 = vmatpush1.msra.mxu0 0.0
    %2707 = vmatprep.subr.mxu0 0.0
    %2708 = vmatpush1.msra.mxu0 0.0
    %2709 = vmatprep.subr.mxu0 0.0
    %2710 = vmatpush1.msra.mxu0 0.0
    %2711 = vmatprep.subr.mxu0 0.0
    %2712 = vmatpush1.msra.mxu0 0.0
    %2713 = vmatprep.subr.mxu0 0.0
    %2714 = vmatpush1.msra.mxu0 0.0
    %2715 = vmatprep.subr.mxu0 0.0
    %2716 = vmatpush1.msra.mxu0 0.0
    %2717 = vmatprep.subr.mxu0 0.0
    %2718 = vmatpush1.msra.mxu0 0.0
    %2719 = vmatprep.subr.mxu0 0.0
    %2720 = vmatpush1.msra.mxu0 0.0
    %2721 = vmatprep.subr.mxu0 0.0
    %2722 = vmatpush1.msra.mxu0 0.0
    %2723 = vmatprep.subr.mxu0 0.0
    %2724 = vmatpush1.msra.mxu0 0.0
    %2725 = vmatprep.subr.mxu0 0.0
    %2726 = vmatpush1.msra.mxu0 0.0
    %2727 = vmatprep.subr.mxu0 0.0
    %2728 = vmatpush1.msra.mxu0 0.0
    %2729 = vmatprep.subr.mxu0 0.0
    %2730 = vmatpush1.msra.mxu0 0.0
    %2731 = vmatprep.subr.mxu0 0.0
    %2732 = vmatpush1.msra.mxu0 0.0
    %2733 = vmatprep.subr.mxu0 0.0
    %2734 = vmatpush1.msra.mxu0 0.0
    %2735 = vmatprep.mubr.f32.mxu0 0.0
    %2736 = vmatmul.mubr.f32.gmra.mrb[0].mxu0 %v2669
    %v2737 = vpop.f32.mrb[0].mxu0
    %v2738 = vadd.f32 0.0, %v2737
    %v2739 = vpop.f32.mrb[0].mxu0
    %2740 = vdwg.mxu0
    %v2741 = vadd.f32 %v2499, %v2738
    %v2742 = vld [vmem:[#allocation2 + $0x90] sm:$0xff]
    %v2743 = vld [vmem:[#allocation2 + $0x98] sm:$0xff]
    %v2744 = vld [vmem:[#allocation2 + $0xa0] sm:$0xff]
    %2745 = vmatprep.subr.mxu0 %v1270
    %2746 = vmatpush1.msra.mxu0 %v1269
    %2747 = vmatprep.subr.mxu0 %v1273
    %2748 = vmatpush1.msra.mxu0 %v1272
    %2749 = vmatprep.subr.mxu0 0.0
    %2750 = vmatpush1.msra.mxu0 0.0
    %2751 = vmatprep.subr.mxu0 0.0
    %2752 = vmatpush1.msra.mxu0 0.0
    %2753 = vmatprep.subr.mxu0 0.0
    %2754 = vmatpush1.msra.mxu0 0.0
    %2755 = vmatprep.subr.mxu0 0.0
    %2756 = vmatpush1.msra.mxu0 0.0
    %2757 = vmatprep.subr.mxu0 0.0
    %2758 = vmatpush1.msra.mxu0 0.0
    %2759 = vmatprep.subr.mxu0 0.0
    %2760 = vmatpush1.msra.mxu0 0.0
    %2761 = vmatprep.subr.mxu0 0.0
    %2762 = vmatpush1.msra.mxu0 0.0
    %2763 = vmatprep.subr.mxu0 0.0
    %2764 = vmatpush1.msra.mxu0 0.0
    %2765 = vmatprep.subr.mxu0 0.0
    %2766 = vmatpush1.msra.mxu0 0.0
    %2767 = vmatprep.subr.mxu0 0.0
    %2768 = vmatpush1.msra.mxu0 0.0
    %2769 = vmatprep.subr.mxu0 0.0
    %2770 = vmatpush1.msra.mxu0 0.0
    %2771 = vmatprep.subr.mxu0 0.0
    %2772 = vmatpush1.msra.mxu0 0.0
    %2773 = vmatprep.subr.mxu0 0.0
    %2774 = vmatpush1.msra.mxu0 0.0
    %2775 = vmatprep.subr.mxu0 0.0
    %2776 = vmatpush1.msra.mxu0 0.0
    %2777 = vmatprep.subr.mxu0 0.0
    %2778 = vmatpush1.msra.mxu0 0.0
    %2779 = vmatprep.subr.mxu0 0.0
    %2780 = vmatpush1.msra.mxu0 0.0
    %2781 = vmatprep.subr.mxu0 0.0
    %2782 = vmatpush1.msra.mxu0 0.0
    %2783 = vmatprep.subr.mxu0 0.0
    %2784 = vmatpush1.msra.mxu0 0.0
    %2785 = vmatprep.subr.mxu0 0.0
    %2786 = vmatpush1.msra.mxu0 0.0
    %2787 = vmatprep.subr.mxu0 0.0
    %2788 = vmatpush1.msra.mxu0 0.0
    %2789 = vmatprep.subr.mxu0 0.0
    %2790 = vmatpush1.msra.mxu0 0.0
    %2791 = vmatprep.subr.mxu0 0.0
    %2792 = vmatpush1.msra.mxu0 0.0
    %2793 = vmatprep.subr.mxu0 0.0
    %2794 = vmatpush1.msra.mxu0 0.0
    %2795 = vmatprep.subr.mxu0 0.0
    %2796 = vmatpush1.msra.mxu0 0.0
    %2797 = vmatprep.subr.mxu0 0.0
    %2798 = vmatpush1.msra.mxu0 0.0
    %2799 = vmatprep.subr.mxu0 0.0
    %2800 = vmatpush1.msra.mxu0 0.0
    %2801 = vmatprep.subr.mxu0 0.0
    %2802 = vmatpush1.msra.mxu0 0.0
    %2803 = vmatprep.subr.mxu0 0.0
    %2804 = vmatpush1.msra.mxu0 0.0
    %2805 = vmatprep.subr.mxu0 0.0
    %2806 = vmatpush1.msra.mxu0 0.0
    %2807 = vmatprep.subr.mxu0 0.0
    %2808 = vmatpush1.msra.mxu0 0.0
    %2809 = vmatprep.mubr.f32.mxu0 0.0
    %2810 = vmatmul.mubr.f32.gmra.mrb[0].mxu0 %v2669
    %v2811 = vpop.f32.mrb[0].mxu0
    %v2812 = vadd.f32 %v1280, %v2811
    %v2813 = vpop.f32.mrb[0].mxu0
    %v2814 = vadd.f32 %v1284, %v2813
    %2815 = vdwg.mxu0
    %2816 = vmatprep.subr.mxu0 0.0
    %2817 = vmatpush1.msra.mxu0 %v1271
    %2818 = vmatprep.subr.mxu0 0.0
    %2819 = vmatpush1.msra.mxu0 %v1274
    %2820 = vmatprep.subr.mxu0 0.0
    %2821 = vmatpush1.msra.mxu0 0.0
    %2822 = vmatprep.subr.mxu0 0.0
    %2823 = vmatpush1.msra.mxu0 0.0
    %2824 = vmatprep.subr.mxu0 0.0
    %2825 = vmatpush1.msra.mxu0 0.0
    %2826 = vmatprep.subr.mxu0 0.0
    %2827 = vmatpush1.msra.mxu0 0.0
    %2828 = vmatprep.subr.mxu0 0.0
    %2829 = vmatpush1.msra.mxu0 0.0
    %2830 = vmatprep.subr.mxu0 0.0
    %2831 = vmatpush1.msra.mxu0 0.0
    %2832 = vmatprep.subr.mxu0 0.0
    %2833 = vmatpush1.msra.mxu0 0.0
    %2834 = vmatprep.subr.mxu0 0.0
    %2835 = vmatpush1.msra.mxu0 0.0
    %2836 = vmatprep.subr.mxu0 0.0
    %2837 = vmatpush1.msra.mxu0 0.0
    %2838 = vmatprep.subr.mxu0 0.0
    %2839 = vmatpush1.msra.mxu0 0.0
    %2840 = vmatprep.subr.mxu0 0.0
    %2841 = vmatpush1.msra.mxu0 0.0
    %2842 = vmatprep.subr.mxu0 0.0
    %2843 = vmatpush1.msra.mxu0 0.0
    %2844 = vmatprep.subr.mxu0 0.0
    %2845 = vmatpush1.msra.mxu0 0.0
    %2846 = vmatprep.subr.mxu0 0.0
    %2847 = vmatpush1.msra.mxu0 0.0
    %2848 = vmatprep.subr.mxu0 0.0
    %2849 = vmatpush1.msra.mxu0 0.0
    %2850 = vmatprep.subr.mxu0 0.0
    %2851 = vmatpush1.msra.mxu0 0.0
    %2852 = vmatprep.subr.mxu0 0.0
    %2853 = vmatpush1.msra.mxu0 0.0
    %2854 = vmatprep.subr.mxu0 0.0
    %2855 = vmatpush1.msra.mxu0 0.0
    %2856 = vmatprep.subr.mxu0 0.0
    %2857 = vmatpush1.msra.mxu0 0.0
    %2858 = vmatprep.subr.mxu0 0.0
    %2859 = vmatpush1.msra.mxu0 0.0
    %2860 = vmatprep.subr.mxu0 0.0
    %2861 = vmatpush1.msra.mxu0 0.0
    %2862 = vmatprep.subr.mxu0 0.0
    %2863 = vmatpush1.msra.mxu0 0.0
    %2864 = vmatprep.subr.mxu0 0.0
    %2865 = vmatpush1.msra.mxu0 0.0
    %2866 = vmatprep.subr.mxu0 0.0
    %2867 = vmatpush1.msra.mxu0 0.0
    %2868 = vmatprep.subr.mxu0 0.0
    %2869 = vmatpush1.msra.mxu0 0.0
    %2870 = vmatprep.subr.mxu0 0.0
    %2871 = vmatpush1.msra.mxu0 0.0
    %2872 = vmatprep.subr.mxu0 0.0
    %2873 = vmatpush1.msra.mxu0 0.0
    %2874 = vmatprep.subr.mxu0 0.0
    %2875 = vmatpush1.msra.mxu0 0.0
    %2876 = vmatprep.subr.mxu0 0.0
    %2877 = vmatpush1.msra.mxu0 0.0
    %2878 = vmatprep.subr.mxu0 0.0
    %2879 = vmatpush1.msra.mxu0 0.0
    %2880 = vmatprep.mubr.f32.mxu0 0.0
    %2881 = vmatmul.mubr.f32.gmra.mrb[0].mxu0 %v2669
    %v2882 = vpop.f32.mrb[0].mxu0
    %v2883 = vadd.f32 %v1288, %v2882
    %v2884 = vpop.f32.mrb[0].mxu0
    %2885 = vdwg.mxu0
    %v2886 = vadd.f32 %v2742, %v2812
    %v2887 = vxor.u32 %v2886, 2147483648
    %v2888 = vmul.f32 %v2887, 1.442695
    %v2889 = vpow.pop %v2888
    %v2890 = vadd.f32 %v2889, 1.0
    %v2891 = vrcp.pop %v2890
    %v2892 = vmul.f32 1.0, %v2891
    %v2893 = vadd.f32 %v2743, %v2814
    %v2894 = vxor.u32 %v2893, 2147483648
    %v2895 = vmul.f32 %v2894, 1.442695
    %v2896 = vpow.pop %v2895
    %v2897 = vadd.f32 %v2896, 1.0
    %v2898 = vrcp.pop %v2897
    %v2899 = vmul.f32 1.0, %v2898
    %v2900 = vmul.f32 %v2892, %v2883
    %v2901 = vadd.f32 %v2744, %v2900
    %v2902 = vtanh.pop %v2901
    %v2903 = vsub.f32 1.0, %v2899
    %v2904 = vmul.f32 %v2903, %v2902
    %v2905 = vmul.f32 %v2899, %v2664
    %v2906 = vadd.f32 %v2904, %v2905
    %s2907 = scalar_lea.vmem %s7, 96
    %v2908 = vld [vmem:[%s2907] sm:$0xff]
    %v2909 = vld [vmem:[%s2907 + $0x8] sm:$0xff]
    %v2911 = vsel %vm1292, %v2906, 0
    %2913 = vmatprep.subr.mxu0 0.0
    %2914 = vmatpush1.msra.mxu0 %v2908
    %2915 = vmatprep.subr.mxu0 0.0
    %2916 = vmatpush1.msra.mxu0 %v2909
    %2917 = vmatprep.subr.mxu0 0.0
    %2918 = vmatpush1.msra.mxu0 0.0
    %2919 = vmatprep.subr.mxu0 0.0
    %2920 = vmatpush1.msra.mxu0 0.0
    %2921 = vmatprep.subr.mxu0 0.0
    %2922 = vmatpush1.msra.mxu0 0.0
    %2923 = vmatprep.subr.mxu0 0.0
    %2924 = vmatpush1.msra.mxu0 0.0
    %2925 = vmatprep.subr.mxu0 0.0
    %2926 = vmatpush1.msra.mxu0 0.0
    %2927 = vmatprep.subr.mxu0 0.0
    %2928 = vmatpush1.msra.mxu0 0.0
    %2929 = vmatprep.subr.mxu0 0.0
    %2930 = vmatpush1.msra.mxu0 0.0
    %2931 = vmatprep.subr.mxu0 0.0
    %2932 = vmatpush1.msra.mxu0 0.0
    %2933 = vmatprep.subr.mxu0 0.0
    %2934 = vmatpush1.msra.mxu0 0.0
    %2935 = vmatprep.subr.mxu0 0.0
    %2936 = vmatpush1.msra.mxu0 0.0
    %2937 = vmatprep.subr.mxu0 0.0
    %2938 = vmatpush1.msra.mxu0 0.0
    %2939 = vmatprep.subr.mxu0 0.0
    %2940 = vmatpush1.msra.mxu0 0.0
    %2941 = vmatprep.subr.mxu0 0.0
    %2942 = vmatpush1.msra.mxu0 0.0
    %2943 = vmatprep.subr.mxu0 0.0
    %2944 = vmatpush1.msra.mxu0 0.0
    %2945 = vmatprep.subr.mxu0 0.0
    %2946 = vmatpush1.msra.mxu0 0.0
    %2947 = vmatprep.subr.mxu0 0.0
    %2948 = vmatpush1.msra.mxu0 0.0
    %2949 = vmatprep.subr.mxu0 0.0
    %2950 = vmatpush1.msra.mxu0 0.0
    %2951 = vmatprep.subr.mxu0 0.0
    %2952 = vmatpush1.msra.mxu0 0.0
    %2953 = vmatprep.subr.mxu0 0.0
    %2954 = vmatpush1.msra.mxu0 0.0
    %2955 = vmatprep.subr.mxu0 0.0
    %2956 = vmatpush1.msra.mxu0 0.0
    %2957 = vmatprep.subr.mxu0 0.0
    %2958 = vmatpush1.msra.mxu0 0.0
    %2959 = vmatprep.subr.mxu0 0.0
    %2960 = vmatpush1.msra.mxu0 0.0
    %2961 = vmatprep.subr.mxu0 0.0
    %2962 = vmatpush1.msra.mxu0 0.0
    %2963 = vmatprep.subr.mxu0 0.0
    %2964 = vmatpush1.msra.mxu0 0.0
    %2965 = vmatprep.subr.mxu0 0.0
    %2966 = vmatpush1.msra.mxu0 0.0
    %2967 = vmatprep.subr.mxu0 0.0
    %2968 = vmatpush1.msra.mxu0 0.0
    %2969 = vmatprep.subr.mxu0 0.0
    %2970 = vmatpush1.msra.mxu0 0.0
    %2971 = vmatprep.subr.mxu0 0.0
    %2972 = vmatpush1.msra.mxu0 0.0
    %2973 = vmatprep.subr.mxu0 0.0
    %2974 = vmatpush1.msra.mxu0 0.0
    %2975 = vmatprep.subr.mxu0 0.0
    %2976 = vmatpush1.msra.mxu0 0.0
    %2977 = vmatprep.mubr.f32.mxu0 0.0
    %2978 = vmatmul.mubr.f32.gmra.mrb[0].mxu0 %v2911
    %v2979 = vpop.f32.mrb[0].mxu0
    %v2980 = vadd.f32 0.0, %v2979
    %v2981 = vpop.f32.mrb[0].mxu0
    %2982 = vdwg.mxu0
    %v2983 = vadd.f32 %v2741, %v2980
    %v2984 = vld [vmem:[#allocation2 + $0xa8] sm:$0xff]
    %v2985 = vld [vmem:[#allocation2 + $0xb0] sm:$0xff]
    %v2986 = vld [vmem:[#allocation2 + $0xb8] sm:$0xff]
    %2987 = vmatprep.subr.mxu0 %v1270
    %2988 = vmatpush1.msra.mxu0 %v1269
    %2989 = vmatprep.subr.mxu0 %v1273
    %2990 = vmatpush1.msra.mxu0 %v1272
    %2991 = vmatprep.subr.mxu0 0.0
    %2992 = vmatpush1.msra.mxu0 0.0
    %2993 = vmatprep.subr.mxu0 0.0
    %2994 = vmatpush1.msra.mxu0 0.0
    %2995 = vmatprep.subr.mxu0 0.0
    %2996 = vmatpush1.msra.mxu0 0.0
    %2997 = vmatprep.subr.mxu0 0.0
    %2998 = vmatpush1.msra.mxu0 0.0
    %2999 = vmatprep.subr.mxu0 0.0
    %3000 = vmatpush1.msra.mxu0 0.0
    %3001 = vmatprep.subr.mxu0 0.0
    %3002 = vmatpush1.msra.mxu0 0.0
    %3003 = vmatprep.subr.mxu0 0.0
    %3004 = vmatpush1.msra.mxu0 0.0
    %3005 = vmatprep.subr.mxu0 0.0
    %3006 = vmatpush1.msra.mxu0 0.0
    %3007 = vmatprep.subr.mxu0 0.0
    %3008 = vmatpush1.msra.mxu0 0.0
    %3009 = vmatprep.subr.mxu0 0.0
    %3010 = vmatpush1.msra.mxu0 0.0
    %3011 = vmatprep.subr.mxu0 0.0
    %3012 = vmatpush1.msra.mxu0 0.0
    %3013 = vmatprep.subr.mxu0 0.0
    %3014 = vmatpush1.msra.mxu0 0.0
    %3015 = vmatprep.subr.mxu0 0.0
    %3016 = vmatpush1.msra.mxu0 0.0
    %3017 = vmatprep.subr.mxu0 0.0
    %3018 = vmatpush1.msra.mxu0 0.0
    %3019 = vmatprep.subr.mxu0 0.0
    %3020 = vmatpush1.msra.mxu0 0.0
    %3021 = vmatprep.subr.mxu0 0.0
    %3022 = vmatpush1.msra.mxu0 0.0
    %3023 = vmatprep.subr.mxu0 0.0
    %3024 = vmatpush1.msra.mxu0 0.0
    %3025 = vmatprep.subr.mxu0 0.0
    %3026 = vmatpush1.msra.mxu0 0.0
    %3027 = vmatprep.subr.mxu0 0.0
    %3028 = vmatpush1.msra.mxu0 0.0
    %3029 = vmatprep.subr.mxu0 0.0
    %3030 = vmatpush1.msra.mxu0 0.0
    %3031 = vmatprep.subr.mxu0 0.0
    %3032 = vmatpush1.msra.mxu0 0.0
    %3033 = vmatprep.subr.mxu0 0.0
    %3034 = vmatpush1.msra.mxu0 0.0
    %3035 = vmatprep.subr.mxu0 0.0
    %3036 = vmatpush1.msra.mxu0 0.0
    %3037 = vmatprep.subr.mxu0 0.0
    %3038 = vmatpush1.msra.mxu0 0.0
    %3039 = vmatprep.subr.mxu0 0.0
    %3040 = vmatpush1.msra.mxu0 0.0
    %3041 = vmatprep.subr.mxu0 0.0
    %3042 = vmatpush1.msra.mxu0 0.0
    %3043 = vmatprep.subr.mxu0 0.0
    %3044 = vmatpush1.msra.mxu0 0.0
    %3045 = vmatprep.subr.mxu0 0.0
    %3046 = vmatpush1.msra.mxu0 0.0
    %3047 = vmatprep.subr.mxu0 0.0
    %3048 = vmatpush1.msra.mxu0 0.0
    %3049 = vmatprep.subr.mxu0 0.0
    %3050 = vmatpush1.msra.mxu0 0.0
    %3051 = vmatprep.mubr.f32.mxu0 0.0
    %3052 = vmatmul.mubr.f32.gmra.mrb[0].mxu0 %v2911
    %v3053 = vpop.f32.mrb[0].mxu0
    %v3054 = vadd.f32 %v1280, %v3053
    %v3055 = vpop.f32.mrb[0].mxu0
    %v3056 = vadd.f32 %v1284, %v3055
    %3057 = vdwg.mxu0
    %3058 = vmatprep.subr.mxu0 0.0
    %3059 = vmatpush1.msra.mxu0 %v1271
    %3060 = vmatprep.subr.mxu0 0.0
    %3061 = vmatpush1.msra.mxu0 %v1274
    %3062 = vmatprep.subr.mxu0 0.0
    %3063 = vmatpush1.msra.mxu0 0.0
    %3064 = vmatprep.subr.mxu0 0.0
    %3065 = vmatpush1.msra.mxu0 0.0
    %3066 = vmatprep.subr.mxu0 0.0
    %3067 = vmatpush1.msra.mxu0 0.0
    %3068 = vmatprep.subr.mxu0 0.0
    %3069 = vmatpush1.msra.mxu0 0.0
    %3070 = vmatprep.subr.mxu0 0.0
    %3071 = vmatpush1.msra.mxu0 0.0
    %3072 = vmatprep.subr.mxu0 0.0
    %3073 = vmatpush1.msra.mxu0 0.0
    %3074 = vmatprep.subr.mxu0 0.0
    %3075 = vmatpush1.msra.mxu0 0.0
    %3076 = vmatprep.subr.mxu0 0.0
    %3077 = vmatpush1.msra.mxu0 0.0
    %3078 = vmatprep.subr.mxu0 0.0
    %3079 = vmatpush1.msra.mxu0 0.0
    %3080 = vmatprep.subr.mxu0 0.0
    %3081 = vmatpush1.msra.mxu0 0.0
    %3082 = vmatprep.subr.mxu0 0.0
    %3083 = vmatpush1.msra.mxu0 0.0
    %3084 = vmatprep.subr.mxu0 0.0
    %3085 = vmatpush1.msra.mxu0 0.0
    %3086 = vmatprep.subr.mxu0 0.0
    %3087 = vmatpush1.msra.mxu0 0.0
    %3088 = vmatprep.subr.mxu0 0.0
    %3089 = vmatpush1.msra.mxu0 0.0
    %3090 = vmatprep.subr.mxu0 0.0
    %3091 = vmatpush1.msra.mxu0 0.0
    %3092 = vmatprep.subr.mxu0 0.0
    %3093 = vmatpush1.msra.mxu0 0.0
    %3094 = vmatprep.subr.mxu0 0.0
    %3095 = vmatpush1.msra.mxu0 0.0
    %3096 = vmatprep.subr.mxu0 0.0
    %3097 = vmatpush1.msra.mxu0 0.0
    %3098 = vmatprep.subr.mxu0 0.0
    %3099 = vmatpush1.msra.mxu0 0.0
    %3100 = vmatprep.subr.mxu0 0.0
    %3101 = vmatpush1.msra.mxu0 0.0
    %3102 = vmatprep.subr.mxu0 0.0
    %3103 = vmatpush1.msra.mxu0 0.0
    %3104 = vmatprep.subr.mxu0 0.0
    %3105 = vmatpush1.msra.mxu0 0.0
    %3106 = vmatprep.subr.mxu0 0.0
    %3107 = vmatpush1.msra.mxu0 0.0
    %3108 = vmatprep.subr.mxu0 0.0
    %3109 = vmatpush1.msra.mxu0 0.0
    %3110 = vmatprep.subr.mxu0 0.0
    %3111 = vmatpush1.msra.mxu0 0.0
    %3112 = vmatprep.subr.mxu0 0.0
    %3113 = vmatpush1.msra.mxu0 0.0
    %3114 = vmatprep.subr.mxu0 0.0
    %3115 = vmatpush1.msra.mxu0 0.0
    %3116 = vmatprep.subr.mxu0 0.0
    %3117 = vmatpush1.msra.mxu0 0.0
    %3118 = vmatprep.subr.mxu0 0.0
    %3119 = vmatpush1.msra.mxu0 0.0
    %3120 = vmatprep.subr.mxu0 0.0
    %3121 = vmatpush1.msra.mxu0 0.0
    %3122 = vmatprep.mubr.f32.mxu0 0.0
    %3123 = vmatmul.mubr.f32.gmra.mrb[0].mxu0 %v2911
    %v3124 = vpop.f32.mrb[0].mxu0
    %v3125 = vadd.f32 %v1288, %v3124
    %v3126 = vpop.f32.mrb[0].mxu0
    %3127 = vdwg.mxu0
    %v3128 = vadd.f32 %v2984, %v3054
    %v3129 = vxor.u32 %v3128, 2147483648
    %v3130 = vmul.f32 %v3129, 1.442695
    %v3131 = vpow.pop %v3130
    %v3132 = vadd.f32 %v3131, 1.0
    %v3133 = vrcp.pop %v3132
    %v3134 = vmul.f32 1.0, %v3133
    %v3135 = vadd.f32 %v2985, %v3056
    %v3136 = vxor.u32 %v3135, 2147483648
    %v3137 = vmul.f32 %v3136, 1.442695
    %v3138 = vpow.pop %v3137
    %v3139 = vadd.f32 %v3138, 1.0
    %v3140 = vrcp.pop %v3139
    %v3141 = vmul.f32 1.0, %v3140
    %v3142 = vmul.f32 %v3134, %v3125
    %v3143 = vadd.f32 %v2986, %v3142
    %v3144 = vtanh.pop %v3143
    %v3145 = vsub.f32 1.0, %v3141
    %v3146 = vmul.f32 %v3145, %v3144
    %v3147 = vmul.f32 %v3141, %v2906
    %v3148 = vadd.f32 %v3146, %v3147
    %s3149 = scalar_lea.vmem %s7, 112
    %v3150 = vld [vmem:[%s3149] sm:$0xff]
    %v3151 = vld [vmem:[%s3149 + $0x8] sm:$0xff]
    %v3153 = vsel %vm1292, %v3148, 0
    %3155 = vmatprep.subr.mxu0 0.0
    %3156 = vmatpush1.msra.mxu0 %v3150
    %3157 = vmatprep.subr.mxu0 0.0
    %3158 = vmatpush1.msra.mxu0 %v3151
    %3159 = vmatprep.subr.mxu0 0.0
    %3160 = vmatpush1.msra.mxu0 0.0
    %3161 = vmatprep.subr.mxu0 0.0
    %3162 = vmatpush1.msra.mxu0 0.0
    %3163 = vmatprep.subr.mxu0 0.0
    %3164 = vmatpush1.msra.mxu0 0.0
    %3165 = vmatprep.subr.mxu0 0.0
    %3166 = vmatpush1.msra.mxu0 0.0
    %3167 = vmatprep.subr.mxu0 0.0
    %3168 = vmatpush1.msra.mxu0 0.0
    %3169 = vmatprep.subr.mxu0 0.0
    %3170 = vmatpush1.msra.mxu0 0.0
    %3171 = vmatprep.subr.mxu0 0.0
    %3172 = vmatpush1.msra.mxu0 0.0
    %3173 = vmatprep.subr.mxu0 0.0
    %3174 = vmatpush1.msra.mxu0 0.0
    %3175 = vmatprep.subr.mxu0 0.0
    %3176 = vmatpush1.msra.mxu0 0.0
    %3177 = vmatprep.subr.mxu0 0.0
    %3178 = vmatpush1.msra.mxu0 0.0
    %3179 = vmatprep.subr.mxu0 0.0
    %3180 = vmatpush1.msra.mxu0 0.0
    %3181 = vmatprep.subr.mxu0 0.0
    %3182 = vmatpush1.msra.mxu0 0.0
    %3183 = vmatprep.subr.mxu0 0.0
    %3184 = vmatpush1.msra.mxu0 0.0
    %3185 = vmatprep.subr.mxu0 0.0
    %3186 = vmatpush1.msra.mxu0 0.0
    %3187 = vmatprep.subr.mxu0 0.0
    %3188 = vmatpush1.msra.mxu0 0.0
    %3189 = vmatprep.subr.mxu0 0.0
    %3190 = vmatpush1.msra.mxu0 0.0
    %3191 = vmatprep.subr.mxu0 0.0
    %3192 = vmatpush1.msra.mxu0 0.0
    %3193 = vmatprep.subr.mxu0 0.0
    %3194 = vmatpush1.msra.mxu0 0.0
    %3195 = vmatprep.subr.mxu0 0.0
    %3196 = vmatpush1.msra.mxu0 0.0
    %3197 = vmatprep.subr.mxu0 0.0
    %3198 = vmatpush1.msra.mxu0 0.0
    %3199 = vmatprep.subr.mxu0 0.0
    %3200 = vmatpush1.msra.mxu0 0.0
    %3201 = vmatprep.subr.mxu0 0.0
    %3202 = vmatpush1.msra.mxu0 0.0
    %3203 = vmatprep.subr.mxu0 0.0
    %3204 = vmatpush1.msra.mxu0 0.0
    %3205 = vmatprep.subr.mxu0 0.0
    %3206 = vmatpush1.msra.mxu0 0.0
    %3207 = vmatprep.subr.mxu0 0.0
    %3208 = vmatpush1.msra.mxu0 0.0
    %3209 = vmatprep.subr.mxu0 0.0
    %3210 = vmatpush1.msra.mxu0 0.0
    %3211 = vmatprep.subr.mxu0 0.0
    %3212 = vmatpush1.msra.mxu0 0.0
    %3213 = vmatprep.subr.mxu0 0.0
    %3214 = vmatpush1.msra.mxu0 0.0
    %3215 = vmatprep.subr.mxu0 0.0
    %3216 = vmatpush1.msra.mxu0 0.0
    %3217 = vmatprep.subr.mxu0 0.0
    %3218 = vmatpush1.msra.mxu0 0.0
    %3219 = vmatprep.mubr.f32.mxu0 0.0
    %3220 = vmatmul.mubr.f32.gmra.mrb[0].mxu0 %v3153
    %v3221 = vpop.f32.mrb[0].mxu0
    %v3222 = vadd.f32 0.0, %v3221
    %v3223 = vpop.f32.mrb[0].mxu0
    %3224 = vdwg.mxu0
    %v3225 = vadd.f32 %v2983, %v3222
    %v3226 = vld [vmem:[#allocation2 + $0xc0] sm:$0xff]
    %v3227 = vld [vmem:[#allocation2 + $0xc8] sm:$0xff]
    %v3228 = vld [vmem:[#allocation2 + $0xd0] sm:$0xff]
    %3229 = vmatprep.subr.mxu0 %v1270
    %3230 = vmatpush1.msra.mxu0 %v1269
    %3231 = vmatprep.subr.mxu0 %v1273
    %3232 = vmatpush1.msra.mxu0 %v1272
    %3233 = vmatprep.subr.mxu0 0.0
    %3234 = vmatpush1.msra.mxu0 0.0
    %3235 = vmatprep.subr.mxu0 0.0
    %3236 = vmatpush1.msra.mxu0 0.0
    %3237 = vmatprep.subr.mxu0 0.0
    %3238 = vmatpush1.msra.mxu0 0.0
    %3239 = vmatprep.subr.mxu0 0.0
    %3240 = vmatpush1.msra.mxu0 0.0
    %3241 = vmatprep.subr.mxu0 0.0
    %3242 = vmatpush1.msra.mxu0 0.0
    %3243 = vmatprep.subr.mxu0 0.0
    %3244 = vmatpush1.msra.mxu0 0.0
    %3245 = vmatprep.subr.mxu0 0.0
    %3246 = vmatpush1.msra.mxu0 0.0
    %3247 = vmatprep.subr.mxu0 0.0
    %3248 = vmatpush1.msra.mxu0 0.0
    %3249 = vmatprep.subr.mxu0 0.0
    %3250 = vmatpush1.msra.mxu0 0.0
    %3251 = vmatprep.subr.mxu0 0.0
    %3252 = vmatpush1.msra.mxu0 0.0
    %3253 = vmatprep.subr.mxu0 0.0
    %3254 = vmatpush1.msra.mxu0 0.0
    %3255 = vmatprep.subr.mxu0 0.0
    %3256 = vmatpush1.msra.mxu0 0.0
    %3257 = vmatprep.subr.mxu0 0.0
    %3258 = vmatpush1.msra.mxu0 0.0
    %3259 = vmatprep.subr.mxu0 0.0
    %3260 = vmatpush1.msra.mxu0 0.0
    %3261 = vmatprep.subr.mxu0 0.0
    %3262 = vmatpush1.msra.mxu0 0.0
    %3263 = vmatprep.subr.mxu0 0.0
    %3264 = vmatpush1.msra.mxu0 0.0
    %3265 = vmatprep.subr.mxu0 0.0
    %3266 = vmatpush1.msra.mxu0 0.0
    %3267 = vmatprep.subr.mxu0 0.0
    %3268 = vmatpush1.msra.mxu0 0.0
    %3269 = vmatprep.subr.mxu0 0.0
    %3270 = vmatpush1.msra.mxu0 0.0
    %3271 = vmatprep.subr.mxu0 0.0
    %3272 = vmatpush1.msra.mxu0 0.0
    %3273 = vmatprep.subr.mxu0 0.0
    %3274 = vmatpush1.msra.mxu0 0.0
    %3275 = vmatprep.subr.mxu0 0.0
    %3276 = vmatpush1.msra.mxu0 0.0
    %3277 = vmatprep.subr.mxu0 0.0
    %3278 = vmatpush1.msra.mxu0 0.0
    %3279 = vmatprep.subr.mxu0 0.0
    %3280 = vmatpush1.msra.mxu0 0.0
    %3281 = vmatprep.subr.mxu0 0.0
    %3282 = vmatpush1.msra.mxu0 0.0
    %3283 = vmatprep.subr.mxu0 0.0
    %3284 = vmatpush1.msra.mxu0 0.0
    %3285 = vmatprep.subr.mxu0 0.0
    %3286 = vmatpush1.msra.mxu0 0.0
    %3287 = vmatprep.subr.mxu0 0.0
    %3288 = vmatpush1.msra.mxu0 0.0
    %3289 = vmatprep.subr.mxu0 0.0
    %3290 = vmatpush1.msra.mxu0 0.0
    %3291 = vmatprep.subr.mxu0 0.0
    %3292 = vmatpush1.msra.mxu0 0.0
    %3293 = vmatprep.mubr.f32.mxu0 0.0
    %3294 = vmatmul.mubr.f32.gmra.mrb[0].mxu0 %v3153
    %v3295 = vpop.f32.mrb[0].mxu0
    %v3296 = vadd.f32 %v1280, %v3295
    %v3297 = vpop.f32.mrb[0].mxu0
    %v3298 = vadd.f32 %v1284, %v3297
    %3299 = vdwg.mxu0
    %3300 = vmatprep.subr.mxu0 0.0
    %3301 = vmatpush1.msra.mxu0 %v1271
    %3302 = vmatprep.subr.mxu0 0.0
    %3303 = vmatpush1.msra.mxu0 %v1274
    %3304 = vmatprep.subr.mxu0 0.0
    %3305 = vmatpush1.msra.mxu0 0.0
    %3306 = vmatprep.subr.mxu0 0.0
    %3307 = vmatpush1.msra.mxu0 0.0
    %3308 = vmatprep.subr.mxu0 0.0
    %3309 = vmatpush1.msra.mxu0 0.0
    %3310 = vmatprep.subr.mxu0 0.0
    %3311 = vmatpush1.msra.mxu0 0.0
    %3312 = vmatprep.subr.mxu0 0.0
    %3313 = vmatpush1.msra.mxu0 0.0
    %3314 = vmatprep.subr.mxu0 0.0
    %3315 = vmatpush1.msra.mxu0 0.0
    %3316 = vmatprep.subr.mxu0 0.0
    %3317 = vmatpush1.msra.mxu0 0.0
    %3318 = vmatprep.subr.mxu0 0.0
    %3319 = vmatpush1.msra.mxu0 0.0
    %3320 = vmatprep.subr.mxu0 0.0
    %3321 = vmatpush1.msra.mxu0 0.0
    %3322 = vmatprep.subr.mxu0 0.0
    %3323 = vmatpush1.msra.mxu0 0.0
    %3324 = vmatprep.subr.mxu0 0.0
    %3325 = vmatpush1.msra.mxu0 0.0
    %3326 = vmatprep.subr.mxu0 0.0
    %3327 = vmatpush1.msra.mxu0 0.0
    %3328 = vmatprep.subr.mxu0 0.0
    %3329 = vmatpush1.msra.mxu0 0.0
    %3330 = vmatprep.subr.mxu0 0.0
    %3331 = vmatpush1.msra.mxu0 0.0
    %3332 = vmatprep.subr.mxu0 0.0
    %3333 = vmatpush1.msra.mxu0 0.0
    %3334 = vmatprep.subr.mxu0 0.0
    %3335 = vmatpush1.msra.mxu0 0.0
    %3336 = vmatprep.subr.mxu0 0.0
    %3337 = vmatpush1.msra.mxu0 0.0
    %3338 = vmatprep.subr.mxu0 0.0
    %3339 = vmatpush1.msra.mxu0 0.0
    %3340 = vmatprep.subr.mxu0 0.0
    %3341 = vmatpush1.msra.mxu0 0.0
    %3342 = vmatprep.subr.mxu0 0.0
    %3343 = vmatpush1.msra.mxu0 0.0
    %3344 = vmatprep.subr.mxu0 0.0
    %3345 = vmatpush1.msra.mxu0 0.0
    %3346 = vmatprep.subr.mxu0 0.0
    %3347 = vmatpush1.msra.mxu0 0.0
    %3348 = vmatprep.subr.mxu0 0.0
    %3349 = vmatpush1.msra.mxu0 0.0
    %3350 = vmatprep.subr.mxu0 0.0
    %3351 = vmatpush1.msra.mxu0 0.0
    %3352 = vmatprep.subr.mxu0 0.0
    %3353 = vmatpush1.msra.mxu0 0.0
    %3354 = vmatprep.subr.mxu0 0.0
    %3355 = vmatpush1.msra.mxu0 0.0
    %3356 = vmatprep.subr.mxu0 0.0
    %3357 = vmatpush1.msra.mxu0 0.0
    %3358 = vmatprep.subr.mxu0 0.0
    %3359 = vmatpush1.msra.mxu0 0.0
    %3360 = vmatprep.subr.mxu0 0.0
    %3361 = vmatpush1.msra.mxu0 0.0
    %3362 = vmatprep.subr.mxu0 0.0
    %3363 = vmatpush1.msra.mxu0 0.0
    %3364 = vmatprep.mubr.f32.mxu0 0.0
    %3365 = vmatmul.mubr.f32.gmra.mrb[0].mxu0 %v3153
    %v3366 = vpop.f32.mrb[0].mxu0
    %v3367 = vadd.f32 %v1288, %v3366
    %v3368 = vpop.f32.mrb[0].mxu0
    %3369 = vdwg.mxu0
    %v3370 = vadd.f32 %v3226, %v3296
    %v3371 = vxor.u32 %v3370, 2147483648
    %v3372 = vmul.f32 %v3371, 1.442695
    %v3373 = vpow.pop %v3372
    %v3374 = vadd.f32 %v3373, 1.0
    %v3375 = vrcp.pop %v3374
    %v3376 = vmul.f32 1.0, %v3375
    %v3377 = vadd.f32 %v3227, %v3298
    %v3378 = vxor.u32 %v3377, 2147483648
    %v3379 = vmul.f32 %v3378, 1.442695
    %v3380 = vpow.pop %v3379
    %v3381 = vadd.f32 %v3380, 1.0
    %v3382 = vrcp.pop %v3381
    %v3383 = vmul.f32 1.0, %v3382
    %v3384 = vmul.f32 %v3376, %v3367
    %v3385 = vadd.f32 %v3228, %v3384
    %v3386 = vtanh.pop %v3385
    %v3387 = vsub.f32 1.0, %v3383
    %v3388 = vmul.f32 %v3387, %v3386
    %v3389 = vmul.f32 %v3383, %v3148
    %v3390 = vadd.f32 %v3388, %v3389
    %s3391 = scalar_lea.vmem %s7, 128
    %v3392 = vld [vmem:[%s3391] sm:$0xff]
    %v3393 = vld [vmem:[%s3391 + $0x8] sm:$0xff]
    %v3395 = vsel %vm1292, %v3390, 0
    %3397 = vmatprep.subr.mxu0 0.0
    %3398 = vmatpush1.msra.mxu0 %v3392
    %3399 = vmatprep.subr.mxu0 0.0
    %3400 = vmatpush1.msra.mxu0 %v3393
    %3401 = vmatprep.subr.mxu0 0.0
    %3402 = vmatpush1.msra.mxu0 0.0
    %3403 = vmatprep.subr.mxu0 0.0
    %3404 = vmatpush1.msra.mxu0 0.0
    %3405 = vmatprep.subr.mxu0 0.0
    %3406 = vmatpush1.msra.mxu0 0.0
    %3407 = vmatprep.subr.mxu0 0.0
    %3408 = vmatpush1.msra.mxu0 0.0
    %3409 = vmatprep.subr.mxu0 0.0
    %3410 = vmatpush1.msra.mxu0 0.0
    %3411 = vmatprep.subr.mxu0 0.0
    %3412 = vmatpush1.msra.mxu0 0.0
    %3413 = vmatprep.subr.mxu0 0.0
    %3414 = vmatpush1.msra.mxu0 0.0
    %3415 = vmatprep.subr.mxu0 0.0
    %3416 = vmatpush1.msra.mxu0 0.0
    %3417 = vmatprep.subr.mxu0 0.0
    %3418 = vmatpush1.msra.mxu0 0.0
    %3419 = vmatprep.subr.mxu0 0.0
    %3420 = vmatpush1.msra.mxu0 0.0
    %3421 = vmatprep.subr.mxu0 0.0
    %3422 = vmatpush1.msra.mxu0 0.0
    %3423 = vmatprep.subr.mxu0 0.0
    %3424 = vmatpush1.msra.mxu0 0.0
    %3425 = vmatprep.subr.mxu0 0.0
    %3426 = vmatpush1.msra.mxu0 0.0
    %3427 = vmatprep.subr.mxu0 0.0
    %3428 = vmatpush1.msra.mxu0 0.0
    %3429 = vmatprep.subr.mxu0 0.0
    %3430 = vmatpush1.msra.mxu0 0.0
    %3431 = vmatprep.subr.mxu0 0.0
    %3432 = vmatpush1.msra.mxu0 0.0
    %3433 = vmatprep.subr.mxu0 0.0
    %3434 = vmatpush1.msra.mxu0 0.0
    %3435 = vmatprep.subr.mxu0 0.0
    %3436 = vmatpush1.msra.mxu0 0.0
    %3437 = vmatprep.subr.mxu0 0.0
    %3438 = vmatpush1.msra.mxu0 0.0
    %3439 = vmatprep.subr.mxu0 0.0
    %3440 = vmatpush1.msra.mxu0 0.0
    %3441 = vmatprep.subr.mxu0 0.0
    %3442 = vmatpush1.msra.mxu0 0.0
    %3443 = vmatprep.subr.mxu0 0.0
    %3444 = vmatpush1.msra.mxu0 0.0
    %3445 = vmatprep.subr.mxu0 0.0
    %3446 = vmatpush1.msra.mxu0 0.0
    %3447 = vmatprep.subr.mxu0 0.0
    %3448 = vmatpush1.msra.mxu0 0.0
    %3449 = vmatprep.subr.mxu0 0.0
    %3450 = vmatpush1.msra.mxu0 0.0
    %3451 = vmatprep.subr.mxu0 0.0
    %3452 = vmatpush1.msra.mxu0 0.0
    %3453 = vmatprep.subr.mxu0 0.0
    %3454 = vmatpush1.msra.mxu0 0.0
    %3455 = vmatprep.subr.mxu0 0.0
    %3456 = vmatpush1.msra.mxu0 0.0
    %3457 = vmatprep.subr.mxu0 0.0
    %3458 = vmatpush1.msra.mxu0 0.0
    %3459 = vmatprep.subr.mxu0 0.0
    %3460 = vmatpush1.msra.mxu0 0.0
    %3461 = vmatprep.mubr.f32.mxu0 0.0
    %3462 = vmatmul.mubr.f32.gmra.mrb[0].mxu0 %v3395
    %v3463 = vpop.f32.mrb[0].mxu0
    %v3464 = vadd.f32 0.0, %v3463
    %v3465 = vpop.f32.mrb[0].mxu0
    %3466 = vdwg.mxu0
    %v3467 = vadd.f32 %v3225, %v3464
    %v3468 = vld [vmem:[#allocation2 + $0xd8] sm:$0xff]
    %v3469 = vld [vmem:[#allocation2 + $0xe0] sm:$0xff]
    %v3470 = vld [vmem:[#allocation2 + $0xe8] sm:$0xff]
    %3471 = vmatprep.subr.mxu0 %v1270
    %3472 = vmatpush1.msra.mxu0 %v1269
    %3473 = vmatprep.subr.mxu0 %v1273
    %3474 = vmatpush1.msra.mxu0 %v1272
    %3475 = vmatprep.subr.mxu0 0.0
    %3476 = vmatpush1.msra.mxu0 0.0
    %3477 = vmatprep.subr.mxu0 0.0
    %3478 = vmatpush1.msra.mxu0 0.0
    %3479 = vmatprep.subr.mxu0 0.0
    %3480 = vmatpush1.msra.mxu0 0.0
    %3481 = vmatprep.subr.mxu0 0.0
    %3482 = vmatpush1.msra.mxu0 0.0
    %3483 = vmatprep.subr.mxu0 0.0
    %3484 = vmatpush1.msra.mxu0 0.0
    %3485 = vmatprep.subr.mxu0 0.0
    %3486 = vmatpush1.msra.mxu0 0.0
    %3487 = vmatprep.subr.mxu0 0.0
    %3488 = vmatpush1.msra.mxu0 0.0
    %3489 = vmatprep.subr.mxu0 0.0
    %3490 = vmatpush1.msra.mxu0 0.0
    %3491 = vmatprep.subr.mxu0 0.0
    %3492 = vmatpush1.msra.mxu0 0.0
    %3493 = vmatprep.subr.mxu0 0.0
    %3494 = vmatpush1.msra.mxu0 0.0
    %3495 = vmatprep.subr.mxu0 0.0
    %3496 = vmatpush1.msra.mxu0 0.0
    %3497 = vmatprep.subr.mxu0 0.0
    %3498 = vmatpush1.msra.mxu0 0.0
    %3499 = vmatprep.subr.mxu0 0.0
    %3500 = vmatpush1.msra.mxu0 0.0
    %3501 = vmatprep.subr.mxu0 0.0
    %3502 = vmatpush1.msra.mxu0 0.0
    %3503 = vmatprep.subr.mxu0 0.0
    %3504 = vmatpush1.msra.mxu0 0.0
    %3505 = vmatprep.subr.mxu0 0.0
    %3506 = vmatpush1.msra.mxu0 0.0
    %3507 = vmatprep.subr.mxu0 0.0
    %3508 = vmatpush1.msra.mxu0 0.0
    %3509 = vmatprep.subr.mxu0 0.0
    %3510 = vmatpush1.msra.mxu0 0.0
    %3511 = vmatprep.subr.mxu0 0.0
    %3512 = vmatpush1.msra.mxu0 0.0
    %3513 = vmatprep.subr.mxu0 0.0
    %3514 = vmatpush1.msra.mxu0 0.0
    %3515 = vmatprep.subr.mxu0 0.0
    %3516 = vmatpush1.msra.mxu0 0.0
    %3517 = vmatprep.subr.mxu0 0.0
    %3518 = vmatpush1.msra.mxu0 0.0
    %3519 = vmatprep.subr.mxu0 0.0
    %3520 = vmatpush1.msra.mxu0 0.0
    %3521 = vmatprep.subr.mxu0 0.0
    %3522 = vmatpush1.msra.mxu0 0.0
    %3523 = vmatprep.subr.mxu0 0.0
    %3524 = vmatpush1.msra.mxu0 0.0
    %3525 = vmatprep.subr.mxu0 0.0
    %3526 = vmatpush1.msra.mxu0 0.0
    %3527 = vmatprep.subr.mxu0 0.0
    %3528 = vmatpush1.msra.mxu0 0.0
    %3529 = vmatprep.subr.mxu0 0.0
    %3530 = vmatpush1.msra.mxu0 0.0
    %3531 = vmatprep.subr.mxu0 0.0
    %3532 = vmatpush1.msra.mxu0 0.0
    %3533 = vmatprep.subr.mxu0 0.0
    %3534 = vmatpush1.msra.mxu0 0.0
    %3535 = vmatprep.mubr.f32.mxu0 0.0
    %3536 = vmatmul.mubr.f32.gmra.mrb[0].mxu0 %v3395
    %v3537 = vpop.f32.mrb[0].mxu0
    %v3538 = vadd.f32 %v1280, %v3537
    %v3539 = vpop.f32.mrb[0].mxu0
    %v3540 = vadd.f32 %v1284, %v3539
    %3541 = vdwg.mxu0
    %3542 = vmatprep.subr.mxu0 0.0
    %3543 = vmatpush1.msra.mxu0 %v1271
    %3544 = vmatprep.subr.mxu0 0.0
    %3545 = vmatpush1.msra.mxu0 %v1274
    %3546 = vmatprep.subr.mxu0 0.0
    %3547 = vmatpush1.msra.mxu0 0.0
    %3548 = vmatprep.subr.mxu0 0.0
    %3549 = vmatpush1.msra.mxu0 0.0
    %3550 = vmatprep.subr.mxu0 0.0
    %3551 = vmatpush1.msra.mxu0 0.0
    %3552 = vmatprep.subr.mxu0 0.0
    %3553 = vmatpush1.msra.mxu0 0.0
    %3554 = vmatprep.subr.mxu0 0.0
    %3555 = vmatpush1.msra.mxu0 0.0
    %3556 = vmatprep.subr.mxu0 0.0
    %3557 = vmatpush1.msra.mxu0 0.0
    %3558 = vmatprep.subr.mxu0 0.0
    %3559 = vmatpush1.msra.mxu0 0.0
    %3560 = vmatprep.subr.mxu0 0.0
    %3561 = vmatpush1.msra.mxu0 0.0
    %3562 = vmatprep.subr.mxu0 0.0
    %3563 = vmatpush1.msra.mxu0 0.0
    %3564 = vmatprep.subr.mxu0 0.0
    %3565 = vmatpush1.msra.mxu0 0.0
    %3566 = vmatprep.subr.mxu0 0.0
    %3567 = vmatpush1.msra.mxu0 0.0
    %3568 = vmatprep.subr.mxu0 0.0
    %3569 = vmatpush1.msra.mxu0 0.0
    %3570 = vmatprep.subr.mxu0 0.0
    %3571 = vmatpush1.msra.mxu0 0.0
    %3572 = vmatprep.subr.mxu0 0.0
    %3573 = vmatpush1.msra.mxu0 0.0
    %3574 = vmatprep.subr.mxu0 0.0
    %3575 = vmatpush1.msra.mxu0 0.0
    %3576 = vmatprep.subr.mxu0 0.0
    %3577 = vmatpush1.msra.mxu0 0.0
    %3578 = vmatprep.subr.mxu0 0.0
    %3579 = vmatpush1.msra.mxu0 0.0
    %3580 = vmatprep.subr.mxu0 0.0
    %3581 = vmatpush1.msra.mxu0 0.0
    %3582 = vmatprep.subr.mxu0 0.0
    %3583 = vmatpush1.msra.mxu0 0.0
    %3584 = vmatprep.subr.mxu0 0.0
    %3585 = vmatpush1.msra.mxu0 0.0
    %3586 = vmatprep.subr.mxu0 0.0
    %3587 = vmatpush1.msra.mxu0 0.0
    %3588 = vmatprep.subr.mxu0 0.0
    %3589 = vmatpush1.msra.mxu0 0.0
    %3590 = vmatprep.subr.mxu0 0.0
    %3591 = vmatpush1.msra.mxu0 0.0
    %3592 = vmatprep.subr.mxu0 0.0
    %3593 = vmatpush1.msra.mxu0 0.0
    %3594 = vmatprep.subr.mxu0 0.0
    %3595 = vmatpush1.msra.mxu0 0.0
    %3596 = vmatprep.subr.mxu0 0.0
    %3597 = vmatpush1.msra.mxu0 0.0
    %3598 = vmatprep.subr.mxu0 0.0
    %3599 = vmatpush1.msra.mxu0 0.0
    %3600 = vmatprep.subr.mxu0 0.0
    %3601 = vmatpush1.msra.mxu0 0.0
    %3602 = vmatprep.subr.mxu0 0.0
    %3603 = vmatpush1.msra.mxu0 0.0
    %3604 = vmatprep.subr.mxu0 0.0
    %3605 = vmatpush1.msra.mxu0 0.0
    %3606 = vmatprep.mubr.f32.mxu0 0.0
    %3607 = vmatmul.mubr.f32.gmra.mrb[0].mxu0 %v3395
    %v3608 = vpop.f32.mrb[0].mxu0
    %v3609 = vadd.f32 %v1288, %v3608
    %v3610 = vpop.f32.mrb[0].mxu0
    %3611 = vdwg.mxu0
    %v3612 = vadd.f32 %v3468, %v3538
    %v3613 = vxor.u32 %v3612, 2147483648
    %v3614 = vmul.f32 %v3613, 1.442695
    %v3615 = vpow.pop %v3614
    %v3616 = vadd.f32 %v3615, 1.0
    %v3617 = vrcp.pop %v3616
    %v3618 = vmul.f32 1.0, %v3617
    %v3619 = vadd.f32 %v3469, %v3540
    %v3620 = vxor.u32 %v3619, 2147483648
    %v3621 = vmul.f32 %v3620, 1.442695
    %v3622 = vpow.pop %v3621
    %v3623 = vadd.f32 %v3622, 1.0
    %v3624 = vrcp.pop %v3623
    %v3625 = vmul.f32 1.0, %v3624
    %v3626 = vmul.f32 %v3618, %v3609
    %v3627 = vadd.f32 %v3470, %v3626
    %v3628 = vtanh.pop %v3627
    %v3629 = vsub.f32 1.0, %v3625
    %v3630 = vmul.f32 %v3629, %v3628
    %v3631 = vmul.f32 %v3625, %v3390
    %v3632 = vadd.f32 %v3630, %v3631
    %s3633 = scalar_lea.vmem %s7, 144
    %v3634 = vld [vmem:[%s3633] sm:$0xff]
    %v3635 = vld [vmem:[%s3633 + $0x8] sm:$0xff]
    %v3637 = vsel %vm1292, %v3632, 0
    %3639 = vmatprep.subr.mxu0 0.0
    %3640 = vmatpush1.msra.mxu0 %v3634
    %3641 = vmatprep.subr.mxu0 0.0
    %3642 = vmatpush1.msra.mxu0 %v3635
    %3643 = vmatprep.subr.mxu0 0.0
    %3644 = vmatpush1.msra.mxu0 0.0
    %3645 = vmatprep.subr.mxu0 0.0
    %3646 = vmatpush1.msra.mxu0 0.0
    %3647 = vmatprep.subr.mxu0 0.0
    %3648 = vmatpush1.msra.mxu0 0.0
    %3649 = vmatprep.subr.mxu0 0.0
    %3650 = vmatpush1.msra.mxu0 0.0
    %3651 = vmatprep.subr.mxu0 0.0
    %3652 = vmatpush1.msra.mxu0 0.0
    %3653 = vmatprep.subr.mxu0 0.0
    %3654 = vmatpush1.msra.mxu0 0.0
    %3655 = vmatprep.subr.mxu0 0.0
    %3656 = vmatpush1.msra.mxu0 0.0
    %3657 = vmatprep.subr.mxu0 0.0
    %3658 = vmatpush1.msra.mxu0 0.0
    %3659 = vmatprep.subr.mxu0 0.0
    %3660 = vmatpush1.msra.mxu0 0.0
    %3661 = vmatprep.subr.mxu0 0.0
    %3662 = vmatpush1.msra.mxu0 0.0
    %3663 = vmatprep.subr.mxu0 0.0
    %3664 = vmatpush1.msra.mxu0 0.0
    %3665 = vmatprep.subr.mxu0 0.0
    %3666 = vmatpush1.msra.mxu0 0.0
    %3667 = vmatprep.subr.mxu0 0.0
    %3668 = vmatpush1.msra.mxu0 0.0
    %3669 = vmatprep.subr.mxu0 0.0
    %3670 = vmatpush1.msra.mxu0 0.0
    %3671 = vmatprep.subr.mxu0 0.0
    %3672 = vmatpush1.msra.mxu0 0.0
    %3673 = vmatprep.subr.mxu0 0.0
    %3674 = vmatpush1.msra.mxu0 0.0
    %3675 = vmatprep.subr.mxu0 0.0
    %3676 = vmatpush1.msra.mxu0 0.0
    %3677 = vmatprep.subr.mxu0 0.0
    %3678 = vmatpush1.msra.mxu0 0.0
    %3679 = vmatprep.subr.mxu0 0.0
    %3680 = vmatpush1.msra.mxu0 0.0
    %3681 = vmatprep.subr.mxu0 0.0
    %3682 = vmatpush1.msra.mxu0 0.0
    %3683 = vmatprep.subr.mxu0 0.0
    %3684 = vmatpush1.msra.mxu0 0.0
    %3685 = vmatprep.subr.mxu0 0.0
    %3686 = vmatpush1.msra.mxu0 0.0
    %3687 = vmatprep.subr.mxu0 0.0
    %3688 = vmatpush1.msra.mxu0 0.0
    %3689 = vmatprep.subr.mxu0 0.0
    %3690 = vmatpush1.msra.mxu0 0.0
    %3691 = vmatprep.subr.mxu0 0.0
    %3692 = vmatpush1.msra.mxu0 0.0
    %3693 = vmatprep.subr.mxu0 0.0
    %3694 = vmatpush1.msra.mxu0 0.0
    %3695 = vmatprep.subr.mxu0 0.0
    %3696 = vmatpush1.msra.mxu0 0.0
    %3697 = vmatprep.subr.mxu0 0.0
    %3698 = vmatpush1.msra.mxu0 0.0
    %3699 = vmatprep.subr.mxu0 0.0
    %3700 = vmatpush1.msra.mxu0 0.0
    %3701 = vmatprep.subr.mxu0 0.0
    %3702 = vmatpush1.msra.mxu0 0.0
    %3703 = vmatprep.mubr.f32.mxu0 0.0
    %3704 = vmatmul.mubr.f32.gmra.mrb[0].mxu0 %v3637
    %v3705 = vpop.f32.mrb[0].mxu0
    %v3706 = vadd.f32 0.0, %v3705
    %v3707 = vpop.f32.mrb[0].mxu0
    %3708 = vdwg.mxu0
    %v3709 = vadd.f32 %v3467, %v3706
    %v3710 = vld [vmem:[#allocation2 + $0xf0] sm:$0xff]
    %v3711 = vld [vmem:[#allocation2 + $0xf8] sm:$0xff]
    %v3712 = vld [vmem:[#allocation2 + $0x100] sm:$0xff]
    %3713 = vmatprep.subr.mxu0 %v1270
    %3714 = vmatpush1.msra.mxu0 %v1269
    %3715 = vmatprep.subr.mxu0 %v1273
    %3716 = vmatpush1.msra.mxu0 %v1272
    %3717 = vmatprep.subr.mxu0 0.0
    %3718 = vmatpush1.msra.mxu0 0.0
    %3719 = vmatprep.subr.mxu0 0.0
    %3720 = vmatpush1.msra.mxu0 0.0
    %3721 = vmatprep.subr.mxu0 0.0
    %3722 = vmatpush1.msra.mxu0 0.0
    %3723 = vmatprep.subr.mxu0 0.0
    %3724 = vmatpush1.msra.mxu0 0.0
    %3725 = vmatprep.subr.mxu0 0.0
    %3726 = vmatpush1.msra.mxu0 0.0
    %3727 = vmatprep.subr.mxu0 0.0
    %3728 = vmatpush1.msra.mxu0 0.0
    %3729 = vmatprep.subr.mxu0 0.0
    %3730 = vmatpush1.msra.mxu0 0.0
    %3731 = vmatprep.subr.mxu0 0.0
    %3732 = vmatpush1.msra.mxu0 0.0
    %3733 = vmatprep.subr.mxu0 0.0
    %3734 = vmatpush1.msra.mxu0 0.0
    %3735 = vmatprep.subr.mxu0 0.0
    %3736 = vmatpush1.msra.mxu0 0.0
    %3737 = vmatprep.subr.mxu0 0.0
    %3738 = vmatpush1.msra.mxu0 0.0
    %3739 = vmatprep.subr.mxu0 0.0
    %3740 = vmatpush1.msra.mxu0 0.0
    %3741 = vmatprep.subr.mxu0 0.0
    %3742 = vmatpush1.msra.mxu0 0.0
    %3743 = vmatprep.subr.mxu0 0.0
    %3744 = vmatpush1.msra.mxu0 0.0
    %3745 = vmatprep.subr.mxu0 0.0
    %3746 = vmatpush1.msra.mxu0 0.0
    %3747 = vmatprep.subr.mxu0 0.0
    %3748 = vmatpush1.msra.mxu0 0.0
    %3749 = vmatprep.subr.mxu0 0.0
    %3750 = vmatpush1.msra.mxu0 0.0
    %3751 = vmatprep.subr.mxu0 0.0
    %3752 = vmatpush1.msra.mxu0 0.0
    %3753 = vmatprep.subr.mxu0 0.0
    %3754 = vmatpush1.msra.mxu0 0.0
    %3755 = vmatprep.subr.mxu0 0.0
    %3756 = vmatpush1.msra.mxu0 0.0
    %3757 = vmatprep.subr.mxu0 0.0
    %3758 = vmatpush1.msra.mxu0 0.0
    %3759 = vmatprep.subr.mxu0 0.0
    %3760 = vmatpush1.msra.mxu0 0.0
    %3761 = vmatprep.subr.mxu0 0.0
    %3762 = vmatpush1.msra.mxu0 0.0
    %3763 = vmatprep.subr.mxu0 0.0
    %3764 = vmatpush1.msra.mxu0 0.0
    %3765 = vmatprep.subr.mxu0 0.0
    %3766 = vmatpush1.msra.mxu0 0.0
    %3767 = vmatprep.subr.mxu0 0.0
    %3768 = vmatpush1.msra.mxu0 0.0
    %3769 = vmatprep.subr.mxu0 0.0
    %3770 = vmatpush1.msra.mxu0 0.0
    %3771 = vmatprep.subr.mxu0 0.0
    %3772 = vmatpush1.msra.mxu0 0.0
    %3773 = vmatprep.subr.mxu0 0.0
    %3774 = vmatpush1.msra.mxu0 0.0
    %3775 = vmatprep.subr.mxu0 0.0
    %3776 = vmatpush1.msra.mxu0 0.0
    %3777 = vmatprep.mubr.f32.mxu0 0.0
    %3778 = vmatmul.mubr.f32.gmra.mrb[0].mxu0 %v3637
    %v3779 = vpop.f32.mrb[0].mxu0
    %v3780 = vadd.f32 %v1280, %v3779
    %v3781 = vpop.f32.mrb[0].mxu0
    %v3782 = vadd.f32 %v1284, %v3781
    %3783 = vdwg.mxu0
    %3784 = vmatprep.subr.mxu0 0.0
    %3785 = vmatpush1.msra.mxu0 %v1271
    %3786 = vmatprep.subr.mxu0 0.0
    %3787 = vmatpush1.msra.mxu0 %v1274
    %3788 = vmatprep.subr.mxu0 0.0
    %3789 = vmatpush1.msra.mxu0 0.0
    %3790 = vmatprep.subr.mxu0 0.0
    %3791 = vmatpush1.msra.mxu0 0.0
    %3792 = vmatprep.subr.mxu0 0.0
    %3793 = vmatpush1.msra.mxu0 0.0
    %3794 = vmatprep.subr.mxu0 0.0
    %3795 = vmatpush1.msra.mxu0 0.0
    %3796 = vmatprep.subr.mxu0 0.0
    %3797 = vmatpush1.msra.mxu0 0.0
    %3798 = vmatprep.subr.mxu0 0.0
    %3799 = vmatpush1.msra.mxu0 0.0
    %3800 = vmatprep.subr.mxu0 0.0
    %3801 = vmatpush1.msra.mxu0 0.0
    %3802 = vmatprep.subr.mxu0 0.0
    %3803 = vmatpush1.msra.mxu0 0.0
    %3804 = vmatprep.subr.mxu0 0.0
    %3805 = vmatpush1.msra.mxu0 0.0
    %3806 = vmatprep.subr.mxu0 0.0
    %3807 = vmatpush1.msra.mxu0 0.0
    %3808 = vmatprep.subr.mxu0 0.0
    %3809 = vmatpush1.msra.mxu0 0.0
    %3810 = vmatprep.subr.mxu0 0.0
    %3811 = vmatpush1.msra.mxu0 0.0
    %3812 = vmatprep.subr.mxu0 0.0
    %3813 = vmatpush1.msra.mxu0 0.0
    %3814 = vmatprep.subr.mxu0 0.0
    %3815 = vmatpush1.msra.mxu0 0.0
    %3816 = vmatprep.subr.mxu0 0.0
    %3817 = vmatpush1.msra.mxu0 0.0
    %3818 = vmatprep.subr.mxu0 0.0
    %3819 = vmatpush1.msra.mxu0 0.0
    %3820 = vmatprep.subr.mxu0 0.0
    %3821 = vmatpush1.msra.mxu0 0.0
    %3822 = vmatprep.subr.mxu0 0.0
    %3823 = vmatpush1.msra.mxu0 0.0
    %3824 = vmatprep.subr.mxu0 0.0
    %3825 = vmatpush1.msra.mxu0 0.0
    %3826 = vmatprep.subr.mxu0 0.0
    %3827 = vmatpush1.msra.mxu0 0.0
    %3828 = vmatprep.subr.mxu0 0.0
    %3829 = vmatpush1.msra.mxu0 0.0
    %3830 = vmatprep.subr.mxu0 0.0
    %3831 = vmatpush1.msra.mxu0 0.0
    %3832 = vmatprep.subr.mxu0 0.0
    %3833 = vmatpush1.msra.mxu0 0.0
    %3834 = vmatprep.subr.mxu0 0.0
    %3835 = vmatpush1.msra.mxu0 0.0
    %3836 = vmatprep.subr.mxu0 0.0
    %3837 = vmatpush1.msra.mxu0 0.0
    %3838 = vmatprep.subr.mxu0 0.0
    %3839 = vmatpush1.msra.mxu0 0.0
    %3840 = vmatprep.subr.mxu0 0.0
    %3841 = vmatpush1.msra.mxu0 0.0
    %3842 = vmatprep.subr.mxu0 0.0
    %3843 = vmatpush1.msra.mxu0 0.0
    %3844 = vmatprep.subr.mxu0 0.0
    %3845 = vmatpush1.msra.mxu0 0.0
    %3846 = vmatprep.subr.mxu0 0.0
    %3847 = vmatpush1.msra.mxu0 0.0
    %3848 = vmatprep.mubr.f32.mxu0 0.0
    %3849 = vmatmul.mubr.f32.gmra.mrb[0].mxu0 %v3637
    %v3850 = vpop.f32.mrb[0].mxu0
    %v3851 = vadd.f32 %v1288, %v3850
    %v3852 = vpop.f32.mrb[0].mxu0
    %3853 = vdwg.mxu0
    %v3854 = vadd.f32 %v3710, %v3780
    %v3855 = vxor.u32 %v3854, 2147483648
    %v3856 = vmul.f32 %v3855, 1.442695
    %v3857 = vpow.pop %v3856
    %v3858 = vadd.f32 %v3857, 1.0
    %v3859 = vrcp.pop %v3858
    %v3860 = vmul.f32 1.0, %v3859
    %v3861 = vadd.f32 %v3711, %v3782
    %v3862 = vxor.u32 %v3861, 2147483648
    %v3863 = vmul.f32 %v3862, 1.442695
    %v3864 = vpow.pop %v3863
    %v3865 = vadd.f32 %v3864, 1.0
    %v3866 = vrcp.pop %v3865
    %v3867 = vmul.f32 1.0, %v3866
    %v3868 = vmul.f32 %v3860, %v3851
    %v3869 = vadd.f32 %v3712, %v3868
    %v3870 = vtanh.pop %v3869
    %v3871 = vsub.f32 1.0, %v3867
    %v3872 = vmul.f32 %v3871, %v3870
    %v3873 = vmul.f32 %v3867, %v3632
    %v3874 = vadd.f32 %v3872, %v3873
    %s3875 = scalar_lea.vmem %s7, 160
    %v3876 = vld [vmem:[%s3875] sm:$0xff]
    %v3877 = vld [vmem:[%s3875 + $0x8] sm:$0xff]
    %v3879 = vsel %vm1292, %v3874, 0
    %3881 = vmatprep.subr.mxu0 0.0
    %3882 = vmatpush1.msra.mxu0 %v3876
    %3883 = vmatprep.subr.mxu0 0.0
    %3884 = vmatpush1.msra.mxu0 %v3877
    %3885 = vmatprep.subr.mxu0 0.0
    %3886 = vmatpush1.msra.mxu0 0.0
    %3887 = vmatprep.subr.mxu0 0.0
    %3888 = vmatpush1.msra.mxu0 0.0
    %3889 = vmatprep.subr.mxu0 0.0
    %3890 = vmatpush1.msra.mxu0 0.0
    %3891 = vmatprep.subr.mxu0 0.0
    %3892 = vmatpush1.msra.mxu0 0.0
    %3893 = vmatprep.subr.mxu0 0.0
    %3894 = vmatpush1.msra.mxu0 0.0
    %3895 = vmatprep.subr.mxu0 0.0
    %3896 = vmatpush1.msra.mxu0 0.0
    %3897 = vmatprep.subr.mxu0 0.0
    %3898 = vmatpush1.msra.mxu0 0.0
    %3899 = vmatprep.subr.mxu0 0.0
    %3900 = vmatpush1.msra.mxu0 0.0
    %3901 = vmatprep.subr.mxu0 0.0
    %3902 = vmatpush1.msra.mxu0 0.0
    %3903 = vmatprep.subr.mxu0 0.0
    %3904 = vmatpush1.msra.mxu0 0.0
    %3905 = vmatprep.subr.mxu0 0.0
    %3906 = vmatpush1.msra.mxu0 0.0
    %3907 = vmatprep.subr.mxu0 0.0
    %3908 = vmatpush1.msra.mxu0 0.0
    %3909 = vmatprep.subr.mxu0 0.0
    %3910 = vmatpush1.msra.mxu0 0.0
    %3911 = vmatprep.subr.mxu0 0.0
    %3912 = vmatpush1.msra.mxu0 0.0
    %3913 = vmatprep.subr.mxu0 0.0
    %3914 = vmatpush1.msra.mxu0 0.0
    %3915 = vmatprep.subr.mxu0 0.0
    %3916 = vmatpush1.msra.mxu0 0.0
    %3917 = vmatprep.subr.mxu0 0.0
    %3918 = vmatpush1.msra.mxu0 0.0
    %3919 = vmatprep.subr.mxu0 0.0
    %3920 = vmatpush1.msra.mxu0 0.0
    %3921 = vmatprep.subr.mxu0 0.0
    %3922 = vmatpush1.msra.mxu0 0.0
    %3923 = vmatprep.subr.mxu0 0.0
    %3924 = vmatpush1.msra.mxu0 0.0
    %3925 = vmatprep.subr.mxu0 0.0
    %3926 = vmatpush1.msra.mxu0 0.0
    %3927 = vmatprep.subr.mxu0 0.0
    %3928 = vmatpush1.msra.mxu0 0.0
    %3929 = vmatprep.subr.mxu0 0.0
    %3930 = vmatpush1.msra.mxu0 0.0
    %3931 = vmatprep.subr.mxu0 0.0
    %3932 = vmatpush1.msra.mxu0 0.0
    %3933 = vmatprep.subr.mxu0 0.0
    %3934 = vmatpush1.msra.mxu0 0.0
    %3935 = vmatprep.subr.mxu0 0.0
    %3936 = vmatpush1.msra.mxu0 0.0
    %3937 = vmatprep.subr.mxu0 0.0
    %3938 = vmatpush1.msra.mxu0 0.0
    %3939 = vmatprep.subr.mxu0 0.0
    %3940 = vmatpush1.msra.mxu0 0.0
    %3941 = vmatprep.subr.mxu0 0.0
    %3942 = vmatpush1.msra.mxu0 0.0
    %3943 = vmatprep.subr.mxu0 0.0
    %3944 = vmatpush1.msra.mxu0 0.0
    %3945 = vmatprep.mubr.f32.mxu0 0.0
    %3946 = vmatmul.mubr.f32.gmra.mrb[0].mxu0 %v3879
    %v3947 = vpop.f32.mrb[0].mxu0
    %v3948 = vadd.f32 0.0, %v3947
    %v3949 = vpop.f32.mrb[0].mxu0
    %3950 = vdwg.mxu0
    %v3951 = vadd.f32 %v3709, %v3948
    %v3952 = vld [vmem:[#allocation2 + $0x108] sm:$0xff]
    %v3953 = vld [vmem:[#allocation2 + $0x110] sm:$0xff]
    %v3954 = vld [vmem:[#allocation2 + $0x118] sm:$0xff]
    %3955 = vmatprep.subr.mxu0 %v1270
    %3956 = vmatpush1.msra.mxu0 %v1269
    %3957 = vmatprep.subr.mxu0 %v1273
    %3958 = vmatpush1.msra.mxu0 %v1272
    %3959 = vmatprep.subr.mxu0 0.0
    %3960 = vmatpush1.msra.mxu0 0.0
    %3961 = vmatprep.subr.mxu0 0.0
    %3962 = vmatpush1.msra.mxu0 0.0
    %3963 = vmatprep.subr.mxu0 0.0
    %3964 = vmatpush1.msra.mxu0 0.0
    %3965 = vmatprep.subr.mxu0 0.0
    %3966 = vmatpush1.msra.mxu0 0.0
    %3967 = vmatprep.subr.mxu0 0.0
    %3968 = vmatpush1.msra.mxu0 0.0
    %3969 = vmatprep.subr.mxu0 0.0
    %3970 = vmatpush1.msra.mxu0 0.0
    %3971 = vmatprep.subr.mxu0 0.0
    %3972 = vmatpush1.msra.mxu0 0.0
    %3973 = vmatprep.subr.mxu0 0.0
    %3974 = vmatpush1.msra.mxu0 0.0
    %3975 = vmatprep.subr.mxu0 0.0
    %3976 = vmatpush1.msra.mxu0 0.0
    %3977 = vmatprep.subr.mxu0 0.0
    %3978 = vmatpush1.msra.mxu0 0.0
    %3979 = vmatprep.subr.mxu0 0.0
    %3980 = vmatpush1.msra.mxu0 0.0
    %3981 = vmatprep.subr.mxu0 0.0
    %3982 = vmatpush1.msra.mxu0 0.0
    %3983 = vmatprep.subr.mxu0 0.0
    %3984 = vmatpush1.msra.mxu0 0.0
    %3985 = vmatprep.subr.mxu0 0.0
    %3986 = vmatpush1.msra.mxu0 0.0
    %3987 = vmatprep.subr.mxu0 0.0
    %3988 = vmatpush1.msra.mxu0 0.0
    %3989 = vmatprep.subr.mxu0 0.0
    %3990 = vmatpush1.msra.mxu0 0.0
    %3991 = vmatprep.subr.mxu0 0.0
    %3992 = vmatpush1.msra.mxu0 0.0
    %3993 = vmatprep.subr.mxu0 0.0
    %3994 = vmatpush1.msra.mxu0 0.0
    %3995 = vmatprep.subr.mxu0 0.0
    %3996 = vmatpush1.msra.mxu0 0.0
    %3997 = vmatprep.subr.mxu0 0.0
    %3998 = vmatpush1.msra.mxu0 0.0
    %3999 = vmatprep.subr.mxu0 0.0
    %4000 = vmatpush1.msra.mxu0 0.0
    %4001 = vmatprep.subr.mxu0 0.0
    %4002 = vmatpush1.msra.mxu0 0.0
    %4003 = vmatprep.subr.mxu0 0.0
    %4004 = vmatpush1.msra.mxu0 0.0
    %4005 = vmatprep.subr.mxu0 0.0
    %4006 = vmatpush1.msra.mxu0 0.0
    %4007 = vmatprep.subr.mxu0 0.0
    %4008 = vmatpush1.msra.mxu0 0.0
    %4009 = vmatprep.subr.mxu0 0.0
    %4010 = vmatpush1.msra.mxu0 0.0
    %4011 = vmatprep.subr.mxu0 0.0
    %4012 = vmatpush1.msra.mxu0 0.0
    %4013 = vmatprep.subr.mxu0 0.0
    %4014 = vmatpush1.msra.mxu0 0.0
    %4015 = vmatprep.subr.mxu0 0.0
    %4016 = vmatpush1.msra.mxu0 0.0
    %4017 = vmatprep.subr.mxu0 0.0
    %4018 = vmatpush1.msra.mxu0 0.0
    %4019 = vmatprep.mubr.f32.mxu0 0.0
    %4020 = vmatmul.mubr.f32.gmra.mrb[0].mxu0 %v3879
    %v4021 = vpop.f32.mrb[0].mxu0
    %v4022 = vadd.f32 %v1280, %v4021
    %v4023 = vpop.f32.mrb[0].mxu0
    %v4024 = vadd.f32 %v1284, %v4023
    %4025 = vdwg.mxu0
    %4026 = vmatprep.subr.mxu0 0.0
    %4027 = vmatpush1.msra.mxu0 %v1271
    %4028 = vmatprep.subr.mxu0 0.0
    %4029 = vmatpush1.msra.mxu0 %v1274
    %4030 = vmatprep.subr.mxu0 0.0
    %4031 = vmatpush1.msra.mxu0 0.0
    %4032 = vmatprep.subr.mxu0 0.0
    %4033 = vmatpush1.msra.mxu0 0.0
    %4034 = vmatprep.subr.mxu0 0.0
    %4035 = vmatpush1.msra.mxu0 0.0
    %4036 = vmatprep.subr.mxu0 0.0
    %4037 = vmatpush1.msra.mxu0 0.0
    %4038 = vmatprep.subr.mxu0 0.0
    %4039 = vmatpush1.msra.mxu0 0.0
    %4040 = vmatprep.subr.mxu0 0.0
    %4041 = vmatpush1.msra.mxu0 0.0
    %4042 = vmatprep.subr.mxu0 0.0
    %4043 = vmatpush1.msra.mxu0 0.0
    %4044 = vmatprep.subr.mxu0 0.0
    %4045 = vmatpush1.msra.mxu0 0.0
    %4046 = vmatprep.subr.mxu0 0.0
    %4047 = vmatpush1.msra.mxu0 0.0
    %4048 = vmatprep.subr.mxu0 0.0
    %4049 = vmatpush1.msra.mxu0 0.0
    %4050 = vmatprep.subr.mxu0 0.0
    %4051 = vmatpush1.msra.mxu0 0.0
    %4052 = vmatprep.subr.mxu0 0.0
    %4053 = vmatpush1.msra.mxu0 0.0
    %4054 = vmatprep.subr.mxu0 0.0
    %4055 = vmatpush1.msra.mxu0 0.0
    %4056 = vmatprep.subr.mxu0 0.0
    %4057 = vmatpush1.msra.mxu0 0.0
    %4058 = vmatprep.subr.mxu0 0.0
    %4059 = vmatpush1.msra.mxu0 0.0
    %4060 = vmatprep.subr.mxu0 0.0
    %4061 = vmatpush1.msra.mxu0 0.0
    %4062 = vmatprep.subr.mxu0 0.0
    %4063 = vmatpush1.msra.mxu0 0.0
    %4064 = vmatprep.subr.mxu0 0.0
    %4065 = vmatpush1.msra.mxu0 0.0
    %4066 = vmatprep.subr.mxu0 0.0
    %4067 = vmatpush1.msra.mxu0 0.0
    %4068 = vmatprep.subr.mxu0 0.0
    %4069 = vmatpush1.msra.mxu0 0.0
    %4070 = vmatprep.subr.mxu0 0.0
    %4071 = vmatpush1.msra.mxu0 0.0
    %4072 = vmatprep.subr.mxu0 0.0
    %4073 = vmatpush1.msra.mxu0 0.0
    %4074 = vmatprep.subr.mxu0 0.0
    %4075 = vmatpush1.msra.mxu0 0.0
    %4076 = vmatprep.subr.mxu0 0.0
    %4077 = vmatpush1.msra.mxu0 0.0
    %4078 = vmatprep.subr.mxu0 0.0
    %4079 = vmatpush1.msra.mxu0 0.0
    %4080 = vmatprep.subr.mxu0 0.0
    %4081 = vmatpush1.msra.mxu0 0.0
    %4082 = vmatprep.subr.mxu0 0.0
    %4083 = vmatpush1.msra.mxu0 0.0
    %4084 = vmatprep.subr.mxu0 0.0
    %4085 = vmatpush1.msra.mxu0 0.0
    %4086 = vmatprep.subr.mxu0 0.0
    %4087 = vmatpush1.msra.mxu0 0.0
    %4088 = vmatprep.subr.mxu0 0.0
    %4089 = vmatpush1.msra.mxu0 0.0
    %4090 = vmatprep.mubr.f32.mxu0 0.0
    %4091 = vmatmul.mubr.f32.gmra.mrb[0].mxu0 %v3879
    %v4092 = vpop.f32.mrb[0].mxu0
    %v4093 = vadd.f32 %v1288, %v4092
    %v4094 = vpop.f32.mrb[0].mxu0
    %4095 = vdwg.mxu0
    %v4096 = vadd.f32 %v3952, %v4022
    %v4097 = vxor.u32 %v4096, 2147483648
    %v4098 = vmul.f32 %v4097, 1.442695
    %v4099 = vpow.pop %v4098
    %v4100 = vadd.f32 %v4099, 1.0
    %v4101 = vrcp.pop %v4100
    %v4102 = vmul.f32 1.0, %v4101
    %v4103 = vadd.f32 %v3953, %v4024
    %v4104 = vxor.u32 %v4103, 2147483648
    %v4105 = vmul.f32 %v4104, 1.442695
    %v4106 = vpow.pop %v4105
    %v4107 = vadd.f32 %v4106, 1.0
    %v4108 = vrcp.pop %v4107
    %v4109 = vmul.f32 1.0, %v4108
    %v4110 = vmul.f32 %v4102, %v4093
    %v4111 = vadd.f32 %v3954, %v4110
    %v4112 = vtanh.pop %v4111
    %v4113 = vsub.f32 1.0, %v4109
    %v4114 = vmul.f32 %v4113, %v4112
    %v4115 = vmul.f32 %v4109, %v3874
    %v4116 = vadd.f32 %v4114, %v4115
    %s4117 = scalar_lea.vmem %s7, 176
    %v4118 = vld [vmem:[%s4117] sm:$0xff]
    %v4119 = vld [vmem:[%s4117 + $0x8] sm:$0xff]
    %v4121 = vsel %vm1292, %v4116, 0
    %4123 = vmatprep.subr.mxu0 0.0
    %4124 = vmatpush1.msra.mxu0 %v4118
    %4125 = vmatprep.subr.mxu0 0.0
    %4126 = vmatpush1.msra.mxu0 %v4119
    %4127 = vmatprep.subr.mxu0 0.0
    %4128 = vmatpush1.msra.mxu0 0.0
    %4129 = vmatprep.subr.mxu0 0.0
    %4130 = vmatpush1.msra.mxu0 0.0
    %4131 = vmatprep.subr.mxu0 0.0
    %4132 = vmatpush1.msra.mxu0 0.0
    %4133 = vmatprep.subr.mxu0 0.0
    %4134 = vmatpush1.msra.mxu0 0.0
    %4135 = vmatprep.subr.mxu0 0.0
    %4136 = vmatpush1.msra.mxu0 0.0
    %4137 = vmatprep.subr.mxu0 0.0
    %4138 = vmatpush1.msra.mxu0 0.0
    %4139 = vmatprep.subr.mxu0 0.0
    %4140 = vmatpush1.msra.mxu0 0.0
    %4141 = vmatprep.subr.mxu0 0.0
    %4142 = vmatpush1.msra.mxu0 0.0
    %4143 = vmatprep.subr.mxu0 0.0
    %4144 = vmatpush1.msra.mxu0 0.0
    %4145 = vmatprep.subr.mxu0 0.0
    %4146 = vmatpush1.msra.mxu0 0.0
    %4147 = vmatprep.subr.mxu0 0.0
    %4148 = vmatpush1.msra.mxu0 0.0
    %4149 = vmatprep.subr.mxu0 0.0
    %4150 = vmatpush1.msra.mxu0 0.0
    %4151 = vmatprep.subr.mxu0 0.0
    %4152 = vmatpush1.msra.mxu0 0.0
    %4153 = vmatprep.subr.mxu0 0.0
    %4154 = vmatpush1.msra.mxu0 0.0
    %4155 = vmatprep.subr.mxu0 0.0
    %4156 = vmatpush1.msra.mxu0 0.0
    %4157 = vmatprep.subr.mxu0 0.0
    %4158 = vmatpush1.msra.mxu0 0.0
    %4159 = vmatprep.subr.mxu0 0.0
    %4160 = vmatpush1.msra.mxu0 0.0
    %4161 = vmatprep.subr.mxu0 0.0
    %4162 = vmatpush1.msra.mxu0 0.0
    %4163 = vmatprep.subr.mxu0 0.0
    %4164 = vmatpush1.msra.mxu0 0.0
    %4165 = vmatprep.subr.mxu0 0.0
    %4166 = vmatpush1.msra.mxu0 0.0
    %4167 = vmatprep.subr.mxu0 0.0
    %4168 = vmatpush1.msra.mxu0 0.0
    %4169 = vmatprep.subr.mxu0 0.0
    %4170 = vmatpush1.msra.mxu0 0.0
    %4171 = vmatprep.subr.mxu0 0.0
    %4172 = vmatpush1.msra.mxu0 0.0
    %4173 = vmatprep.subr.mxu0 0.0
    %4174 = vmatpush1.msra.mxu0 0.0
    %4175 = vmatprep.subr.mxu0 0.0
    %4176 = vmatpush1.msra.mxu0 0.0
    %4177 = vmatprep.subr.mxu0 0.0
    %4178 = vmatpush1.msra.mxu0 0.0
    %4179 = vmatprep.subr.mxu0 0.0
    %4180 = vmatpush1.msra.mxu0 0.0
    %4181 = vmatprep.subr.mxu0 0.0
    %4182 = vmatpush1.msra.mxu0 0.0
    %4183 = vmatprep.subr.mxu0 0.0
    %4184 = vmatpush1.msra.mxu0 0.0
    %4185 = vmatprep.subr.mxu0 0.0
    %4186 = vmatpush1.msra.mxu0 0.0
    %4187 = vmatprep.mubr.f32.mxu0 0.0
    %4188 = vmatmul.mubr.f32.gmra.mrb[0].mxu0 %v4121
    %v4189 = vpop.f32.mrb[0].mxu0
    %v4190 = vadd.f32 0.0, %v4189
    %v4191 = vpop.f32.mrb[0].mxu0
    %4192 = vdwg.mxu0
    %v4193 = vadd.f32 %v3951, %v4190
    %v4194 = vld [vmem:[#allocation2 + $0x120] sm:$0xff]
    %v4195 = vld [vmem:[#allocation2 + $0x128] sm:$0xff]
    %v4196 = vld [vmem:[#allocation2 + $0x130] sm:$0xff]
    %4197 = vmatprep.subr.mxu0 %v1270
    %4198 = vmatpush1.msra.mxu0 %v1269
    %4199 = vmatprep.subr.mxu0 %v1273
    %4200 = vmatpush1.msra.mxu0 %v1272
    %4201 = vmatprep.subr.mxu0 0.0
    %4202 = vmatpush1.msra.mxu0 0.0
    %4203 = vmatprep.subr.mxu0 0.0
    %4204 = vmatpush1.msra.mxu0 0.0
    %4205 = vmatprep.subr.mxu0 0.0
    %4206 = vmatpush1.msra.mxu0 0.0
    %4207 = vmatprep.subr.mxu0 0.0
    %4208 = vmatpush1.msra.mxu0 0.0
    %4209 = vmatprep.subr.mxu0 0.0
    %4210 = vmatpush1.msra.mxu0 0.0
    %4211 = vmatprep.subr.mxu0 0.0
    %4212 = vmatpush1.msra.mxu0 0.0
    %4213 = vmatprep.subr.mxu0 0.0
    %4214 = vmatpush1.msra.mxu0 0.0
    %4215 = vmatprep.subr.mxu0 0.0
    %4216 = vmatpush1.msra.mxu0 0.0
    %4217 = vmatprep.subr.mxu0 0.0
    %4218 = vmatpush1.msra.mxu0 0.0
    %4219 = vmatprep.subr.mxu0 0.0
    %4220 = vmatpush1.msra.mxu0 0.0
    %4221 = vmatprep.subr.mxu0 0.0
    %4222 = vmatpush1.msra.mxu0 0.0
    %4223 = vmatprep.subr.mxu0 0.0
    %4224 = vmatpush1.msra.mxu0 0.0
    %4225 = vmatprep.subr.mxu0 0.0
    %4226 = vmatpush1.msra.mxu0 0.0
    %4227 = vmatprep.subr.mxu0 0.0
    %4228 = vmatpush1.msra.mxu0 0.0
    %4229 = vmatprep.subr.mxu0 0.0
    %4230 = vmatpush1.msra.mxu0 0.0
    %4231 = vmatprep.subr.mxu0 0.0
    %4232 = vmatpush1.msra.mxu0 0.0
    %4233 = vmatprep.subr.mxu0 0.0
    %4234 = vmatpush1.msra.mxu0 0.0
    %4235 = vmatprep.subr.mxu0 0.0
    %4236 = vmatpush1.msra.mxu0 0.0
    %4237 = vmatprep.subr.mxu0 0.0
    %4238 = vmatpush1.msra.mxu0 0.0
    %4239 = vmatprep.subr.mxu0 0.0
    %4240 = vmatpush1.msra.mxu0 0.0
    %4241 = vmatprep.subr.mxu0 0.0
    %4242 = vmatpush1.msra.mxu0 0.0
    %4243 = vmatprep.subr.mxu0 0.0
    %4244 = vmatpush1.msra.mxu0 0.0
    %4245 = vmatprep.subr.mxu0 0.0
    %4246 = vmatpush1.msra.mxu0 0.0
    %4247 = vmatprep.subr.mxu0 0.0
    %4248 = vmatpush1.msra.mxu0 0.0
    %4249 = vmatprep.subr.mxu0 0.0
    %4250 = vmatpush1.msra.mxu0 0.0
    %4251 = vmatprep.subr.mxu0 0.0
    %4252 = vmatpush1.msra.mxu0 0.0
    %4253 = vmatprep.subr.mxu0 0.0
    %4254 = vmatpush1.msra.mxu0 0.0
    %4255 = vmatprep.subr.mxu0 0.0
    %4256 = vmatpush1.msra.mxu0 0.0
    %4257 = vmatprep.subr.mxu0 0.0
    %4258 = vmatpush1.msra.mxu0 0.0
    %4259 = vmatprep.subr.mxu0 0.0
    %4260 = vmatpush1.msra.mxu0 0.0
    %4261 = vmatprep.mubr.f32.mxu0 0.0
    %4262 = vmatmul.mubr.f32.gmra.mrb[0].mxu0 %v4121
    %v4263 = vpop.f32.mrb[0].mxu0
    %v4264 = vadd.f32 %v1280, %v4263
    %v4265 = vpop.f32.mrb[0].mxu0
    %v4266 = vadd.f32 %v1284, %v4265
    %4267 = vdwg.mxu0
    %4268 = vmatprep.subr.mxu0 0.0
    %4269 = vmatpush1.msra.mxu0 %v1271
    %4270 = vmatprep.subr.mxu0 0.0
    %4271 = vmatpush1.msra.mxu0 %v1274
    %4272 = vmatprep.subr.mxu0 0.0
    %4273 = vmatpush1.msra.mxu0 0.0
    %4274 = vmatprep.subr.mxu0 0.0
    %4275 = vmatpush1.msra.mxu0 0.0
    %4276 = vmatprep.subr.mxu0 0.0
    %4277 = vmatpush1.msra.mxu0 0.0
    %4278 = vmatprep.subr.mxu0 0.0
    %4279 = vmatpush1.msra.mxu0 0.0
    %4280 = vmatprep.subr.mxu0 0.0
    %4281 = vmatpush1.msra.mxu0 0.0
    %4282 = vmatprep.subr.mxu0 0.0
    %4283 = vmatpush1.msra.mxu0 0.0
    %4284 = vmatprep.subr.mxu0 0.0
    %4285 = vmatpush1.msra.mxu0 0.0
    %4286 = vmatprep.subr.mxu0 0.0
    %4287 = vmatpush1.msra.mxu0 0.0
    %4288 = vmatprep.subr.mxu0 0.0
    %4289 = vmatpush1.msra.mxu0 0.0
    %4290 = vmatprep.subr.mxu0 0.0
    %4291 = vmatpush1.msra.mxu0 0.0
    %4292 = vmatprep.subr.mxu0 0.0
    %4293 = vmatpush1.msra.mxu0 0.0
    %4294 = vmatprep.subr.mxu0 0.0
    %4295 = vmatpush1.msra.mxu0 0.0
    %4296 = vmatprep.subr.mxu0 0.0
    %4297 = vmatpush1.msra.mxu0 0.0
    %4298 = vmatprep.subr.mxu0 0.0
    %4299 = vmatpush1.msra.mxu0 0.0
    %4300 = vmatprep.subr.mxu0 0.0
    %4301 = vmatpush1.msra.mxu0 0.0
    %4302 = vmatprep.subr.mxu0 0.0
    %4303 = vmatpush1.msra.mxu0 0.0
    %4304 = vmatprep.subr.mxu0 0.0
    %4305 = vmatpush1.msra.mxu0 0.0
    %4306 = vmatprep.subr.mxu0 0.0
    %4307 = vmatpush1.msra.mxu0 0.0
    %4308 = vmatprep.subr.mxu0 0.0
    %4309 = vmatpush1.msra.mxu0 0.0
    %4310 = vmatprep.subr.mxu0 0.0
    %4311 = vmatpush1.msra.mxu0 0.0
    %4312 = vmatprep.subr.mxu0 0.0
    %4313 = vmatpush1.msra.mxu0 0.0
    %4314 = vmatprep.subr.mxu0 0.0
    %4315 = vmatpush1.msra.mxu0 0.0
    %4316 = vmatprep.subr.mxu0 0.0
    %4317 = vmatpush1.msra.mxu0 0.0
    %4318 = vmatprep.subr.mxu0 0.0
    %4319 = vmatpush1.msra.mxu0 0.0
    %4320 = vmatprep.subr.mxu0 0.0
    %4321 = vmatpush1.msra.mxu0 0.0
    %4322 = vmatprep.subr.mxu0 0.0
    %4323 = vmatpush1.msra.mxu0 0.0
    %4324 = vmatprep.subr.mxu0 0.0
    %4325 = vmatpush1.msra.mxu0 0.0
    %4326 = vmatprep.subr.mxu0 0.0
    %4327 = vmatpush1.msra.mxu0 0.0
    %4328 = vmatprep.subr.mxu0 0.0
    %4329 = vmatpush1.msra.mxu0 0.0
    %4330 = vmatprep.subr.mxu0 0.0
    %4331 = vmatpush1.msra.mxu0 0.0
    %4332 = vmatprep.mubr.f32.mxu0 0.0
    %4333 = vmatmul.mubr.f32.gmra.mrb[0].mxu0 %v4121
    %v4334 = vpop.f32.mrb[0].mxu0
    %v4335 = vadd.f32 %v1288, %v4334
    %v4336 = vpop.f32.mrb[0].mxu0
    %4337 = vdwg.mxu0
    %v4338 = vadd.f32 %v4194, %v4264
    %v4339 = vxor.u32 %v4338, 2147483648
    %v4340 = vmul.f32 %v4339, 1.442695
    %v4341 = vpow.pop %v4340
    %v4342 = vadd.f32 %v4341, 1.0
    %v4343 = vrcp.pop %v4342
    %v4344 = vmul.f32 1.0, %v4343
    %v4345 = vadd.f32 %v4195, %v4266
    %v4346 = vxor.u32 %v4345, 2147483648
    %v4347 = vmul.f32 %v4346, 1.442695
    %v4348 = vpow.pop %v4347
    %v4349 = vadd.f32 %v4348, 1.0
    %v4350 = vrcp.pop %v4349
    %v4351 = vmul.f32 1.0, %v4350
    %v4352 = vmul.f32 %v4344, %v4335
    %v4353 = vadd.f32 %v4196, %v4352
    %v4354 = vtanh.pop %v4353
    %v4355 = vsub.f32 1.0, %v4351
    %v4356 = vmul.f32 %v4355, %v4354
    %v4357 = vmul.f32 %v4351, %v4116
    %v4358 = vadd.f32 %v4356, %v4357
    %s4359 = scalar_lea.vmem %s7, 192
    %v4360 = vld [vmem:[%s4359] sm:$0xff]
    %v4361 = vld [vmem:[%s4359 + $0x8] sm:$0xff]
    %v4363 = vsel %vm1292, %v4358, 0
    %4365 = vmatprep.subr.mxu0 0.0
    %4366 = vmatpush1.msra.mxu0 %v4360
    %4367 = vmatprep.subr.mxu0 0.0
    %4368 = vmatpush1.msra.mxu0 %v4361
    %4369 = vmatprep.subr.mxu0 0.0
    %4370 = vmatpush1.msra.mxu0 0.0
    %4371 = vmatprep.subr.mxu0 0.0
    %4372 = vmatpush1.msra.mxu0 0.0
    %4373 = vmatprep.subr.mxu0 0.0
    %4374 = vmatpush1.msra.mxu0 0.0
    %4375 = vmatprep.subr.mxu0 0.0
    %4376 = vmatpush1.msra.mxu0 0.0
    %4377 = vmatprep.subr.mxu0 0.0
    %4378 = vmatpush1.msra.mxu0 0.0
    %4379 = vmatprep.subr.mxu0 0.0
    %4380 = vmatpush1.msra.mxu0 0.0
    %4381 = vmatprep.subr.mxu0 0.0
    %4382 = vmatpush1.msra.mxu0 0.0
    %4383 = vmatprep.subr.mxu0 0.0
    %4384 = vmatpush1.msra.mxu0 0.0
    %4385 = vmatprep.subr.mxu0 0.0
    %4386 = vmatpush1.msra.mxu0 0.0
    %4387 = vmatprep.subr.mxu0 0.0
    %4388 = vmatpush1.msra.mxu0 0.0
    %4389 = vmatprep.subr.mxu0 0.0
    %4390 = vmatpush1.msra.mxu0 0.0
    %4391 = vmatprep.subr.mxu0 0.0
    %4392 = vmatpush1.msra.mxu0 0.0
    %4393 = vmatprep.subr.mxu0 0.0
    %4394 = vmatpush1.msra.mxu0 0.0
    %4395 = vmatprep.subr.mxu0 0.0
    %4396 = vmatpush1.msra.mxu0 0.0
    %4397 = vmatprep.subr.mxu0 0.0
    %4398 = vmatpush1.msra.mxu0 0.0
    %4399 = vmatprep.subr.mxu0 0.0
    %4400 = vmatpush1.msra.mxu0 0.0
    %4401 = vmatprep.subr.mxu0 0.0
    %4402 = vmatpush1.msra.mxu0 0.0
    %4403 = vmatprep.subr.mxu0 0.0
    %4404 = vmatpush1.msra.mxu0 0.0
    %4405 = vmatprep.subr.mxu0 0.0
    %4406 = vmatpush1.msra.mxu0 0.0
    %4407 = vmatprep.subr.mxu0 0.0
    %4408 = vmatpush1.msra.mxu0 0.0
    %4409 = vmatprep.subr.mxu0 0.0
    %4410 = vmatpush1.msra.mxu0 0.0
    %4411 = vmatprep.subr.mxu0 0.0
    %4412 = vmatpush1.msra.mxu0 0.0
    %4413 = vmatprep.subr.mxu0 0.0
    %4414 = vmatpush1.msra.mxu0 0.0
    %4415 = vmatprep.subr.mxu0 0.0
    %4416 = vmatpush1.msra.mxu0 0.0
    %4417 = vmatprep.subr.mxu0 0.0
    %4418 = vmatpush1.msra.mxu0 0.0
    %4419 = vmatprep.subr.mxu0 0.0
    %4420 = vmatpush1.msra.mxu0 0.0
    %4421 = vmatprep.subr.mxu0 0.0
    %4422 = vmatpush1.msra.mxu0 0.0
    %4423 = vmatprep.subr.mxu0 0.0
    %4424 = vmatpush1.msra.mxu0 0.0
    %4425 = vmatprep.subr.mxu0 0.0
    %4426 = vmatpush1.msra.mxu0 0.0
    %4427 = vmatprep.subr.mxu0 0.0
    %4428 = vmatpush1.msra.mxu0 0.0
    %4429 = vmatprep.mubr.f32.mxu0 0.0
    %4430 = vmatmul.mubr.f32.gmra.mrb[0].mxu0 %v4363
    %v4431 = vpop.f32.mrb[0].mxu0
    %v4432 = vadd.f32 0.0, %v4431
    %v4433 = vpop.f32.mrb[0].mxu0
    %4434 = vdwg.mxu0
    %v4435 = vadd.f32 %v4193, %v4432
    %v4436 = vld [vmem:[#allocation2 + $0x138] sm:$0xff]
    %v4437 = vld [vmem:[#allocation2 + $0x140] sm:$0xff]
    %v4438 = vld [vmem:[#allocation2 + $0x148] sm:$0xff]
    %4439 = vmatprep.subr.mxu0 %v1270
    %4440 = vmatpush1.msra.mxu0 %v1269
    %4441 = vmatprep.subr.mxu0 %v1273
    %4442 = vmatpush1.msra.mxu0 %v1272
    %4443 = vmatprep.subr.mxu0 0.0
    %4444 = vmatpush1.msra.mxu0 0.0
    %4445 = vmatprep.subr.mxu0 0.0
    %4446 = vmatpush1.msra.mxu0 0.0
    %4447 = vmatprep.subr.mxu0 0.0
    %4448 = vmatpush1.msra.mxu0 0.0
    %4449 = vmatprep.subr.mxu0 0.0
    %4450 = vmatpush1.msra.mxu0 0.0
    %4451 = vmatprep.subr.mxu0 0.0
    %4452 = vmatpush1.msra.mxu0 0.0
    %4453 = vmatprep.subr.mxu0 0.0
    %4454 = vmatpush1.msra.mxu0 0.0
    %4455 = vmatprep.subr.mxu0 0.0
    %4456 = vmatpush1.msra.mxu0 0.0
    %4457 = vmatprep.subr.mxu0 0.0
    %4458 = vmatpush1.msra.mxu0 0.0
    %4459 = vmatprep.subr.mxu0 0.0
    %4460 = vmatpush1.msra.mxu0 0.0
    %4461 = vmatprep.subr.mxu0 0.0
    %4462 = vmatpush1.msra.mxu0 0.0
    %4463 = vmatprep.subr.mxu0 0.0
    %4464 = vmatpush1.msra.mxu0 0.0
    %4465 = vmatprep.subr.mxu0 0.0
    %4466 = vmatpush1.msra.mxu0 0.0
    %4467 = vmatprep.subr.mxu0 0.0
    %4468 = vmatpush1.msra.mxu0 0.0
    %4469 = vmatprep.subr.mxu0 0.0
    %4470 = vmatpush1.msra.mxu0 0.0
    %4471 = vmatprep.subr.mxu0 0.0
    %4472 = vmatpush1.msra.mxu0 0.0
    %4473 = vmatprep.subr.mxu0 0.0
    %4474 = vmatpush1.msra.mxu0 0.0
    %4475 = vmatprep.subr.mxu0 0.0
    %4476 = vmatpush1.msra.mxu0 0.0
    %4477 = vmatprep.subr.mxu0 0.0
    %4478 = vmatpush1.msra.mxu0 0.0
    %4479 = vmatprep.subr.mxu0 0.0
    %4480 = vmatpush1.msra.mxu0 0.0
    %4481 = vmatprep.subr.mxu0 0.0
    %4482 = vmatpush1.msra.mxu0 0.0
    %4483 = vmatprep.subr.mxu0 0.0
    %4484 = vmatpush1.msra.mxu0 0.0
    %4485 = vmatprep.subr.mxu0 0.0
    %4486 = vmatpush1.msra.mxu0 0.0
    %4487 = vmatprep.subr.mxu0 0.0
    %4488 = vmatpush1.msra.mxu0 0.0
    %4489 = vmatprep.subr.mxu0 0.0
    %4490 = vmatpush1.msra.mxu0 0.0
    %4491 = vmatprep.subr.mxu0 0.0
    %4492 = vmatpush1.msra.mxu0 0.0
    %4493 = vmatprep.subr.mxu0 0.0
    %4494 = vmatpush1.msra.mxu0 0.0
    %4495 = vmatprep.subr.mxu0 0.0
    %4496 = vmatpush1.msra.mxu0 0.0
    %4497 = vmatprep.subr.mxu0 0.0
    %4498 = vmatpush1.msra.mxu0 0.0
    %4499 = vmatprep.subr.mxu0 0.0
    %4500 = vmatpush1.msra.mxu0 0.0
    %4501 = vmatprep.subr.mxu0 0.0
    %4502 = vmatpush1.msra.mxu0 0.0
    %4503 = vmatprep.mubr.f32.mxu0 0.0
    %4504 = vmatmul.mubr.f32.gmra.mrb[0].mxu0 %v4363
    %v4505 = vpop.f32.mrb[0].mxu0
    %v4506 = vadd.f32 %v1280, %v4505
    %v4507 = vpop.f32.mrb[0].mxu0
    %v4508 = vadd.f32 %v1284, %v4507
    %4509 = vdwg.mxu0
    %4510 = vmatprep.subr.mxu0 0.0
    %4511 = vmatpush1.msra.mxu0 %v1271
    %4512 = vmatprep.subr.mxu0 0.0
    %4513 = vmatpush1.msra.mxu0 %v1274
    %4514 = vmatprep.subr.mxu0 0.0
    %4515 = vmatpush1.msra.mxu0 0.0
    %4516 = vmatprep.subr.mxu0 0.0
    %4517 = vmatpush1.msra.mxu0 0.0
    %4518 = vmatprep.subr.mxu0 0.0
    %4519 = vmatpush1.msra.mxu0 0.0
    %4520 = vmatprep.subr.mxu0 0.0
    %4521 = vmatpush1.msra.mxu0 0.0
    %4522 = vmatprep.subr.mxu0 0.0
    %4523 = vmatpush1.msra.mxu0 0.0
    %4524 = vmatprep.subr.mxu0 0.0
    %4525 = vmatpush1.msra.mxu0 0.0
    %4526 = vmatprep.subr.mxu0 0.0
    %4527 = vmatpush1.msra.mxu0 0.0
    %4528 = vmatprep.subr.mxu0 0.0
    %4529 = vmatpush1.msra.mxu0 0.0
    %4530 = vmatprep.subr.mxu0 0.0
    %4531 = vmatpush1.msra.mxu0 0.0
    %4532 = vmatprep.subr.mxu0 0.0
    %4533 = vmatpush1.msra.mxu0 0.0
    %4534 = vmatprep.subr.mxu0 0.0
    %4535 = vmatpush1.msra.mxu0 0.0
    %4536 = vmatprep.subr.mxu0 0.0
    %4537 = vmatpush1.msra.mxu0 0.0
    %4538 = vmatprep.subr.mxu0 0.0
    %4539 = vmatpush1.msra.mxu0 0.0
    %4540 = vmatprep.subr.mxu0 0.0
    %4541 = vmatpush1.msra.mxu0 0.0
    %4542 = vmatprep.subr.mxu0 0.0
    %4543 = vmatpush1.msra.mxu0 0.0
    %4544 = vmatprep.subr.mxu0 0.0
    %4545 = vmatpush1.msra.mxu0 0.0
    %4546 = vmatprep.subr.mxu0 0.0
    %4547 = vmatpush1.msra.mxu0 0.0
    %4548 = vmatprep.subr.mxu0 0.0
    %4549 = vmatpush1.msra.mxu0 0.0
    %4550 = vmatprep.subr.mxu0 0.0
    %4551 = vmatpush1.msra.mxu0 0.0
    %4552 = vmatprep.subr.mxu0 0.0
    %4553 = vmatpush1.msra.mxu0 0.0
    %4554 = vmatprep.subr.mxu0 0.0
    %4555 = vmatpush1.msra.mxu0 0.0
    %4556 = vmatprep.subr.mxu0 0.0
    %4557 = vmatpush1.msra.mxu0 0.0
    %4558 = vmatprep.subr.mxu0 0.0
    %4559 = vmatpush1.msra.mxu0 0.0
    %4560 = vmatprep.subr.mxu0 0.0
    %4561 = vmatpush1.msra.mxu0 0.0
    %4562 = vmatprep.subr.mxu0 0.0
    %4563 = vmatpush1.msra.mxu0 0.0
    %4564 = vmatprep.subr.mxu0 0.0
    %4565 = vmatpush1.msra.mxu0 0.0
    %4566 = vmatprep.subr.mxu0 0.0
    %4567 = vmatpush1.msra.mxu0 0.0
    %4568 = vmatprep.subr.mxu0 0.0
    %4569 = vmatpush1.msra.mxu0 0.0
    %4570 = vmatprep.subr.mxu0 0.0
    %4571 = vmatpush1.msra.mxu0 0.0
    %4572 = vmatprep.subr.mxu0 0.0
    %4573 = vmatpush1.msra.mxu0 0.0
    %4574 = vmatprep.mubr.f32.mxu0 0.0
    %4575 = vmatmul.mubr.f32.gmra.mrb[0].mxu0 %v4363
    %v4576 = vpop.f32.mrb[0].mxu0
    %v4577 = vadd.f32 %v1288, %v4576
    %v4578 = vpop.f32.mrb[0].mxu0
    %4579 = vdwg.mxu0
    %v4580 = vadd.f32 %v4436, %v4506
    %v4581 = vxor.u32 %v4580, 2147483648
    %v4582 = vmul.f32 %v4581, 1.442695
    %v4583 = vpow.pop %v4582
    %v4584 = vadd.f32 %v4583, 1.0
    %v4585 = vrcp.pop %v4584
    %v4586 = vmul.f32 1.0, %v4585
    %v4587 = vadd.f32 %v4437, %v4508
    %v4588 = vxor.u32 %v4587, 2147483648
    %v4589 = vmul.f32 %v4588, 1.442695
    %v4590 = vpow.pop %v4589
    %v4591 = vadd.f32 %v4590, 1.0
    %v4592 = vrcp.pop %v4591
    %v4593 = vmul.f32 1.0, %v4592
    %v4594 = vmul.f32 %v4586, %v4577
    %v4595 = vadd.f32 %v4438, %v4594
    %v4596 = vtanh.pop %v4595
    %v4597 = vsub.f32 1.0, %v4593
    %v4598 = vmul.f32 %v4597, %v4596
    %v4599 = vmul.f32 %v4593, %v4358
    %v4600 = vadd.f32 %v4598, %v4599
    %s4601 = scalar_lea.vmem %s7, 208
    %v4602 = vld [vmem:[%s4601] sm:$0xff]
    %v4603 = vld [vmem:[%s4601 + $0x8] sm:$0xff]
    %v4605 = vsel %vm1292, %v4600, 0
    %4607 = vmatprep.subr.mxu0 0.0
    %4608 = vmatpush1.msra.mxu0 %v4602
    %4609 = vmatprep.subr.mxu0 0.0
    %4610 = vmatpush1.msra.mxu0 %v4603
    %4611 = vmatprep.subr.mxu0 0.0
    %4612 = vmatpush1.msra.mxu0 0.0
    %4613 = vmatprep.subr.mxu0 0.0
    %4614 = vmatpush1.msra.mxu0 0.0
    %4615 = vmatprep.subr.mxu0 0.0
    %4616 = vmatpush1.msra.mxu0 0.0
    %4617 = vmatprep.subr.mxu0 0.0
    %4618 = vmatpush1.msra.mxu0 0.0
    %4619 = vmatprep.subr.mxu0 0.0
    %4620 = vmatpush1.msra.mxu0 0.0
    %4621 = vmatprep.subr.mxu0 0.0
    %4622 = vmatpush1.msra.mxu0 0.0
    %4623 = vmatprep.subr.mxu0 0.0
    %4624 = vmatpush1.msra.mxu0 0.0
    %4625 = vmatprep.subr.mxu0 0.0
    %4626 = vmatpush1.msra.mxu0 0.0
    %4627 = vmatprep.subr.mxu0 0.0
    %4628 = vmatpush1.msra.mxu0 0.0
    %4629 = vmatprep.subr.mxu0 0.0
    %4630 = vmatpush1.msra.mxu0 0.0
    %4631 = vmatprep.subr.mxu0 0.0
    %4632 = vmatpush1.msra.mxu0 0.0
    %4633 = vmatprep.subr.mxu0 0.0
    %4634 = vmatpush1.msra.mxu0 0.0
    %4635 = vmatprep.subr.mxu0 0.0
    %4636 = vmatpush1.msra.mxu0 0.0
    %4637 = vmatprep.subr.mxu0 0.0
    %4638 = vmatpush1.msra.mxu0 0.0
    %4639 = vmatprep.subr.mxu0 0.0
    %4640 = vmatpush1.msra.mxu0 0.0
    %4641 = vmatprep.subr.mxu0 0.0
    %4642 = vmatpush1.msra.mxu0 0.0
    %4643 = vmatprep.subr.mxu0 0.0
    %4644 = vmatpush1.msra.mxu0 0.0
    %4645 = vmatprep.subr.mxu0 0.0
    %4646 = vmatpush1.msra.mxu0 0.0
    %4647 = vmatprep.subr.mxu0 0.0
    %4648 = vmatpush1.msra.mxu0 0.0
    %4649 = vmatprep.subr.mxu0 0.0
    %4650 = vmatpush1.msra.mxu0 0.0
    %4651 = vmatprep.subr.mxu0 0.0
    %4652 = vmatpush1.msra.mxu0 0.0
    %4653 = vmatprep.subr.mxu0 0.0
    %4654 = vmatpush1.msra.mxu0 0.0
    %4655 = vmatprep.subr.mxu0 0.0
    %4656 = vmatpush1.msra.mxu0 0.0
    %4657 = vmatprep.subr.mxu0 0.0
    %4658 = vmatpush1.msra.mxu0 0.0
    %4659 = vmatprep.subr.mxu0 0.0
    %4660 = vmatpush1.msra.mxu0 0.0
    %4661 = vmatprep.subr.mxu0 0.0
    %4662 = vmatpush1.msra.mxu0 0.0
    %4663 = vmatprep.subr.mxu0 0.0
    %4664 = vmatpush1.msra.mxu0 0.0
    %4665 = vmatprep.subr.mxu0 0.0
    %4666 = vmatpush1.msra.mxu0 0.0
    %4667 = vmatprep.subr.mxu0 0.0
    %4668 = vmatpush1.msra.mxu0 0.0
    %4669 = vmatprep.subr.mxu0 0.0
    %4670 = vmatpush1.msra.mxu0 0.0
    %4671 = vmatprep.mubr.f32.mxu0 0.0
    %4672 = vmatmul.mubr.f32.gmra.mrb[0].mxu0 %v4605
    %v4673 = vpop.f32.mrb[0].mxu0
    %v4674 = vadd.f32 0.0, %v4673
    %v4675 = vpop.f32.mrb[0].mxu0
    %4676 = vdwg.mxu0
    %v4677 = vadd.f32 %v4435, %v4674
    %v4678 = vld [vmem:[#allocation2 + $0x150] sm:$0xff]
    %v4679 = vld [vmem:[#allocation2 + $0x158] sm:$0xff]
    %v4680 = vld [vmem:[#allocation2 + $0x160] sm:$0xff]
    %4681 = vmatprep.subr.mxu0 %v1270
    %4682 = vmatpush1.msra.mxu0 %v1269
    %4683 = vmatprep.subr.mxu0 %v1273
    %4684 = vmatpush1.msra.mxu0 %v1272
    %4685 = vmatprep.subr.mxu0 0.0
    %4686 = vmatpush1.msra.mxu0 0.0
    %4687 = vmatprep.subr.mxu0 0.0
    %4688 = vmatpush1.msra.mxu0 0.0
    %4689 = vmatprep.subr.mxu0 0.0
    %4690 = vmatpush1.msra.mxu0 0.0
    %4691 = vmatprep.subr.mxu0 0.0
    %4692 = vmatpush1.msra.mxu0 0.0
    %4693 = vmatprep.subr.mxu0 0.0
    %4694 = vmatpush1.msra.mxu0 0.0
    %4695 = vmatprep.subr.mxu0 0.0
    %4696 = vmatpush1.msra.mxu0 0.0
    %4697 = vmatprep.subr.mxu0 0.0
    %4698 = vmatpush1.msra.mxu0 0.0
    %4699 = vmatprep.subr.mxu0 0.0
    %4700 = vmatpush1.msra.mxu0 0.0
    %4701 = vmatprep.subr.mxu0 0.0
    %4702 = vmatpush1.msra.mxu0 0.0
    %4703 = vmatprep.subr.mxu0 0.0
    %4704 = vmatpush1.msra.mxu0 0.0
    %4705 = vmatprep.subr.mxu0 0.0
    %4706 = vmatpush1.msra.mxu0 0.0
    %4707 = vmatprep.subr.mxu0 0.0
    %4708 = vmatpush1.msra.mxu0 0.0
    %4709 = vmatprep.subr.mxu0 0.0
    %4710 = vmatpush1.msra.mxu0 0.0
    %4711 = vmatprep.subr.mxu0 0.0
    %4712 = vmatpush1.msra.mxu0 0.0
    %4713 = vmatprep.subr.mxu0 0.0
    %4714 = vmatpush1.msra.mxu0 0.0
    %4715 = vmatprep.subr.mxu0 0.0
    %4716 = vmatpush1.msra.mxu0 0.0
    %4717 = vmatprep.subr.mxu0 0.0
    %4718 = vmatpush1.msra.mxu0 0.0
    %4719 = vmatprep.subr.mxu0 0.0
    %4720 = vmatpush1.msra.mxu0 0.0
    %4721 = vmatprep.subr.mxu0 0.0
    %4722 = vmatpush1.msra.mxu0 0.0
    %4723 = vmatprep.subr.mxu0 0.0
    %4724 = vmatpush1.msra.mxu0 0.0
    %4725 = vmatprep.subr.mxu0 0.0
    %4726 = vmatpush1.msra.mxu0 0.0
    %4727 = vmatprep.subr.mxu0 0.0
    %4728 = vmatpush1.msra.mxu0 0.0
    %4729 = vmatprep.subr.mxu0 0.0
    %4730 = vmatpush1.msra.mxu0 0.0
    %4731 = vmatprep.subr.mxu0 0.0
    %4732 = vmatpush1.msra.mxu0 0.0
    %4733 = vmatprep.subr.mxu0 0.0
    %4734 = vmatpush1.msra.mxu0 0.0
    %4735 = vmatprep.subr.mxu0 0.0
    %4736 = vmatpush1.msra.mxu0 0.0
    %4737 = vmatprep.subr.mxu0 0.0
    %4738 = vmatpush1.msra.mxu0 0.0
    %4739 = vmatprep.subr.mxu0 0.0
    %4740 = vmatpush1.msra.mxu0 0.0
    %4741 = vmatprep.subr.mxu0 0.0
    %4742 = vmatpush1.msra.mxu0 0.0
    %4743 = vmatprep.subr.mxu0 0.0
    %4744 = vmatpush1.msra.mxu0 0.0
    %4745 = vmatprep.mubr.f32.mxu0 0.0
    %4746 = vmatmul.mubr.f32.gmra.mrb[0].mxu0 %v4605
    %v4747 = vpop.f32.mrb[0].mxu0
    %v4748 = vadd.f32 %v1280, %v4747
    %v4749 = vpop.f32.mrb[0].mxu0
    %v4750 = vadd.f32 %v1284, %v4749
    %4751 = vdwg.mxu0
    %4752 = vmatprep.subr.mxu0 0.0
    %4753 = vmatpush1.msra.mxu0 %v1271
    %4754 = vmatprep.subr.mxu0 0.0
    %4755 = vmatpush1.msra.mxu0 %v1274
    %4756 = vmatprep.subr.mxu0 0.0
    %4757 = vmatpush1.msra.mxu0 0.0
    %4758 = vmatprep.subr.mxu0 0.0
    %4759 = vmatpush1.msra.mxu0 0.0
    %4760 = vmatprep.subr.mxu0 0.0
    %4761 = vmatpush1.msra.mxu0 0.0
    %4762 = vmatprep.subr.mxu0 0.0
    %4763 = vmatpush1.msra.mxu0 0.0
    %4764 = vmatprep.subr.mxu0 0.0
    %4765 = vmatpush1.msra.mxu0 0.0
    %4766 = vmatprep.subr.mxu0 0.0
    %4767 = vmatpush1.msra.mxu0 0.0
    %4768 = vmatprep.subr.mxu0 0.0
    %4769 = vmatpush1.msra.mxu0 0.0
    %4770 = vmatprep.subr.mxu0 0.0
    %4771 = vmatpush1.msra.mxu0 0.0
    %4772 = vmatprep.subr.mxu0 0.0
    %4773 = vmatpush1.msra.mxu0 0.0
    %4774 = vmatprep.subr.mxu0 0.0
    %4775 = vmatpush1.msra.mxu0 0.0
    %4776 = vmatprep.subr.mxu0 0.0
    %4777 = vmatpush1.msra.mxu0 0.0
    %4778 = vmatprep.subr.mxu0 0.0
    %4779 = vmatpush1.msra.mxu0 0.0
    %4780 = vmatprep.subr.mxu0 0.0
    %4781 = vmatpush1.msra.mxu0 0.0
    %4782 = vmatprep.subr.mxu0 0.0
    %4783 = vmatpush1.msra.mxu0 0.0
    %4784 = vmatprep.subr.mxu0 0.0
    %4785 = vmatpush1.msra.mxu0 0.0
    %4786 = vmatprep.subr.mxu0 0.0
    %4787 = vmatpush1.msra.mxu0 0.0
    %4788 = vmatprep.subr.mxu0 0.0
    %4789 = vmatpush1.msra.mxu0 0.0
    %4790 = vmatprep.subr.mxu0 0.0
    %4791 = vmatpush1.msra.mxu0 0.0
    %4792 = vmatprep.subr.mxu0 0.0
    %4793 = vmatpush1.msra.mxu0 0.0
    %4794 = vmatprep.subr.mxu0 0.0
    %4795 = vmatpush1.msra.mxu0 0.0
    %4796 = vmatprep.subr.mxu0 0.0
    %4797 = vmatpush1.msra.mxu0 0.0
    %4798 = vmatprep.subr.mxu0 0.0
    %4799 = vmatpush1.msra.mxu0 0.0
    %4800 = vmatprep.subr.mxu0 0.0
    %4801 = vmatpush1.msra.mxu0 0.0
    %4802 = vmatprep.subr.mxu0 0.0
    %4803 = vmatpush1.msra.mxu0 0.0
    %4804 = vmatprep.subr.mxu0 0.0
    %4805 = vmatpush1.msra.mxu0 0.0
    %4806 = vmatprep.subr.mxu0 0.0
    %4807 = vmatpush1.msra.mxu0 0.0
    %4808 = vmatprep.subr.mxu0 0.0
    %4809 = vmatpush1.msra.mxu0 0.0
    %4810 = vmatprep.subr.mxu0 0.0
    %4811 = vmatpush1.msra.mxu0 0.0
    %4812 = vmatprep.subr.mxu0 0.0
    %4813 = vmatpush1.msra.mxu0 0.0
    %4814 = vmatprep.subr.mxu0 0.0
    %4815 = vmatpush1.msra.mxu0 0.0
    %4816 = vmatprep.mubr.f32.mxu0 0.0
    %4817 = vmatmul.mubr.f32.gmra.mrb[0].mxu0 %v4605
    %v4818 = vpop.f32.mrb[0].mxu0
    %v4819 = vadd.f32 %v1288, %v4818
    %v4820 = vpop.f32.mrb[0].mxu0
    %4821 = vdwg.mxu0
    %v4822 = vadd.f32 %v4678, %v4748
    %v4823 = vxor.u32 %v4822, 2147483648
    %v4824 = vmul.f32 %v4823, 1.442695
    %v4825 = vpow.pop %v4824
    %v4826 = vadd.f32 %v4825, 1.0
    %v4827 = vrcp.pop %v4826
    %v4828 = vmul.f32 1.0, %v4827
    %v4829 = vadd.f32 %v4679, %v4750
    %v4830 = vxor.u32 %v4829, 2147483648
    %v4831 = vmul.f32 %v4830, 1.442695
    %v4832 = vpow.pop %v4831
    %v4833 = vadd.f32 %v4832, 1.0
    %v4834 = vrcp.pop %v4833
    %v4835 = vmul.f32 1.0, %v4834
    %v4836 = vmul.f32 %v4828, %v4819
    %v4837 = vadd.f32 %v4680, %v4836
    %v4838 = vtanh.pop %v4837
    %v4839 = vsub.f32 1.0, %v4835
    %v4840 = vmul.f32 %v4839, %v4838
    %v4841 = vmul.f32 %v4835, %v4600
    %v4842 = vadd.f32 %v4840, %v4841
    %s4843 = scalar_lea.vmem %s7, 224
    %v4844 = vld [vmem:[%s4843] sm:$0xff]
    %v4845 = vld [vmem:[%s4843 + $0x8] sm:$0xff]
    %v4847 = vsel %vm1292, %v4842, 0
    %4849 = vmatprep.subr.mxu0 0.0
    %4850 = vmatpush1.msra.mxu0 %v4844
    %4851 = vmatprep.subr.mxu0 0.0
    %4852 = vmatpush1.msra.mxu0 %v4845
    %4853 = vmatprep.subr.mxu0 0.0
    %4854 = vmatpush1.msra.mxu0 0.0
    %4855 = vmatprep.subr.mxu0 0.0
    %4856 = vmatpush1.msra.mxu0 0.0
    %4857 = vmatprep.subr.mxu0 0.0
    %4858 = vmatpush1.msra.mxu0 0.0
    %4859 = vmatprep.subr.mxu0 0.0
    %4860 = vmatpush1.msra.mxu0 0.0
    %4861 = vmatprep.subr.mxu0 0.0
    %4862 = vmatpush1.msra.mxu0 0.0
    %4863 = vmatprep.subr.mxu0 0.0
    %4864 = vmatpush1.msra.mxu0 0.0
    %4865 = vmatprep.subr.mxu0 0.0
    %4866 = vmatpush1.msra.mxu0 0.0
    %4867 = vmatprep.subr.mxu0 0.0
    %4868 = vmatpush1.msra.mxu0 0.0
    %4869 = vmatprep.subr.mxu0 0.0
    %4870 = vmatpush1.msra.mxu0 0.0
    %4871 = vmatprep.subr.mxu0 0.0
    %4872 = vmatpush1.msra.mxu0 0.0
    %4873 = vmatprep.subr.mxu0 0.0
    %4874 = vmatpush1.msra.mxu0 0.0
    %4875 = vmatprep.subr.mxu0 0.0
    %4876 = vmatpush1.msra.mxu0 0.0
    %4877 = vmatprep.subr.mxu0 0.0
    %4878 = vmatpush1.msra.mxu0 0.0
    %4879 = vmatprep.subr.mxu0 0.0
    %4880 = vmatpush1.msra.mxu0 0.0
    %4881 = vmatprep.subr.mxu0 0.0
    %4882 = vmatpush1.msra.mxu0 0.0
    %4883 = vmatprep.subr.mxu0 0.0
    %4884 = vmatpush1.msra.mxu0 0.0
    %4885 = vmatprep.subr.mxu0 0.0
    %4886 = vmatpush1.msra.mxu0 0.0
    %4887 = vmatprep.subr.mxu0 0.0
    %4888 = vmatpush1.msra.mxu0 0.0
    %4889 = vmatprep.subr.mxu0 0.0
    %4890 = vmatpush1.msra.mxu0 0.0
    %4891 = vmatprep.subr.mxu0 0.0
    %4892 = vmatpush1.msra.mxu0 0.0
    %4893 = vmatprep.subr.mxu0 0.0
    %4894 = vmatpush1.msra.mxu0 0.0
    %4895 = vmatprep.subr.mxu0 0.0
    %4896 = vmatpush1.msra.mxu0 0.0
    %4897 = vmatprep.subr.mxu0 0.0
    %4898 = vmatpush1.msra.mxu0 0.0
    %4899 = vmatprep.subr.mxu0 0.0
    %4900 = vmatpush1.msra.mxu0 0.0
    %4901 = vmatprep.subr.mxu0 0.0
    %4902 = vmatpush1.msra.mxu0 0.0
    %4903 = vmatprep.subr.mxu0 0.0
    %4904 = vmatpush1.msra.mxu0 0.0
    %4905 = vmatprep.subr.mxu0 0.0
    %4906 = vmatpush1.msra.mxu0 0.0
    %4907 = vmatprep.subr.mxu0 0.0
    %4908 = vmatpush1.msra.mxu0 0.0
    %4909 = vmatprep.subr.mxu0 0.0
    %4910 = vmatpush1.msra.mxu0 0.0
    %4911 = vmatprep.subr.mxu0 0.0
    %4912 = vmatpush1.msra.mxu0 0.0
    %4913 = vmatprep.mubr.f32.mxu0 0.0
    %4914 = vmatmul.mubr.f32.gmra.mrb[0].mxu0 %v4847
    %v4915 = vpop.f32.mrb[0].mxu0
    %v4916 = vadd.f32 0.0, %v4915
    %v4917 = vpop.f32.mrb[0].mxu0
    %4918 = vdwg.mxu0
    %v4919 = vadd.f32 %v4677, %v4916
    %v4920 = vld [vmem:[#allocation2 + $0x168] sm:$0xff]
    %v4921 = vld [vmem:[#allocation2 + $0x170] sm:$0xff]
    %v4922 = vld [vmem:[#allocation2 + $0x178] sm:$0xff]
    %4923 = vmatprep.subr.mxu0 %v1270
    %4924 = vmatpush1.msra.mxu0 %v1269
    %4925 = vmatprep.subr.mxu0 %v1273
    %4926 = vmatpush1.msra.mxu0 %v1272
    %4927 = vmatprep.subr.mxu0 0.0
    %4928 = vmatpush1.msra.mxu0 0.0
    %4929 = vmatprep.subr.mxu0 0.0
    %4930 = vmatpush1.msra.mxu0 0.0
    %4931 = vmatprep.subr.mxu0 0.0
    %4932 = vmatpush1.msra.mxu0 0.0
    %4933 = vmatprep.subr.mxu0 0.0
    %4934 = vmatpush1.msra.mxu0 0.0
    %4935 = vmatprep.subr.mxu0 0.0
    %4936 = vmatpush1.msra.mxu0 0.0
    %4937 = vmatprep.subr.mxu0 0.0
    %4938 = vmatpush1.msra.mxu0 0.0
    %4939 = vmatprep.subr.mxu0 0.0
    %4940 = vmatpush1.msra.mxu0 0.0
    %4941 = vmatprep.subr.mxu0 0.0
    %4942 = vmatpush1.msra.mxu0 0.0
    %4943 = vmatprep.subr.mxu0 0.0
    %4944 = vmatpush1.msra.mxu0 0.0
    %4945 = vmatprep.subr.mxu0 0.0
    %4946 = vmatpush1.msra.mxu0 0.0
    %4947 = vmatprep.subr.mxu0 0.0
    %4948 = vmatpush1.msra.mxu0 0.0
    %4949 = vmatprep.subr.mxu0 0.0
    %4950 = vmatpush1.msra.mxu0 0.0
    %4951 = vmatprep.subr.mxu0 0.0
    %4952 = vmatpush1.msra.mxu0 0.0
    %4953 = vmatprep.subr.mxu0 0.0
    %4954 = vmatpush1.msra.mxu0 0.0
    %4955 = vmatprep.subr.mxu0 0.0
    %4956 = vmatpush1.msra.mxu0 0.0
    %4957 = vmatprep.subr.mxu0 0.0
    %4958 = vmatpush1.msra.mxu0 0.0
    %4959 = vmatprep.subr.mxu0 0.0
    %4960 = vmatpush1.msra.mxu0 0.0
    %4961 = vmatprep.subr.mxu0 0.0
    %4962 = vmatpush1.msra.mxu0 0.0
    %4963 = vmatprep.subr.mxu0 0.0
    %4964 = vmatpush1.msra.mxu0 0.0
    %4965 = vmatprep.subr.mxu0 0.0
    %4966 = vmatpush1.msra.mxu0 0.0
    %4967 = vmatprep.subr.mxu0 0.0
    %4968 = vmatpush1.msra.mxu0 0.0
    %4969 = vmatprep.subr.mxu0 0.0
    %4970 = vmatpush1.msra.mxu0 0.0
    %4971 = vmatprep.subr.mxu0 0.0
    %4972 = vmatpush1.msra.mxu0 0.0
    %4973 = vmatprep.subr.mxu0 0.0
    %4974 = vmatpush1.msra.mxu0 0.0
    %4975 = vmatprep.subr.mxu0 0.0
    %4976 = vmatpush1.msra.mxu0 0.0
    %4977 = vmatprep.subr.mxu0 0.0
    %4978 = vmatpush1.msra.mxu0 0.0
    %4979 = vmatprep.subr.mxu0 0.0
    %4980 = vmatpush1.msra.mxu0 0.0
    %4981 = vmatprep.subr.mxu0 0.0
    %4982 = vmatpush1.msra.mxu0 0.0
    %4983 = vmatprep.subr.mxu0 0.0
    %4984 = vmatpush1.msra.mxu0 0.0
    %4985 = vmatprep.subr.mxu0 0.0
    %4986 = vmatpush1.msra.mxu0 0.0
    %4987 = vmatprep.mubr.f32.mxu0 0.0
    %4988 = vmatmul.mubr.f32.gmra.mrb[0].mxu0 %v4847
    %v4989 = vpop.f32.mrb[0].mxu0
    %v4990 = vadd.f32 %v1280, %v4989
    %v4991 = vpop.f32.mrb[0].mxu0
    %v4992 = vadd.f32 %v1284, %v4991
    %4993 = vdwg.mxu0
    %4994 = vmatprep.subr.mxu0 0.0
    %4995 = vmatpush1.msra.mxu0 %v1271
    %4996 = vmatprep.subr.mxu0 0.0
    %4997 = vmatpush1.msra.mxu0 %v1274
    %4998 = vmatprep.subr.mxu0 0.0
    %4999 = vmatpush1.msra.mxu0 0.0
    %5000 = vmatprep.subr.mxu0 0.0
    %5001 = vmatpush1.msra.mxu0 0.0
    %5002 = vmatprep.subr.mxu0 0.0
    %5003 = vmatpush1.msra.mxu0 0.0
    %5004 = vmatprep.subr.mxu0 0.0
    %5005 = vmatpush1.msra.mxu0 0.0
    %5006 = vmatprep.subr.mxu0 0.0
    %5007 = vmatpush1.msra.mxu0 0.0
    %5008 = vmatprep.subr.mxu0 0.0
    %5009 = vmatpush1.msra.mxu0 0.0
    %5010 = vmatprep.subr.mxu0 0.0
    %5011 = vmatpush1.msra.mxu0 0.0
    %5012 = vmatprep.subr.mxu0 0.0
    %5013 = vmatpush1.msra.mxu0 0.0
    %5014 = vmatprep.subr.mxu0 0.0
    %5015 = vmatpush1.msra.mxu0 0.0
    %5016 = vmatprep.subr.mxu0 0.0
    %5017 = vmatpush1.msra.mxu0 0.0
    %5018 = vmatprep.subr.mxu0 0.0
    %5019 = vmatpush1.msra.mxu0 0.0
    %5020 = vmatprep.subr.mxu0 0.0
    %5021 = vmatpush1.msra.mxu0 0.0
    %5022 = vmatprep.subr.mxu0 0.0
    %5023 = vmatpush1.msra.mxu0 0.0
    %5024 = vmatprep.subr.mxu0 0.0
    %5025 = vmatpush1.msra.mxu0 0.0
    %5026 = vmatprep.subr.mxu0 0.0
    %5027 = vmatpush1.msra.mxu0 0.0
    %5028 = vmatprep.subr.mxu0 0.0
    %5029 = vmatpush1.msra.mxu0 0.0
    %5030 = vmatprep.subr.mxu0 0.0
    %5031 = vmatpush1.msra.mxu0 0.0
    %5032 = vmatprep.subr.mxu0 0.0
    %5033 = vmatpush1.msra.mxu0 0.0
    %5034 = vmatprep.subr.mxu0 0.0
    %5035 = vmatpush1.msra.mxu0 0.0
    %5036 = vmatprep.subr.mxu0 0.0
    %5037 = vmatpush1.msra.mxu0 0.0
    %5038 = vmatprep.subr.mxu0 0.0
    %5039 = vmatpush1.msra.mxu0 0.0
    %5040 = vmatprep.subr.mxu0 0.0
    %5041 = vmatpush1.msra.mxu0 0.0
    %5042 = vmatprep.subr.mxu0 0.0
    %5043 = vmatpush1.msra.mxu0 0.0
    %5044 = vmatprep.subr.mxu0 0.0
    %5045 = vmatpush1.msra.mxu0 0.0
    %5046 = vmatprep.subr.mxu0 0.0
    %5047 = vmatpush1.msra.mxu0 0.0
    %5048 = vmatprep.subr.mxu0 0.0
    %5049 = vmatpush1.msra.mxu0 0.0
    %5050 = vmatprep.subr.mxu0 0.0
    %5051 = vmatpush1.msra.mxu0 0.0
    %5052 = vmatprep.subr.mxu0 0.0
    %5053 = vmatpush1.msra.mxu0 0.0
    %5054 = vmatprep.subr.mxu0 0.0
    %5055 = vmatpush1.msra.mxu0 0.0
    %5056 = vmatprep.subr.mxu0 0.0
    %5057 = vmatpush1.msra.mxu0 0.0
    %5058 = vmatprep.mubr.f32.mxu0 0.0
    %5059 = vmatmul.mubr.f32.gmra.mrb[0].mxu0 %v4847
    %v5060 = vpop.f32.mrb[0].mxu0
    %v5061 = vadd.f32 %v1288, %v5060
    %v5062 = vpop.f32.mrb[0].mxu0
    %5063 = vdwg.mxu0
    %v5064 = vadd.f32 %v4920, %v4990
    %v5065 = vxor.u32 %v5064, 2147483648
    %v5066 = vmul.f32 %v5065, 1.442695
    %v5067 = vpow.pop %v5066
    %v5068 = vadd.f32 %v5067, 1.0
    %v5069 = vrcp.pop %v5068
    %v5070 = vmul.f32 1.0, %v5069
    %v5071 = vadd.f32 %v4921, %v4992
    %v5072 = vxor.u32 %v5071, 2147483648
    %v5073 = vmul.f32 %v5072, 1.442695
    %v5074 = vpow.pop %v5073
    %v5075 = vadd.f32 %v5074, 1.0
    %v5076 = vrcp.pop %v5075
    %v5077 = vmul.f32 1.0, %v5076
    %v5078 = vmul.f32 %v5070, %v5061
    %v5079 = vadd.f32 %v4922, %v5078
    %v5080 = vtanh.pop %v5079
    %v5081 = vsub.f32 1.0, %v5077
    %v5082 = vmul.f32 %v5081, %v5080
    %v5083 = vmul.f32 %v5077, %v4842
    %v5084 = vadd.f32 %v5082, %v5083
    %s5085 = scalar_lea.vmem %s7, 240
    %v5086 = vld [vmem:[%s5085] sm:$0xff]
    %v5087 = vld [vmem:[%s5085 + $0x8] sm:$0xff]
    %v5089 = vsel %vm1292, %v5084, 0
    %5091 = vmatprep.subr.mxu0 0.0
    %5092 = vmatpush1.msra.mxu0 %v5086
    %5093 = vmatprep.subr.mxu0 0.0
    %5094 = vmatpush1.msra.mxu0 %v5087
    %5095 = vmatprep.subr.mxu0 0.0
    %5096 = vmatpush1.msra.mxu0 0.0
    %5097 = vmatprep.subr.mxu0 0.0
    %5098 = vmatpush1.msra.mxu0 0.0
    %5099 = vmatprep.subr.mxu0 0.0
    %5100 = vmatpush1.msra.mxu0 0.0
    %5101 = vmatprep.subr.mxu0 0.0
    %5102 = vmatpush1.msra.mxu0 0.0
    %5103 = vmatprep.subr.mxu0 0.0
    %5104 = vmatpush1.msra.mxu0 0.0
    %5105 = vmatprep.subr.mxu0 0.0
    %5106 = vmatpush1.msra.mxu0 0.0
    %5107 = vmatprep.subr.mxu0 0.0
    %5108 = vmatpush1.msra.mxu0 0.0
    %5109 = vmatprep.subr.mxu0 0.0
    %5110 = vmatpush1.msra.mxu0 0.0
    %5111 = vmatprep.subr.mxu0 0.0
    %5112 = vmatpush1.msra.mxu0 0.0
    %5113 = vmatprep.subr.mxu0 0.0
    %5114 = vmatpush1.msra.mxu0 0.0
    %5115 = vmatprep.subr.mxu0 0.0
    %5116 = vmatpush1.msra.mxu0 0.0
    %5117 = vmatprep.subr.mxu0 0.0
    %5118 = vmatpush1.msra.mxu0 0.0
    %5119 = vmatprep.subr.mxu0 0.0
    %5120 = vmatpush1.msra.mxu0 0.0
    %5121 = vmatprep.subr.mxu0 0.0
    %5122 = vmatpush1.msra.mxu0 0.0
    %5123 = vmatprep.subr.mxu0 0.0
    %5124 = vmatpush1.msra.mxu0 0.0
    %5125 = vmatprep.subr.mxu0 0.0
    %5126 = vmatpush1.msra.mxu0 0.0
    %5127 = vmatprep.subr.mxu0 0.0
    %5128 = vmatpush1.msra.mxu0 0.0
    %5129 = vmatprep.subr.mxu0 0.0
    %5130 = vmatpush1.msra.mxu0 0.0
    %5131 = vmatprep.subr.mxu0 0.0
    %5132 = vmatpush1.msra.mxu0 0.0
    %5133 = vmatprep.subr.mxu0 0.0
    %5134 = vmatpush1.msra.mxu0 0.0
    %5135 = vmatprep.subr.mxu0 0.0
    %5136 = vmatpush1.msra.mxu0 0.0
    %5137 = vmatprep.subr.mxu0 0.0
    %5138 = vmatpush1.msra.mxu0 0.0
    %5139 = vmatprep.subr.mxu0 0.0
    %5140 = vmatpush1.msra.mxu0 0.0
    %5141 = vmatprep.subr.mxu0 0.0
    %5142 = vmatpush1.msra.mxu0 0.0
    %5143 = vmatprep.subr.mxu0 0.0
    %5144 = vmatpush1.msra.mxu0 0.0
    %5145 = vmatprep.subr.mxu0 0.0
    %5146 = vmatpush1.msra.mxu0 0.0
    %5147 = vmatprep.subr.mxu0 0.0
    %5148 = vmatpush1.msra.mxu0 0.0
    %5149 = vmatprep.subr.mxu0 0.0
    %5150 = vmatpush1.msra.mxu0 0.0
    %5151 = vmatprep.subr.mxu0 0.0
    %5152 = vmatpush1.msra.mxu0 0.0
    %5153 = vmatprep.subr.mxu0 0.0
    %5154 = vmatpush1.msra.mxu0 0.0
    %5155 = vmatprep.mubr.f32.mxu0 0.0
    %5156 = vmatmul.mubr.f32.gmra.mrb[0].mxu0 %v5089
    %v5157 = vpop.f32.mrb[0].mxu0
    %v5158 = vadd.f32 0.0, %v5157
    %v5159 = vpop.f32.mrb[0].mxu0
    %5160 = vdwg.mxu0
    %v5161 = vadd.f32 %v4919, %v5158
    %v5162 = vld [vmem:[#allocation2 + $0x180] sm:$0xff]
    %v5163 = vld [vmem:[#allocation2 + $0x188] sm:$0xff]
    %v5164 = vld [vmem:[#allocation2 + $0x190] sm:$0xff]
    %5165 = vmatprep.subr.mxu0 %v1270
    %5166 = vmatpush1.msra.mxu0 %v1269
    %5167 = vmatprep.subr.mxu0 %v1273
    %5168 = vmatpush1.msra.mxu0 %v1272
    %5169 = vmatprep.subr.mxu0 0.0
    %5170 = vmatpush1.msra.mxu0 0.0
    %5171 = vmatprep.subr.mxu0 0.0
    %5172 = vmatpush1.msra.mxu0 0.0
    %5173 = vmatprep.subr.mxu0 0.0
    %5174 = vmatpush1.msra.mxu0 0.0
    %5175 = vmatprep.subr.mxu0 0.0
    %5176 = vmatpush1.msra.mxu0 0.0
    %5177 = vmatprep.subr.mxu0 0.0
    %5178 = vmatpush1.msra.mxu0 0.0
    %5179 = vmatprep.subr.mxu0 0.0
    %5180 = vmatpush1.msra.mxu0 0.0
    %5181 = vmatprep.subr.mxu0 0.0
    %5182 = vmatpush1.msra.mxu0 0.0
    %5183 = vmatprep.subr.mxu0 0.0
    %5184 = vmatpush1.msra.mxu0 0.0
    %5185 = vmatprep.subr.mxu0 0.0
    %5186 = vmatpush1.msra.mxu0 0.0
    %5187 = vmatprep.subr.mxu0 0.0
    %5188 = vmatpush1.msra.mxu0 0.0
    %5189 = vmatprep.subr.mxu0 0.0
    %5190 = vmatpush1.msra.mxu0 0.0
    %5191 = vmatprep.subr.mxu0 0.0
    %5192 = vmatpush1.msra.mxu0 0.0
    %5193 = vmatprep.subr.mxu0 0.0
    %5194 = vmatpush1.msra.mxu0 0.0
    %5195 = vmatprep.subr.mxu0 0.0
    %5196 = vmatpush1.msra.mxu0 0.0
    %5197 = vmatprep.subr.mxu0 0.0
    %5198 = vmatpush1.msra.mxu0 0.0
    %5199 = vmatprep.subr.mxu0 0.0
    %5200 = vmatpush1.msra.mxu0 0.0
    %5201 = vmatprep.subr.mxu0 0.0
    %5202 = vmatpush1.msra.mxu0 0.0
    %5203 = vmatprep.subr.mxu0 0.0
    %5204 = vmatpush1.msra.mxu0 0.0
    %5205 = vmatprep.subr.mxu0 0.0
    %5206 = vmatpush1.msra.mxu0 0.0
    %5207 = vmatprep.subr.mxu0 0.0
    %5208 = vmatpush1.msra.mxu0 0.0
    %5209 = vmatprep.subr.mxu0 0.0
    %5210 = vmatpush1.msra.mxu0 0.0
    %5211 = vmatprep.subr.mxu0 0.0
    %5212 = vmatpush1.msra.mxu0 0.0
    %5213 = vmatprep.subr.mxu0 0.0
    %5214 = vmatpush1.msra.mxu0 0.0
    %5215 = vmatprep.subr.mxu0 0.0
    %5216 = vmatpush1.msra.mxu0 0.0
    %5217 = vmatprep.subr.mxu0 0.0
    %5218 = vmatpush1.msra.mxu0 0.0
    %5219 = vmatprep.subr.mxu0 0.0
    %5220 = vmatpush1.msra.mxu0 0.0
    %5221 = vmatprep.subr.mxu0 0.0
    %5222 = vmatpush1.msra.mxu0 0.0
    %5223 = vmatprep.subr.mxu0 0.0
    %5224 = vmatpush1.msra.mxu0 0.0
    %5225 = vmatprep.subr.mxu0 0.0
    %5226 = vmatpush1.msra.mxu0 0.0
    %5227 = vmatprep.subr.mxu0 0.0
    %5228 = vmatpush1.msra.mxu0 0.0
    %5229 = vmatprep.mubr.f32.mxu0 0.0
    %5230 = vmatmul.mubr.f32.gmra.mrb[0].mxu0 %v5089
    %v5231 = vpop.f32.mrb[0].mxu0
    %v5232 = vadd.f32 %v1280, %v5231
    %v5233 = vpop.f32.mrb[0].mxu0
    %v5234 = vadd.f32 %v1284, %v5233
    %5235 = vdwg.mxu0
    %5236 = vmatprep.subr.mxu0 0.0
    %5237 = vmatpush1.msra.mxu0 %v1271
    %5238 = vmatprep.subr.mxu0 0.0
    %5239 = vmatpush1.msra.mxu0 %v1274
    %5240 = vmatprep.subr.mxu0 0.0
    %5241 = vmatpush1.msra.mxu0 0.0
    %5242 = vmatprep.subr.mxu0 0.0
    %5243 = vmatpush1.msra.mxu0 0.0
    %5244 = vmatprep.subr.mxu0 0.0
    %5245 = vmatpush1.msra.mxu0 0.0
    %5246 = vmatprep.subr.mxu0 0.0
    %5247 = vmatpush1.msra.mxu0 0.0
    %5248 = vmatprep.subr.mxu0 0.0
    %5249 = vmatpush1.msra.mxu0 0.0
    %5250 = vmatprep.subr.mxu0 0.0
    %5251 = vmatpush1.msra.mxu0 0.0
    %5252 = vmatprep.subr.mxu0 0.0
    %5253 = vmatpush1.msra.mxu0 0.0
    %5254 = vmatprep.subr.mxu0 0.0
    %5255 = vmatpush1.msra.mxu0 0.0
    %5256 = vmatprep.subr.mxu0 0.0
    %5257 = vmatpush1.msra.mxu0 0.0
    %5258 = vmatprep.subr.mxu0 0.0
    %5259 = vmatpush1.msra.mxu0 0.0
    %5260 = vmatprep.subr.mxu0 0.0
    %5261 = vmatpush1.msra.mxu0 0.0
    %5262 = vmatprep.subr.mxu0 0.0
    %5263 = vmatpush1.msra.mxu0 0.0
    %5264 = vmatprep.subr.mxu0 0.0
    %5265 = vmatpush1.msra.mxu0 0.0
    %5266 = vmatprep.subr.mxu0 0.0
    %5267 = vmatpush1.msra.mxu0 0.0
    %5268 = vmatprep.subr.mxu0 0.0
    %5269 = vmatpush1.msra.mxu0 0.0
    %5270 = vmatprep.subr.mxu0 0.0
    %5271 = vmatpush1.msra.mxu0 0.0
    %5272 = vmatprep.subr.mxu0 0.0
    %5273 = vmatpush1.msra.mxu0 0.0
    %5274 = vmatprep.subr.mxu0 0.0
    %5275 = vmatpush1.msra.mxu0 0.0
    %5276 = vmatprep.subr.mxu0 0.0
    %5277 = vmatpush1.msra.mxu0 0.0
    %5278 = vmatprep.subr.mxu0 0.0
    %5279 = vmatpush1.msra.mxu0 0.0
    %5280 = vmatprep.subr.mxu0 0.0
    %5281 = vmatpush1.msra.mxu0 0.0
    %5282 = vmatprep.subr.mxu0 0.0
    %5283 = vmatpush1.msra.mxu0 0.0
    %5284 = vmatprep.subr.mxu0 0.0
    %5285 = vmatpush1.msra.mxu0 0.0
    %5286 = vmatprep.subr.mxu0 0.0
    %5287 = vmatpush1.msra.mxu0 0.0
    %5288 = vmatprep.subr.mxu0 0.0
    %5289 = vmatpush1.msra.mxu0 0.0
    %5290 = vmatprep.subr.mxu0 0.0
    %5291 = vmatpush1.msra.mxu0 0.0
    %5292 = vmatprep.subr.mxu0 0.0
    %5293 = vmatpush1.msra.mxu0 0.0
    %5294 = vmatprep.subr.mxu0 0.0
    %5295 = vmatpush1.msra.mxu0 0.0
    %5296 = vmatprep.subr.mxu0 0.0
    %5297 = vmatpush1.msra.mxu0 0.0
    %5298 = vmatprep.subr.mxu0 0.0
    %5299 = vmatpush1.msra.mxu0 0.0
    %5300 = vmatprep.mubr.f32.mxu0 0.0
    %5301 = vmatmul.mubr.f32.gmra.mrb[0].mxu0 %v5089
    %v5302 = vpop.f32.mrb[0].mxu0
    %v5303 = vadd.f32 %v1288, %v5302
    %v5304 = vpop.f32.mrb[0].mxu0
    %5305 = vdwg.mxu0
    %v5306 = vadd.f32 %v5162, %v5232
    %v5307 = vxor.u32 %v5306, 2147483648
    %v5308 = vmul.f32 %v5307, 1.442695
    %v5309 = vpow.pop %v5308
    %v5310 = vadd.f32 %v5309, 1.0
    %v5311 = vrcp.pop %v5310
    %v5312 = vmul.f32 1.0, %v5311
    %v5313 = vadd.f32 %v5163, %v5234
    %v5314 = vxor.u32 %v5313, 2147483648
    %v5315 = vmul.f32 %v5314, 1.442695
    %v5316 = vpow.pop %v5315
    %v5317 = vadd.f32 %v5316, 1.0
    %v5318 = vrcp.pop %v5317
    %v5319 = vmul.f32 1.0, %v5318
    %v5320 = vmul.f32 %v5312, %v5303
    %v5321 = vadd.f32 %v5164, %v5320
    %v5322 = vtanh.pop %v5321
    %v5323 = vsub.f32 1.0, %v5319
    %v5324 = vmul.f32 %v5323, %v5322
    %v5325 = vmul.f32 %v5319, %v5084
    %v5326 = vadd.f32 %v5324, %v5325
    %s5327 = scalar_lea.vmem %s7, 256
    %v5328 = vld [vmem:[%s5327] sm:$0xff]
    %v5329 = vld [vmem:[%s5327 + $0x8] sm:$0xff]
    %v5331 = vsel %vm1292, %v5326, 0
    %5333 = vmatprep.subr.mxu0 0.0
    %5334 = vmatpush1.msra.mxu0 %v5328
    %5335 = vmatprep.subr.mxu0 0.0
    %5336 = vmatpush1.msra.mxu0 %v5329
    %5337 = vmatprep.subr.mxu0 0.0
    %5338 = vmatpush1.msra.mxu0 0.0
    %5339 = vmatprep.subr.mxu0 0.0
    %5340 = vmatpush1.msra.mxu0 0.0
    %5341 = vmatprep.subr.mxu0 0.0
    %5342 = vmatpush1.msra.mxu0 0.0
    %5343 = vmatprep.subr.mxu0 0.0
    %5344 = vmatpush1.msra.mxu0 0.0
    %5345 = vmatprep.subr.mxu0 0.0
    %5346 = vmatpush1.msra.mxu0 0.0
    %5347 = vmatprep.subr.mxu0 0.0
    %5348 = vmatpush1.msra.mxu0 0.0
    %5349 = vmatprep.subr.mxu0 0.0
    %5350 = vmatpush1.msra.mxu0 0.0
    %5351 = vmatprep.subr.mxu0 0.0
    %5352 = vmatpush1.msra.mxu0 0.0
    %5353 = vmatprep.subr.mxu0 0.0
    %5354 = vmatpush1.msra.mxu0 0.0
    %5355 = vmatprep.subr.mxu0 0.0
    %5356 = vmatpush1.msra.mxu0 0.0
    %5357 = vmatprep.subr.mxu0 0.0
    %5358 = vmatpush1.msra.mxu0 0.0
    %5359 = vmatprep.subr.mxu0 0.0
    %5360 = vmatpush1.msra.mxu0 0.0
    %5361 = vmatprep.subr.mxu0 0.0
    %5362 = vmatpush1.msra.mxu0 0.0
    %5363 = vmatprep.subr.mxu0 0.0
    %5364 = vmatpush1.msra.mxu0 0.0
    %5365 = vmatprep.subr.mxu0 0.0
    %5366 = vmatpush1.msra.mxu0 0.0
    %5367 = vmatprep.subr.mxu0 0.0
    %5368 = vmatpush1.msra.mxu0 0.0
    %5369 = vmatprep.subr.mxu0 0.0
    %5370 = vmatpush1.msra.mxu0 0.0
    %5371 = vmatprep.subr.mxu0 0.0
    %5372 = vmatpush1.msra.mxu0 0.0
    %5373 = vmatprep.subr.mxu0 0.0
    %5374 = vmatpush1.msra.mxu0 0.0
    %5375 = vmatprep.subr.mxu0 0.0
    %5376 = vmatpush1.msra.mxu0 0.0
    %5377 = vmatprep.subr.mxu0 0.0
    %5378 = vmatpush1.msra.mxu0 0.0
    %5379 = vmatprep.subr.mxu0 0.0
    %5380 = vmatpush1.msra.mxu0 0.0
    %5381 = vmatprep.subr.mxu0 0.0
    %5382 = vmatpush1.msra.mxu0 0.0
    %5383 = vmatprep.subr.mxu0 0.0
    %5384 = vmatpush1.msra.mxu0 0.0
    %5385 = vmatprep.subr.mxu0 0.0
    %5386 = vmatpush1.msra.mxu0 0.0
    %5387 = vmatprep.subr.mxu0 0.0
    %5388 = vmatpush1.msra.mxu0 0.0
    %5389 = vmatprep.subr.mxu0 0.0
    %5390 = vmatpush1.msra.mxu0 0.0
    %5391 = vmatprep.subr.mxu0 0.0
    %5392 = vmatpush1.msra.mxu0 0.0
    %5393 = vmatprep.subr.mxu0 0.0
    %5394 = vmatpush1.msra.mxu0 0.0
    %5395 = vmatprep.subr.mxu0 0.0
    %5396 = vmatpush1.msra.mxu0 0.0
    %5397 = vmatprep.mubr.f32.mxu0 0.0
    %5398 = vmatmul.mubr.f32.gmra.mrb[0].mxu0 %v5331
    %v5399 = vpop.f32.mrb[0].mxu0
    %v5400 = vadd.f32 0.0, %v5399
    %v5401 = vpop.f32.mrb[0].mxu0
    %5402 = vdwg.mxu0
    %v5403 = vadd.f32 %v5161, %v5400
    %v5404 = vld [vmem:[#allocation2 + $0x198] sm:$0xff]
    %v5405 = vld [vmem:[#allocation2 + $0x1a0] sm:$0xff]
    %v5406 = vld [vmem:[#allocation2 + $0x1a8] sm:$0xff]
    %5407 = vmatprep.subr.mxu0 %v1270
    %5408 = vmatpush1.msra.mxu0 %v1269
    %5409 = vmatprep.subr.mxu0 %v1273
    %5410 = vmatpush1.msra.mxu0 %v1272
    %5411 = vmatprep.subr.mxu0 0.0
    %5412 = vmatpush1.msra.mxu0 0.0
    %5413 = vmatprep.subr.mxu0 0.0
    %5414 = vmatpush1.msra.mxu0 0.0
    %5415 = vmatprep.subr.mxu0 0.0
    %5416 = vmatpush1.msra.mxu0 0.0
    %5417 = vmatprep.subr.mxu0 0.0
    %5418 = vmatpush1.msra.mxu0 0.0
    %5419 = vmatprep.subr.mxu0 0.0
    %5420 = vmatpush1.msra.mxu0 0.0
    %5421 = vmatprep.subr.mxu0 0.0
    %5422 = vmatpush1.msra.mxu0 0.0
    %5423 = vmatprep.subr.mxu0 0.0
    %5424 = vmatpush1.msra.mxu0 0.0
    %5425 = vmatprep.subr.mxu0 0.0
    %5426 = vmatpush1.msra.mxu0 0.0
    %5427 = vmatprep.subr.mxu0 0.0
    %5428 = vmatpush1.msra.mxu0 0.0
    %5429 = vmatprep.subr.mxu0 0.0
    %5430 = vmatpush1.msra.mxu0 0.0
    %5431 = vmatprep.subr.mxu0 0.0
    %5432 = vmatpush1.msra.mxu0 0.0
    %5433 = vmatprep.subr.mxu0 0.0
    %5434 = vmatpush1.msra.mxu0 0.0
    %5435 = vmatprep.subr.mxu0 0.0
    %5436 = vmatpush1.msra.mxu0 0.0
    %5437 = vmatprep.subr.mxu0 0.0
    %5438 = vmatpush1.msra.mxu0 0.0
    %5439 = vmatprep.subr.mxu0 0.0
    %5440 = vmatpush1.msra.mxu0 0.0
    %5441 = vmatprep.subr.mxu0 0.0
    %5442 = vmatpush1.msra.mxu0 0.0
    %5443 = vmatprep.subr.mxu0 0.0
    %5444 = vmatpush1.msra.mxu0 0.0
    %5445 = vmatprep.subr.mxu0 0.0
    %5446 = vmatpush1.msra.mxu0 0.0
    %5447 = vmatprep.subr.mxu0 0.0
    %5448 = vmatpush1.msra.mxu0 0.0
    %5449 = vmatprep.subr.mxu0 0.0
    %5450 = vmatpush1.msra.mxu0 0.0
    %5451 = vmatprep.subr.mxu0 0.0
    %5452 = vmatpush1.msra.mxu0 0.0
    %5453 = vmatprep.subr.mxu0 0.0
    %5454 = vmatpush1.msra.mxu0 0.0
    %5455 = vmatprep.subr.mxu0 0.0
    %5456 = vmatpush1.msra.mxu0 0.0
    %5457 = vmatprep.subr.mxu0 0.0
    %5458 = vmatpush1.msra.mxu0 0.0
    %5459 = vmatprep.subr.mxu0 0.0
    %5460 = vmatpush1.msra.mxu0 0.0
    %5461 = vmatprep.subr.mxu0 0.0
    %5462 = vmatpush1.msra.mxu0 0.0
    %5463 = vmatprep.subr.mxu0 0.0
    %5464 = vmatpush1.msra.mxu0 0.0
    %5465 = vmatprep.subr.mxu0 0.0
    %5466 = vmatpush1.msra.mxu0 0.0
    %5467 = vmatprep.subr.mxu0 0.0
    %5468 = vmatpush1.msra.mxu0 0.0
    %5469 = vmatprep.subr.mxu0 0.0
    %5470 = vmatpush1.msra.mxu0 0.0
    %5471 = vmatprep.mubr.f32.mxu0 0.0
    %5472 = vmatmul.mubr.f32.gmra.mrb[0].mxu0 %v5331
    %v5473 = vpop.f32.mrb[0].mxu0
    %v5474 = vadd.f32 %v1280, %v5473
    %v5475 = vpop.f32.mrb[0].mxu0
    %v5476 = vadd.f32 %v1284, %v5475
    %5477 = vdwg.mxu0
    %5478 = vmatprep.subr.mxu0 0.0
    %5479 = vmatpush1.msra.mxu0 %v1271
    %5480 = vmatprep.subr.mxu0 0.0
    %5481 = vmatpush1.msra.mxu0 %v1274
    %5482 = vmatprep.subr.mxu0 0.0
    %5483 = vmatpush1.msra.mxu0 0.0
    %5484 = vmatprep.subr.mxu0 0.0
    %5485 = vmatpush1.msra.mxu0 0.0
    %5486 = vmatprep.subr.mxu0 0.0
    %5487 = vmatpush1.msra.mxu0 0.0
    %5488 = vmatprep.subr.mxu0 0.0
    %5489 = vmatpush1.msra.mxu0 0.0
    %5490 = vmatprep.subr.mxu0 0.0
    %5491 = vmatpush1.msra.mxu0 0.0
    %5492 = vmatprep.subr.mxu0 0.0
    %5493 = vmatpush1.msra.mxu0 0.0
    %5494 = vmatprep.subr.mxu0 0.0
    %5495 = vmatpush1.msra.mxu0 0.0
    %5496 = vmatprep.subr.mxu0 0.0
    %5497 = vmatpush1.msra.mxu0 0.0
    %5498 = vmatprep.subr.mxu0 0.0
    %5499 = vmatpush1.msra.mxu0 0.0
    %5500 = vmatprep.subr.mxu0 0.0
    %5501 = vmatpush1.msra.mxu0 0.0
    %5502 = vmatprep.subr.mxu0 0.0
    %5503 = vmatpush1.msra.mxu0 0.0
    %5504 = vmatprep.subr.mxu0 0.0
    %5505 = vmatpush1.msra.mxu0 0.0
    %5506 = vmatprep.subr.mxu0 0.0
    %5507 = vmatpush1.msra.mxu0 0.0
    %5508 = vmatprep.subr.mxu0 0.0
    %5509 = vmatpush1.msra.mxu0 0.0
    %5510 = vmatprep.subr.mxu0 0.0
    %5511 = vmatpush1.msra.mxu0 0.0
    %5512 = vmatprep.subr.mxu0 0.0
    %5513 = vmatpush1.msra.mxu0 0.0
    %5514 = vmatprep.subr.mxu0 0.0
    %5515 = vmatpush1.msra.mxu0 0.0
    %5516 = vmatprep.subr.mxu0 0.0
    %5517 = vmatpush1.msra.mxu0 0.0
    %5518 = vmatprep.subr.mxu0 0.0
    %5519 = vmatpush1.msra.mxu0 0.0
    %5520 = vmatprep.subr.mxu0 0.0
    %5521 = vmatpush1.msra.mxu0 0.0
    %5522 = vmatprep.subr.mxu0 0.0
    %5523 = vmatpush1.msra.mxu0 0.0
    %5524 = vmatprep.subr.mxu0 0.0
    %5525 = vmatpush1.msra.mxu0 0.0
    %5526 = vmatprep.subr.mxu0 0.0
    %5527 = vmatpush1.msra.mxu0 0.0
    %5528 = vmatprep.subr.mxu0 0.0
    %5529 = vmatpush1.msra.mxu0 0.0
    %5530 = vmatprep.subr.mxu0 0.0
    %5531 = vmatpush1.msra.mxu0 0.0
    %5532 = vmatprep.subr.mxu0 0.0
    %5533 = vmatpush1.msra.mxu0 0.0
    %5534 = vmatprep.subr.mxu0 0.0
    %5535 = vmatpush1.msra.mxu0 0.0
    %5536 = vmatprep.subr.mxu0 0.0
    %5537 = vmatpush1.msra.mxu0 0.0
    %5538 = vmatprep.subr.mxu0 0.0
    %5539 = vmatpush1.msra.mxu0 0.0
    %5540 = vmatprep.subr.mxu0 0.0
    %5541 = vmatpush1.msra.mxu0 0.0
    %5542 = vmatprep.mubr.f32.mxu0 0.0
    %5543 = vmatmul.mubr.f32.gmra.mrb[0].mxu0 %v5331
    %v5544 = vpop.f32.mrb[0].mxu0
    %v5545 = vadd.f32 %v1288, %v5544
    %v5546 = vpop.f32.mrb[0].mxu0
    %5547 = vdwg.mxu0
    %v5548 = vadd.f32 %v5404, %v5474
    %v5549 = vxor.u32 %v5548, 2147483648
    %v5550 = vmul.f32 %v5549, 1.442695
    %v5551 = vpow.pop %v5550
    %v5552 = vadd.f32 %v5551, 1.0
    %v5553 = vrcp.pop %v5552
    %v5554 = vmul.f32 1.0, %v5553
    %v5555 = vadd.f32 %v5405, %v5476
    %v5556 = vxor.u32 %v5555, 2147483648
    %v5557 = vmul.f32 %v5556, 1.442695
    %v5558 = vpow.pop %v5557
    %v5559 = vadd.f32 %v5558, 1.0
    %v5560 = vrcp.pop %v5559
    %v5561 = vmul.f32 1.0, %v5560
    %v5562 = vmul.f32 %v5554, %v5545
    %v5563 = vadd.f32 %v5406, %v5562
    %v5564 = vtanh.pop %v5563
    %v5565 = vsub.f32 1.0, %v5561
    %v5566 = vmul.f32 %v5565, %v5564
    %v5567 = vmul.f32 %v5561, %v5326
    %v5568 = vadd.f32 %v5566, %v5567
    %s5569 = scalar_lea.vmem %s7, 272
    %v5570 = vld [vmem:[%s5569] sm:$0xff]
    %v5571 = vld [vmem:[%s5569 + $0x8] sm:$0xff]
    %v5573 = vsel %vm1292, %v5568, 0
    %5575 = vmatprep.subr.mxu0 0.0
    %5576 = vmatpush1.msra.mxu0 %v5570
    %5577 = vmatprep.subr.mxu0 0.0
    %5578 = vmatpush1.msra.mxu0 %v5571
    %5579 = vmatprep.subr.mxu0 0.0
    %5580 = vmatpush1.msra.mxu0 0.0
    %5581 = vmatprep.subr.mxu0 0.0
    %5582 = vmatpush1.msra.mxu0 0.0
    %5583 = vmatprep.subr.mxu0 0.0
    %5584 = vmatpush1.msra.mxu0 0.0
    %5585 = vmatprep.subr.mxu0 0.0
    %5586 = vmatpush1.msra.mxu0 0.0
    %5587 = vmatprep.subr.mxu0 0.0
    %5588 = vmatpush1.msra.mxu0 0.0
    %5589 = vmatprep.subr.mxu0 0.0
    %5590 = vmatpush1.msra.mxu0 0.0
    %5591 = vmatprep.subr.mxu0 0.0
    %5592 = vmatpush1.msra.mxu0 0.0
    %5593 = vmatprep.subr.mxu0 0.0
    %5594 = vmatpush1.msra.mxu0 0.0
    %5595 = vmatprep.subr.mxu0 0.0
    %5596 = vmatpush1.msra.mxu0 0.0
    %5597 = vmatprep.subr.mxu0 0.0
    %5598 = vmatpush1.msra.mxu0 0.0
    %5599 = vmatprep.subr.mxu0 0.0
    %5600 = vmatpush1.msra.mxu0 0.0
    %5601 = vmatprep.subr.mxu0 0.0
    %5602 = vmatpush1.msra.mxu0 0.0
    %5603 = vmatprep.subr.mxu0 0.0
    %5604 = vmatpush1.msra.mxu0 0.0
    %5605 = vmatprep.subr.mxu0 0.0
    %5606 = vmatpush1.msra.mxu0 0.0
    %5607 = vmatprep.subr.mxu0 0.0
    %5608 = vmatpush1.msra.mxu0 0.0
    %5609 = vmatprep.subr.mxu0 0.0
    %5610 = vmatpush1.msra.mxu0 0.0
    %5611 = vmatprep.subr.mxu0 0.0
    %5612 = vmatpush1.msra.mxu0 0.0
    %5613 = vmatprep.subr.mxu0 0.0
    %5614 = vmatpush1.msra.mxu0 0.0
    %5615 = vmatprep.subr.mxu0 0.0
    %5616 = vmatpush1.msra.mxu0 0.0
    %5617 = vmatprep.subr.mxu0 0.0
    %5618 = vmatpush1.msra.mxu0 0.0
    %5619 = vmatprep.subr.mxu0 0.0
    %5620 = vmatpush1.msra.mxu0 0.0
    %5621 = vmatprep.subr.mxu0 0.0
    %5622 = vmatpush1.msra.mxu0 0.0
    %5623 = vmatprep.subr.mxu0 0.0
    %5624 = vmatpush1.msra.mxu0 0.0
    %5625 = vmatprep.subr.mxu0 0.0
    %5626 = vmatpush1.msra.mxu0 0.0
    %5627 = vmatprep.subr.mxu0 0.0
    %5628 = vmatpush1.msra.mxu0 0.0
    %5629 = vmatprep.subr.mxu0 0.0
    %5630 = vmatpush1.msra.mxu0 0.0
    %5631 = vmatprep.subr.mxu0 0.0
    %5632 = vmatpush1.msra.mxu0 0.0
    %5633 = vmatprep.subr.mxu0 0.0
    %5634 = vmatpush1.msra.mxu0 0.0
    %5635 = vmatprep.subr.mxu0 0.0
    %5636 = vmatpush1.msra.mxu0 0.0
    %5637 = vmatprep.subr.mxu0 0.0
    %5638 = vmatpush1.msra.mxu0 0.0
    %5639 = vmatprep.mubr.f32.mxu0 0.0
    %5640 = vmatmul.mubr.f32.gmra.mrb[0].mxu0 %v5573
    %v5641 = vpop.f32.mrb[0].mxu0
    %v5642 = vadd.f32 0.0, %v5641
    %v5643 = vpop.f32.mrb[0].mxu0
    %5644 = vdwg.mxu0
    %v5645 = vadd.f32 %v5403, %v5642
    %v5646 = vld [vmem:[%s8] sm:$0x1]
    %v5648 = vlaneseq
    %v5649 = vshrl.u32 %v5648, 7
    %v5650 = vsub.s32 0, %v5649
    %v5651 = vrot.slane %v5646, %v5650
    %v5653 = vadd.f32 %v5645, %v5651
    %vm5654 = vcmask 33792
    %5655 = vst.msk [vmem:[#allocation3] sm:$0x3] %vm5654, %v5653
    // Predicated region
    $region38: #{_model_forward.1} parent=1 // pred_check
      _
    $region39: #{_model_forward.1} parent=1 // pred_check_branch
      %5657 = sbr.rel (0) target = $region41
    $region40: #{_model_forward.1} parent=1 // pred_region
      %s5659 = ssub.s32 32, 32
      %5660 = vsyncadd [#allocation4], %s5659
      %s5662 = sshll.u32 [#allocation3], 4
      %s5663 = int_to_ptr.vmem [resolvable:$true] %s5662
      %5665 = dma.vmem_to_hbm [thread:$0]  %s5663, 32, %s9, [#allocation4]
    $region41: #{_model_forward.1} parent=1 // pred_fallthru
      _
    // Predicated region
    $region42: #{_model_forward.1} parent=1 // pred_check
      _
    $region43: #{_model_forward.1} parent=1 // pred_check_branch
      %5667 = sbr.rel (0) target = $region45
    $region44: #{_model_forward.1} parent=1 // pred_region
      %5668 = dma.done [#allocation4], 32
    $region45: #{_model_forward.1} parent=1 // pred_fallthru
      _
    %5669 = vsyncpa [#allocation4], 1

</llo_original>
